<compile_context>
chip_gen: v7x
topology: tpu7x:2x2x1
jax: 0.10.0
libtpu: 0.0.40
codegen_flags: <defaults>
</compile_context>

<pallas_src>
import functools

import numpy as np

import jax
import jax.numpy as jnp
from jax.experimental import pallas as pl
from jax.experimental.pallas import tpu as pltpu


_K = 4      # conv kernel size (all layers)
_PAD = 1    # conv padding (all layers)
_EPS = 1e-5
_SLOPE = 0.2
# (cin, cout, stride) per layer
_CHANNELS = [(2, 32, 2), (32, 64, 2), (64, 128, 2), (128, 256, 1), (256, 1, 1)]


# ----------------------------------------------------------------------------
# In-kernel helpers
# ----------------------------------------------------------------------------
def _leaky(v):
    return jnp.where(v > 0, v, _SLOPE * v)


def _inorm(v):
    # InstanceNorm2d(affine=False), eps=1e-5, biased variance, two-pass stats (f32).
    mean = jnp.mean(v, axis=0, keepdims=True)
    d = v - mean
    var = jnp.mean(d * d, axis=0, keepdims=True)
    return d * jax.lax.rsqrt(var + _EPS)


def _rows(x3):
    """Collapse a 3-D value [a, b, c] -> [a*b, c] via int-index + sublane concat
    (avoids relying on general reshape lowering)."""
    a = x3.shape[0]
    if a == 1:
        return x3[0]
    return jnp.concatenate([x3[i] for i in range(a)], axis=0)


def _build_fold(act_ref, fold_ref, n, c):
    """Scatter a raster [n*n, c] activation (f32, act_ref) into the 2x2-block folded,
    zero-bordered layout fold_ref [n//2+1, n//2+1, 4c] (bf16).

    Channel slot q = 2*r + cp of fold[i, j] holds zero-padded[2i+r, 2j+cp]; the
    untouched border entries of each slot are exactly the conv zero-padding and were
    zeroed once at kernel start."""
    m = n // 2
    # (slot, act_row_parity, act_col_parity, dst_row_off, dst_col_off)
    specs = ((0, 1, 1, 1, 1), (1, 1, 0, 1, 0), (2, 0, 1, 0, 1), (3, 0, 0, 0, 0))
    for q, rp, cp, dr, dc in specs:
        for yy in range(m):
            src = (2 * yy + rp) * n + cp
            row = act_ref[pl.ds(src, m, 2), :]            # [m, c] stride-2 sublane read
            fold_ref[dr + yy, dc:dc + m, q * c:(q + 1) * c] = row.astype(jnp.bfloat16)


def _conv_folded(fold_ref, w_ref, b_ref, oh, cout):
    """Stride-2 4x4 conv as 4 fused MXU matmuls (K = 4*Cin) over the folded input."""
    acc = jnp.zeros((oh * oh, cout), jnp.float32)
    for a in range(2):
        for b in range(2):
            xs = _rows(fold_ref[a:a + oh, b:b + oh, :])    # [oh*oh, 4*cin] bf16
            acc += jnp.dot(xs, w_ref[2 * a + b], preferred_element_type=jnp.float32)
    return acc + b_ref[...]


def _conv_s1(pad_ref, w_ref, b_ref, oh, cin, cout, group):
    """Stride-1 4x4 conv from a zero-padded buffer; kw taps fused in groups of `group`
    along the contraction dim (K = group*cin)."""
    acc = jnp.zeros((oh * oh, cout), jnp.float32)
    for kh in range(_K):
        for g0 in range(0, _K, group):
            parts = [_rows(pad_ref[kh:kh + oh, kw:kw + oh, :])
                     for kw in range(g0, g0 + group)]
            xcat = parts[0] if group == 1 else jnp.concatenate(parts, axis=1)
            wcat = _rows(w_ref[_K * kh + g0:_K * kh + g0 + group])
            acc += jnp.dot(xcat, wcat, preferred_element_type=jnp.float32)
    return acc + b_ref[...]


# ----------------------------------------------------------------------------
# Fused kernel: whole discriminator forward, b_tile images per grid step
# ----------------------------------------------------------------------------
def _disc_kernel(x_ref, w1_ref, w2_ref, w3_ref, w4_ref, w5_ref,
                 b1_ref, b2_ref, b3_ref, b4_ref, b5_ref,
                 o_ref,
                 act1_ref, fold2_ref, act2_ref, fold3_ref, pad4_ref, pad5_ref,
                 *, spatial, b_tile):
    s1, s2, s3, s4, s5 = spatial

    # Zero the padded scratch buffers once; interiors are fully rewritten per image,
    # so the zero borders (= conv padding) persist across the per-image loop.
    fold2_ref[...] = jnp.zeros_like(fold2_ref)
    fold3_ref[...] = jnp.zeros_like(fold3_ref)
    pad4_ref[...] = jnp.zeros_like(pad4_ref)
    pad5_ref[...] = jnp.zeros_like(pad5_ref)

    for b in range(b_tile):
        # ---- layer 1: conv(2->32, stride 2) as ONE im2col matmul (K = 32) ----
        y1 = jnp.dot(x_ref[b], w1_ref[...], preferred_element_type=jnp.float32)
        act1_ref[...] = _leaky(y1 + b1_ref[...])                    # [s1*s1, 32] f32
        _build_fold(act1_ref, fold2_ref, s1, 32)

        # ---- layer 2: conv(32->64, stride 2) + IN + LeakyReLU (4 matmuls, K=128) ----
        y2 = _conv_folded(fold2_ref, w2_ref, b2_ref, s2, 64)
        act2_ref[...] = _leaky(_inorm(y2))                          # [s2*s2, 64] f32
        _build_fold(act2_ref, fold3_ref, s2, 64)

        # ---- layer 3: conv(64->128, stride 2) + IN + LeakyReLU (4 matmuls, K=256) ----
        y3 = _conv_folded(fold3_ref, w3_ref, b3_ref, s3, 128)
        a3 = _leaky(_inorm(y3))                                     # [s3*s3, 128] f32
        for r in range(s3):                                         # zero-padded store
            pad4_ref[1 + r, 1:1 + s3, :] = a3[s3 * r:s3 * r + s3, :].astype(jnp.bfloat16)

        # ---- layer 4: conv(128->256, stride 1) + IN + LeakyReLU (kw pairs, K=256) ----
        y4 = _conv_s1(pad4_ref, w4_ref, b4_ref, s4, 128, 256, group=2)
        a4 = _leaky(_inorm(y4))                                     # [s4*s4, 256] f32
        for r in range(s4):
            pad5_ref[1 + r, 1:1 + s4, :] = a4[s4 * r:s4 * r + s4, :]

        # ---- layer 5: conv(256->1, stride 1) + sigmoid on the VPU/XLU ----
        acc5 = jnp.zeros((s5 * s5, 1), jnp.float32)
        for kh in range(_K):
            for kw in range(_K):
                xs = _rows(pad5_ref[kh:kh + s5, kw:kw + s5, :])      # [s5*s5, 256] f32
                wv = w5_ref[_K * kh + kw]                            # [1, 256] f32
                acc5 += jnp.sum(xs * wv, axis=1, keepdims=True)
        o_ref[b] = jax.nn.sigmoid(acc5 + b5_ref[...])                # [s5*s5, 1] f32


# ----------------------------------------------------------------------------
# Wrapper
# ----------------------------------------------------------------------------
def _const_spec(arr):
    nd = arr.ndim
    return pl.BlockSpec(tuple(arr.shape), lambda n, _nd=nd: (0,) * _nd)


def _blockify_stride2(w):
    """[16, cin, cout] (tap index kh*4+kw) -> [4, 4*cin, cout], blocks indexed by
    (kh//2)*2 + (kw//2), channel-slot order q = 2*(kh%2) + (kw%2) (matches the fold)."""
    cin, cout = w.shape[1], w.shape[2]
    blocks = []
    for a in range(2):
        for b in range(2):
            taps = [(2 * a) * _K + (2 * b), (2 * a) * _K + (2 * b) + 1,
                    (2 * a + 1) * _K + (2 * b), (2 * a + 1) * _K + (2 * b) + 1]
            blocks.append(w[jnp.asarray(taps)].reshape(4 * cin, cout))
    return jnp.stack(blocks, axis=0)


def _pick_batch_tile(n):
    for bt in (8, 4, 2):
        if n % bt == 0 and n // bt >= 2:   # keep >=2 grid steps so v7x uses both TCs
            return bt
    return 1


@jax.jit
def discriminator_forward(x_nchw, params):
    N, C, H, W = x_nchw.shape
    assert C == 2 and H == W and H % 8 == 0 and H >= 32, \
        "Discriminator expects [N, 2, H, H], H multiple of 8, H >= 32"

    s1, s2, s3 = H // 2, H // 4, H // 8
    s4, s5 = s3 - 1, s3 - 2
    b_tile = _pick_batch_tile(N)

    # ---- layer-1 im2col in plain-JAX glue (input is tiny): [N, s1*s1, 32] bf16 ----
    x = jnp.transpose(x_nchw, (0, 2, 3, 1)).astype(jnp.float32)
    xp = jnp.pad(x, ((0, 0), (_PAD, _PAD), (_PAD, _PAD), (0, 0)))
    taps = [xp[:, kh:kh + 2 * s1 - 1:2, kw:kw + 2 * s1 - 1:2, :]
            for kh in range(_K) for kw in range(_K)]
    x_im2col = jnp.concatenate(taps, axis=-1).reshape(N, s1 * s1, _K * _K * C)
    x_im2col = x_im2col.astype(jnp.bfloat16)

    # ---- weights in MXU-ready layouts ----
    w1 = params["w1"].astype(jnp.bfloat16).reshape(_K * _K * 2, 32)    # [32, 32]
    w2 = _blockify_stride2(params["w2"].astype(jnp.bfloat16))          # [4, 128, 64]
    w3 = _blockify_stride2(params["w3"].astype(jnp.bfloat16))          # [4, 256, 128]
    w4 = params["w4"].astype(jnp.bfloat16)                             # [16, 128, 256]
    w5 = jnp.transpose(params["w5"].astype(jnp.float32), (0, 2, 1))    # [16, 1, 256]
    bs = [params[f"b{i}"].astype(jnp.float32) for i in range(1, 6)]

    operands = [x_im2col, w1, w2, w3, w4, w5] + bs
    in_specs = [pl.BlockSpec((b_tile, s1 * s1, _K * _K * C), lambda n: (n, 0, 0))]
    in_specs += [_const_spec(a) for a in operands[1:]]

    out = pl.pallas_call(
        functools.partial(_disc_kernel, spatial=(s1, s2, s3, s4, s5), b_tile=b_tile),
        out_shape=jax.ShapeDtypeStruct((N, s5 * s5, 1), jnp.float32),
        grid=(N // b_tile,),
        in_specs=in_specs,
        out_specs=pl.BlockSpec((b_tile, s5 * s5, 1), lambda n: (n, 0, 0)),
        scratch_shapes=[
            pltpu.VMEM((s1 * s1, 32), jnp.float32),               # act1 (raster)
            pltpu.VMEM((s2 + 1, s2 + 1, 4 * 32), jnp.bfloat16),   # fold2
            pltpu.VMEM((s2 * s2, 64), jnp.float32),               # act2 (raster)
            pltpu.VMEM((s3 + 1, s3 + 1, 4 * 64), jnp.bfloat16),   # fold3
            pltpu.VMEM((s3 + 2, s3 + 2, 128), jnp.bfloat16),      # pad4 (zero border)
            pltpu.VMEM((s4 + 2, s4 + 2, 256), jnp.float32),       # pad5 (zero border)
        ],
        compiler_params=pltpu.CompilerParams(
            dimension_semantics=("parallel",),
            vmem_limit_bytes=32 * 1024 * 1024,
        ),
    )(*operands)

    return out.reshape(N, 1, s5, s5)


# ----------------------------------------------------------------------------
# Parameters (PyTorch-default-like uniform init; tap layout t = kh*4 + kw)
# ----------------------------------------------------------------------------
def init_discriminator_params(key):
    keys = jax.random.split(key, 5)
    params = {}
    for i, ((cin, cout, _), k) in enumerate(zip(_CHANNELS, keys), start=1):
        kw_key, kb_key = jax.random.split(k)
        fan_in = cin * _K * _K
        bound = 1.0 / float(np.sqrt(fan_in))
        w = jax.random.uniform(kw_key, (_K * _K, cin, cout), jnp.float32, -bound, bound)
        b = jax.random.uniform(kb_key, (cout,), jnp.float32, -bound, bound)
        params[f"w{i}"] = w.astype(jnp.bfloat16)          # [16, Cin, Cout]
        params[f"b{i}"] = b.reshape(1, cout)              # f32
    return params


# ----------------------------------------------------------------------------
# Plain-JAX / XLA reference (same math, f32) used for a correctness cross-check
# ----------------------------------------------------------------------------
def reference_forward(x_nchw, params):
    x = jnp.transpose(x_nchw, (0, 2, 3, 1)).astype(jnp.bfloat16).astype(jnp.float32)

    def conv(h, w, b, stride):
        cin, cout = w.shape[1], w.shape[2]
        w4 = w.astype(jnp.float32).reshape(_K, _K, cin, cout)
        y = jax.lax.conv_general_dilated(
            h, w4, window_strides=(stride, stride),
            padding=((_PAD, _PAD), (_PAD, _PAD)),
            dimension_numbers=("NHWC", "HWIO", "NHWC"),
            precision=jax.lax.Precision.HIGHEST)
        return y + b.astype(jnp.float32).reshape(1, 1, 1, cout)

    def inorm(v):
        mean = jnp.mean(v, axis=(1, 2), keepdims=True)
        var = jnp.mean((v - mean) ** 2, axis=(1, 2), keepdims=True)
        return (v - mean) * jax.lax.rsqrt(var + _EPS)

    lrelu = lambda v: jnp.where(v > 0, v, _SLOPE * v)
    h = lrelu(conv(x, params["w1"], params["b1"], 2))
    h = lrelu(inorm(conv(h, params["w2"], params["b2"], 2)))
    h = lrelu(inorm(conv(h, params["w3"], params["b3"], 2)))
    h = lrelu(inorm(conv(h, params["w4"], params["b4"], 1)))
    h = jax.nn.sigmoid(conv(h, params["w5"], params["b5"], 1))
    return jnp.transpose(h, (0, 3, 1, 2))


# ----------------------------------------------------------------------------
if __name__ == "__main__":
    key = jax.random.PRNGKey(0)
    key_x, key_p = jax.random.split(key)

    # Discriminator input: 2-channel (condition ++ image), 32x32, batch 2.
    x = jax.random.normal(key_x, (2, 2, 32, 32), dtype=jnp.float32)
    params = init_discriminator_params(key_p)

    out = jax.block_until_ready(discriminator_forward(x, params))

    assert out.shape == (2, 1, 2, 2), out.shape
    assert bool(jnp.all(jnp.isfinite(out)))
    assert bool(jnp.all((out >= 0.0) & (out <= 1.0)))       # sigmoid range

    # Cross-check against the XLA reference (loose tol: bf16 matmuls in-kernel).
    ref = jax.block_until_ready(reference_forward(x, params))
    max_err = float(jnp.max(jnp.abs(out - ref)))
    assert max_err < 5e-2, f"mismatch vs reference: {max_err}"

    print("KERNEL_OK")
</pallas_src>

<mosaic_0001>
module attributes {stable_mosaic.version = 11 : i64} {
  func.func @_disc_kernel(%arg0: i32, %arg1: memref<1x256x32xbf16, #tpu.memory_space<vmem>>, %arg2: memref<32x32xbf16, #tpu.memory_space<vmem>>, %arg3: memref<4x128x64xbf16, #tpu.memory_space<vmem>>, %arg4: memref<4x256x128xbf16, #tpu.memory_space<vmem>>, %arg5: memref<16x128x256xbf16, #tpu.memory_space<vmem>>, %arg6: memref<16x1x256xf32, #tpu.memory_space<vmem>>, %arg7: memref<1x32xf32, #tpu.memory_space<vmem>>, %arg8: memref<1x64xf32, #tpu.memory_space<vmem>>, %arg9: memref<1x128xf32, #tpu.memory_space<vmem>>, %arg10: memref<1x256xf32, #tpu.memory_space<vmem>>, %arg11: memref<1x1xf32, #tpu.memory_space<vmem>>, %arg12: memref<1x4x1xf32, #tpu.memory_space<vmem>>, %arg13: memref<256x32xf32, #tpu.memory_space<vmem>>, %arg14: memref<9x9x128xbf16, #tpu.memory_space<vmem>>, %arg15: memref<64x64xf32, #tpu.memory_space<vmem>>, %arg16: memref<5x5x256xbf16, #tpu.memory_space<vmem>>, %arg17: memref<6x6x128xbf16, #tpu.memory_space<vmem>>, %arg18: memref<5x5x256xf32, #tpu.memory_space<vmem>>) attributes {dimension_semantics = [#tpu.dimension_semantics<parallel>], iteration_bounds = array<i64: 2>, scalar_prefetch = 0 : i64, scratch_operands = 6 : i64, tpu.core_type = #tpu.core_type<tc>, window_params = [{transform_indices = @transform_0, window_bounds = array<i64: 1, 256, 32>}, {pipeline_mode = #tpu.pipeline_mode<synchronous>, transform_indices = @transform_1, window_bounds = array<i64: 32, 32>}, {pipeline_mode = #tpu.pipeline_mode<synchronous>, transform_indices = @transform_2, window_bounds = array<i64: 4, 128, 64>}, {pipeline_mode = #tpu.pipeline_mode<synchronous>, transform_indices = @transform_3, window_bounds = array<i64: 4, 256, 128>}, {pipeline_mode = #tpu.pipeline_mode<synchronous>, transform_indices = @transform_4, window_bounds = array<i64: 16, 128, 256>}, {pipeline_mode = #tpu.pipeline_mode<synchronous>, transform_indices = @transform_5, window_bounds = array<i64: 16, 1, 256>}, {pipeline_mode = #tpu.pipeline_mode<synchronous>, transform_indices = @transform_6, window_bounds = array<i64: 1, 32>}, {pipeline_mode = #tpu.pipeline_mode<synchronous>, transform_indices = @transform_7, window_bounds = array<i64: 1, 64>}, {pipeline_mode = #tpu.pipeline_mode<synchronous>, transform_indices = @transform_8, window_bounds = array<i64: 1, 128>}, {pipeline_mode = #tpu.pipeline_mode<synchronous>, transform_indices = @transform_9, window_bounds = array<i64: 1, 256>}, {pipeline_mode = #tpu.pipeline_mode<synchronous>, transform_indices = @transform_10, window_bounds = array<i64: 1, 1>}, {transform_indices = @transform_11, window_bounds = array<i64: 1, 4, 1>}]} {
    %cst = arith.constant 0.000000e+00 : bf16
    %0 = vector.broadcast %cst : bf16 to vector<9x9x128xbf16>
    %c0 = arith.constant 0 : index
    %c0_0 = arith.constant 0 : index
    %c0_1 = arith.constant 0 : index
    %1 = vector.load %arg14[%c0, %c0_0, %c0_1] : memref<9x9x128xbf16, #tpu.memory_space<vmem>>, vector<9x9x128xbf16>
    tpu.vector_store %arg14[%c0, %c0_0, %c0_1], %0 {strides = array<i32>} : memref<9x9x128xbf16, #tpu.memory_space<vmem>>, vector<9x9x128xbf16>,
    %cst_2 = arith.constant 0.000000e+00 : bf16
    %2 = vector.broadcast %cst_2 : bf16 to vector<5x5x256xbf16>
    %c0_3 = arith.constant 0 : index
    %c0_4 = arith.constant 0 : index
    %c0_5 = arith.constant 0 : index
    %3 = vector.load %arg16[%c0_3, %c0_4, %c0_5] : memref<5x5x256xbf16, #tpu.memory_space<vmem>>, vector<5x5x256xbf16>
    tpu.vector_store %arg16[%c0_3, %c0_4, %c0_5], %2 {strides = array<i32>} : memref<5x5x256xbf16, #tpu.memory_space<vmem>>, vector<5x5x256xbf16>,
    %cst_6 = arith.constant 0.000000e+00 : bf16
    %4 = vector.broadcast %cst_6 : bf16 to vector<6x6x128xbf16>
    %c0_7 = arith.constant 0 : index
    %c0_8 = arith.constant 0 : index
    %c0_9 = arith.constant 0 : index
    %5 = vector.load %arg17[%c0_7, %c0_8, %c0_9] : memref<6x6x128xbf16, #tpu.memory_space<vmem>>, vector<6x6x128xbf16>
    tpu.vector_store %arg17[%c0_7, %c0_8, %c0_9], %4 {strides = array<i32>} : memref<6x6x128xbf16, #tpu.memory_space<vmem>>, vector<6x6x128xbf16>,
    %cst_10 = arith.constant 0.000000e+00 : f32
    %6 = vector.broadcast %cst_10 : f32 to vector<5x5x256xf32>
    %c0_11 = arith.constant 0 : index
    %c0_12 = arith.constant 0 : index
    %c0_13 = arith.constant 0 : index
    %7 = vector.load %arg18[%c0_11, %c0_12, %c0_13] : memref<5x5x256xf32, #tpu.memory_space<vmem>>, vector<5x5x256xf32>
    tpu.vector_store %arg18[%c0_11, %c0_12, %c0_13], %6 {strides = array<i32>} : memref<5x5x256xf32, #tpu.memory_space<vmem>>, vector<5x5x256xf32>,
    %c0_14 = arith.constant 0 : index
    %c0_15 = arith.constant 0 : index
    %c0_16 = arith.constant 0 : index
    %8 = vector.load %arg1[%c0_14, %c0_15, %c0_16] : memref<1x256x32xbf16, #tpu.memory_space<vmem>>, vector<1x256x32xbf16>
    %9 = vector.shape_cast %8 : vector<1x256x32xbf16> to vector<256x32xbf16>
    %c0_17 = arith.constant 0 : index
    %c0_18 = arith.constant 0 : index
    %10 = vector.load %arg2[%c0_17, %c0_18] : memref<32x32xbf16, #tpu.memory_space<vmem>>, vector<32x32xbf16>
    %cst_19 = arith.constant dense<0.000000e+00> : vector<256x32xf32>
    %11 = tpu.matmul %9, %10, %cst_19 {dimension_numbers = #tpu.dot_dimension_numbers<[1], [0], [0], [1], [0, 0, 1, 1], [], []>} : vector<256x32xbf16>, vector<32x32xbf16>, vector<256x32xf32> -> vector<256x32xf32>
    %c0_20 = arith.constant 0 : index
    %c0_21 = arith.constant 0 : index
    %12 = vector.load %arg7[%c0_20, %c0_21] : memref<1x32xf32, #tpu.memory_space<vmem>>, vector<1x32xf32>
    %13 = vector.broadcast %12 : vector<1x32xf32> to vector<256x32xf32>
    %14 = arith.addf %11, %13 : vector<256x32xf32>
    %cst_22 = arith.constant 0.000000e+00 : f32
    %15 = vector.broadcast %cst_22 : f32 to vector<256x32xf32>
    %16 = arith.cmpf ogt, %14, %15 : vector<256x32xf32>
    %cst_23 = arith.constant 2.000000e-01 : f32
    %17 = vector.broadcast %cst_23 : f32 to vector<256x32xf32>
    %18 = arith.mulf %17, %14 : vector<256x32xf32>
    %19 = arith.select %16, %14, %18 : vector<256x32xi1>, vector<256x32xf32>
    %c0_24 = arith.constant 0 : index
    %c0_25 = arith.constant 0 : index
    %20 = vector.load %arg13[%c0_24, %c0_25] : memref<256x32xf32, #tpu.memory_space<vmem>>, vector<256x32xf32>
    tpu.vector_store %arg13[%c0_24, %c0_25], %19 {strides = array<i32>} : memref<256x32xf32, #tpu.memory_space<vmem>>, vector<256x32xf32>,
    %c17 = arith.constant 17 : index
    %c0_26 = arith.constant 0 : index
    %21 = tpu.strided_load %arg13[%c17, %c0_26] {strides = array<i32: 2, 1>} : memref<256x32xf32, #tpu.memory_space<vmem>>, vector<8x32xf32>
    %22 = arith.truncf %21 : vector<8x32xf32> to vector<8x32xbf16>
    %c1 = arith.constant 1 : index
    %c1_27 = arith.constant 1 : index
    %c0_28 = arith.constant 0 : index
    %23 = vector.load %arg14[%c1, %c1_27, %c0_28] : memref<9x9x128xbf16, #tpu.memory_space<vmem>>, vector<1x8x32xbf16>
    %24 = vector.shape_cast %23 : vector<1x8x32xbf16> to vector<8x32xbf16>
    %25 = vector.shape_cast %22 : vector<8x32xbf16> to vector<1x8x32xbf16>
    tpu.vector_store %arg14[%c1, %c1_27, %c0_28], %25 {strides = array<i32>} : memref<9x9x128xbf16, #tpu.memory_space<vmem>>, vector<1x8x32xbf16>,
    %c49 = arith.constant 49 : index
    %c0_29 = arith.constant 0 : index
    %26 = tpu.strided_load %arg13[%c49, %c0_29] {strides = array<i32: 2, 1>} : memref<256x32xf32, #tpu.memory_space<vmem>>, vector<8x32xf32>
    %27 = arith.truncf %26 : vector<8x32xf32> to vector<8x32xbf16>
    %c2 = arith.constant 2 : index
    %c1_30 = arith.constant 1 : index
    %c0_31 = arith.constant 0 : index
    %28 = vector.load %arg14[%c2, %c1_30, %c0_31] : memref<9x9x128xbf16, #tpu.memory_space<vmem>>, vector<1x8x32xbf16>
    %29 = vector.shape_cast %28 : vector<1x8x32xbf16> to vector<8x32xbf16>
    %30 = vector.shape_cast %27 : vector<8x32xbf16> to vector<1x8x32xbf16>
    tpu.vector_store %arg14[%c2, %c1_30, %c0_31], %30 {strides = array<i32>} : memref<9x9x128xbf16, #tpu.memory_space<vmem>>, vector<1x8x32xbf16>,
    %c81 = arith.constant 81 : index
    %c0_32 = arith.constant 0 : index
    %31 = tpu.strided_load %arg13[%c81, %c0_32] {strides = array<i32: 2, 1>} : memref<256x32xf32, #tpu.memory_space<vmem>>, vector<8x32xf32>
    %32 = arith.truncf %31 : vector<8x32xf32> to vector<8x32xbf16>
    %c3 = arith.constant 3 : index
    %c1_33 = arith.constant 1 : index
    %c0_34 = arith.constant 0 : index
    %33 = vector.load %arg14[%c3, %c1_33, %c0_34] : memref<9x9x128xbf16, #tpu.memory_space<vmem>>, vector<1x8x32xbf16>
    %34 = vector.shape_cast %33 : vector<1x8x32xbf16> to vector<8x32xbf16>
    %35 = vector.shape_cast %32 : vector<8x32xbf16> to vector<1x8x32xbf16>
    tpu.vector_store %arg14[%c3, %c1_33, %c0_34], %35 {strides = array<i32>} : memref<9x9x128xbf16, #tpu.memory_space<vmem>>, vector<1x8x32xbf16>,
    %c113 = arith.constant 113 : index
    %c0_35 = arith.constant 0 : index
    %36 = tpu.strided_load %arg13[%c113, %c0_35] {strides = array<i32: 2, 1>} : memref<256x32xf32, #tpu.memory_space<vmem>>, vector<8x32xf32>
    %37 = arith.truncf %36 : vector<8x32xf32> to vector<8x32xbf16>
    %c4 = arith.constant 4 : index
    %c1_36 = arith.constant 1 : index
    %c0_37 = arith.constant 0 : index
    %38 = vector.load %arg14[%c4, %c1_36, %c0_37] : memref<9x9x128xbf16, #tpu.memory_space<vmem>>, vector<1x8x32xbf16>
    %39 = vector.shape_cast %38 : vector<1x8x32xbf16> to vector<8x32xbf16>
    %40 = vector.shape_cast %37 : vector<8x32xbf16> to vector<1x8x32xbf16>
    tpu.vector_store %arg14[%c4, %c1_36, %c0_37], %40 {strides = array<i32>} : memref<9x9x128xbf16, #tpu.memory_space<vmem>>, vector<1x8x32xbf16>,
    %c145 = arith.constant 145 : index
    %c0_38 = arith.constant 0 : index
    %41 = tpu.strided_load %arg13[%c145, %c0_38] {strides = array<i32: 2, 1>} : memref<256x32xf32, #tpu.memory_space<vmem>>, vector<8x32xf32>
    %42 = arith.truncf %41 : vector<8x32xf32> to vector<8x32xbf16>
    %c5 = arith.constant 5 : index
    %c1_39 = arith.constant 1 : index
    %c0_40 = arith.constant 0 : index
    %43 = vector.load %arg14[%c5, %c1_39, %c0_40] : memref<9x9x128xbf16, #tpu.memory_space<vmem>>, vector<1x8x32xbf16>
    %44 = vector.shape_cast %43 : vector<1x8x32xbf16> to vector<8x32xbf16>
    %45 = vector.shape_cast %42 : vector<8x32xbf16> to vector<1x8x32xbf16>
    tpu.vector_store %arg14[%c5, %c1_39, %c0_40], %45 {strides = array<i32>} : memref<9x9x128xbf16, #tpu.memory_space<vmem>>, vector<1x8x32xbf16>,
    %c177 = arith.constant 177 : index
    %c0_41 = arith.constant 0 : index
    %46 = tpu.strided_load %arg13[%c177, %c0_41] {strides = array<i32: 2, 1>} : memref<256x32xf32, #tpu.memory_space<vmem>>, vector<8x32xf32>
    %47 = arith.truncf %46 : vector<8x32xf32> to vector<8x32xbf16>
    %c6 = arith.constant 6 : index
    %c1_42 = arith.constant 1 : index
    %c0_43 = arith.constant 0 : index
    %48 = vector.load %arg14[%c6, %c1_42, %c0_43] : memref<9x9x128xbf16, #tpu.memory_space<vmem>>, vector<1x8x32xbf16>
    %49 = vector.shape_cast %48 : vector<1x8x32xbf16> to vector<8x32xbf16>
    %50 = vector.shape_cast %47 : vector<8x32xbf16> to vector<1x8x32xbf16>
    tpu.vector_store %arg14[%c6, %c1_42, %c0_43], %50 {strides = array<i32>} : memref<9x9x128xbf16, #tpu.memory_space<vmem>>, vector<1x8x32xbf16>,
    %c209 = arith.constant 209 : index
    %c0_44 = arith.constant 0 : index
    %51 = tpu.strided_load %arg13[%c209, %c0_44] {strides = array<i32: 2, 1>} : memref<256x32xf32, #tpu.memory_space<vmem>>, vector<8x32xf32>
    %52 = arith.truncf %51 : vector<8x32xf32> to vector<8x32xbf16>
    %c7 = arith.constant 7 : index
    %c1_45 = arith.constant 1 : index
    %c0_46 = arith.constant 0 : index
    %53 = vector.load %arg14[%c7, %c1_45, %c0_46] : memref<9x9x128xbf16, #tpu.memory_space<vmem>>, vector<1x8x32xbf16>
    %54 = vector.shape_cast %53 : vector<1x8x32xbf16> to vector<8x32xbf16>
    %55 = vector.shape_cast %52 : vector<8x32xbf16> to vector<1x8x32xbf16>
    tpu.vector_store %arg14[%c7, %c1_45, %c0_46], %55 {strides = array<i32>} : memref<9x9x128xbf16, #tpu.memory_space<vmem>>, vector<1x8x32xbf16>,
    %c241 = arith.constant 241 : index
    %c0_47 = arith.constant 0 : index
    %56 = tpu.strided_load %arg13[%c241, %c0_47] {strides = array<i32: 2, 1>} : memref<256x32xf32, #tpu.memory_space<vmem>>, vector<8x32xf32>
    %57 = arith.truncf %56 : vector<8x32xf32> to vector<8x32xbf16>
    %c8 = arith.constant 8 : index
    %c1_48 = arith.constant 1 : index
    %c0_49 = arith.constant 0 : index
    %58 = vector.load %arg14[%c8, %c1_48, %c0_49] : memref<9x9x128xbf16, #tpu.memory_space<vmem>>, vector<1x8x32xbf16>
    %59 = vector.shape_cast %58 : vector<1x8x32xbf16> to vector<8x32xbf16>
    %60 = vector.shape_cast %57 : vector<8x32xbf16> to vector<1x8x32xbf16>
    tpu.vector_store %arg14[%c8, %c1_48, %c0_49], %60 {strides = array<i32>} : memref<9x9x128xbf16, #tpu.memory_space<vmem>>, vector<1x8x32xbf16>,
    %c16 = arith.constant 16 : index
    %c0_50 = arith.constant 0 : index
    %61 = tpu.strided_load %arg13[%c16, %c0_50] {strides = array<i32: 2, 1>} : memref<256x32xf32, #tpu.memory_space<vmem>>, vector<8x32xf32>
    %62 = arith.truncf %61 : vector<8x32xf32> to vector<8x32xbf16>
    %c1_51 = arith.constant 1 : index
    %c0_52 = arith.constant 0 : index
    %c32 = arith.constant 32 : index
    %63 = vector.load %arg14[%c1_51, %c0_52, %c32] : memref<9x9x128xbf16, #tpu.memory_space<vmem>>, vector<1x8x32xbf16>
    %64 = vector.shape_cast %63 : vector<1x8x32xbf16> to vector<8x32xbf16>
    %65 = vector.shape_cast %62 : vector<8x32xbf16> to vector<1x8x32xbf16>
    tpu.vector_store %arg14[%c1_51, %c0_52, %c32], %65 {strides = array<i32>} : memref<9x9x128xbf16, #tpu.memory_space<vmem>>, vector<1x8x32xbf16>,
    %c48 = arith.constant 48 : index
    %c0_53 = arith.constant 0 : index
    %66 = tpu.strided_load %arg13[%c48, %c0_53] {strides = array<i32: 2, 1>} : memref<256x32xf32, #tpu.memory_space<vmem>>, vector<8x32xf32>
    %67 = arith.truncf %66 : vector<8x32xf32> to vector<8x32xbf16>
    %c2_54 = arith.constant 2 : index
    %c0_55 = arith.constant 0 : index
    %c32_56 = arith.constant 32 : index
    %68 = vector.load %arg14[%c2_54, %c0_55, %c32_56] : memref<9x9x128xbf16, #tpu.memory_space<vmem>>, vector<1x8x32xbf16>
    %69 = vector.shape_cast %68 : vector<1x8x32xbf16> to vector<8x32xbf16>
    %70 = vector.shape_cast %67 : vector<8x32xbf16> to vector<1x8x32xbf16>
    tpu.vector_store %arg14[%c2_54, %c0_55, %c32_56], %70 {strides = array<i32>} : memref<9x9x128xbf16, #tpu.memory_space<vmem>>, vector<1x8x32xbf16>,
    %c80 = arith.constant 80 : index
    %c0_57 = arith.constant 0 : index
    %71 = tpu.strided_load %arg13[%c80, %c0_57] {strides = array<i32: 2, 1>} : memref<256x32xf32, #tpu.memory_space<vmem>>, vector<8x32xf32>
    %72 = arith.truncf %71 : vector<8x32xf32> to vector<8x32xbf16>
    %c3_58 = arith.constant 3 : index
    %c0_59 = arith.constant 0 : index
    %c32_60 = arith.constant 32 : index
    %73 = vector.load %arg14[%c3_58, %c0_59, %c32_60] : memref<9x9x128xbf16, #tpu.memory_space<vmem>>, vector<1x8x32xbf16>
    %74 = vector.shape_cast %73 : vector<1x8x32xbf16> to vector<8x32xbf16>
    %75 = vector.shape_cast %72 : vector<8x32xbf16> to vector<1x8x32xbf16>
    tpu.vector_store %arg14[%c3_58, %c0_59, %c32_60], %75 {strides = array<i32>} : memref<9x9x128xbf16, #tpu.memory_space<vmem>>, vector<1x8x32xbf16>,
    %c112 = arith.constant 112 : index
    %c0_61 = arith.constant 0 : index
    %76 = tpu.strided_load %arg13[%c112, %c0_61] {strides = array<i32: 2, 1>} : memref<256x32xf32, #tpu.memory_space<vmem>>, vector<8x32xf32>
    %77 = arith.truncf %76 : vector<8x32xf32> to vector<8x32xbf16>
    %c4_62 = arith.constant 4 : index
    %c0_63 = arith.constant 0 : index
    %c32_64 = arith.constant 32 : index
    %78 = vector.load %arg14[%c4_62, %c0_63, %c32_64] : memref<9x9x128xbf16, #tpu.memory_space<vmem>>, vector<1x8x32xbf16>
    %79 = vector.shape_cast %78 : vector<1x8x32xbf16> to vector<8x32xbf16>
    %80 = vector.shape_cast %77 : vector<8x32xbf16> to vector<1x8x32xbf16>
    tpu.vector_store %arg14[%c4_62, %c0_63, %c32_64], %80 {strides = array<i32>} : memref<9x9x128xbf16, #tpu.memory_space<vmem>>, vector<1x8x32xbf16>,
    %c144 = arith.constant 144 : index
    %c0_65 = arith.constant 0 : index
    %81 = tpu.strided_load %arg13[%c144, %c0_65] {strides = array<i32: 2, 1>} : memref<256x32xf32, #tpu.memory_space<vmem>>, vector<8x32xf32>
    %82 = arith.truncf %81 : vector<8x32xf32> to vector<8x32xbf16>
    %c5_66 = arith.constant 5 : index
    %c0_67 = arith.constant 0 : index
    %c32_68 = arith.constant 32 : index
    %83 = vector.load %arg14[%c5_66, %c0_67, %c32_68] : memref<9x9x128xbf16, #tpu.memory_space<vmem>>, vector<1x8x32xbf16>
    %84 = vector.shape_cast %83 : vector<1x8x32xbf16> to vector<8x32xbf16>
    %85 = vector.shape_cast %82 : vector<8x32xbf16> to vector<1x8x32xbf16>
    tpu.vector_store %arg14[%c5_66, %c0_67, %c32_68], %85 {strides = array<i32>} : memref<9x9x128xbf16, #tpu.memory_space<vmem>>, vector<1x8x32xbf16>,
    %c176 = arith.constant 176 : index
    %c0_69 = arith.constant 0 : index
    %86 = tpu.strided_load %arg13[%c176, %c0_69] {strides = array<i32: 2, 1>} : memref<256x32xf32, #tpu.memory_space<vmem>>, vector<8x32xf32>
    %87 = arith.truncf %86 : vector<8x32xf32> to vector<8x32xbf16>
    %c6_70 = arith.constant 6 : index
    %c0_71 = arith.constant 0 : index
    %c32_72 = arith.constant 32 : index
    %88 = vector.load %arg14[%c6_70, %c0_71, %c32_72] : memref<9x9x128xbf16, #tpu.memory_space<vmem>>, vector<1x8x32xbf16>
    %89 = vector.shape_cast %88 : vector<1x8x32xbf16> to vector<8x32xbf16>
    %90 = vector.shape_cast %87 : vector<8x32xbf16> to vector<1x8x32xbf16>
    tpu.vector_store %arg14[%c6_70, %c0_71, %c32_72], %90 {strides = array<i32>} : memref<9x9x128xbf16, #tpu.memory_space<vmem>>, vector<1x8x32xbf16>,
    %c208 = arith.constant 208 : index
    %c0_73 = arith.constant 0 : index
    %91 = tpu.strided_load %arg13[%c208, %c0_73] {strides = array<i32: 2, 1>} : memref<256x32xf32, #tpu.memory_space<vmem>>, vector<8x32xf32>
    %92 = arith.truncf %91 : vector<8x32xf32> to vector<8x32xbf16>
    %c7_74 = arith.constant 7 : index
    %c0_75 = arith.constant 0 : index
    %c32_76 = arith.constant 32 : index
    %93 = vector.load %arg14[%c7_74, %c0_75, %c32_76] : memref<9x9x128xbf16, #tpu.memory_space<vmem>>, vector<1x8x32xbf16>
    %94 = vector.shape_cast %93 : vector<1x8x32xbf16> to vector<8x32xbf16>
    %95 = vector.shape_cast %92 : vector<8x32xbf16> to vector<1x8x32xbf16>
    tpu.vector_store %arg14[%c7_74, %c0_75, %c32_76], %95 {strides = array<i32>} : memref<9x9x128xbf16, #tpu.memory_space<vmem>>, vector<1x8x32xbf16>,
    %c240 = arith.constant 240 : index
    %c0_77 = arith.constant 0 : index
    %96 = tpu.strided_load %arg13[%c240, %c0_77] {strides = array<i32: 2, 1>} : memref<256x32xf32, #tpu.memory_space<vmem>>, vector<8x32xf32>
    %97 = arith.truncf %96 : vector<8x32xf32> to vector<8x32xbf16>
    %c8_78 = arith.constant 8 : index
    %c0_79 = arith.constant 0 : index
    %c32_80 = arith.constant 32 : index
    %98 = vector.load %arg14[%c8_78, %c0_79, %c32_80] : memref<9x9x128xbf16, #tpu.memory_space<vmem>>, vector<1x8x32xbf16>
    %99 = vector.shape_cast %98 : vector<1x8x32xbf16> to vector<8x32xbf16>
    %100 = vector.shape_cast %97 : vector<8x32xbf16> to vector<1x8x32xbf16>
    tpu.vector_store %arg14[%c8_78, %c0_79, %c32_80], %100 {strides = array<i32>} : memref<9x9x128xbf16, #tpu.memory_space<vmem>>, vector<1x8x32xbf16>,
    %c1_81 = arith.constant 1 : index
    %c0_82 = arith.constant 0 : index
    %101 = tpu.strided_load %arg13[%c1_81, %c0_82] {strides = array<i32: 2, 1>} : memref<256x32xf32, #tpu.memory_space<vmem>>, vector<8x32xf32>
    %102 = arith.truncf %101 : vector<8x32xf32> to vector<8x32xbf16>
    %c0_83 = arith.constant 0 : index
    %c1_84 = arith.constant 1 : index
    %c64 = arith.constant 64 : index
    %103 = vector.load %arg14[%c0_83, %c1_84, %c64] : memref<9x9x128xbf16, #tpu.memory_space<vmem>>, vector<1x8x32xbf16>
    %104 = vector.shape_cast %103 : vector<1x8x32xbf16> to vector<8x32xbf16>
    %105 = vector.shape_cast %102 : vector<8x32xbf16> to vector<1x8x32xbf16>
    tpu.vector_store %arg14[%c0_83, %c1_84, %c64], %105 {strides = array<i32>} : memref<9x9x128xbf16, #tpu.memory_space<vmem>>, vector<1x8x32xbf16>,
    %c33 = arith.constant 33 : index
    %c0_85 = arith.constant 0 : index
    %106 = tpu.strided_load %arg13[%c33, %c0_85] {strides = array<i32: 2, 1>} : memref<256x32xf32, #tpu.memory_space<vmem>>, vector<8x32xf32>
    %107 = arith.truncf %106 : vector<8x32xf32> to vector<8x32xbf16>
    %c1_86 = arith.constant 1 : index
    %c1_87 = arith.constant 1 : index
    %c64_88 = arith.constant 64 : index
    %108 = vector.load %arg14[%c1_86, %c1_87, %c64_88] : memref<9x9x128xbf16, #tpu.memory_space<vmem>>, vector<1x8x32xbf16>
    %109 = vector.shape_cast %108 : vector<1x8x32xbf16> to vector<8x32xbf16>
    %110 = vector.shape_cast %107 : vector<8x32xbf16> to vector<1x8x32xbf16>
    tpu.vector_store %arg14[%c1_86, %c1_87, %c64_88], %110 {strides = array<i32>} : memref<9x9x128xbf16, #tpu.memory_space<vmem>>, vector<1x8x32xbf16>,
    %c65 = arith.constant 65 : index
    %c0_89 = arith.constant 0 : index
    %111 = tpu.strided_load %arg13[%c65, %c0_89] {strides = array<i32: 2, 1>} : memref<256x32xf32, #tpu.memory_space<vmem>>, vector<8x32xf32>
    %112 = arith.truncf %111 : vector<8x32xf32> to vector<8x32xbf16>
    %c2_90 = arith.constant 2 : index
    %c1_91 = arith.constant 1 : index
    %c64_92 = arith.constant 64 : index
    %113 = vector.load %arg14[%c2_90, %c1_91, %c64_92] : memref<9x9x128xbf16, #tpu.memory_space<vmem>>, vector<1x8x32xbf16>
    %114 = vector.shape_cast %113 : vector<1x8x32xbf16> to vector<8x32xbf16>
    %115 = vector.shape_cast %112 : vector<8x32xbf16> to vector<1x8x32xbf16>
    tpu.vector_store %arg14[%c2_90, %c1_91, %c64_92], %115 {strides = array<i32>} : memref<9x9x128xbf16, #tpu.memory_space<vmem>>, vector<1x8x32xbf16>,
    %c97 = arith.constant 97 : index
    %c0_93 = arith.constant 0 : index
    %116 = tpu.strided_load %arg13[%c97, %c0_93] {strides = array<i32: 2, 1>} : memref<256x32xf32, #tpu.memory_space<vmem>>, vector<8x32xf32>
    %117 = arith.truncf %116 : vector<8x32xf32> to vector<8x32xbf16>
    %c3_94 = arith.constant 3 : index
    %c1_95 = arith.constant 1 : index
    %c64_96 = arith.constant 64 : index
    %118 = vector.load %arg14[%c3_94, %c1_95, %c64_96] : memref<9x9x128xbf16, #tpu.memory_space<vmem>>, vector<1x8x32xbf16>
    %119 = vector.shape_cast %118 : vector<1x8x32xbf16> to vector<8x32xbf16>
    %120 = vector.shape_cast %117 : vector<8x32xbf16> to vector<1x8x32xbf16>
    tpu.vector_store %arg14[%c3_94, %c1_95, %c64_96], %120 {strides = array<i32>} : memref<9x9x128xbf16, #tpu.memory_space<vmem>>, vector<1x8x32xbf16>,
    %c129 = arith.constant 129 : index
    %c0_97 = arith.constant 0 : index
    %121 = tpu.strided_load %arg13[%c129, %c0_97] {strides = array<i32: 2, 1>} : memref<256x32xf32, #tpu.memory_space<vmem>>, vector<8x32xf32>
    %122 = arith.truncf %121 : vector<8x32xf32> to vector<8x32xbf16>
    %c4_98 = arith.constant 4 : index
    %c1_99 = arith.constant 1 : index
    %c64_100 = arith.constant 64 : index
    %123 = vector.load %arg14[%c4_98, %c1_99, %c64_100] : memref<9x9x128xbf16, #tpu.memory_space<vmem>>, vector<1x8x32xbf16>
    %124 = vector.shape_cast %123 : vector<1x8x32xbf16> to vector<8x32xbf16>
    %125 = vector.shape_cast %122 : vector<8x32xbf16> to vector<1x8x32xbf16>
    tpu.vector_store %arg14[%c4_98, %c1_99, %c64_100], %125 {strides = array<i32>} : memref<9x9x128xbf16, #tpu.memory_space<vmem>>, vector<1x8x32xbf16>,
    %c161 = arith.constant 161 : index
    %c0_101 = arith.constant 0 : index
    %126 = tpu.strided_load %arg13[%c161, %c0_101] {strides = array<i32: 2, 1>} : memref<256x32xf32, #tpu.memory_space<vmem>>, vector<8x32xf32>
    %127 = arith.truncf %126 : vector<8x32xf32> to vector<8x32xbf16>
    %c5_102 = arith.constant 5 : index
    %c1_103 = arith.constant 1 : index
    %c64_104 = arith.constant 64 : index
    %128 = vector.load %arg14[%c5_102, %c1_103, %c64_104] : memref<9x9x128xbf16, #tpu.memory_space<vmem>>, vector<1x8x32xbf16>
    %129 = vector.shape_cast %128 : vector<1x8x32xbf16> to vector<8x32xbf16>
    %130 = vector.shape_cast %127 : vector<8x32xbf16> to vector<1x8x32xbf16>
    tpu.vector_store %arg14[%c5_102, %c1_103, %c64_104], %130 {strides = array<i32>} : memref<9x9x128xbf16, #tpu.memory_space<vmem>>, vector<1x8x32xbf16>,
    %c193 = arith.constant 193 : index
    %c0_105 = arith.constant 0 : index
    %131 = tpu.strided_load %arg13[%c193, %c0_105] {strides = array<i32: 2, 1>} : memref<256x32xf32, #tpu.memory_space<vmem>>, vector<8x32xf32>
    %132 = arith.truncf %131 : vector<8x32xf32> to vector<8x32xbf16>
    %c6_106 = arith.constant 6 : index
    %c1_107 = arith.constant 1 : index
    %c64_108 = arith.constant 64 : index
    %133 = vector.load %arg14[%c6_106, %c1_107, %c64_108] : memref<9x9x128xbf16, #tpu.memory_space<vmem>>, vector<1x8x32xbf16>
    %134 = vector.shape_cast %133 : vector<1x8x32xbf16> to vector<8x32xbf16>
    %135 = vector.shape_cast %132 : vector<8x32xbf16> to vector<1x8x32xbf16>
    tpu.vector_store %arg14[%c6_106, %c1_107, %c64_108], %135 {strides = array<i32>} : memref<9x9x128xbf16, #tpu.memory_space<vmem>>, vector<1x8x32xbf16>,
    %c225 = arith.constant 225 : index
    %c0_109 = arith.constant 0 : index
    %136 = tpu.strided_load %arg13[%c225, %c0_109] {strides = array<i32: 2, 1>} : memref<256x32xf32, #tpu.memory_space<vmem>>, vector<8x32xf32>
    %137 = arith.truncf %136 : vector<8x32xf32> to vector<8x32xbf16>
    %c7_110 = arith.constant 7 : index
    %c1_111 = arith.constant 1 : index
    %c64_112 = arith.constant 64 : index
    %138 = vector.load %arg14[%c7_110, %c1_111, %c64_112] : memref<9x9x128xbf16, #tpu.memory_space<vmem>>, vector<1x8x32xbf16>
    %139 = vector.shape_cast %138 : vector<1x8x32xbf16> to vector<8x32xbf16>
    %140 = vector.shape_cast %137 : vector<8x32xbf16> to vector<1x8x32xbf16>
    tpu.vector_store %arg14[%c7_110, %c1_111, %c64_112], %140 {strides = array<i32>} : memref<9x9x128xbf16, #tpu.memory_space<vmem>>, vector<1x8x32xbf16>,
    %c0_113 = arith.constant 0 : index
    %c0_114 = arith.constant 0 : index
    %141 = tpu.strided_load %arg13[%c0_113, %c0_114] {strides = array<i32: 2, 1>} : memref<256x32xf32, #tpu.memory_space<vmem>>, vector<8x32xf32>
    %142 = arith.truncf %141 : vector<8x32xf32> to vector<8x32xbf16>
    %c0_115 = arith.constant 0 : index
    %c0_116 = arith.constant 0 : index
    %c96 = arith.constant 96 : index
    %143 = vector.load %arg14[%c0_115, %c0_116, %c96] : memref<9x9x128xbf16, #tpu.memory_space<vmem>>, vector<1x8x32xbf16>
    %144 = vector.shape_cast %143 : vector<1x8x32xbf16> to vector<8x32xbf16>
    %145 = vector.shape_cast %142 : vector<8x32xbf16> to vector<1x8x32xbf16>
    tpu.vector_store %arg14[%c0_115, %c0_116, %c96], %145 {strides = array<i32>} : memref<9x9x128xbf16, #tpu.memory_space<vmem>>, vector<1x8x32xbf16>,
    %c32_117 = arith.constant 32 : index
    %c0_118 = arith.constant 0 : index
    %146 = tpu.strided_load %arg13[%c32_117, %c0_118] {strides = array<i32: 2, 1>} : memref<256x32xf32, #tpu.memory_space<vmem>>, vector<8x32xf32>
    %147 = arith.truncf %146 : vector<8x32xf32> to vector<8x32xbf16>
    %c1_119 = arith.constant 1 : index
    %c0_120 = arith.constant 0 : index
    %c96_121 = arith.constant 96 : index
    %148 = vector.load %arg14[%c1_119, %c0_120, %c96_121] : memref<9x9x128xbf16, #tpu.memory_space<vmem>>, vector<1x8x32xbf16>
    %149 = vector.shape_cast %148 : vector<1x8x32xbf16> to vector<8x32xbf16>
    %150 = vector.shape_cast %147 : vector<8x32xbf16> to vector<1x8x32xbf16>
    tpu.vector_store %arg14[%c1_119, %c0_120, %c96_121], %150 {strides = array<i32>} : memref<9x9x128xbf16, #tpu.memory_space<vmem>>, vector<1x8x32xbf16>,
    %c64_122 = arith.constant 64 : index
    %c0_123 = arith.constant 0 : index
    %151 = tpu.strided_load %arg13[%c64_122, %c0_123] {strides = array<i32: 2, 1>} : memref<256x32xf32, #tpu.memory_space<vmem>>, vector<8x32xf32>
    %152 = arith.truncf %151 : vector<8x32xf32> to vector<8x32xbf16>
    %c2_124 = arith.constant 2 : index
    %c0_125 = arith.constant 0 : index
    %c96_126 = arith.constant 96 : index
    %153 = vector.load %arg14[%c2_124, %c0_125, %c96_126] : memref<9x9x128xbf16, #tpu.memory_space<vmem>>, vector<1x8x32xbf16>
    %154 = vector.shape_cast %153 : vector<1x8x32xbf16> to vector<8x32xbf16>
    %155 = vector.shape_cast %152 : vector<8x32xbf16> to vector<1x8x32xbf16>
    tpu.vector_store %arg14[%c2_124, %c0_125, %c96_126], %155 {strides = array<i32>} : memref<9x9x128xbf16, #tpu.memory_space<vmem>>, vector<1x8x32xbf16>,
    %c96_127 = arith.constant 96 : index
    %c0_128 = arith.constant 0 : index
    %156 = tpu.strided_load %arg13[%c96_127, %c0_128] {strides = array<i32: 2, 1>} : memref<256x32xf32, #tpu.memory_space<vmem>>, vector<8x32xf32>
    %157 = arith.truncf %156 : vector<8x32xf32> to vector<8x32xbf16>
    %c3_129 = arith.constant 3 : index
    %c0_130 = arith.constant 0 : index
    %c96_131 = arith.constant 96 : index
    %158 = vector.load %arg14[%c3_129, %c0_130, %c96_131] : memref<9x9x128xbf16, #tpu.memory_space<vmem>>, vector<1x8x32xbf16>
    %159 = vector.shape_cast %158 : vector<1x8x32xbf16> to vector<8x32xbf16>
    %160 = vector.shape_cast %157 : vector<8x32xbf16> to vector<1x8x32xbf16>
    tpu.vector_store %arg14[%c3_129, %c0_130, %c96_131], %160 {strides = array<i32>} : memref<9x9x128xbf16, #tpu.memory_space<vmem>>, vector<1x8x32xbf16>,
    %c128 = arith.constant 128 : index
    %c0_132 = arith.constant 0 : index
    %161 = tpu.strided_load %arg13[%c128, %c0_132] {strides = array<i32: 2, 1>} : memref<256x32xf32, #tpu.memory_space<vmem>>, vector<8x32xf32>
    %162 = arith.truncf %161 : vector<8x32xf32> to vector<8x32xbf16>
    %c4_133 = arith.constant 4 : index
    %c0_134 = arith.constant 0 : index
    %c96_135 = arith.constant 96 : index
    %163 = vector.load %arg14[%c4_133, %c0_134, %c96_135] : memref<9x9x128xbf16, #tpu.memory_space<vmem>>, vector<1x8x32xbf16>
    %164 = vector.shape_cast %163 : vector<1x8x32xbf16> to vector<8x32xbf16>
    %165 = vector.shape_cast %162 : vector<8x32xbf16> to vector<1x8x32xbf16>
    tpu.vector_store %arg14[%c4_133, %c0_134, %c96_135], %165 {strides = array<i32>} : memref<9x9x128xbf16, #tpu.memory_space<vmem>>, vector<1x8x32xbf16>,
    %c160 = arith.constant 160 : index
    %c0_136 = arith.constant 0 : index
    %166 = tpu.strided_load %arg13[%c160, %c0_136] {strides = array<i32: 2, 1>} : memref<256x32xf32, #tpu.memory_space<vmem>>, vector<8x32xf32>
    %167 = arith.truncf %166 : vector<8x32xf32> to vector<8x32xbf16>
    %c5_137 = arith.constant 5 : index
    %c0_138 = arith.constant 0 : index
    %c96_139 = arith.constant 96 : index
    %168 = vector.load %arg14[%c5_137, %c0_138, %c96_139] : memref<9x9x128xbf16, #tpu.memory_space<vmem>>, vector<1x8x32xbf16>
    %169 = vector.shape_cast %168 : vector<1x8x32xbf16> to vector<8x32xbf16>
    %170 = vector.shape_cast %167 : vector<8x32xbf16> to vector<1x8x32xbf16>
    tpu.vector_store %arg14[%c5_137, %c0_138, %c96_139], %170 {strides = array<i32>} : memref<9x9x128xbf16, #tpu.memory_space<vmem>>, vector<1x8x32xbf16>,
    %c192 = arith.constant 192 : index
    %c0_140 = arith.constant 0 : index
    %171 = tpu.strided_load %arg13[%c192, %c0_140] {strides = array<i32: 2, 1>} : memref<256x32xf32, #tpu.memory_space<vmem>>, vector<8x32xf32>
    %172 = arith.truncf %171 : vector<8x32xf32> to vector<8x32xbf16>
    %c6_141 = arith.constant 6 : index
    %c0_142 = arith.constant 0 : index
    %c96_143 = arith.constant 96 : index
    %173 = vector.load %arg14[%c6_141, %c0_142, %c96_143] : memref<9x9x128xbf16, #tpu.memory_space<vmem>>, vector<1x8x32xbf16>
    %174 = vector.shape_cast %173 : vector<1x8x32xbf16> to vector<8x32xbf16>
    %175 = vector.shape_cast %172 : vector<8x32xbf16> to vector<1x8x32xbf16>
    tpu.vector_store %arg14[%c6_141, %c0_142, %c96_143], %175 {strides = array<i32>} : memref<9x9x128xbf16, #tpu.memory_space<vmem>>, vector<1x8x32xbf16>,
    %c224 = arith.constant 224 : index
    %c0_144 = arith.constant 0 : index
    %176 = tpu.strided_load %arg13[%c224, %c0_144] {strides = array<i32: 2, 1>} : memref<256x32xf32, #tpu.memory_space<vmem>>, vector<8x32xf32>
    %177 = arith.truncf %176 : vector<8x32xf32> to vector<8x32xbf16>
    %c7_145 = arith.constant 7 : index
    %c0_146 = arith.constant 0 : index
    %c96_147 = arith.constant 96 : index
    %178 = vector.load %arg14[%c7_145, %c0_146, %c96_147] : memref<9x9x128xbf16, #tpu.memory_space<vmem>>, vector<1x8x32xbf16>
    %179 = vector.shape_cast %178 : vector<1x8x32xbf16> to vector<8x32xbf16>
    %180 = vector.shape_cast %177 : vector<8x32xbf16> to vector<1x8x32xbf16>
    tpu.vector_store %arg14[%c7_145, %c0_146, %c96_147], %180 {strides = array<i32>} : memref<9x9x128xbf16, #tpu.memory_space<vmem>>, vector<1x8x32xbf16>,
    %cst_148 = arith.constant 0.000000e+00 : f32
    %181 = vector.broadcast %cst_148 : f32 to vector<64x64xf32>
    %c0_149 = arith.constant 0 : index
    %c0_150 = arith.constant 0 : index
    %c0_151 = arith.constant 0 : index
    %182 = vector.load %arg14[%c0_149, %c0_150, %c0_151] : memref<9x9x128xbf16, #tpu.memory_space<vmem>>, vector<8x8x128xbf16>
    %183 = vector.extract_strided_slice %182 {offsets = [0, 0, 0], sizes = [1, 8, 128], strides = [1, 1, 1]} : vector<8x8x128xbf16> to vector<1x8x128xbf16>
    %184 = vector.shape_cast %183 : vector<1x8x128xbf16> to vector<8x128xbf16>
    %185 = vector.extract_strided_slice %182 {offsets = [1, 0, 0], sizes = [1, 8, 128], strides = [1, 1, 1]} : vector<8x8x128xbf16> to vector<1x8x128xbf16>
    %186 = vector.shape_cast %185 : vector<1x8x128xbf16> to vector<8x128xbf16>
    %187 = vector.extract_strided_slice %182 {offsets = [2, 0, 0], sizes = [1, 8, 128], strides = [1, 1, 1]} : vector<8x8x128xbf16> to vector<1x8x128xbf16>
    %188 = vector.shape_cast %187 : vector<1x8x128xbf16> to vector<8x128xbf16>
    %189 = vector.extract_strided_slice %182 {offsets = [3, 0, 0], sizes = [1, 8, 128], strides = [1, 1, 1]} : vector<8x8x128xbf16> to vector<1x8x128xbf16>
    %190 = vector.shape_cast %189 : vector<1x8x128xbf16> to vector<8x128xbf16>
    %191 = vector.extract_strided_slice %182 {offsets = [4, 0, 0], sizes = [1, 8, 128], strides = [1, 1, 1]} : vector<8x8x128xbf16> to vector<1x8x128xbf16>
    %192 = vector.shape_cast %191 : vector<1x8x128xbf16> to vector<8x128xbf16>
    %193 = vector.extract_strided_slice %182 {offsets = [5, 0, 0], sizes = [1, 8, 128], strides = [1, 1, 1]} : vector<8x8x128xbf16> to vector<1x8x128xbf16>
    %194 = vector.shape_cast %193 : vector<1x8x128xbf16> to vector<8x128xbf16>
    %195 = vector.extract_strided_slice %182 {offsets = [6, 0, 0], sizes = [1, 8, 128], strides = [1, 1, 1]} : vector<8x8x128xbf16> to vector<1x8x128xbf16>
    %196 = vector.shape_cast %195 : vector<1x8x128xbf16> to vector<8x128xbf16>
    %197 = vector.extract_strided_slice %182 {offsets = [7, 0, 0], sizes = [1, 8, 128], strides = [1, 1, 1]} : vector<8x8x128xbf16> to vector<1x8x128xbf16>
    %198 = vector.shape_cast %197 : vector<1x8x128xbf16> to vector<8x128xbf16>
    %199 = tpu.concatenate %184, %186, %188, %190, %192, %194, %196, %198 in 0 : vector<8x128xbf16>, vector<8x128xbf16>, vector<8x128xbf16>, vector<8x128xbf16>, vector<8x128xbf16>, vector<8x128xbf16>, vector<8x128xbf16>, vector<8x128xbf16> -> vector<64x128xbf16>
    %c0_152 = arith.constant 0 : index
    %c0_153 = arith.constant 0 : index
    %c0_154 = arith.constant 0 : index
    %200 = vector.load %arg3[%c0_152, %c0_153, %c0_154] : memref<4x128x64xbf16, #tpu.memory_space<vmem>>, vector<1x128x64xbf16>
    %201 = vector.shape_cast %200 : vector<1x128x64xbf16> to vector<128x64xbf16>
    %cst_155 = arith.constant dense<0.000000e+00> : vector<64x64xf32>
    %202 = tpu.matmul %199, %201, %cst_155 {dimension_numbers = #tpu.dot_dimension_numbers<[1], [0], [0], [1], [0, 0, 1, 1], [], []>} : vector<64x128xbf16>, vector<128x64xbf16>, vector<64x64xf32> -> vector<64x64xf32>
    %203 = arith.addf %181, %202 : vector<64x64xf32>
    %c0_156 = arith.constant 0 : index
    %c1_157 = arith.constant 1 : index
    %c0_158 = arith.constant 0 : index
    %204 = vector.load %arg14[%c0_156, %c1_157, %c0_158] : memref<9x9x128xbf16, #tpu.memory_space<vmem>>, vector<8x8x128xbf16>
    %205 = vector.extract_strided_slice %204 {offsets = [0, 0, 0], sizes = [1, 8, 128], strides = [1, 1, 1]} : vector<8x8x128xbf16> to vector<1x8x128xbf16>
    %206 = vector.shape_cast %205 : vector<1x8x128xbf16> to vector<8x128xbf16>
    %207 = vector.extract_strided_slice %204 {offsets = [1, 0, 0], sizes = [1, 8, 128], strides = [1, 1, 1]} : vector<8x8x128xbf16> to vector<1x8x128xbf16>
    %208 = vector.shape_cast %207 : vector<1x8x128xbf16> to vector<8x128xbf16>
    %209 = vector.extract_strided_slice %204 {offsets = [2, 0, 0], sizes = [1, 8, 128], strides = [1, 1, 1]} : vector<8x8x128xbf16> to vector<1x8x128xbf16>
    %210 = vector.shape_cast %209 : vector<1x8x128xbf16> to vector<8x128xbf16>
    %211 = vector.extract_strided_slice %204 {offsets = [3, 0, 0], sizes = [1, 8, 128], strides = [1, 1, 1]} : vector<8x8x128xbf16> to vector<1x8x128xbf16>
    %212 = vector.shape_cast %211 : vector<1x8x128xbf16> to vector<8x128xbf16>
    %213 = vector.extract_strided_slice %204 {offsets = [4, 0, 0], sizes = [1, 8, 128], strides = [1, 1, 1]} : vector<8x8x128xbf16> to vector<1x8x128xbf16>
    %214 = vector.shape_cast %213 : vector<1x8x128xbf16> to vector<8x128xbf16>
    %215 = vector.extract_strided_slice %204 {offsets = [5, 0, 0], sizes = [1, 8, 128], strides = [1, 1, 1]} : vector<8x8x128xbf16> to vector<1x8x128xbf16>
    %216 = vector.shape_cast %215 : vector<1x8x128xbf16> to vector<8x128xbf16>
    %217 = vector.extract_strided_slice %204 {offsets = [6, 0, 0], sizes = [1, 8, 128], strides = [1, 1, 1]} : vector<8x8x128xbf16> to vector<1x8x128xbf16>
    %218 = vector.shape_cast %217 : vector<1x8x128xbf16> to vector<8x128xbf16>
    %219 = vector.extract_strided_slice %204 {offsets = [7, 0, 0], sizes = [1, 8, 128], strides = [1, 1, 1]} : vector<8x8x128xbf16> to vector<1x8x128xbf16>
    %220 = vector.shape_cast %219 : vector<1x8x128xbf16> to vector<8x128xbf16>
    %221 = tpu.concatenate %206, %208, %210, %212, %214, %216, %218, %220 in 0 : vector<8x128xbf16>, vector<8x128xbf16>, vector<8x128xbf16>, vector<8x128xbf16>, vector<8x128xbf16>, vector<8x128xbf16>, vector<8x128xbf16>, vector<8x128xbf16> -> vector<64x128xbf16>
    %c1_159 = arith.constant 1 : index
    %c0_160 = arith.constant 0 : index
    %c0_161 = arith.constant 0 : index
    %222 = vector.load %arg3[%c1_159, %c0_160, %c0_161] : memref<4x128x64xbf16, #tpu.memory_space<vmem>>, vector<1x128x64xbf16>
    %223 = vector.shape_cast %222 : vector<1x128x64xbf16> to vector<128x64xbf16>
    %cst_162 = arith.constant dense<0.000000e+00> : vector<64x64xf32>
    %224 = tpu.matmul %221, %223, %cst_162 {dimension_numbers = #tpu.dot_dimension_numbers<[1], [0], [0], [1], [0, 0, 1, 1], [], []>} : vector<64x128xbf16>, vector<128x64xbf16>, vector<64x64xf32> -> vector<64x64xf32>
    %225 = arith.addf %203, %224 : vector<64x64xf32>
    %c1_163 = arith.constant 1 : index
    %c0_164 = arith.constant 0 : index
    %c0_165 = arith.constant 0 : index
    %226 = vector.load %arg14[%c1_163, %c0_164, %c0_165] : memref<9x9x128xbf16, #tpu.memory_space<vmem>>, vector<8x8x128xbf16>
    %227 = vector.extract_strided_slice %226 {offsets = [0, 0, 0], sizes = [1, 8, 128], strides = [1, 1, 1]} : vector<8x8x128xbf16> to vector<1x8x128xbf16>
    %228 = vector.shape_cast %227 : vector<1x8x128xbf16> to vector<8x128xbf16>
    %229 = vector.extract_strided_slice %226 {offsets = [1, 0, 0], sizes = [1, 8, 128], strides = [1, 1, 1]} : vector<8x8x128xbf16> to vector<1x8x128xbf16>
    %230 = vector.shape_cast %229 : vector<1x8x128xbf16> to vector<8x128xbf16>
    %231 = vector.extract_strided_slice %226 {offsets = [2, 0, 0], sizes = [1, 8, 128], strides = [1, 1, 1]} : vector<8x8x128xbf16> to vector<1x8x128xbf16>
    %232 = vector.shape_cast %231 : vector<1x8x128xbf16> to vector<8x128xbf16>
    %233 = vector.extract_strided_slice %226 {offsets = [3, 0, 0], sizes = [1, 8, 128], strides = [1, 1, 1]} : vector<8x8x128xbf16> to vector<1x8x128xbf16>
    %234 = vector.shape_cast %233 : vector<1x8x128xbf16> to vector<8x128xbf16>
    %235 = vector.extract_strided_slice %226 {offsets = [4, 0, 0], sizes = [1, 8, 128], strides = [1, 1, 1]} : vector<8x8x128xbf16> to vector<1x8x128xbf16>
    %236 = vector.shape_cast %235 : vector<1x8x128xbf16> to vector<8x128xbf16>
    %237 = vector.extract_strided_slice %226 {offsets = [5, 0, 0], sizes = [1, 8, 128], strides = [1, 1, 1]} : vector<8x8x128xbf16> to vector<1x8x128xbf16>
    %238 = vector.shape_cast %237 : vector<1x8x128xbf16> to vector<8x128xbf16>
    %239 = vector.extract_strided_slice %226 {offsets = [6, 0, 0], sizes = [1, 8, 128], strides = [1, 1, 1]} : vector<8x8x128xbf16> to vector<1x8x128xbf16>
    %240 = vector.shape_cast %239 : vector<1x8x128xbf16> to vector<8x128xbf16>
    %241 = vector.extract_strided_slice %226 {offsets = [7, 0, 0], sizes = [1, 8, 128], strides = [1, 1, 1]} : vector<8x8x128xbf16> to vector<1x8x128xbf16>
    %242 = vector.shape_cast %241 : vector<1x8x128xbf16> to vector<8x128xbf16>
    %243 = tpu.concatenate %228, %230, %232, %234, %236, %238, %240, %242 in 0 : vector<8x128xbf16>, vector<8x128xbf16>, vector<8x128xbf16>, vector<8x128xbf16>, vector<8x128xbf16>, vector<8x128xbf16>, vector<8x128xbf16>, vector<8x128xbf16> -> vector<64x128xbf16>
    %c2_166 = arith.constant 2 : index
    %c0_167 = arith.constant 0 : index
    %c0_168 = arith.constant 0 : index
    %244 = vector.load %arg3[%c2_166, %c0_167, %c0_168] : memref<4x128x64xbf16, #tpu.memory_space<vmem>>, vector<1x128x64xbf16>
    %245 = vector.shape_cast %244 : vector<1x128x64xbf16> to vector<128x64xbf16>
    %cst_169 = arith.constant dense<0.000000e+00> : vector<64x64xf32>
    %246 = tpu.matmul %243, %245, %cst_169 {dimension_numbers = #tpu.dot_dimension_numbers<[1], [0], [0], [1], [0, 0, 1, 1], [], []>} : vector<64x128xbf16>, vector<128x64xbf16>, vector<64x64xf32> -> vector<64x64xf32>
    %247 = arith.addf %225, %246 : vector<64x64xf32>
    %c1_170 = arith.constant 1 : index
    %c1_171 = arith.constant 1 : index
    %c0_172 = arith.constant 0 : index
    %248 = vector.load %arg14[%c1_170, %c1_171, %c0_172] : memref<9x9x128xbf16, #tpu.memory_space<vmem>>, vector<8x8x128xbf16>
    %249 = vector.extract_strided_slice %248 {offsets = [0, 0, 0], sizes = [1, 8, 128], strides = [1, 1, 1]} : vector<8x8x128xbf16> to vector<1x8x128xbf16>
    %250 = vector.shape_cast %249 : vector<1x8x128xbf16> to vector<8x128xbf16>
    %251 = vector.extract_strided_slice %248 {offsets = [1, 0, 0], sizes = [1, 8, 128], strides = [1, 1, 1]} : vector<8x8x128xbf16> to vector<1x8x128xbf16>
    %252 = vector.shape_cast %251 : vector<1x8x128xbf16> to vector<8x128xbf16>
    %253 = vector.extract_strided_slice %248 {offsets = [2, 0, 0], sizes = [1, 8, 128], strides = [1, 1, 1]} : vector<8x8x128xbf16> to vector<1x8x128xbf16>
    %254 = vector.shape_cast %253 : vector<1x8x128xbf16> to vector<8x128xbf16>
    %255 = vector.extract_strided_slice %248 {offsets = [3, 0, 0], sizes = [1, 8, 128], strides = [1, 1, 1]} : vector<8x8x128xbf16> to vector<1x8x128xbf16>
    %256 = vector.shape_cast %255 : vector<1x8x128xbf16> to vector<8x128xbf16>
    %257 = vector.extract_strided_slice %248 {offsets = [4, 0, 0], sizes = [1, 8, 128], strides = [1, 1, 1]} : vector<8x8x128xbf16> to vector<1x8x128xbf16>
    %258 = vector.shape_cast %257 : vector<1x8x128xbf16> to vector<8x128xbf16>
    %259 = vector.extract_strided_slice %248 {offsets = [5, 0, 0], sizes = [1, 8, 128], strides = [1, 1, 1]} : vector<8x8x128xbf16> to vector<1x8x128xbf16>
    %260 = vector.shape_cast %259 : vector<1x8x128xbf16> to vector<8x128xbf16>
    %261 = vector.extract_strided_slice %248 {offsets = [6, 0, 0], sizes = [1, 8, 128], strides = [1, 1, 1]} : vector<8x8x128xbf16> to vector<1x8x128xbf16>
    %262 = vector.shape_cast %261 : vector<1x8x128xbf16> to vector<8x128xbf16>
    %263 = vector.extract_strided_slice %248 {offsets = [7, 0, 0], sizes = [1, 8, 128], strides = [1, 1, 1]} : vector<8x8x128xbf16> to vector<1x8x128xbf16>
    %264 = vector.shape_cast %263 : vector<1x8x128xbf16> to vector<8x128xbf16>
    %265 = tpu.concatenate %250, %252, %254, %256, %258, %260, %262, %264 in 0 : vector<8x128xbf16>, vector<8x128xbf16>, vector<8x128xbf16>, vector<8x128xbf16>, vector<8x128xbf16>, vector<8x128xbf16>, vector<8x128xbf16>, vector<8x128xbf16> -> vector<64x128xbf16>
    %c3_173 = arith.constant 3 : index
    %c0_174 = arith.constant 0 : index
    %c0_175 = arith.constant 0 : index
    %266 = vector.load %arg3[%c3_173, %c0_174, %c0_175] : memref<4x128x64xbf16, #tpu.memory_space<vmem>>, vector<1x128x64xbf16>
    %267 = vector.shape_cast %266 : vector<1x128x64xbf16> to vector<128x64xbf16>
    %cst_176 = arith.constant dense<0.000000e+00> : vector<64x64xf32>
    %268 = tpu.matmul %265, %267, %cst_176 {dimension_numbers = #tpu.dot_dimension_numbers<[1], [0], [0], [1], [0, 0, 1, 1], [], []>} : vector<64x128xbf16>, vector<128x64xbf16>, vector<64x64xf32> -> vector<64x64xf32>
    %269 = arith.addf %247, %268 : vector<64x64xf32>
    %c0_177 = arith.constant 0 : index
    %c0_178 = arith.constant 0 : index
    %270 = vector.load %arg8[%c0_177, %c0_178] : memref<1x64xf32, #tpu.memory_space<vmem>>, vector<1x64xf32>
    %271 = vector.broadcast %270 : vector<1x64xf32> to vector<64x64xf32>
    %272 = arith.addf %269, %271 : vector<64x64xf32>
    %cst_179 = arith.constant dense<0.000000e+00> : vector<64xf32>
    %273 = vector.multi_reduction <add>, %272, %cst_179 [0] : vector<64x64xf32> to vector<64xf32>
    %274 = vector.shape_cast %273 : vector<64xf32> to vector<1x64xf32>
    %cst_180 = arith.constant 6.400000e+01 : f32
    %275 = vector.broadcast %cst_180 : f32 to vector<1x64xf32>
    %276 = arith.divf %274, %275 : vector<1x64xf32>
    %277 = vector.broadcast %276 : vector<1x64xf32> to vector<64x64xf32>
    %278 = arith.subf %272, %277 : vector<64x64xf32>
    %279 = arith.mulf %278, %278 : vector<64x64xf32>
    %cst_181 = arith.constant dense<0.000000e+00> : vector<64xf32>
    %280 = vector.multi_reduction <add>, %279, %cst_181 [0] : vector<64x64xf32> to vector<64xf32>
    %281 = vector.shape_cast %280 : vector<64xf32> to vector<1x64xf32>
    %cst_182 = arith.constant 6.400000e+01 : f32
    %282 = vector.broadcast %cst_182 : f32 to vector<1x64xf32>
    %283 = arith.divf %281, %282 : vector<1x64xf32>
    %cst_183 = arith.constant 9.99999974E-6 : f32
    %284 = vector.broadcast %cst_183 : f32 to vector<1x64xf32>
    %285 = arith.addf %283, %284 : vector<1x64xf32>
    %286 = math.rsqrt %285 : vector<1x64xf32>
    %287 = vector.broadcast %286 : vector<1x64xf32> to vector<64x64xf32>
    %288 = arith.mulf %278, %287 : vector<64x64xf32>
    %cst_184 = arith.constant 0.000000e+00 : f32
    %289 = vector.broadcast %cst_184 : f32 to vector<64x64xf32>
    %290 = arith.cmpf ogt, %288, %289 : vector<64x64xf32>
    %cst_185 = arith.constant 2.000000e-01 : f32
    %291 = vector.broadcast %cst_185 : f32 to vector<64x64xf32>
    %292 = arith.mulf %291, %288 : vector<64x64xf32>
    %293 = arith.select %290, %288, %292 : vector<64x64xi1>, vector<64x64xf32>
    %c0_186 = arith.constant 0 : index
    %c0_187 = arith.constant 0 : index
    %294 = vector.load %arg15[%c0_186, %c0_187] : memref<64x64xf32, #tpu.memory_space<vmem>>, vector<64x64xf32>
    tpu.vector_store %arg15[%c0_186, %c0_187], %293 {strides = array<i32>} : memref<64x64xf32, #tpu.memory_space<vmem>>, vector<64x64xf32>,
    %c9 = arith.constant 9 : index
    %c0_188 = arith.constant 0 : index
    %295 = tpu.strided_load %arg15[%c9, %c0_188] {strides = array<i32: 2, 1>} : memref<64x64xf32, #tpu.memory_space<vmem>>, vector<4x64xf32>
    %296 = arith.truncf %295 : vector<4x64xf32> to vector<4x64xbf16>
    %c1_189 = arith.constant 1 : index
    %c1_190 = arith.constant 1 : index
    %c0_191 = arith.constant 0 : index
    %297 = vector.load %arg16[%c1_189, %c1_190, %c0_191] : memref<5x5x256xbf16, #tpu.memory_space<vmem>>, vector<1x4x64xbf16>
    %298 = vector.shape_cast %297 : vector<1x4x64xbf16> to vector<4x64xbf16>
    %299 = vector.shape_cast %296 : vector<4x64xbf16> to vector<1x4x64xbf16>
    tpu.vector_store %arg16[%c1_189, %c1_190, %c0_191], %299 {strides = array<i32>} : memref<5x5x256xbf16, #tpu.memory_space<vmem>>, vector<1x4x64xbf16>,
    %c25 = arith.constant 25 : index
    %c0_192 = arith.constant 0 : index
    %300 = tpu.strided_load %arg15[%c25, %c0_192] {strides = array<i32: 2, 1>} : memref<64x64xf32, #tpu.memory_space<vmem>>, vector<4x64xf32>
    %301 = arith.truncf %300 : vector<4x64xf32> to vector<4x64xbf16>
    %c2_193 = arith.constant 2 : index
    %c1_194 = arith.constant 1 : index
    %c0_195 = arith.constant 0 : index
    %302 = vector.load %arg16[%c2_193, %c1_194, %c0_195] : memref<5x5x256xbf16, #tpu.memory_space<vmem>>, vector<1x4x64xbf16>
    %303 = vector.shape_cast %302 : vector<1x4x64xbf16> to vector<4x64xbf16>
    %304 = vector.shape_cast %301 : vector<4x64xbf16> to vector<1x4x64xbf16>
    tpu.vector_store %arg16[%c2_193, %c1_194, %c0_195], %304 {strides = array<i32>} : memref<5x5x256xbf16, #tpu.memory_space<vmem>>, vector<1x4x64xbf16>,
    %c41 = arith.constant 41 : index
    %c0_196 = arith.constant 0 : index
    %305 = tpu.strided_load %arg15[%c41, %c0_196] {strides = array<i32: 2, 1>} : memref<64x64xf32, #tpu.memory_space<vmem>>, vector<4x64xf32>
    %306 = arith.truncf %305 : vector<4x64xf32> to vector<4x64xbf16>
    %c3_197 = arith.constant 3 : index
    %c1_198 = arith.constant 1 : index
    %c0_199 = arith.constant 0 : index
    %307 = vector.load %arg16[%c3_197, %c1_198, %c0_199] : memref<5x5x256xbf16, #tpu.memory_space<vmem>>, vector<1x4x64xbf16>
    %308 = vector.shape_cast %307 : vector<1x4x64xbf16> to vector<4x64xbf16>
    %309 = vector.shape_cast %306 : vector<4x64xbf16> to vector<1x4x64xbf16>
    tpu.vector_store %arg16[%c3_197, %c1_198, %c0_199], %309 {strides = array<i32>} : memref<5x5x256xbf16, #tpu.memory_space<vmem>>, vector<1x4x64xbf16>,
    %c57 = arith.constant 57 : index
    %c0_200 = arith.constant 0 : index
    %310 = tpu.strided_load %arg15[%c57, %c0_200] {strides = array<i32: 2, 1>} : memref<64x64xf32, #tpu.memory_space<vmem>>, vector<4x64xf32>
    %311 = arith.truncf %310 : vector<4x64xf32> to vector<4x64xbf16>
    %c4_201 = arith.constant 4 : index
    %c1_202 = arith.constant 1 : index
    %c0_203 = arith.constant 0 : index
    %312 = vector.load %arg16[%c4_201, %c1_202, %c0_203] : memref<5x5x256xbf16, #tpu.memory_space<vmem>>, vector<1x4x64xbf16>
    %313 = vector.shape_cast %312 : vector<1x4x64xbf16> to vector<4x64xbf16>
    %314 = vector.shape_cast %311 : vector<4x64xbf16> to vector<1x4x64xbf16>
    tpu.vector_store %arg16[%c4_201, %c1_202, %c0_203], %314 {strides = array<i32>} : memref<5x5x256xbf16, #tpu.memory_space<vmem>>, vector<1x4x64xbf16>,
    %c8_204 = arith.constant 8 : index
    %c0_205 = arith.constant 0 : index
    %315 = tpu.strided_load %arg15[%c8_204, %c0_205] {strides = array<i32: 2, 1>} : memref<64x64xf32, #tpu.memory_space<vmem>>, vector<4x64xf32>
    %316 = arith.truncf %315 : vector<4x64xf32> to vector<4x64xbf16>
    %c1_206 = arith.constant 1 : index
    %c0_207 = arith.constant 0 : index
    %c64_208 = arith.constant 64 : index
    %317 = vector.load %arg16[%c1_206, %c0_207, %c64_208] : memref<5x5x256xbf16, #tpu.memory_space<vmem>>, vector<1x4x64xbf16>
    %318 = vector.shape_cast %317 : vector<1x4x64xbf16> to vector<4x64xbf16>
    %319 = vector.shape_cast %316 : vector<4x64xbf16> to vector<1x4x64xbf16>
    tpu.vector_store %arg16[%c1_206, %c0_207, %c64_208], %319 {strides = array<i32>} : memref<5x5x256xbf16, #tpu.memory_space<vmem>>, vector<1x4x64xbf16>,
    %c24 = arith.constant 24 : index
    %c0_209 = arith.constant 0 : index
    %320 = tpu.strided_load %arg15[%c24, %c0_209] {strides = array<i32: 2, 1>} : memref<64x64xf32, #tpu.memory_space<vmem>>, vector<4x64xf32>
    %321 = arith.truncf %320 : vector<4x64xf32> to vector<4x64xbf16>
    %c2_210 = arith.constant 2 : index
    %c0_211 = arith.constant 0 : index
    %c64_212 = arith.constant 64 : index
    %322 = vector.load %arg16[%c2_210, %c0_211, %c64_212] : memref<5x5x256xbf16, #tpu.memory_space<vmem>>, vector<1x4x64xbf16>
    %323 = vector.shape_cast %322 : vector<1x4x64xbf16> to vector<4x64xbf16>
    %324 = vector.shape_cast %321 : vector<4x64xbf16> to vector<1x4x64xbf16>
    tpu.vector_store %arg16[%c2_210, %c0_211, %c64_212], %324 {strides = array<i32>} : memref<5x5x256xbf16, #tpu.memory_space<vmem>>, vector<1x4x64xbf16>,
    %c40 = arith.constant 40 : index
    %c0_213 = arith.constant 0 : index
    %325 = tpu.strided_load %arg15[%c40, %c0_213] {strides = array<i32: 2, 1>} : memref<64x64xf32, #tpu.memory_space<vmem>>, vector<4x64xf32>
    %326 = arith.truncf %325 : vector<4x64xf32> to vector<4x64xbf16>
    %c3_214 = arith.constant 3 : index
    %c0_215 = arith.constant 0 : index
    %c64_216 = arith.constant 64 : index
    %327 = vector.load %arg16[%c3_214, %c0_215, %c64_216] : memref<5x5x256xbf16, #tpu.memory_space<vmem>>, vector<1x4x64xbf16>
    %328 = vector.shape_cast %327 : vector<1x4x64xbf16> to vector<4x64xbf16>
    %329 = vector.shape_cast %326 : vector<4x64xbf16> to vector<1x4x64xbf16>
    tpu.vector_store %arg16[%c3_214, %c0_215, %c64_216], %329 {strides = array<i32>} : memref<5x5x256xbf16, #tpu.memory_space<vmem>>, vector<1x4x64xbf16>,
    %c56 = arith.constant 56 : index
    %c0_217 = arith.constant 0 : index
    %330 = tpu.strided_load %arg15[%c56, %c0_217] {strides = array<i32: 2, 1>} : memref<64x64xf32, #tpu.memory_space<vmem>>, vector<4x64xf32>
    %331 = arith.truncf %330 : vector<4x64xf32> to vector<4x64xbf16>
    %c4_218 = arith.constant 4 : index
    %c0_219 = arith.constant 0 : index
    %c64_220 = arith.constant 64 : index
    %332 = vector.load %arg16[%c4_218, %c0_219, %c64_220] : memref<5x5x256xbf16, #tpu.memory_space<vmem>>, vector<1x4x64xbf16>
    %333 = vector.shape_cast %332 : vector<1x4x64xbf16> to vector<4x64xbf16>
    %334 = vector.shape_cast %331 : vector<4x64xbf16> to vector<1x4x64xbf16>
    tpu.vector_store %arg16[%c4_218, %c0_219, %c64_220], %334 {strides = array<i32>} : memref<5x5x256xbf16, #tpu.memory_space<vmem>>, vector<1x4x64xbf16>,
    %c1_221 = arith.constant 1 : index
    %c0_222 = arith.constant 0 : index
    %335 = tpu.strided_load %arg15[%c1_221, %c0_222] {strides = array<i32: 2, 1>} : memref<64x64xf32, #tpu.memory_space<vmem>>, vector<4x64xf32>
    %336 = arith.truncf %335 : vector<4x64xf32> to vector<4x64xbf16>
    %c0_223 = arith.constant 0 : index
    %c1_224 = arith.constant 1 : index
    %c128_225 = arith.constant 128 : index
    %337 = vector.load %arg16[%c0_223, %c1_224, %c128_225] : memref<5x5x256xbf16, #tpu.memory_space<vmem>>, vector<1x4x64xbf16>
    %338 = vector.shape_cast %337 : vector<1x4x64xbf16> to vector<4x64xbf16>
    %339 = vector.shape_cast %336 : vector<4x64xbf16> to vector<1x4x64xbf16>
    tpu.vector_store %arg16[%c0_223, %c1_224, %c128_225], %339 {strides = array<i32>} : memref<5x5x256xbf16, #tpu.memory_space<vmem>>, vector<1x4x64xbf16>,
    %c17_226 = arith.constant 17 : index
    %c0_227 = arith.constant 0 : index
    %340 = tpu.strided_load %arg15[%c17_226, %c0_227] {strides = array<i32: 2, 1>} : memref<64x64xf32, #tpu.memory_space<vmem>>, vector<4x64xf32>
    %341 = arith.truncf %340 : vector<4x64xf32> to vector<4x64xbf16>
    %c1_228 = arith.constant 1 : index
    %c1_229 = arith.constant 1 : index
    %c128_230 = arith.constant 128 : index
    %342 = vector.load %arg16[%c1_228, %c1_229, %c128_230] : memref<5x5x256xbf16, #tpu.memory_space<vmem>>, vector<1x4x64xbf16>
    %343 = vector.shape_cast %342 : vector<1x4x64xbf16> to vector<4x64xbf16>
    %344 = vector.shape_cast %341 : vector<4x64xbf16> to vector<1x4x64xbf16>
    tpu.vector_store %arg16[%c1_228, %c1_229, %c128_230], %344 {strides = array<i32>} : memref<5x5x256xbf16, #tpu.memory_space<vmem>>, vector<1x4x64xbf16>,
    %c33_231 = arith.constant 33 : index
    %c0_232 = arith.constant 0 : index
    %345 = tpu.strided_load %arg15[%c33_231, %c0_232] {strides = array<i32: 2, 1>} : memref<64x64xf32, #tpu.memory_space<vmem>>, vector<4x64xf32>
    %346 = arith.truncf %345 : vector<4x64xf32> to vector<4x64xbf16>
    %c2_233 = arith.constant 2 : index
    %c1_234 = arith.constant 1 : index
    %c128_235 = arith.constant 128 : index
    %347 = vector.load %arg16[%c2_233, %c1_234, %c128_235] : memref<5x5x256xbf16, #tpu.memory_space<vmem>>, vector<1x4x64xbf16>
    %348 = vector.shape_cast %347 : vector<1x4x64xbf16> to vector<4x64xbf16>
    %349 = vector.shape_cast %346 : vector<4x64xbf16> to vector<1x4x64xbf16>
    tpu.vector_store %arg16[%c2_233, %c1_234, %c128_235], %349 {strides = array<i32>} : memref<5x5x256xbf16, #tpu.memory_space<vmem>>, vector<1x4x64xbf16>,
    %c49_236 = arith.constant 49 : index
    %c0_237 = arith.constant 0 : index
    %350 = tpu.strided_load %arg15[%c49_236, %c0_237] {strides = array<i32: 2, 1>} : memref<64x64xf32, #tpu.memory_space<vmem>>, vector<4x64xf32>
    %351 = arith.truncf %350 : vector<4x64xf32> to vector<4x64xbf16>
    %c3_238 = arith.constant 3 : index
    %c1_239 = arith.constant 1 : index
    %c128_240 = arith.constant 128 : index
    %352 = vector.load %arg16[%c3_238, %c1_239, %c128_240] : memref<5x5x256xbf16, #tpu.memory_space<vmem>>, vector<1x4x64xbf16>
    %353 = vector.shape_cast %352 : vector<1x4x64xbf16> to vector<4x64xbf16>
    %354 = vector.shape_cast %351 : vector<4x64xbf16> to vector<1x4x64xbf16>
    tpu.vector_store %arg16[%c3_238, %c1_239, %c128_240], %354 {strides = array<i32>} : memref<5x5x256xbf16, #tpu.memory_space<vmem>>, vector<1x4x64xbf16>,
    %c0_241 = arith.constant 0 : index
    %c0_242 = arith.constant 0 : index
    %355 = tpu.strided_load %arg15[%c0_241, %c0_242] {strides = array<i32: 2, 1>} : memref<64x64xf32, #tpu.memory_space<vmem>>, vector<4x64xf32>
    %356 = arith.truncf %355 : vector<4x64xf32> to vector<4x64xbf16>
    %c0_243 = arith.constant 0 : index
    %c0_244 = arith.constant 0 : index
    %c192_245 = arith.constant 192 : index
    %357 = vector.load %arg16[%c0_243, %c0_244, %c192_245] : memref<5x5x256xbf16, #tpu.memory_space<vmem>>, vector<1x4x64xbf16>
    %358 = vector.shape_cast %357 : vector<1x4x64xbf16> to vector<4x64xbf16>
    %359 = vector.shape_cast %356 : vector<4x64xbf16> to vector<1x4x64xbf16>
    tpu.vector_store %arg16[%c0_243, %c0_244, %c192_245], %359 {strides = array<i32>} : memref<5x5x256xbf16, #tpu.memory_space<vmem>>, vector<1x4x64xbf16>,
    %c16_246 = arith.constant 16 : index
    %c0_247 = arith.constant 0 : index
    %360 = tpu.strided_load %arg15[%c16_246, %c0_247] {strides = array<i32: 2, 1>} : memref<64x64xf32, #tpu.memory_space<vmem>>, vector<4x64xf32>
    %361 = arith.truncf %360 : vector<4x64xf32> to vector<4x64xbf16>
    %c1_248 = arith.constant 1 : index
    %c0_249 = arith.constant 0 : index
    %c192_250 = arith.constant 192 : index
    %362 = vector.load %arg16[%c1_248, %c0_249, %c192_250] : memref<5x5x256xbf16, #tpu.memory_space<vmem>>, vector<1x4x64xbf16>
    %363 = vector.shape_cast %362 : vector<1x4x64xbf16> to vector<4x64xbf16>
    %364 = vector.shape_cast %361 : vector<4x64xbf16> to vector<1x4x64xbf16>
    tpu.vector_store %arg16[%c1_248, %c0_249, %c192_250], %364 {strides = array<i32>} : memref<5x5x256xbf16, #tpu.memory_space<vmem>>, vector<1x4x64xbf16>,
    %c32_251 = arith.constant 32 : index
    %c0_252 = arith.constant 0 : index
    %365 = tpu.strided_load %arg15[%c32_251, %c0_252] {strides = array<i32: 2, 1>} : memref<64x64xf32, #tpu.memory_space<vmem>>, vector<4x64xf32>
    %366 = arith.truncf %365 : vector<4x64xf32> to vector<4x64xbf16>
    %c2_253 = arith.constant 2 : index
    %c0_254 = arith.constant 0 : index
    %c192_255 = arith.constant 192 : index
    %367 = vector.load %arg16[%c2_253, %c0_254, %c192_255] : memref<5x5x256xbf16, #tpu.memory_space<vmem>>, vector<1x4x64xbf16>
    %368 = vector.shape_cast %367 : vector<1x4x64xbf16> to vector<4x64xbf16>
    %369 = vector.shape_cast %366 : vector<4x64xbf16> to vector<1x4x64xbf16>
    tpu.vector_store %arg16[%c2_253, %c0_254, %c192_255], %369 {strides = array<i32>} : memref<5x5x256xbf16, #tpu.memory_space<vmem>>, vector<1x4x64xbf16>,
    %c48_256 = arith.constant 48 : index
    %c0_257 = arith.constant 0 : index
    %370 = tpu.strided_load %arg15[%c48_256, %c0_257] {strides = array<i32: 2, 1>} : memref<64x64xf32, #tpu.memory_space<vmem>>, vector<4x64xf32>
    %371 = arith.truncf %370 : vector<4x64xf32> to vector<4x64xbf16>
    %c3_258 = arith.constant 3 : index
    %c0_259 = arith.constant 0 : index
    %c192_260 = arith.constant 192 : index
    %372 = vector.load %arg16[%c3_258, %c0_259, %c192_260] : memref<5x5x256xbf16, #tpu.memory_space<vmem>>, vector<1x4x64xbf16>
    %373 = vector.shape_cast %372 : vector<1x4x64xbf16> to vector<4x64xbf16>
    %374 = vector.shape_cast %371 : vector<4x64xbf16> to vector<1x4x64xbf16>
    tpu.vector_store %arg16[%c3_258, %c0_259, %c192_260], %374 {strides = array<i32>} : memref<5x5x256xbf16, #tpu.memory_space<vmem>>, vector<1x4x64xbf16>,
    %cst_261 = arith.constant 0.000000e+00 : f32
    %375 = vector.broadcast %cst_261 : f32 to vector<16x128xf32>
    %c0_262 = arith.constant 0 : index
    %c0_263 = arith.constant 0 : index
    %c0_264 = arith.constant 0 : index
    %376 = vector.load %arg16[%c0_262, %c0_263, %c0_264] : memref<5x5x256xbf16, #tpu.memory_space<vmem>>, vector<4x4x256xbf16>
    %377 = vector.extract_strided_slice %376 {offsets = [0, 0, 0], sizes = [1, 4, 256], strides = [1, 1, 1]} : vector<4x4x256xbf16> to vector<1x4x256xbf16>
    %378 = vector.shape_cast %377 : vector<1x4x256xbf16> to vector<4x256xbf16>
    %379 = vector.extract_strided_slice %376 {offsets = [1, 0, 0], sizes = [1, 4, 256], strides = [1, 1, 1]} : vector<4x4x256xbf16> to vector<1x4x256xbf16>
    %380 = vector.shape_cast %379 : vector<1x4x256xbf16> to vector<4x256xbf16>
    %381 = vector.extract_strided_slice %376 {offsets = [2, 0, 0], sizes = [1, 4, 256], strides = [1, 1, 1]} : vector<4x4x256xbf16> to vector<1x4x256xbf16>
    %382 = vector.shape_cast %381 : vector<1x4x256xbf16> to vector<4x256xbf16>
    %383 = vector.extract_strided_slice %376 {offsets = [3, 0, 0], sizes = [1, 4, 256], strides = [1, 1, 1]} : vector<4x4x256xbf16> to vector<1x4x256xbf16>
    %384 = vector.shape_cast %383 : vector<1x4x256xbf16> to vector<4x256xbf16>
    %385 = tpu.concatenate %378, %380, %382, %384 in 0 : vector<4x256xbf16>, vector<4x256xbf16>, vector<4x256xbf16>, vector<4x256xbf16> -> vector<16x256xbf16>
    %c0_265 = arith.constant 0 : index
    %c0_266 = arith.constant 0 : index
    %c0_267 = arith.constant 0 : index
    %386 = vector.load %arg4[%c0_265, %c0_266, %c0_267] : memref<4x256x128xbf16, #tpu.memory_space<vmem>>, vector<1x256x128xbf16>
    %387 = vector.shape_cast %386 : vector<1x256x128xbf16> to vector<256x128xbf16>
    %cst_268 = arith.constant dense<0.000000e+00> : vector<16x128xf32>
    %388 = tpu.matmul %385, %387, %cst_268 {dimension_numbers = #tpu.dot_dimension_numbers<[1], [0], [0], [1], [0, 0, 1, 1], [], []>} : vector<16x256xbf16>, vector<256x128xbf16>, vector<16x128xf32> -> vector<16x128xf32>
    %389 = arith.addf %375, %388 : vector<16x128xf32>
    %c0_269 = arith.constant 0 : index
    %c1_270 = arith.constant 1 : index
    %c0_271 = arith.constant 0 : index
    %390 = vector.load %arg16[%c0_269, %c1_270, %c0_271] : memref<5x5x256xbf16, #tpu.memory_space<vmem>>, vector<4x4x256xbf16>
    %391 = vector.extract_strided_slice %390 {offsets = [0, 0, 0], sizes = [1, 4, 256], strides = [1, 1, 1]} : vector<4x4x256xbf16> to vector<1x4x256xbf16>
    %392 = vector.shape_cast %391 : vector<1x4x256xbf16> to vector<4x256xbf16>
    %393 = vector.extract_strided_slice %390 {offsets = [1, 0, 0], sizes = [1, 4, 256], strides = [1, 1, 1]} : vector<4x4x256xbf16> to vector<1x4x256xbf16>
    %394 = vector.shape_cast %393 : vector<1x4x256xbf16> to vector<4x256xbf16>
    %395 = vector.extract_strided_slice %390 {offsets = [2, 0, 0], sizes = [1, 4, 256], strides = [1, 1, 1]} : vector<4x4x256xbf16> to vector<1x4x256xbf16>
    %396 = vector.shape_cast %395 : vector<1x4x256xbf16> to vector<4x256xbf16>
    %397 = vector.extract_strided_slice %390 {offsets = [3, 0, 0], sizes = [1, 4, 256], strides = [1, 1, 1]} : vector<4x4x256xbf16> to vector<1x4x256xbf16>
    %398 = vector.shape_cast %397 : vector<1x4x256xbf16> to vector<4x256xbf16>
    %399 = tpu.concatenate %392, %394, %396, %398 in 0 : vector<4x256xbf16>, vector<4x256xbf16>, vector<4x256xbf16>, vector<4x256xbf16> -> vector<16x256xbf16>
    %c1_272 = arith.constant 1 : index
    %c0_273 = arith.constant 0 : index
    %c0_274 = arith.constant 0 : index
    %400 = vector.load %arg4[%c1_272, %c0_273, %c0_274] : memref<4x256x128xbf16, #tpu.memory_space<vmem>>, vector<1x256x128xbf16>
    %401 = vector.shape_cast %400 : vector<1x256x128xbf16> to vector<256x128xbf16>
    %cst_275 = arith.constant dense<0.000000e+00> : vector<16x128xf32>
    %402 = tpu.matmul %399, %401, %cst_275 {dimension_numbers = #tpu.dot_dimension_numbers<[1], [0], [0], [1], [0, 0, 1, 1], [], []>} : vector<16x256xbf16>, vector<256x128xbf16>, vector<16x128xf32> -> vector<16x128xf32>
    %403 = arith.addf %389, %402 : vector<16x128xf32>
    %c1_276 = arith.constant 1 : index
    %c0_277 = arith.constant 0 : index
    %c0_278 = arith.constant 0 : index
    %404 = vector.load %arg16[%c1_276, %c0_277, %c0_278] : memref<5x5x256xbf16, #tpu.memory_space<vmem>>, vector<4x4x256xbf16>
    %405 = vector.extract_strided_slice %404 {offsets = [0, 0, 0], sizes = [1, 4, 256], strides = [1, 1, 1]} : vector<4x4x256xbf16> to vector<1x4x256xbf16>
    %406 = vector.shape_cast %405 : vector<1x4x256xbf16> to vector<4x256xbf16>
    %407 = vector.extract_strided_slice %404 {offsets = [1, 0, 0], sizes = [1, 4, 256], strides = [1, 1, 1]} : vector<4x4x256xbf16> to vector<1x4x256xbf16>
    %408 = vector.shape_cast %407 : vector<1x4x256xbf16> to vector<4x256xbf16>
    %409 = vector.extract_strided_slice %404 {offsets = [2, 0, 0], sizes = [1, 4, 256], strides = [1, 1, 1]} : vector<4x4x256xbf16> to vector<1x4x256xbf16>
    %410 = vector.shape_cast %409 : vector<1x4x256xbf16> to vector<4x256xbf16>
    %411 = vector.extract_strided_slice %404 {offsets = [3, 0, 0], sizes = [1, 4, 256], strides = [1, 1, 1]} : vector<4x4x256xbf16> to vector<1x4x256xbf16>
    %412 = vector.shape_cast %411 : vector<1x4x256xbf16> to vector<4x256xbf16>
    %413 = tpu.concatenate %406, %408, %410, %412 in 0 : vector<4x256xbf16>, vector<4x256xbf16>, vector<4x256xbf16>, vector<4x256xbf16> -> vector<16x256xbf16>
    %c2_279 = arith.constant 2 : index
    %c0_280 = arith.constant 0 : index
    %c0_281 = arith.constant 0 : index
    %414 = vector.load %arg4[%c2_279, %c0_280, %c0_281] : memref<4x256x128xbf16, #tpu.memory_space<vmem>>, vector<1x256x128xbf16>
    %415 = vector.shape_cast %414 : vector<1x256x128xbf16> to vector<256x128xbf16>
    %cst_282 = arith.constant dense<0.000000e+00> : vector<16x128xf32>
    %416 = tpu.matmul %413, %415, %cst_282 {dimension_numbers = #tpu.dot_dimension_numbers<[1], [0], [0], [1], [0, 0, 1, 1], [], []>} : vector<16x256xbf16>, vector<256x128xbf16>, vector<16x128xf32> -> vector<16x128xf32>
    %417 = arith.addf %403, %416 : vector<16x128xf32>
    %c1_283 = arith.constant 1 : index
    %c1_284 = arith.constant 1 : index
    %c0_285 = arith.constant 0 : index
    %418 = vector.load %arg16[%c1_283, %c1_284, %c0_285] : memref<5x5x256xbf16, #tpu.memory_space<vmem>>, vector<4x4x256xbf16>
    %419 = vector.extract_strided_slice %418 {offsets = [0, 0, 0], sizes = [1, 4, 256], strides = [1, 1, 1]} : vector<4x4x256xbf16> to vector<1x4x256xbf16>
    %420 = vector.shape_cast %419 : vector<1x4x256xbf16> to vector<4x256xbf16>
    %421 = vector.extract_strided_slice %418 {offsets = [1, 0, 0], sizes = [1, 4, 256], strides = [1, 1, 1]} : vector<4x4x256xbf16> to vector<1x4x256xbf16>
    %422 = vector.shape_cast %421 : vector<1x4x256xbf16> to vector<4x256xbf16>
    %423 = vector.extract_strided_slice %418 {offsets = [2, 0, 0], sizes = [1, 4, 256], strides = [1, 1, 1]} : vector<4x4x256xbf16> to vector<1x4x256xbf16>
    %424 = vector.shape_cast %423 : vector<1x4x256xbf16> to vector<4x256xbf16>
    %425 = vector.extract_strided_slice %418 {offsets = [3, 0, 0], sizes = [1, 4, 256], strides = [1, 1, 1]} : vector<4x4x256xbf16> to vector<1x4x256xbf16>
    %426 = vector.shape_cast %425 : vector<1x4x256xbf16> to vector<4x256xbf16>
    %427 = tpu.concatenate %420, %422, %424, %426 in 0 : vector<4x256xbf16>, vector<4x256xbf16>, vector<4x256xbf16>, vector<4x256xbf16> -> vector<16x256xbf16>
    %c3_286 = arith.constant 3 : index
    %c0_287 = arith.constant 0 : index
    %c0_288 = arith.constant 0 : index
    %428 = vector.load %arg4[%c3_286, %c0_287, %c0_288] : memref<4x256x128xbf16, #tpu.memory_space<vmem>>, vector<1x256x128xbf16>
    %429 = vector.shape_cast %428 : vector<1x256x128xbf16> to vector<256x128xbf16>
    %cst_289 = arith.constant dense<0.000000e+00> : vector<16x128xf32>
    %430 = tpu.matmul %427, %429, %cst_289 {dimension_numbers = #tpu.dot_dimension_numbers<[1], [0], [0], [1], [0, 0, 1, 1], [], []>} : vector<16x256xbf16>, vector<256x128xbf16>, vector<16x128xf32> -> vector<16x128xf32>
    %431 = arith.addf %417, %430 : vector<16x128xf32>
    %c0_290 = arith.constant 0 : index
    %c0_291 = arith.constant 0 : index
    %432 = vector.load %arg9[%c0_290, %c0_291] : memref<1x128xf32, #tpu.memory_space<vmem>>, vector<1x128xf32>
    %433 = vector.broadcast %432 : vector<1x128xf32> to vector<16x128xf32>
    %434 = arith.addf %431, %433 : vector<16x128xf32>
    %cst_292 = arith.constant dense<0.000000e+00> : vector<128xf32>
    %435 = vector.multi_reduction <add>, %434, %cst_292 [0] : vector<16x128xf32> to vector<128xf32>
    %436 = vector.shape_cast %435 : vector<128xf32> to vector<1x128xf32>
    %cst_293 = arith.constant 1.600000e+01 : f32
    %437 = vector.broadcast %cst_293 : f32 to vector<1x128xf32>
    %438 = arith.divf %436, %437 : vector<1x128xf32>
    %439 = vector.broadcast %438 : vector<1x128xf32> to vector<16x128xf32>
    %440 = arith.subf %434, %439 : vector<16x128xf32>
    %441 = arith.mulf %440, %440 : vector<16x128xf32>
    %cst_294 = arith.constant dense<0.000000e+00> : vector<128xf32>
    %442 = vector.multi_reduction <add>, %441, %cst_294 [0] : vector<16x128xf32> to vector<128xf32>
    %443 = vector.shape_cast %442 : vector<128xf32> to vector<1x128xf32>
    %cst_295 = arith.constant 1.600000e+01 : f32
    %444 = vector.broadcast %cst_295 : f32 to vector<1x128xf32>
    %445 = arith.divf %443, %444 : vector<1x128xf32>
    %cst_296 = arith.constant 9.99999974E-6 : f32
    %446 = vector.broadcast %cst_296 : f32 to vector<1x128xf32>
    %447 = arith.addf %445, %446 : vector<1x128xf32>
    %448 = math.rsqrt %447 : vector<1x128xf32>
    %449 = vector.broadcast %448 : vector<1x128xf32> to vector<16x128xf32>
    %450 = arith.mulf %440, %449 : vector<16x128xf32>
    %cst_297 = arith.constant 0.000000e+00 : f32
    %451 = vector.broadcast %cst_297 : f32 to vector<16x128xf32>
    %452 = arith.cmpf ogt, %450, %451 : vector<16x128xf32>
    %cst_298 = arith.constant 2.000000e-01 : f32
    %453 = vector.broadcast %cst_298 : f32 to vector<16x128xf32>
    %454 = arith.mulf %453, %450 : vector<16x128xf32>
    %455 = arith.select %452, %450, %454 : vector<16x128xi1>, vector<16x128xf32>
    %456 = vector.extract_strided_slice %455 {offsets = [0, 0], sizes = [4, 128], strides = [1, 1]} : vector<16x128xf32> to vector<4x128xf32>
    %457 = arith.truncf %456 : vector<4x128xf32> to vector<4x128xbf16>
    %c1_299 = arith.constant 1 : index
    %c1_300 = arith.constant 1 : index
    %c0_301 = arith.constant 0 : index
    %458 = vector.load %arg17[%c1_299, %c1_300, %c0_301] : memref<6x6x128xbf16, #tpu.memory_space<vmem>>, vector<1x4x128xbf16>
    %459 = vector.shape_cast %458 : vector<1x4x128xbf16> to vector<4x128xbf16>
    %460 = vector.shape_cast %457 : vector<4x128xbf16> to vector<1x4x128xbf16>
    tpu.vector_store %arg17[%c1_299, %c1_300, %c0_301], %460 {strides = array<i32>} : memref<6x6x128xbf16, #tpu.memory_space<vmem>>, vector<1x4x128xbf16>,
    %461 = vector.extract_strided_slice %455 {offsets = [4, 0], sizes = [4, 128], strides = [1, 1]} : vector<16x128xf32> to vector<4x128xf32>
    %462 = arith.truncf %461 : vector<4x128xf32> to vector<4x128xbf16>
    %c2_302 = arith.constant 2 : index
    %c1_303 = arith.constant 1 : index
    %c0_304 = arith.constant 0 : index
    %463 = vector.load %arg17[%c2_302, %c1_303, %c0_304] : memref<6x6x128xbf16, #tpu.memory_space<vmem>>, vector<1x4x128xbf16>
    %464 = vector.shape_cast %463 : vector<1x4x128xbf16> to vector<4x128xbf16>
    %465 = vector.shape_cast %462 : vector<4x128xbf16> to vector<1x4x128xbf16>
    tpu.vector_store %arg17[%c2_302, %c1_303, %c0_304], %465 {strides = array<i32>} : memref<6x6x128xbf16, #tpu.memory_space<vmem>>, vector<1x4x128xbf16>,
    %466 = vector.extract_strided_slice %455 {offsets = [8, 0], sizes = [4, 128], strides = [1, 1]} : vector<16x128xf32> to vector<4x128xf32>
    %467 = arith.truncf %466 : vector<4x128xf32> to vector<4x128xbf16>
    %c3_305 = arith.constant 3 : index
    %c1_306 = arith.constant 1 : index
    %c0_307 = arith.constant 0 : index
    %468 = vector.load %arg17[%c3_305, %c1_306, %c0_307] : memref<6x6x128xbf16, #tpu.memory_space<vmem>>, vector<1x4x128xbf16>
    %469 = vector.shape_cast %468 : vector<1x4x128xbf16> to vector<4x128xbf16>
    %470 = vector.shape_cast %467 : vector<4x128xbf16> to vector<1x4x128xbf16>
    tpu.vector_store %arg17[%c3_305, %c1_306, %c0_307], %470 {strides = array<i32>} : memref<6x6x128xbf16, #tpu.memory_space<vmem>>, vector<1x4x128xbf16>,
    %471 = vector.extract_strided_slice %455 {offsets = [12, 0], sizes = [4, 128], strides = [1, 1]} : vector<16x128xf32> to vector<4x128xf32>
    %472 = arith.truncf %471 : vector<4x128xf32> to vector<4x128xbf16>
    %c4_308 = arith.constant 4 : index
    %c1_309 = arith.constant 1 : index
    %c0_310 = arith.constant 0 : index
    %473 = vector.load %arg17[%c4_308, %c1_309, %c0_310] : memref<6x6x128xbf16, #tpu.memory_space<vmem>>, vector<1x4x128xbf16>
    %474 = vector.shape_cast %473 : vector<1x4x128xbf16> to vector<4x128xbf16>
    %475 = vector.shape_cast %472 : vector<4x128xbf16> to vector<1x4x128xbf16>
    tpu.vector_store %arg17[%c4_308, %c1_309, %c0_310], %475 {strides = array<i32>} : memref<6x6x128xbf16, #tpu.memory_space<vmem>>, vector<1x4x128xbf16>,
    %cst_311 = arith.constant 0.000000e+00 : f32
    %476 = vector.broadcast %cst_311 : f32 to vector<9x256xf32>
    %c0_312 = arith.constant 0 : index
    %c0_313 = arith.constant 0 : index
    %c0_314 = arith.constant 0 : index
    %477 = vector.load %arg17[%c0_312, %c0_313, %c0_314] : memref<6x6x128xbf16, #tpu.memory_space<vmem>>, vector<3x3x128xbf16>
    %478 = vector.extract_strided_slice %477 {offsets = [0, 0, 0], sizes = [1, 3, 128], strides = [1, 1, 1]} : vector<3x3x128xbf16> to vector<1x3x128xbf16>
    %479 = vector.shape_cast %478 : vector<1x3x128xbf16> to vector<3x128xbf16>
    %480 = vector.extract_strided_slice %477 {offsets = [1, 0, 0], sizes = [1, 3, 128], strides = [1, 1, 1]} : vector<3x3x128xbf16> to vector<1x3x128xbf16>
    %481 = vector.shape_cast %480 : vector<1x3x128xbf16> to vector<3x128xbf16>
    %482 = vector.extract_strided_slice %477 {offsets = [2, 0, 0], sizes = [1, 3, 128], strides = [1, 1, 1]} : vector<3x3x128xbf16> to vector<1x3x128xbf16>
    %483 = vector.shape_cast %482 : vector<1x3x128xbf16> to vector<3x128xbf16>
    %484 = tpu.concatenate %479, %481, %483 in 0 : vector<3x128xbf16>, vector<3x128xbf16>, vector<3x128xbf16> -> vector<9x128xbf16>
    %c0_315 = arith.constant 0 : index
    %c1_316 = arith.constant 1 : index
    %c0_317 = arith.constant 0 : index
    %485 = vector.load %arg17[%c0_315, %c1_316, %c0_317] : memref<6x6x128xbf16, #tpu.memory_space<vmem>>, vector<3x3x128xbf16>
    %486 = vector.extract_strided_slice %485 {offsets = [0, 0, 0], sizes = [1, 3, 128], strides = [1, 1, 1]} : vector<3x3x128xbf16> to vector<1x3x128xbf16>
    %487 = vector.shape_cast %486 : vector<1x3x128xbf16> to vector<3x128xbf16>
    %488 = vector.extract_strided_slice %485 {offsets = [1, 0, 0], sizes = [1, 3, 128], strides = [1, 1, 1]} : vector<3x3x128xbf16> to vector<1x3x128xbf16>
    %489 = vector.shape_cast %488 : vector<1x3x128xbf16> to vector<3x128xbf16>
    %490 = vector.extract_strided_slice %485 {offsets = [2, 0, 0], sizes = [1, 3, 128], strides = [1, 1, 1]} : vector<3x3x128xbf16> to vector<1x3x128xbf16>
    %491 = vector.shape_cast %490 : vector<1x3x128xbf16> to vector<3x128xbf16>
    %492 = tpu.concatenate %487, %489, %491 in 0 : vector<3x128xbf16>, vector<3x128xbf16>, vector<3x128xbf16> -> vector<9x128xbf16>
    %493 = tpu.concatenate %484, %492 in 1 : vector<9x128xbf16>, vector<9x128xbf16> -> vector<9x256xbf16>
    %c0_318 = arith.constant 0 : index
    %c0_319 = arith.constant 0 : index
    %c0_320 = arith.constant 0 : index
    %494 = vector.load %arg5[%c0_318, %c0_319, %c0_320] : memref<16x128x256xbf16, #tpu.memory_space<vmem>>, vector<2x128x256xbf16>
    %495 = vector.extract_strided_slice %494 {offsets = [0, 0, 0], sizes = [1, 128, 256], strides = [1, 1, 1]} : vector<2x128x256xbf16> to vector<1x128x256xbf16>
    %496 = vector.shape_cast %495 : vector<1x128x256xbf16> to vector<128x256xbf16>
    %497 = vector.extract_strided_slice %494 {offsets = [1, 0, 0], sizes = [1, 128, 256], strides = [1, 1, 1]} : vector<2x128x256xbf16> to vector<1x128x256xbf16>
    %498 = vector.shape_cast %497 : vector<1x128x256xbf16> to vector<128x256xbf16>
    %499 = tpu.concatenate %496, %498 in 0 : vector<128x256xbf16>, vector<128x256xbf16> -> vector<256x256xbf16>
    %cst_321 = arith.constant dense<0.000000e+00> : vector<9x256xf32>
    %500 = tpu.matmul %493, %499, %cst_321 {dimension_numbers = #tpu.dot_dimension_numbers<[1], [0], [0], [1], [0, 0, 1, 1], [], []>} : vector<9x256xbf16>, vector<256x256xbf16>, vector<9x256xf32> -> vector<9x256xf32>
    %501 = arith.addf %476, %500 : vector<9x256xf32>
    %c0_322 = arith.constant 0 : index
    %c2_323 = arith.constant 2 : index
    %c0_324 = arith.constant 0 : index
    %502 = vector.load %arg17[%c0_322, %c2_323, %c0_324] : memref<6x6x128xbf16, #tpu.memory_space<vmem>>, vector<3x3x128xbf16>
    %503 = vector.extract_strided_slice %502 {offsets = [0, 0, 0], sizes = [1, 3, 128], strides = [1, 1, 1]} : vector<3x3x128xbf16> to vector<1x3x128xbf16>
    %504 = vector.shape_cast %503 : vector<1x3x128xbf16> to vector<3x128xbf16>
    %505 = vector.extract_strided_slice %502 {offsets = [1, 0, 0], sizes = [1, 3, 128], strides = [1, 1, 1]} : vector<3x3x128xbf16> to vector<1x3x128xbf16>
    %506 = vector.shape_cast %505 : vector<1x3x128xbf16> to vector<3x128xbf16>
    %507 = vector.extract_strided_slice %502 {offsets = [2, 0, 0], sizes = [1, 3, 128], strides = [1, 1, 1]} : vector<3x3x128xbf16> to vector<1x3x128xbf16>
    %508 = vector.shape_cast %507 : vector<1x3x128xbf16> to vector<3x128xbf16>
    %509 = tpu.concatenate %504, %506, %508 in 0 : vector<3x128xbf16>, vector<3x128xbf16>, vector<3x128xbf16> -> vector<9x128xbf16>
    %c0_325 = arith.constant 0 : index
    %c3_326 = arith.constant 3 : index
    %c0_327 = arith.constant 0 : index
    %510 = vector.load %arg17[%c0_325, %c3_326, %c0_327] : memref<6x6x128xbf16, #tpu.memory_space<vmem>>, vector<3x3x128xbf16>
    %511 = vector.extract_strided_slice %510 {offsets = [0, 0, 0], sizes = [1, 3, 128], strides = [1, 1, 1]} : vector<3x3x128xbf16> to vector<1x3x128xbf16>
    %512 = vector.shape_cast %511 : vector<1x3x128xbf16> to vector<3x128xbf16>
    %513 = vector.extract_strided_slice %510 {offsets = [1, 0, 0], sizes = [1, 3, 128], strides = [1, 1, 1]} : vector<3x3x128xbf16> to vector<1x3x128xbf16>
    %514 = vector.shape_cast %513 : vector<1x3x128xbf16> to vector<3x128xbf16>
    %515 = vector.extract_strided_slice %510 {offsets = [2, 0, 0], sizes = [1, 3, 128], strides = [1, 1, 1]} : vector<3x3x128xbf16> to vector<1x3x128xbf16>
    %516 = vector.shape_cast %515 : vector<1x3x128xbf16> to vector<3x128xbf16>
    %517 = tpu.concatenate %512, %514, %516 in 0 : vector<3x128xbf16>, vector<3x128xbf16>, vector<3x128xbf16> -> vector<9x128xbf16>
    %518 = tpu.concatenate %509, %517 in 1 : vector<9x128xbf16>, vector<9x128xbf16> -> vector<9x256xbf16>
    %c2_328 = arith.constant 2 : index
    %c0_329 = arith.constant 0 : index
    %c0_330 = arith.constant 0 : index
    %519 = vector.load %arg5[%c2_328, %c0_329, %c0_330] : memref<16x128x256xbf16, #tpu.memory_space<vmem>>, vector<2x128x256xbf16>
    %520 = vector.extract_strided_slice %519 {offsets = [0, 0, 0], sizes = [1, 128, 256], strides = [1, 1, 1]} : vector<2x128x256xbf16> to vector<1x128x256xbf16>
    %521 = vector.shape_cast %520 : vector<1x128x256xbf16> to vector<128x256xbf16>
    %522 = vector.extract_strided_slice %519 {offsets = [1, 0, 0], sizes = [1, 128, 256], strides = [1, 1, 1]} : vector<2x128x256xbf16> to vector<1x128x256xbf16>
    %523 = vector.shape_cast %522 : vector<1x128x256xbf16> to vector<128x256xbf16>
    %524 = tpu.concatenate %521, %523 in 0 : vector<128x256xbf16>, vector<128x256xbf16> -> vector<256x256xbf16>
    %cst_331 = arith.constant dense<0.000000e+00> : vector<9x256xf32>
    %525 = tpu.matmul %518, %524, %cst_331 {dimension_numbers = #tpu.dot_dimension_numbers<[1], [0], [0], [1], [0, 0, 1, 1], [], []>} : vector<9x256xbf16>, vector<256x256xbf16>, vector<9x256xf32> -> vector<9x256xf32>
    %526 = arith.addf %501, %525 : vector<9x256xf32>
    %c1_332 = arith.constant 1 : index
    %c0_333 = arith.constant 0 : index
    %c0_334 = arith.constant 0 : index
    %527 = vector.load %arg17[%c1_332, %c0_333, %c0_334] : memref<6x6x128xbf16, #tpu.memory_space<vmem>>, vector<3x3x128xbf16>
    %528 = vector.extract_strided_slice %527 {offsets = [0, 0, 0], sizes = [1, 3, 128], strides = [1, 1, 1]} : vector<3x3x128xbf16> to vector<1x3x128xbf16>
    %529 = vector.shape_cast %528 : vector<1x3x128xbf16> to vector<3x128xbf16>
    %530 = vector.extract_strided_slice %527 {offsets = [1, 0, 0], sizes = [1, 3, 128], strides = [1, 1, 1]} : vector<3x3x128xbf16> to vector<1x3x128xbf16>
    %531 = vector.shape_cast %530 : vector<1x3x128xbf16> to vector<3x128xbf16>
    %532 = vector.extract_strided_slice %527 {offsets = [2, 0, 0], sizes = [1, 3, 128], strides = [1, 1, 1]} : vector<3x3x128xbf16> to vector<1x3x128xbf16>
    %533 = vector.shape_cast %532 : vector<1x3x128xbf16> to vector<3x128xbf16>
    %534 = tpu.concatenate %529, %531, %533 in 0 : vector<3x128xbf16>, vector<3x128xbf16>, vector<3x128xbf16> -> vector<9x128xbf16>
    %c1_335 = arith.constant 1 : index
    %c1_336 = arith.constant 1 : index
    %c0_337 = arith.constant 0 : index
    %535 = vector.load %arg17[%c1_335, %c1_336, %c0_337] : memref<6x6x128xbf16, #tpu.memory_space<vmem>>, vector<3x3x128xbf16>
    %536 = vector.extract_strided_slice %535 {offsets = [0, 0, 0], sizes = [1, 3, 128], strides = [1, 1, 1]} : vector<3x3x128xbf16> to vector<1x3x128xbf16>
    %537 = vector.shape_cast %536 : vector<1x3x128xbf16> to vector<3x128xbf16>
    %538 = vector.extract_strided_slice %535 {offsets = [1, 0, 0], sizes = [1, 3, 128], strides = [1, 1, 1]} : vector<3x3x128xbf16> to vector<1x3x128xbf16>
    %539 = vector.shape_cast %538 : vector<1x3x128xbf16> to vector<3x128xbf16>
    %540 = vector.extract_strided_slice %535 {offsets = [2, 0, 0], sizes = [1, 3, 128], strides = [1, 1, 1]} : vector<3x3x128xbf16> to vector<1x3x128xbf16>
    %541 = vector.shape_cast %540 : vector<1x3x128xbf16> to vector<3x128xbf16>
    %542 = tpu.concatenate %537, %539, %541 in 0 : vector<3x128xbf16>, vector<3x128xbf16>, vector<3x128xbf16> -> vector<9x128xbf16>
    %543 = tpu.concatenate %534, %542 in 1 : vector<9x128xbf16>, vector<9x128xbf16> -> vector<9x256xbf16>
    %c4_338 = arith.constant 4 : index
    %c0_339 = arith.constant 0 : index
    %c0_340 = arith.constant 0 : index
    %544 = vector.load %arg5[%c4_338, %c0_339, %c0_340] : memref<16x128x256xbf16, #tpu.memory_space<vmem>>, vector<2x128x256xbf16>
    %545 = vector.extract_strided_slice %544 {offsets = [0, 0, 0], sizes = [1, 128, 256], strides = [1, 1, 1]} : vector<2x128x256xbf16> to vector<1x128x256xbf16>
    %546 = vector.shape_cast %545 : vector<1x128x256xbf16> to vector<128x256xbf16>
    %547 = vector.extract_strided_slice %544 {offsets = [1, 0, 0], sizes = [1, 128, 256], strides = [1, 1, 1]} : vector<2x128x256xbf16> to vector<1x128x256xbf16>
    %548 = vector.shape_cast %547 : vector<1x128x256xbf16> to vector<128x256xbf16>
    %549 = tpu.concatenate %546, %548 in 0 : vector<128x256xbf16>, vector<128x256xbf16> -> vector<256x256xbf16>
    %cst_341 = arith.constant dense<0.000000e+00> : vector<9x256xf32>
    %550 = tpu.matmul %543, %549, %cst_341 {dimension_numbers = #tpu.dot_dimension_numbers<[1], [0], [0], [1], [0, 0, 1, 1], [], []>} : vector<9x256xbf16>, vector<256x256xbf16>, vector<9x256xf32> -> vector<9x256xf32>
    %551 = arith.addf %526, %550 : vector<9x256xf32>
    %c1_342 = arith.constant 1 : index
    %c2_343 = arith.constant 2 : index
    %c0_344 = arith.constant 0 : index
    %552 = vector.load %arg17[%c1_342, %c2_343, %c0_344] : memref<6x6x128xbf16, #tpu.memory_space<vmem>>, vector<3x3x128xbf16>
    %553 = vector.extract_strided_slice %552 {offsets = [0, 0, 0], sizes = [1, 3, 128], strides = [1, 1, 1]} : vector<3x3x128xbf16> to vector<1x3x128xbf16>
    %554 = vector.shape_cast %553 : vector<1x3x128xbf16> to vector<3x128xbf16>
    %555 = vector.extract_strided_slice %552 {offsets = [1, 0, 0], sizes = [1, 3, 128], strides = [1, 1, 1]} : vector<3x3x128xbf16> to vector<1x3x128xbf16>
    %556 = vector.shape_cast %555 : vector<1x3x128xbf16> to vector<3x128xbf16>
    %557 = vector.extract_strided_slice %552 {offsets = [2, 0, 0], sizes = [1, 3, 128], strides = [1, 1, 1]} : vector<3x3x128xbf16> to vector<1x3x128xbf16>
    %558 = vector.shape_cast %557 : vector<1x3x128xbf16> to vector<3x128xbf16>
    %559 = tpu.concatenate %554, %556, %558 in 0 : vector<3x128xbf16>, vector<3x128xbf16>, vector<3x128xbf16> -> vector<9x128xbf16>
    %c1_345 = arith.constant 1 : index
    %c3_346 = arith.constant 3 : index
    %c0_347 = arith.constant 0 : index
    %560 = vector.load %arg17[%c1_345, %c3_346, %c0_347] : memref<6x6x128xbf16, #tpu.memory_space<vmem>>, vector<3x3x128xbf16>
    %561 = vector.extract_strided_slice %560 {offsets = [0, 0, 0], sizes = [1, 3, 128], strides = [1, 1, 1]} : vector<3x3x128xbf16> to vector<1x3x128xbf16>
    %562 = vector.shape_cast %561 : vector<1x3x128xbf16> to vector<3x128xbf16>
    %563 = vector.extract_strided_slice %560 {offsets = [1, 0, 0], sizes = [1, 3, 128], strides = [1, 1, 1]} : vector<3x3x128xbf16> to vector<1x3x128xbf16>
    %564 = vector.shape_cast %563 : vector<1x3x128xbf16> to vector<3x128xbf16>
    %565 = vector.extract_strided_slice %560 {offsets = [2, 0, 0], sizes = [1, 3, 128], strides = [1, 1, 1]} : vector<3x3x128xbf16> to vector<1x3x128xbf16>
    %566 = vector.shape_cast %565 : vector<1x3x128xbf16> to vector<3x128xbf16>
    %567 = tpu.concatenate %562, %564, %566 in 0 : vector<3x128xbf16>, vector<3x128xbf16>, vector<3x128xbf16> -> vector<9x128xbf16>
    %568 = tpu.concatenate %559, %567 in 1 : vector<9x128xbf16>, vector<9x128xbf16> -> vector<9x256xbf16>
    %c6_348 = arith.constant 6 : index
    %c0_349 = arith.constant 0 : index
    %c0_350 = arith.constant 0 : index
    %569 = vector.load %arg5[%c6_348, %c0_349, %c0_350] : memref<16x128x256xbf16, #tpu.memory_space<vmem>>, vector<2x128x256xbf16>
    %570 = vector.extract_strided_slice %569 {offsets = [0, 0, 0], sizes = [1, 128, 256], strides = [1, 1, 1]} : vector<2x128x256xbf16> to vector<1x128x256xbf16>
    %571 = vector.shape_cast %570 : vector<1x128x256xbf16> to vector<128x256xbf16>
    %572 = vector.extract_strided_slice %569 {offsets = [1, 0, 0], sizes = [1, 128, 256], strides = [1, 1, 1]} : vector<2x128x256xbf16> to vector<1x128x256xbf16>
    %573 = vector.shape_cast %572 : vector<1x128x256xbf16> to vector<128x256xbf16>
    %574 = tpu.concatenate %571, %573 in 0 : vector<128x256xbf16>, vector<128x256xbf16> -> vector<256x256xbf16>
    %cst_351 = arith.constant dense<0.000000e+00> : vector<9x256xf32>
    %575 = tpu.matmul %568, %574, %cst_351 {dimension_numbers = #tpu.dot_dimension_numbers<[1], [0], [0], [1], [0, 0, 1, 1], [], []>} : vector<9x256xbf16>, vector<256x256xbf16>, vector<9x256xf32> -> vector<9x256xf32>
    %576 = arith.addf %551, %575 : vector<9x256xf32>
    %c2_352 = arith.constant 2 : index
    %c0_353 = arith.constant 0 : index
    %c0_354 = arith.constant 0 : index
    %577 = vector.load %arg17[%c2_352, %c0_353, %c0_354] : memref<6x6x128xbf16, #tpu.memory_space<vmem>>, vector<3x3x128xbf16>
    %578 = vector.extract_strided_slice %577 {offsets = [0, 0, 0], sizes = [1, 3, 128], strides = [1, 1, 1]} : vector<3x3x128xbf16> to vector<1x3x128xbf16>
    %579 = vector.shape_cast %578 : vector<1x3x128xbf16> to vector<3x128xbf16>
    %580 = vector.extract_strided_slice %577 {offsets = [1, 0, 0], sizes = [1, 3, 128], strides = [1, 1, 1]} : vector<3x3x128xbf16> to vector<1x3x128xbf16>
    %581 = vector.shape_cast %580 : vector<1x3x128xbf16> to vector<3x128xbf16>
    %582 = vector.extract_strided_slice %577 {offsets = [2, 0, 0], sizes = [1, 3, 128], strides = [1, 1, 1]} : vector<3x3x128xbf16> to vector<1x3x128xbf16>
    %583 = vector.shape_cast %582 : vector<1x3x128xbf16> to vector<3x128xbf16>
    %584 = tpu.concatenate %579, %581, %583 in 0 : vector<3x128xbf16>, vector<3x128xbf16>, vector<3x128xbf16> -> vector<9x128xbf16>
    %c2_355 = arith.constant 2 : index
    %c1_356 = arith.constant 1 : index
    %c0_357 = arith.constant 0 : index
    %585 = vector.load %arg17[%c2_355, %c1_356, %c0_357] : memref<6x6x128xbf16, #tpu.memory_space<vmem>>, vector<3x3x128xbf16>
    %586 = vector.extract_strided_slice %585 {offsets = [0, 0, 0], sizes = [1, 3, 128], strides = [1, 1, 1]} : vector<3x3x128xbf16> to vector<1x3x128xbf16>
    %587 = vector.shape_cast %586 : vector<1x3x128xbf16> to vector<3x128xbf16>
    %588 = vector.extract_strided_slice %585 {offsets = [1, 0, 0], sizes = [1, 3, 128], strides = [1, 1, 1]} : vector<3x3x128xbf16> to vector<1x3x128xbf16>
    %589 = vector.shape_cast %588 : vector<1x3x128xbf16> to vector<3x128xbf16>
    %590 = vector.extract_strided_slice %585 {offsets = [2, 0, 0], sizes = [1, 3, 128], strides = [1, 1, 1]} : vector<3x3x128xbf16> to vector<1x3x128xbf16>
    %591 = vector.shape_cast %590 : vector<1x3x128xbf16> to vector<3x128xbf16>
    %592 = tpu.concatenate %587, %589, %591 in 0 : vector<3x128xbf16>, vector<3x128xbf16>, vector<3x128xbf16> -> vector<9x128xbf16>
    %593 = tpu.concatenate %584, %592 in 1 : vector<9x128xbf16>, vector<9x128xbf16> -> vector<9x256xbf16>
    %c8_358 = arith.constant 8 : index
    %c0_359 = arith.constant 0 : index
    %c0_360 = arith.constant 0 : index
    %594 = vector.load %arg5[%c8_358, %c0_359, %c0_360] : memref<16x128x256xbf16, #tpu.memory_space<vmem>>, vector<2x128x256xbf16>
    %595 = vector.extract_strided_slice %594 {offsets = [0, 0, 0], sizes = [1, 128, 256], strides = [1, 1, 1]} : vector<2x128x256xbf16> to vector<1x128x256xbf16>
    %596 = vector.shape_cast %595 : vector<1x128x256xbf16> to vector<128x256xbf16>
    %597 = vector.extract_strided_slice %594 {offsets = [1, 0, 0], sizes = [1, 128, 256], strides = [1, 1, 1]} : vector<2x128x256xbf16> to vector<1x128x256xbf16>
    %598 = vector.shape_cast %597 : vector<1x128x256xbf16> to vector<128x256xbf16>
    %599 = tpu.concatenate %596, %598 in 0 : vector<128x256xbf16>, vector<128x256xbf16> -> vector<256x256xbf16>
    %cst_361 = arith.constant dense<0.000000e+00> : vector<9x256xf32>
    %600 = tpu.matmul %593, %599, %cst_361 {dimension_numbers = #tpu.dot_dimension_numbers<[1], [0], [0], [1], [0, 0, 1, 1], [], []>} : vector<9x256xbf16>, vector<256x256xbf16>, vector<9x256xf32> -> vector<9x256xf32>
    %601 = arith.addf %576, %600 : vector<9x256xf32>
    %c2_362 = arith.constant 2 : index
    %c2_363 = arith.constant 2 : index
    %c0_364 = arith.constant 0 : index
    %602 = vector.load %arg17[%c2_362, %c2_363, %c0_364] : memref<6x6x128xbf16, #tpu.memory_space<vmem>>, vector<3x3x128xbf16>
    %603 = vector.extract_strided_slice %602 {offsets = [0, 0, 0], sizes = [1, 3, 128], strides = [1, 1, 1]} : vector<3x3x128xbf16> to vector<1x3x128xbf16>
    %604 = vector.shape_cast %603 : vector<1x3x128xbf16> to vector<3x128xbf16>
    %605 = vector.extract_strided_slice %602 {offsets = [1, 0, 0], sizes = [1, 3, 128], strides = [1, 1, 1]} : vector<3x3x128xbf16> to vector<1x3x128xbf16>
    %606 = vector.shape_cast %605 : vector<1x3x128xbf16> to vector<3x128xbf16>
    %607 = vector.extract_strided_slice %602 {offsets = [2, 0, 0], sizes = [1, 3, 128], strides = [1, 1, 1]} : vector<3x3x128xbf16> to vector<1x3x128xbf16>
    %608 = vector.shape_cast %607 : vector<1x3x128xbf16> to vector<3x128xbf16>
    %609 = tpu.concatenate %604, %606, %608 in 0 : vector<3x128xbf16>, vector<3x128xbf16>, vector<3x128xbf16> -> vector<9x128xbf16>
    %c2_365 = arith.constant 2 : index
    %c3_366 = arith.constant 3 : index
    %c0_367 = arith.constant 0 : index
    %610 = vector.load %arg17[%c2_365, %c3_366, %c0_367] : memref<6x6x128xbf16, #tpu.memory_space<vmem>>, vector<3x3x128xbf16>
    %611 = vector.extract_strided_slice %610 {offsets = [0, 0, 0], sizes = [1, 3, 128], strides = [1, 1, 1]} : vector<3x3x128xbf16> to vector<1x3x128xbf16>
    %612 = vector.shape_cast %611 : vector<1x3x128xbf16> to vector<3x128xbf16>
    %613 = vector.extract_strided_slice %610 {offsets = [1, 0, 0], sizes = [1, 3, 128], strides = [1, 1, 1]} : vector<3x3x128xbf16> to vector<1x3x128xbf16>
    %614 = vector.shape_cast %613 : vector<1x3x128xbf16> to vector<3x128xbf16>
    %615 = vector.extract_strided_slice %610 {offsets = [2, 0, 0], sizes = [1, 3, 128], strides = [1, 1, 1]} : vector<3x3x128xbf16> to vector<1x3x128xbf16>
    %616 = vector.shape_cast %615 : vector<1x3x128xbf16> to vector<3x128xbf16>
    %617 = tpu.concatenate %612, %614, %616 in 0 : vector<3x128xbf16>, vector<3x128xbf16>, vector<3x128xbf16> -> vector<9x128xbf16>
    %618 = tpu.concatenate %609, %617 in 1 : vector<9x128xbf16>, vector<9x128xbf16> -> vector<9x256xbf16>
    %c10 = arith.constant 10 : index
    %c0_368 = arith.constant 0 : index
    %c0_369 = arith.constant 0 : index
    %619 = vector.load %arg5[%c10, %c0_368, %c0_369] : memref<16x128x256xbf16, #tpu.memory_space<vmem>>, vector<2x128x256xbf16>
    %620 = vector.extract_strided_slice %619 {offsets = [0, 0, 0], sizes = [1, 128, 256], strides = [1, 1, 1]} : vector<2x128x256xbf16> to vector<1x128x256xbf16>
    %621 = vector.shape_cast %620 : vector<1x128x256xbf16> to vector<128x256xbf16>
    %622 = vector.extract_strided_slice %619 {offsets = [1, 0, 0], sizes = [1, 128, 256], strides = [1, 1, 1]} : vector<2x128x256xbf16> to vector<1x128x256xbf16>
    %623 = vector.shape_cast %622 : vector<1x128x256xbf16> to vector<128x256xbf16>
    %624 = tpu.concatenate %621, %623 in 0 : vector<128x256xbf16>, vector<128x256xbf16> -> vector<256x256xbf16>
    %cst_370 = arith.constant dense<0.000000e+00> : vector<9x256xf32>
    %625 = tpu.matmul %618, %624, %cst_370 {dimension_numbers = #tpu.dot_dimension_numbers<[1], [0], [0], [1], [0, 0, 1, 1], [], []>} : vector<9x256xbf16>, vector<256x256xbf16>, vector<9x256xf32> -> vector<9x256xf32>
    %626 = arith.addf %601, %625 : vector<9x256xf32>
    %c3_371 = arith.constant 3 : index
    %c0_372 = arith.constant 0 : index
    %c0_373 = arith.constant 0 : index
    %627 = vector.load %arg17[%c3_371, %c0_372, %c0_373] : memref<6x6x128xbf16, #tpu.memory_space<vmem>>, vector<3x3x128xbf16>
    %628 = vector.extract_strided_slice %627 {offsets = [0, 0, 0], sizes = [1, 3, 128], strides = [1, 1, 1]} : vector<3x3x128xbf16> to vector<1x3x128xbf16>
    %629 = vector.shape_cast %628 : vector<1x3x128xbf16> to vector<3x128xbf16>
    %630 = vector.extract_strided_slice %627 {offsets = [1, 0, 0], sizes = [1, 3, 128], strides = [1, 1, 1]} : vector<3x3x128xbf16> to vector<1x3x128xbf16>
    %631 = vector.shape_cast %630 : vector<1x3x128xbf16> to vector<3x128xbf16>
    %632 = vector.extract_strided_slice %627 {offsets = [2, 0, 0], sizes = [1, 3, 128], strides = [1, 1, 1]} : vector<3x3x128xbf16> to vector<1x3x128xbf16>
    %633 = vector.shape_cast %632 : vector<1x3x128xbf16> to vector<3x128xbf16>
    %634 = tpu.concatenate %629, %631, %633 in 0 : vector<3x128xbf16>, vector<3x128xbf16>, vector<3x128xbf16> -> vector<9x128xbf16>
    %c3_374 = arith.constant 3 : index
    %c1_375 = arith.constant 1 : index
    %c0_376 = arith.constant 0 : index
    %635 = vector.load %arg17[%c3_374, %c1_375, %c0_376] : memref<6x6x128xbf16, #tpu.memory_space<vmem>>, vector<3x3x128xbf16>
    %636 = vector.extract_strided_slice %635 {offsets = [0, 0, 0], sizes = [1, 3, 128], strides = [1, 1, 1]} : vector<3x3x128xbf16> to vector<1x3x128xbf16>
    %637 = vector.shape_cast %636 : vector<1x3x128xbf16> to vector<3x128xbf16>
    %638 = vector.extract_strided_slice %635 {offsets = [1, 0, 0], sizes = [1, 3, 128], strides = [1, 1, 1]} : vector<3x3x128xbf16> to vector<1x3x128xbf16>
    %639 = vector.shape_cast %638 : vector<1x3x128xbf16> to vector<3x128xbf16>
    %640 = vector.extract_strided_slice %635 {offsets = [2, 0, 0], sizes = [1, 3, 128], strides = [1, 1, 1]} : vector<3x3x128xbf16> to vector<1x3x128xbf16>
    %641 = vector.shape_cast %640 : vector<1x3x128xbf16> to vector<3x128xbf16>
    %642 = tpu.concatenate %637, %639, %641 in 0 : vector<3x128xbf16>, vector<3x128xbf16>, vector<3x128xbf16> -> vector<9x128xbf16>
    %643 = tpu.concatenate %634, %642 in 1 : vector<9x128xbf16>, vector<9x128xbf16> -> vector<9x256xbf16>
    %c12 = arith.constant 12 : index
    %c0_377 = arith.constant 0 : index
    %c0_378 = arith.constant 0 : index
    %644 = vector.load %arg5[%c12, %c0_377, %c0_378] : memref<16x128x256xbf16, #tpu.memory_space<vmem>>, vector<2x128x256xbf16>
    %645 = vector.extract_strided_slice %644 {offsets = [0, 0, 0], sizes = [1, 128, 256], strides = [1, 1, 1]} : vector<2x128x256xbf16> to vector<1x128x256xbf16>
    %646 = vector.shape_cast %645 : vector<1x128x256xbf16> to vector<128x256xbf16>
    %647 = vector.extract_strided_slice %644 {offsets = [1, 0, 0], sizes = [1, 128, 256], strides = [1, 1, 1]} : vector<2x128x256xbf16> to vector<1x128x256xbf16>
    %648 = vector.shape_cast %647 : vector<1x128x256xbf16> to vector<128x256xbf16>
    %649 = tpu.concatenate %646, %648 in 0 : vector<128x256xbf16>, vector<128x256xbf16> -> vector<256x256xbf16>
    %cst_379 = arith.constant dense<0.000000e+00> : vector<9x256xf32>
    %650 = tpu.matmul %643, %649, %cst_379 {dimension_numbers = #tpu.dot_dimension_numbers<[1], [0], [0], [1], [0, 0, 1, 1], [], []>} : vector<9x256xbf16>, vector<256x256xbf16>, vector<9x256xf32> -> vector<9x256xf32>
    %651 = arith.addf %626, %650 : vector<9x256xf32>
    %c3_380 = arith.constant 3 : index
    %c2_381 = arith.constant 2 : index
    %c0_382 = arith.constant 0 : index
    %652 = vector.load %arg17[%c3_380, %c2_381, %c0_382] : memref<6x6x128xbf16, #tpu.memory_space<vmem>>, vector<3x3x128xbf16>
    %653 = vector.extract_strided_slice %652 {offsets = [0, 0, 0], sizes = [1, 3, 128], strides = [1, 1, 1]} : vector<3x3x128xbf16> to vector<1x3x128xbf16>
    %654 = vector.shape_cast %653 : vector<1x3x128xbf16> to vector<3x128xbf16>
    %655 = vector.extract_strided_slice %652 {offsets = [1, 0, 0], sizes = [1, 3, 128], strides = [1, 1, 1]} : vector<3x3x128xbf16> to vector<1x3x128xbf16>
    %656 = vector.shape_cast %655 : vector<1x3x128xbf16> to vector<3x128xbf16>
    %657 = vector.extract_strided_slice %652 {offsets = [2, 0, 0], sizes = [1, 3, 128], strides = [1, 1, 1]} : vector<3x3x128xbf16> to vector<1x3x128xbf16>
    %658 = vector.shape_cast %657 : vector<1x3x128xbf16> to vector<3x128xbf16>
    %659 = tpu.concatenate %654, %656, %658 in 0 : vector<3x128xbf16>, vector<3x128xbf16>, vector<3x128xbf16> -> vector<9x128xbf16>
    %c3_383 = arith.constant 3 : index
    %c3_384 = arith.constant 3 : index
    %c0_385 = arith.constant 0 : index
    %660 = vector.load %arg17[%c3_383, %c3_384, %c0_385] : memref<6x6x128xbf16, #tpu.memory_space<vmem>>, vector<3x3x128xbf16>
    %661 = vector.extract_strided_slice %660 {offsets = [0, 0, 0], sizes = [1, 3, 128], strides = [1, 1, 1]} : vector<3x3x128xbf16> to vector<1x3x128xbf16>
    %662 = vector.shape_cast %661 : vector<1x3x128xbf16> to vector<3x128xbf16>
    %663 = vector.extract_strided_slice %660 {offsets = [1, 0, 0], sizes = [1, 3, 128], strides = [1, 1, 1]} : vector<3x3x128xbf16> to vector<1x3x128xbf16>
    %664 = vector.shape_cast %663 : vector<1x3x128xbf16> to vector<3x128xbf16>
    %665 = vector.extract_strided_slice %660 {offsets = [2, 0, 0], sizes = [1, 3, 128], strides = [1, 1, 1]} : vector<3x3x128xbf16> to vector<1x3x128xbf16>
    %666 = vector.shape_cast %665 : vector<1x3x128xbf16> to vector<3x128xbf16>
    %667 = tpu.concatenate %662, %664, %666 in 0 : vector<3x128xbf16>, vector<3x128xbf16>, vector<3x128xbf16> -> vector<9x128xbf16>
    %668 = tpu.concatenate %659, %667 in 1 : vector<9x128xbf16>, vector<9x128xbf16> -> vector<9x256xbf16>
    %c14 = arith.constant 14 : index
    %c0_386 = arith.constant 0 : index
    %c0_387 = arith.constant 0 : index
    %669 = vector.load %arg5[%c14, %c0_386, %c0_387] : memref<16x128x256xbf16, #tpu.memory_space<vmem>>, vector<2x128x256xbf16>
    %670 = vector.extract_strided_slice %669 {offsets = [0, 0, 0], sizes = [1, 128, 256], strides = [1, 1, 1]} : vector<2x128x256xbf16> to vector<1x128x256xbf16>
    %671 = vector.shape_cast %670 : vector<1x128x256xbf16> to vector<128x256xbf16>
    %672 = vector.extract_strided_slice %669 {offsets = [1, 0, 0], sizes = [1, 128, 256], strides = [1, 1, 1]} : vector<2x128x256xbf16> to vector<1x128x256xbf16>
    %673 = vector.shape_cast %672 : vector<1x128x256xbf16> to vector<128x256xbf16>
    %674 = tpu.concatenate %671, %673 in 0 : vector<128x256xbf16>, vector<128x256xbf16> -> vector<256x256xbf16>
    %cst_388 = arith.constant dense<0.000000e+00> : vector<9x256xf32>
    %675 = tpu.matmul %668, %674, %cst_388 {dimension_numbers = #tpu.dot_dimension_numbers<[1], [0], [0], [1], [0, 0, 1, 1], [], []>} : vector<9x256xbf16>, vector<256x256xbf16>, vector<9x256xf32> -> vector<9x256xf32>
    %676 = arith.addf %651, %675 : vector<9x256xf32>
    %c0_389 = arith.constant 0 : index
    %c0_390 = arith.constant 0 : index
    %677 = vector.load %arg10[%c0_389, %c0_390] : memref<1x256xf32, #tpu.memory_space<vmem>>, vector<1x256xf32>
    %678 = vector.broadcast %677 : vector<1x256xf32> to vector<9x256xf32>
    %679 = arith.addf %676, %678 : vector<9x256xf32>
    %cst_391 = arith.constant dense<0.000000e+00> : vector<256xf32>
    %680 = vector.multi_reduction <add>, %679, %cst_391 [0] : vector<9x256xf32> to vector<256xf32>
    %681 = vector.shape_cast %680 : vector<256xf32> to vector<1x256xf32>
    %cst_392 = arith.constant 9.000000e+00 : f32
    %682 = vector.broadcast %cst_392 : f32 to vector<1x256xf32>
    %683 = arith.divf %681, %682 : vector<1x256xf32>
    %684 = vector.broadcast %683 : vector<1x256xf32> to vector<9x256xf32>
    %685 = arith.subf %679, %684 : vector<9x256xf32>
    %686 = arith.mulf %685, %685 : vector<9x256xf32>
    %cst_393 = arith.constant dense<0.000000e+00> : vector<256xf32>
    %687 = vector.multi_reduction <add>, %686, %cst_393 [0] : vector<9x256xf32> to vector<256xf32>
    %688 = vector.shape_cast %687 : vector<256xf32> to vector<1x256xf32>
    %cst_394 = arith.constant 9.000000e+00 : f32
    %689 = vector.broadcast %cst_394 : f32 to vector<1x256xf32>
    %690 = arith.divf %688, %689 : vector<1x256xf32>
    %cst_395 = arith.constant 9.99999974E-6 : f32
    %691 = vector.broadcast %cst_395 : f32 to vector<1x256xf32>
    %692 = arith.addf %690, %691 : vector<1x256xf32>
    %693 = math.rsqrt %692 : vector<1x256xf32>
    %694 = vector.broadcast %693 : vector<1x256xf32> to vector<9x256xf32>
    %695 = arith.mulf %685, %694 : vector<9x256xf32>
    %cst_396 = arith.constant 0.000000e+00 : f32
    %696 = vector.broadcast %cst_396 : f32 to vector<9x256xf32>
    %697 = arith.cmpf ogt, %695, %696 : vector<9x256xf32>
    %cst_397 = arith.constant 2.000000e-01 : f32
    %698 = vector.broadcast %cst_397 : f32 to vector<9x256xf32>
    %699 = arith.mulf %698, %695 : vector<9x256xf32>
    %700 = arith.select %697, %695, %699 : vector<9x256xi1>, vector<9x256xf32>
    %701 = vector.extract_strided_slice %700 {offsets = [0, 0], sizes = [3, 256], strides = [1, 1]} : vector<9x256xf32> to vector<3x256xf32>
    %c1_398 = arith.constant 1 : index
    %c1_399 = arith.constant 1 : index
    %c0_400 = arith.constant 0 : index
    %702 = vector.load %arg18[%c1_398, %c1_399, %c0_400] : memref<5x5x256xf32, #tpu.memory_space<vmem>>, vector<1x3x256xf32>
    %703 = vector.shape_cast %702 : vector<1x3x256xf32> to vector<3x256xf32>
    %704 = vector.shape_cast %701 : vector<3x256xf32> to vector<1x3x256xf32>
    tpu.vector_store %arg18[%c1_398, %c1_399, %c0_400], %704 {strides = array<i32>} : memref<5x5x256xf32, #tpu.memory_space<vmem>>, vector<1x3x256xf32>,
    %705 = vector.extract_strided_slice %700 {offsets = [3, 0], sizes = [3, 256], strides = [1, 1]} : vector<9x256xf32> to vector<3x256xf32>
    %c2_401 = arith.constant 2 : index
    %c1_402 = arith.constant 1 : index
    %c0_403 = arith.constant 0 : index
    %706 = vector.load %arg18[%c2_401, %c1_402, %c0_403] : memref<5x5x256xf32, #tpu.memory_space<vmem>>, vector<1x3x256xf32>
    %707 = vector.shape_cast %706 : vector<1x3x256xf32> to vector<3x256xf32>
    %708 = vector.shape_cast %705 : vector<3x256xf32> to vector<1x3x256xf32>
    tpu.vector_store %arg18[%c2_401, %c1_402, %c0_403], %708 {strides = array<i32>} : memref<5x5x256xf32, #tpu.memory_space<vmem>>, vector<1x3x256xf32>,
    %709 = vector.extract_strided_slice %700 {offsets = [6, 0], sizes = [3, 256], strides = [1, 1]} : vector<9x256xf32> to vector<3x256xf32>
    %c3_404 = arith.constant 3 : index
    %c1_405 = arith.constant 1 : index
    %c0_406 = arith.constant 0 : index
    %710 = vector.load %arg18[%c3_404, %c1_405, %c0_406] : memref<5x5x256xf32, #tpu.memory_space<vmem>>, vector<1x3x256xf32>
    %711 = vector.shape_cast %710 : vector<1x3x256xf32> to vector<3x256xf32>
    %712 = vector.shape_cast %709 : vector<3x256xf32> to vector<1x3x256xf32>
    tpu.vector_store %arg18[%c3_404, %c1_405, %c0_406], %712 {strides = array<i32>} : memref<5x5x256xf32, #tpu.memory_space<vmem>>, vector<1x3x256xf32>,
    %cst_407 = arith.constant 0.000000e+00 : f32
    %713 = vector.broadcast %cst_407 : f32 to vector<4x1xf32>
    %c0_408 = arith.constant 0 : index
    %c0_409 = arith.constant 0 : index
    %c0_410 = arith.constant 0 : index
    %714 = vector.load %arg18[%c0_408, %c0_409, %c0_410] : memref<5x5x256xf32, #tpu.memory_space<vmem>>, vector<2x2x256xf32>
    %715 = vector.extract_strided_slice %714 {offsets = [0, 0, 0], sizes = [1, 2, 256], strides = [1, 1, 1]} : vector<2x2x256xf32> to vector<1x2x256xf32>
    %716 = vector.shape_cast %715 : vector<1x2x256xf32> to vector<2x256xf32>
    %717 = vector.extract_strided_slice %714 {offsets = [1, 0, 0], sizes = [1, 2, 256], strides = [1, 1, 1]} : vector<2x2x256xf32> to vector<1x2x256xf32>
    %718 = vector.shape_cast %717 : vector<1x2x256xf32> to vector<2x256xf32>
    %719 = tpu.concatenate %716, %718 in 0 : vector<2x256xf32>, vector<2x256xf32> -> vector<4x256xf32>
    %c0_411 = arith.constant 0 : index
    %c0_412 = arith.constant 0 : index
    %c0_413 = arith.constant 0 : index
    %720 = vector.load %arg6[%c0_411, %c0_412, %c0_413] : memref<16x1x256xf32, #tpu.memory_space<vmem>>, vector<1x1x256xf32>
    %721 = vector.shape_cast %720 : vector<1x1x256xf32> to vector<1x256xf32>
    %722 = vector.broadcast %721 : vector<1x256xf32> to vector<4x256xf32>
    %723 = arith.mulf %719, %722 : vector<4x256xf32>
    %cst_414 = arith.constant dense<0.000000e+00> : vector<4xf32>
    %724 = vector.multi_reduction <add>, %723, %cst_414 [1] : vector<4x256xf32> to vector<4xf32>
    %725 = vector.shape_cast %724 : vector<4xf32> to vector<4x1xf32>
    %726 = arith.addf %713, %725 : vector<4x1xf32>
    %c0_415 = arith.constant 0 : index
    %c1_416 = arith.constant 1 : index
    %c0_417 = arith.constant 0 : index
    %727 = vector.load %arg18[%c0_415, %c1_416, %c0_417] : memref<5x5x256xf32, #tpu.memory_space<vmem>>, vector<2x2x256xf32>
    %728 = vector.extract_strided_slice %727 {offsets = [0, 0, 0], sizes = [1, 2, 256], strides = [1, 1, 1]} : vector<2x2x256xf32> to vector<1x2x256xf32>
    %729 = vector.shape_cast %728 : vector<1x2x256xf32> to vector<2x256xf32>
    %730 = vector.extract_strided_slice %727 {offsets = [1, 0, 0], sizes = [1, 2, 256], strides = [1, 1, 1]} : vector<2x2x256xf32> to vector<1x2x256xf32>
    %731 = vector.shape_cast %730 : vector<1x2x256xf32> to vector<2x256xf32>
    %732 = tpu.concatenate %729, %731 in 0 : vector<2x256xf32>, vector<2x256xf32> -> vector<4x256xf32>
    %c1_418 = arith.constant 1 : index
    %c0_419 = arith.constant 0 : index
    %c0_420 = arith.constant 0 : index
    %733 = vector.load %arg6[%c1_418, %c0_419, %c0_420] : memref<16x1x256xf32, #tpu.memory_space<vmem>>, vector<1x1x256xf32>
    %734 = vector.shape_cast %733 : vector<1x1x256xf32> to vector<1x256xf32>
    %735 = vector.broadcast %734 : vector<1x256xf32> to vector<4x256xf32>
    %736 = arith.mulf %732, %735 : vector<4x256xf32>
    %cst_421 = arith.constant dense<0.000000e+00> : vector<4xf32>
    %737 = vector.multi_reduction <add>, %736, %cst_421 [1] : vector<4x256xf32> to vector<4xf32>
    %738 = vector.shape_cast %737 : vector<4xf32> to vector<4x1xf32>
    %739 = arith.addf %726, %738 : vector<4x1xf32>
    %c0_422 = arith.constant 0 : index
    %c2_423 = arith.constant 2 : index
    %c0_424 = arith.constant 0 : index
    %740 = vector.load %arg18[%c0_422, %c2_423, %c0_424] : memref<5x5x256xf32, #tpu.memory_space<vmem>>, vector<2x2x256xf32>
    %741 = vector.extract_strided_slice %740 {offsets = [0, 0, 0], sizes = [1, 2, 256], strides = [1, 1, 1]} : vector<2x2x256xf32> to vector<1x2x256xf32>
    %742 = vector.shape_cast %741 : vector<1x2x256xf32> to vector<2x256xf32>
    %743 = vector.extract_strided_slice %740 {offsets = [1, 0, 0], sizes = [1, 2, 256], strides = [1, 1, 1]} : vector<2x2x256xf32> to vector<1x2x256xf32>
    %744 = vector.shape_cast %743 : vector<1x2x256xf32> to vector<2x256xf32>
    %745 = tpu.concatenate %742, %744 in 0 : vector<2x256xf32>, vector<2x256xf32> -> vector<4x256xf32>
    %c2_425 = arith.constant 2 : index
    %c0_426 = arith.constant 0 : index
    %c0_427 = arith.constant 0 : index
    %746 = vector.load %arg6[%c2_425, %c0_426, %c0_427] : memref<16x1x256xf32, #tpu.memory_space<vmem>>, vector<1x1x256xf32>
    %747 = vector.shape_cast %746 : vector<1x1x256xf32> to vector<1x256xf32>
    %748 = vector.broadcast %747 : vector<1x256xf32> to vector<4x256xf32>
    %749 = arith.mulf %745, %748 : vector<4x256xf32>
    %cst_428 = arith.constant dense<0.000000e+00> : vector<4xf32>
    %750 = vector.multi_reduction <add>, %749, %cst_428 [1] : vector<4x256xf32> to vector<4xf32>
    %751 = vector.shape_cast %750 : vector<4xf32> to vector<4x1xf32>
    %752 = arith.addf %739, %751 : vector<4x1xf32>
    %c0_429 = arith.constant 0 : index
    %c3_430 = arith.constant 3 : index
    %c0_431 = arith.constant 0 : index
    %753 = vector.load %arg18[%c0_429, %c3_430, %c0_431] : memref<5x5x256xf32, #tpu.memory_space<vmem>>, vector<2x2x256xf32>
    %754 = vector.extract_strided_slice %753 {offsets = [0, 0, 0], sizes = [1, 2, 256], strides = [1, 1, 1]} : vector<2x2x256xf32> to vector<1x2x256xf32>
    %755 = vector.shape_cast %754 : vector<1x2x256xf32> to vector<2x256xf32>
    %756 = vector.extract_strided_slice %753 {offsets = [1, 0, 0], sizes = [1, 2, 256], strides = [1, 1, 1]} : vector<2x2x256xf32> to vector<1x2x256xf32>
    %757 = vector.shape_cast %756 : vector<1x2x256xf32> to vector<2x256xf32>
    %758 = tpu.concatenate %755, %757 in 0 : vector<2x256xf32>, vector<2x256xf32> -> vector<4x256xf32>
    %c3_432 = arith.constant 3 : index
    %c0_433 = arith.constant 0 : index
    %c0_434 = arith.constant 0 : index
    %759 = vector.load %arg6[%c3_432, %c0_433, %c0_434] : memref<16x1x256xf32, #tpu.memory_space<vmem>>, vector<1x1x256xf32>
    %760 = vector.shape_cast %759 : vector<1x1x256xf32> to vector<1x256xf32>
    %761 = vector.broadcast %760 : vector<1x256xf32> to vector<4x256xf32>
    %762 = arith.mulf %758, %761 : vector<4x256xf32>
    %cst_435 = arith.constant dense<0.000000e+00> : vector<4xf32>
    %763 = vector.multi_reduction <add>, %762, %cst_435 [1] : vector<4x256xf32> to vector<4xf32>
    %764 = vector.shape_cast %763 : vector<4xf32> to vector<4x1xf32>
    %765 = arith.addf %752, %764 : vector<4x1xf32>
    %c1_436 = arith.constant 1 : index
    %c0_437 = arith.constant 0 : index
    %c0_438 = arith.constant 0 : index
    %766 = vector.load %arg18[%c1_436, %c0_437, %c0_438] : memref<5x5x256xf32, #tpu.memory_space<vmem>>, vector<2x2x256xf32>
    %767 = vector.extract_strided_slice %766 {offsets = [0, 0, 0], sizes = [1, 2, 256], strides = [1, 1, 1]} : vector<2x2x256xf32> to vector<1x2x256xf32>
    %768 = vector.shape_cast %767 : vector<1x2x256xf32> to vector<2x256xf32>
    %769 = vector.extract_strided_slice %766 {offsets = [1, 0, 0], sizes = [1, 2, 256], strides = [1, 1, 1]} : vector<2x2x256xf32> to vector<1x2x256xf32>
    %770 = vector.shape_cast %769 : vector<1x2x256xf32> to vector<2x256xf32>
    %771 = tpu.concatenate %768, %770 in 0 : vector<2x256xf32>, vector<2x256xf32> -> vector<4x256xf32>
    %c4_439 = arith.constant 4 : index
    %c0_440 = arith.constant 0 : index
    %c0_441 = arith.constant 0 : index
    %772 = vector.load %arg6[%c4_439, %c0_440, %c0_441] : memref<16x1x256xf32, #tpu.memory_space<vmem>>, vector<1x1x256xf32>
    %773 = vector.shape_cast %772 : vector<1x1x256xf32> to vector<1x256xf32>
    %774 = vector.broadcast %773 : vector<1x256xf32> to vector<4x256xf32>
    %775 = arith.mulf %771, %774 : vector<4x256xf32>
    %cst_442 = arith.constant dense<0.000000e+00> : vector<4xf32>
    %776 = vector.multi_reduction <add>, %775, %cst_442 [1] : vector<4x256xf32> to vector<4xf32>
    %777 = vector.shape_cast %776 : vector<4xf32> to vector<4x1xf32>
    %778 = arith.addf %765, %777 : vector<4x1xf32>
    %c1_443 = arith.constant 1 : index
    %c1_444 = arith.constant 1 : index
    %c0_445 = arith.constant 0 : index
    %779 = vector.load %arg18[%c1_443, %c1_444, %c0_445] : memref<5x5x256xf32, #tpu.memory_space<vmem>>, vector<2x2x256xf32>
    %780 = vector.extract_strided_slice %779 {offsets = [0, 0, 0], sizes = [1, 2, 256], strides = [1, 1, 1]} : vector<2x2x256xf32> to vector<1x2x256xf32>
    %781 = vector.shape_cast %780 : vector<1x2x256xf32> to vector<2x256xf32>
    %782 = vector.extract_strided_slice %779 {offsets = [1, 0, 0], sizes = [1, 2, 256], strides = [1, 1, 1]} : vector<2x2x256xf32> to vector<1x2x256xf32>
    %783 = vector.shape_cast %782 : vector<1x2x256xf32> to vector<2x256xf32>
    %784 = tpu.concatenate %781, %783 in 0 : vector<2x256xf32>, vector<2x256xf32> -> vector<4x256xf32>
    %c5_446 = arith.constant 5 : index
    %c0_447 = arith.constant 0 : index
    %c0_448 = arith.constant 0 : index
    %785 = vector.load %arg6[%c5_446, %c0_447, %c0_448] : memref<16x1x256xf32, #tpu.memory_space<vmem>>, vector<1x1x256xf32>
    %786 = vector.shape_cast %785 : vector<1x1x256xf32> to vector<1x256xf32>
    %787 = vector.broadcast %786 : vector<1x256xf32> to vector<4x256xf32>
    %788 = arith.mulf %784, %787 : vector<4x256xf32>
    %cst_449 = arith.constant dense<0.000000e+00> : vector<4xf32>
    %789 = vector.multi_reduction <add>, %788, %cst_449 [1] : vector<4x256xf32> to vector<4xf32>
    %790 = vector.shape_cast %789 : vector<4xf32> to vector<4x1xf32>
    %791 = arith.addf %778, %790 : vector<4x1xf32>
    %c1_450 = arith.constant 1 : index
    %c2_451 = arith.constant 2 : index
    %c0_452 = arith.constant 0 : index
    %792 = vector.load %arg18[%c1_450, %c2_451, %c0_452] : memref<5x5x256xf32, #tpu.memory_space<vmem>>, vector<2x2x256xf32>
    %793 = vector.extract_strided_slice %792 {offsets = [0, 0, 0], sizes = [1, 2, 256], strides = [1, 1, 1]} : vector<2x2x256xf32> to vector<1x2x256xf32>
    %794 = vector.shape_cast %793 : vector<1x2x256xf32> to vector<2x256xf32>
    %795 = vector.extract_strided_slice %792 {offsets = [1, 0, 0], sizes = [1, 2, 256], strides = [1, 1, 1]} : vector<2x2x256xf32> to vector<1x2x256xf32>
    %796 = vector.shape_cast %795 : vector<1x2x256xf32> to vector<2x256xf32>
    %797 = tpu.concatenate %794, %796 in 0 : vector<2x256xf32>, vector<2x256xf32> -> vector<4x256xf32>
    %c6_453 = arith.constant 6 : index
    %c0_454 = arith.constant 0 : index
    %c0_455 = arith.constant 0 : index
    %798 = vector.load %arg6[%c6_453, %c0_454, %c0_455] : memref<16x1x256xf32, #tpu.memory_space<vmem>>, vector<1x1x256xf32>
    %799 = vector.shape_cast %798 : vector<1x1x256xf32> to vector<1x256xf32>
    %800 = vector.broadcast %799 : vector<1x256xf32> to vector<4x256xf32>
    %801 = arith.mulf %797, %800 : vector<4x256xf32>
    %cst_456 = arith.constant dense<0.000000e+00> : vector<4xf32>
    %802 = vector.multi_reduction <add>, %801, %cst_456 [1] : vector<4x256xf32> to vector<4xf32>
    %803 = vector.shape_cast %802 : vector<4xf32> to vector<4x1xf32>
    %804 = arith.addf %791, %803 : vector<4x1xf32>
    %c1_457 = arith.constant 1 : index
    %c3_458 = arith.constant 3 : index
    %c0_459 = arith.constant 0 : index
    %805 = vector.load %arg18[%c1_457, %c3_458, %c0_459] : memref<5x5x256xf32, #tpu.memory_space<vmem>>, vector<2x2x256xf32>
    %806 = vector.extract_strided_slice %805 {offsets = [0, 0, 0], sizes = [1, 2, 256], strides = [1, 1, 1]} : vector<2x2x256xf32> to vector<1x2x256xf32>
    %807 = vector.shape_cast %806 : vector<1x2x256xf32> to vector<2x256xf32>
    %808 = vector.extract_strided_slice %805 {offsets = [1, 0, 0], sizes = [1, 2, 256], strides = [1, 1, 1]} : vector<2x2x256xf32> to vector<1x2x256xf32>
    %809 = vector.shape_cast %808 : vector<1x2x256xf32> to vector<2x256xf32>
    %810 = tpu.concatenate %807, %809 in 0 : vector<2x256xf32>, vector<2x256xf32> -> vector<4x256xf32>
    %c7_460 = arith.constant 7 : index
    %c0_461 = arith.constant 0 : index
    %c0_462 = arith.constant 0 : index
    %811 = vector.load %arg6[%c7_460, %c0_461, %c0_462] : memref<16x1x256xf32, #tpu.memory_space<vmem>>, vector<1x1x256xf32>
    %812 = vector.shape_cast %811 : vector<1x1x256xf32> to vector<1x256xf32>
    %813 = vector.broadcast %812 : vector<1x256xf32> to vector<4x256xf32>
    %814 = arith.mulf %810, %813 : vector<4x256xf32>
    %cst_463 = arith.constant dense<0.000000e+00> : vector<4xf32>
    %815 = vector.multi_reduction <add>, %814, %cst_463 [1] : vector<4x256xf32> to vector<4xf32>
    %816 = vector.shape_cast %815 : vector<4xf32> to vector<4x1xf32>
    %817 = arith.addf %804, %816 : vector<4x1xf32>
    %c2_464 = arith.constant 2 : index
    %c0_465 = arith.constant 0 : index
    %c0_466 = arith.constant 0 : index
    %818 = vector.load %arg18[%c2_464, %c0_465, %c0_466] : memref<5x5x256xf32, #tpu.memory_space<vmem>>, vector<2x2x256xf32>
    %819 = vector.extract_strided_slice %818 {offsets = [0, 0, 0], sizes = [1, 2, 256], strides = [1, 1, 1]} : vector<2x2x256xf32> to vector<1x2x256xf32>
    %820 = vector.shape_cast %819 : vector<1x2x256xf32> to vector<2x256xf32>
    %821 = vector.extract_strided_slice %818 {offsets = [1, 0, 0], sizes = [1, 2, 256], strides = [1, 1, 1]} : vector<2x2x256xf32> to vector<1x2x256xf32>
    %822 = vector.shape_cast %821 : vector<1x2x256xf32> to vector<2x256xf32>
    %823 = tpu.concatenate %820, %822 in 0 : vector<2x256xf32>, vector<2x256xf32> -> vector<4x256xf32>
    %c8_467 = arith.constant 8 : index
    %c0_468 = arith.constant 0 : index
    %c0_469 = arith.constant 0 : index
    %824 = vector.load %arg6[%c8_467, %c0_468, %c0_469] : memref<16x1x256xf32, #tpu.memory_space<vmem>>, vector<1x1x256xf32>
    %825 = vector.shape_cast %824 : vector<1x1x256xf32> to vector<1x256xf32>
    %826 = vector.broadcast %825 : vector<1x256xf32> to vector<4x256xf32>
    %827 = arith.mulf %823, %826 : vector<4x256xf32>
    %cst_470 = arith.constant dense<0.000000e+00> : vector<4xf32>
    %828 = vector.multi_reduction <add>, %827, %cst_470 [1] : vector<4x256xf32> to vector<4xf32>
    %829 = vector.shape_cast %828 : vector<4xf32> to vector<4x1xf32>
    %830 = arith.addf %817, %829 : vector<4x1xf32>
    %c2_471 = arith.constant 2 : index
    %c1_472 = arith.constant 1 : index
    %c0_473 = arith.constant 0 : index
    %831 = vector.load %arg18[%c2_471, %c1_472, %c0_473] : memref<5x5x256xf32, #tpu.memory_space<vmem>>, vector<2x2x256xf32>
    %832 = vector.extract_strided_slice %831 {offsets = [0, 0, 0], sizes = [1, 2, 256], strides = [1, 1, 1]} : vector<2x2x256xf32> to vector<1x2x256xf32>
    %833 = vector.shape_cast %832 : vector<1x2x256xf32> to vector<2x256xf32>
    %834 = vector.extract_strided_slice %831 {offsets = [1, 0, 0], sizes = [1, 2, 256], strides = [1, 1, 1]} : vector<2x2x256xf32> to vector<1x2x256xf32>
    %835 = vector.shape_cast %834 : vector<1x2x256xf32> to vector<2x256xf32>
    %836 = tpu.concatenate %833, %835 in 0 : vector<2x256xf32>, vector<2x256xf32> -> vector<4x256xf32>
    %c9_474 = arith.constant 9 : index
    %c0_475 = arith.constant 0 : index
    %c0_476 = arith.constant 0 : index
    %837 = vector.load %arg6[%c9_474, %c0_475, %c0_476] : memref<16x1x256xf32, #tpu.memory_space<vmem>>, vector<1x1x256xf32>
    %838 = vector.shape_cast %837 : vector<1x1x256xf32> to vector<1x256xf32>
    %839 = vector.broadcast %838 : vector<1x256xf32> to vector<4x256xf32>
    %840 = arith.mulf %836, %839 : vector<4x256xf32>
    %cst_477 = arith.constant dense<0.000000e+00> : vector<4xf32>
    %841 = vector.multi_reduction <add>, %840, %cst_477 [1] : vector<4x256xf32> to vector<4xf32>
    %842 = vector.shape_cast %841 : vector<4xf32> to vector<4x1xf32>
    %843 = arith.addf %830, %842 : vector<4x1xf32>
    %c2_478 = arith.constant 2 : index
    %c2_479 = arith.constant 2 : index
    %c0_480 = arith.constant 0 : index
    %844 = vector.load %arg18[%c2_478, %c2_479, %c0_480] : memref<5x5x256xf32, #tpu.memory_space<vmem>>, vector<2x2x256xf32>
    %845 = vector.extract_strided_slice %844 {offsets = [0, 0, 0], sizes = [1, 2, 256], strides = [1, 1, 1]} : vector<2x2x256xf32> to vector<1x2x256xf32>
    %846 = vector.shape_cast %845 : vector<1x2x256xf32> to vector<2x256xf32>
    %847 = vector.extract_strided_slice %844 {offsets = [1, 0, 0], sizes = [1, 2, 256], strides = [1, 1, 1]} : vector<2x2x256xf32> to vector<1x2x256xf32>
    %848 = vector.shape_cast %847 : vector<1x2x256xf32> to vector<2x256xf32>
    %849 = tpu.concatenate %846, %848 in 0 : vector<2x256xf32>, vector<2x256xf32> -> vector<4x256xf32>
    %c10_481 = arith.constant 10 : index
    %c0_482 = arith.constant 0 : index
    %c0_483 = arith.constant 0 : index
    %850 = vector.load %arg6[%c10_481, %c0_482, %c0_483] : memref<16x1x256xf32, #tpu.memory_space<vmem>>, vector<1x1x256xf32>
    %851 = vector.shape_cast %850 : vector<1x1x256xf32> to vector<1x256xf32>
    %852 = vector.broadcast %851 : vector<1x256xf32> to vector<4x256xf32>
    %853 = arith.mulf %849, %852 : vector<4x256xf32>
    %cst_484 = arith.constant dense<0.000000e+00> : vector<4xf32>
    %854 = vector.multi_reduction <add>, %853, %cst_484 [1] : vector<4x256xf32> to vector<4xf32>
    %855 = vector.shape_cast %854 : vector<4xf32> to vector<4x1xf32>
    %856 = arith.addf %843, %855 : vector<4x1xf32>
    %c2_485 = arith.constant 2 : index
    %c3_486 = arith.constant 3 : index
    %c0_487 = arith.constant 0 : index
    %857 = vector.load %arg18[%c2_485, %c3_486, %c0_487] : memref<5x5x256xf32, #tpu.memory_space<vmem>>, vector<2x2x256xf32>
    %858 = vector.extract_strided_slice %857 {offsets = [0, 0, 0], sizes = [1, 2, 256], strides = [1, 1, 1]} : vector<2x2x256xf32> to vector<1x2x256xf32>
    %859 = vector.shape_cast %858 : vector<1x2x256xf32> to vector<2x256xf32>
    %860 = vector.extract_strided_slice %857 {offsets = [1, 0, 0], sizes = [1, 2, 256], strides = [1, 1, 1]} : vector<2x2x256xf32> to vector<1x2x256xf32>
    %861 = vector.shape_cast %860 : vector<1x2x256xf32> to vector<2x256xf32>
    %862 = tpu.concatenate %859, %861 in 0 : vector<2x256xf32>, vector<2x256xf32> -> vector<4x256xf32>
    %c11 = arith.constant 11 : index
    %c0_488 = arith.constant 0 : index
    %c0_489 = arith.constant 0 : index
    %863 = vector.load %arg6[%c11, %c0_488, %c0_489] : memref<16x1x256xf32, #tpu.memory_space<vmem>>, vector<1x1x256xf32>
    %864 = vector.shape_cast %863 : vector<1x1x256xf32> to vector<1x256xf32>
    %865 = vector.broadcast %864 : vector<1x256xf32> to vector<4x256xf32>
    %866 = arith.mulf %862, %865 : vector<4x256xf32>
    %cst_490 = arith.constant dense<0.000000e+00> : vector<4xf32>
    %867 = vector.multi_reduction <add>, %866, %cst_490 [1] : vector<4x256xf32> to vector<4xf32>
    %868 = vector.shape_cast %867 : vector<4xf32> to vector<4x1xf32>
    %869 = arith.addf %856, %868 : vector<4x1xf32>
    %c3_491 = arith.constant 3 : index
    %c0_492 = arith.constant 0 : index
    %c0_493 = arith.constant 0 : index
    %870 = vector.load %arg18[%c3_491, %c0_492, %c0_493] : memref<5x5x256xf32, #tpu.memory_space<vmem>>, vector<2x2x256xf32>
    %871 = vector.extract_strided_slice %870 {offsets = [0, 0, 0], sizes = [1, 2, 256], strides = [1, 1, 1]} : vector<2x2x256xf32> to vector<1x2x256xf32>
    %872 = vector.shape_cast %871 : vector<1x2x256xf32> to vector<2x256xf32>
    %873 = vector.extract_strided_slice %870 {offsets = [1, 0, 0], sizes = [1, 2, 256], strides = [1, 1, 1]} : vector<2x2x256xf32> to vector<1x2x256xf32>
    %874 = vector.shape_cast %873 : vector<1x2x256xf32> to vector<2x256xf32>
    %875 = tpu.concatenate %872, %874 in 0 : vector<2x256xf32>, vector<2x256xf32> -> vector<4x256xf32>
    %c12_494 = arith.constant 12 : index
    %c0_495 = arith.constant 0 : index
    %c0_496 = arith.constant 0 : index
    %876 = vector.load %arg6[%c12_494, %c0_495, %c0_496] : memref<16x1x256xf32, #tpu.memory_space<vmem>>, vector<1x1x256xf32>
    %877 = vector.shape_cast %876 : vector<1x1x256xf32> to vector<1x256xf32>
    %878 = vector.broadcast %877 : vector<1x256xf32> to vector<4x256xf32>
    %879 = arith.mulf %875, %878 : vector<4x256xf32>
    %cst_497 = arith.constant dense<0.000000e+00> : vector<4xf32>
    %880 = vector.multi_reduction <add>, %879, %cst_497 [1] : vector<4x256xf32> to vector<4xf32>
    %881 = vector.shape_cast %880 : vector<4xf32> to vector<4x1xf32>
    %882 = arith.addf %869, %881 : vector<4x1xf32>
    %c3_498 = arith.constant 3 : index
    %c1_499 = arith.constant 1 : index
    %c0_500 = arith.constant 0 : index
    %883 = vector.load %arg18[%c3_498, %c1_499, %c0_500] : memref<5x5x256xf32, #tpu.memory_space<vmem>>, vector<2x2x256xf32>
    %884 = vector.extract_strided_slice %883 {offsets = [0, 0, 0], sizes = [1, 2, 256], strides = [1, 1, 1]} : vector<2x2x256xf32> to vector<1x2x256xf32>
    %885 = vector.shape_cast %884 : vector<1x2x256xf32> to vector<2x256xf32>
    %886 = vector.extract_strided_slice %883 {offsets = [1, 0, 0], sizes = [1, 2, 256], strides = [1, 1, 1]} : vector<2x2x256xf32> to vector<1x2x256xf32>
    %887 = vector.shape_cast %886 : vector<1x2x256xf32> to vector<2x256xf32>
    %888 = tpu.concatenate %885, %887 in 0 : vector<2x256xf32>, vector<2x256xf32> -> vector<4x256xf32>
    %c13 = arith.constant 13 : index
    %c0_501 = arith.constant 0 : index
    %c0_502 = arith.constant 0 : index
    %889 = vector.load %arg6[%c13, %c0_501, %c0_502] : memref<16x1x256xf32, #tpu.memory_space<vmem>>, vector<1x1x256xf32>
    %890 = vector.shape_cast %889 : vector<1x1x256xf32> to vector<1x256xf32>
    %891 = vector.broadcast %890 : vector<1x256xf32> to vector<4x256xf32>
    %892 = arith.mulf %888, %891 : vector<4x256xf32>
    %cst_503 = arith.constant dense<0.000000e+00> : vector<4xf32>
    %893 = vector.multi_reduction <add>, %892, %cst_503 [1] : vector<4x256xf32> to vector<4xf32>
    %894 = vector.shape_cast %893 : vector<4xf32> to vector<4x1xf32>
    %895 = arith.addf %882, %894 : vector<4x1xf32>
    %c3_504 = arith.constant 3 : index
    %c2_505 = arith.constant 2 : index
    %c0_506 = arith.constant 0 : index
    %896 = vector.load %arg18[%c3_504, %c2_505, %c0_506] : memref<5x5x256xf32, #tpu.memory_space<vmem>>, vector<2x2x256xf32>
    %897 = vector.extract_strided_slice %896 {offsets = [0, 0, 0], sizes = [1, 2, 256], strides = [1, 1, 1]} : vector<2x2x256xf32> to vector<1x2x256xf32>
    %898 = vector.shape_cast %897 : vector<1x2x256xf32> to vector<2x256xf32>
    %899 = vector.extract_strided_slice %896 {offsets = [1, 0, 0], sizes = [1, 2, 256], strides = [1, 1, 1]} : vector<2x2x256xf32> to vector<1x2x256xf32>
    %900 = vector.shape_cast %899 : vector<1x2x256xf32> to vector<2x256xf32>
    %901 = tpu.concatenate %898, %900 in 0 : vector<2x256xf32>, vector<2x256xf32> -> vector<4x256xf32>
    %c14_507 = arith.constant 14 : index
    %c0_508 = arith.constant 0 : index
    %c0_509 = arith.constant 0 : index
    %902 = vector.load %arg6[%c14_507, %c0_508, %c0_509] : memref<16x1x256xf32, #tpu.memory_space<vmem>>, vector<1x1x256xf32>
    %903 = vector.shape_cast %902 : vector<1x1x256xf32> to vector<1x256xf32>
    %904 = vector.broadcast %903 : vector<1x256xf32> to vector<4x256xf32>
    %905 = arith.mulf %901, %904 : vector<4x256xf32>
    %cst_510 = arith.constant dense<0.000000e+00> : vector<4xf32>
    %906 = vector.multi_reduction <add>, %905, %cst_510 [1] : vector<4x256xf32> to vector<4xf32>
    %907 = vector.shape_cast %906 : vector<4xf32> to vector<4x1xf32>
    %908 = arith.addf %895, %907 : vector<4x1xf32>
    %c3_511 = arith.constant 3 : index
    %c3_512 = arith.constant 3 : index
    %c0_513 = arith.constant 0 : index
    %909 = vector.load %arg18[%c3_511, %c3_512, %c0_513] : memref<5x5x256xf32, #tpu.memory_space<vmem>>, vector<2x2x256xf32>
    %910 = vector.extract_strided_slice %909 {offsets = [0, 0, 0], sizes = [1, 2, 256], strides = [1, 1, 1]} : vector<2x2x256xf32> to vector<1x2x256xf32>
    %911 = vector.shape_cast %910 : vector<1x2x256xf32> to vector<2x256xf32>
    %912 = vector.extract_strided_slice %909 {offsets = [1, 0, 0], sizes = [1, 2, 256], strides = [1, 1, 1]} : vector<2x2x256xf32> to vector<1x2x256xf32>
    %913 = vector.shape_cast %912 : vector<1x2x256xf32> to vector<2x256xf32>
    %914 = tpu.concatenate %911, %913 in 0 : vector<2x256xf32>, vector<2x256xf32> -> vector<4x256xf32>
    %c15 = arith.constant 15 : index
    %c0_514 = arith.constant 0 : index
    %c0_515 = arith.constant 0 : index
    %915 = vector.load %arg6[%c15, %c0_514, %c0_515] : memref<16x1x256xf32, #tpu.memory_space<vmem>>, vector<1x1x256xf32>
    %916 = vector.shape_cast %915 : vector<1x1x256xf32> to vector<1x256xf32>
    %917 = vector.broadcast %916 : vector<1x256xf32> to vector<4x256xf32>
    %918 = arith.mulf %914, %917 : vector<4x256xf32>
    %cst_516 = arith.constant dense<0.000000e+00> : vector<4xf32>
    %919 = vector.multi_reduction <add>, %918, %cst_516 [1] : vector<4x256xf32> to vector<4xf32>
    %920 = vector.shape_cast %919 : vector<4xf32> to vector<4x1xf32>
    %921 = arith.addf %908, %920 : vector<4x1xf32>
    %c0_517 = arith.constant 0 : index
    %c0_518 = arith.constant 0 : index
    %922 = vector.load %arg11[%c0_517, %c0_518] : memref<1x1xf32, #tpu.memory_space<vmem>>, vector<1x1xf32>
    %923 = vector.broadcast %922 : vector<1x1xf32> to vector<4x1xf32>
    %924 = arith.addf %921, %923 : vector<4x1xf32>
    %925 = arith.negf %924 : vector<4x1xf32>
    %926 = math.exp %925 : vector<4x1xf32>
    %cst_519 = arith.constant 1.000000e+00 : f32
    %927 = vector.broadcast %cst_519 : f32 to vector<4x1xf32>
    %928 = arith.addf %927, %926 : vector<4x1xf32>
    %929 = arith.divf %927, %928 : vector<4x1xf32>
    %c0_520 = arith.constant 0 : index
    %c0_521 = arith.constant 0 : index
    %c0_522 = arith.constant 0 : index
    %930 = vector.load %arg12[%c0_520, %c0_521, %c0_522] : memref<1x4x1xf32, #tpu.memory_space<vmem>>, vector<1x4x1xf32>
    %931 = vector.shape_cast %930 : vector<1x4x1xf32> to vector<4x1xf32>
    %932 = vector.shape_cast %929 : vector<4x1xf32> to vector<1x4x1xf32>
    tpu.vector_store %arg12[%c0_520, %c0_521, %c0_522], %932 {strides = array<i32>} : memref<1x4x1xf32, #tpu.memory_space<vmem>>, vector<1x4x1xf32>,
    return
  }
  func.func @transform_0(%arg0: i32) -> (i32, i32, i32) {
    %c0_i32 = arith.constant 0 : i32
    %c0_i32_0 = arith.constant 0 : i32
    %c0_i32_1 = arith.constant 0 : i32
    return %arg0, %c0_i32, %c0_i32_0 : i32, i32, i32
  }
  func.func @transform_1(%arg0: i32) -> (i32, i32) {
    %c0_i32 = arith.constant 0 : i32
    %c0_i32_0 = arith.constant 0 : i32
    %c0_i32_1 = arith.constant 0 : i32
    return %c0_i32, %c0_i32_0 : i32, i32
  }
  func.func @transform_2(%arg0: i32) -> (i32, i32, i32) {
    %c0_i32 = arith.constant 0 : i32
    %c0_i32_0 = arith.constant 0 : i32
    %c0_i32_1 = arith.constant 0 : i32
    %c0_i32_2 = arith.constant 0 : i32
    return %c0_i32, %c0_i32_0, %c0_i32_1 : i32, i32, i32
  }
  func.func @transform_3(%arg0: i32) -> (i32, i32, i32) {
    %c0_i32 = arith.constant 0 : i32
    %c0_i32_0 = arith.constant 0 : i32
    %c0_i32_1 = arith.constant 0 : i32
    %c0_i32_2 = arith.constant 0 : i32
    return %c0_i32, %c0_i32_0, %c0_i32_1 : i32, i32, i32
  }
  func.func @transform_4(%arg0: i32) -> (i32, i32, i32) {
    %c0_i32 = arith.constant 0 : i32
    %c0_i32_0 = arith.constant 0 : i32
    %c0_i32_1 = arith.constant 0 : i32
    %c0_i32_2 = arith.constant 0 : i32
    return %c0_i32, %c0_i32_0, %c0_i32_1 : i32, i32, i32
  }
  func.func @transform_5(%arg0: i32) -> (i32, i32, i32) {
    %c0_i32 = arith.constant 0 : i32
    %c0_i32_0 = arith.constant 0 : i32
    %c0_i32_1 = arith.constant 0 : i32
    %c0_i32_2 = arith.constant 0 : i32
    return %c0_i32, %c0_i32_0, %c0_i32_1 : i32, i32, i32
  }
  func.func @transform_6(%arg0: i32) -> (i32, i32) {
    %c0_i32 = arith.constant 0 : i32
    %c0_i32_0 = arith.constant 0 : i32
    %c0_i32_1 = arith.constant 0 : i32
    return %c0_i32, %c0_i32_0 : i32, i32
  }
  func.func @transform_7(%arg0: i32) -> (i32, i32) {
    %c0_i32 = arith.constant 0 : i32
    %c0_i32_0 = arith.constant 0 : i32
    %c0_i32_1 = arith.constant 0 : i32
    return %c0_i32, %c0_i32_0 : i32, i32
  }
  func.func @transform_8(%arg0: i32) -> (i32, i32) {
    %c0_i32 = arith.constant 0 : i32
    %c0_i32_0 = arith.constant 0 : i32
    %c0_i32_1 = arith.constant 0 : i32
    return %c0_i32, %c0_i32_0 : i32, i32
  }
  func.func @transform_9(%arg0: i32) -> (i32, i32) {
    %c0_i32 = arith.constant 0 : i32
    %c0_i32_0 = arith.constant 0 : i32
    %c0_i32_1 = arith.constant 0 : i32
    return %c0_i32, %c0_i32_0 : i32, i32
  }
  func.func @transform_10(%arg0: i32) -> (i32, i32) {
    %c0_i32 = arith.constant 0 : i32
    %c0_i32_0 = arith.constant 0 : i32
    %c0_i32_1 = arith.constant 0 : i32
    return %c0_i32, %c0_i32_0 : i32, i32
  }
  func.func @transform_11(%arg0: i32) -> (i32, i32, i32) {
    %c0_i32 = arith.constant 0 : i32
    %c0_i32_0 = arith.constant 0 : i32
    %c0_i32_1 = arith.constant 0 : i32
    return %arg0, %c0_i32, %c0_i32_0 : i32, i32, i32
  }
}

</mosaic_0001>

<llo_original>
// kernel: discriminator_forward.1
$region0: #{discriminator_forward.1}
  #allocation0 [shape = 'u32[]', space=smem, size = 0x4, offset = 0x4, fixed_abs, tag = 'smem constant byte address 0x4 - core index']
  #allocation1 [shape = 'u32[144,128]{1,0:T(1,128)}', space=vmem, size = 0x12000, scoped, tag = 'internal scratch']
  #allocation2 [shape = 'f32[256,32]{1,0:T(8,128)}', space=vmem, size = 0x20000, scoped, tag = 'scratch operand']
  #allocation3 [shape = 'bf16[9,9,128]{2,1,0:T(8,128)(2,1)}', space=vmem, size = 0x9000, scoped, tag = 'scratch operand']
  #allocation4 [shape = 'f32[64,64]{1,0:T(8,128)}', space=vmem, size = 0x8000, scoped, tag = 'scratch operand']
  #allocation5 [shape = 'bf16[5,5,256]{2,1,0:T(8,128)(2,1)}', space=vmem, size = 0x5000, scoped, tag = 'scratch operand']
  #allocation6 [shape = 'bf16[6,6,128]{2,1,0:T(8,128)(2,1)}', space=vmem, size = 0x3000, scoped, tag = 'scratch operand']
  #allocation7 [shape = 'f32[5,5,256]{2,1,0:T(8,128)}', space=vmem, size = 0xa000, scoped, tag = 'scratch operand']
  #allocation8 [shape = 'f32[1,1]{1,0:T(1,128)S(1)}', space=vmem, size = 0x200, scoped, tag = 'scoped memory for discriminator_forward.1']
  %s0 = inlined_call_operand.vmem [shape: bf16[2,256,32], index: 0, kind: input, shape index: {}]
  %s1 = inlined_call_operand.vmem [shape: bf16[32,32], index: 1, kind: input, shape index: {}]
  %s2 = inlined_call_operand.vmem [shape: bf16[4,128,64], index: 2, kind: input, shape index: {}]
  %s3 = inlined_call_operand.vmem [shape: bf16[4,256,128], index: 3, kind: input, shape index: {}]
  %s4 = inlined_call_operand.vmem [shape: bf16[16,128,256], index: 4, kind: input, shape index: {}]
  %s5 = inlined_call_operand.vmem [shape: f32[16,1,256], index: 5, kind: input, shape index: {}]
  %s6 = inlined_call_operand.vmem [shape: f32[1,32], index: 6, kind: input, shape index: {}]
  %s7 = inlined_call_operand.vmem [shape: f32[1,64], index: 7, kind: input, shape index: {}]
  %s8 = inlined_call_operand.vmem [shape: f32[1,128], index: 8, kind: input, shape index: {}]
  %s9 = inlined_call_operand.vmem [shape: f32[1,256], index: 9, kind: input, shape index: {}]
  %s10 = inlined_call_operand.<no memory space> [shape: f32[1,1], index: 10, kind: input, shape index: {}]
  %s11 = inlined_call_operand.vmem [shape: f32[2,4,1], index: 11, kind: output, shape index: {}]
  %s12 = sld [smem:[#allocation0]]
  $region77: #{discriminator_forward.1} parent=0
    _
  %s14 = ssub.s32 1, %s12
  %s15 = scalar_select 0, %s14, %s12
  %v16 = vstv %s10
  %17 = vst [vmem:[#allocation8] sm:$0x1] %v16
  loop: start=0, step=1, limit=4
  $region2: #{discriminator_forward.1} parent=0 // loop_pre_header
    _
  $region3: #{discriminator_forward.1} parent=0 // loop_header
    %s19 = sphi 0, %s23
    %p20 = scmp.ge.s32.totalorder %s19, 4
    %s29 = sphi 0, %s31
    %s32 = sphi 0, %s29
    %s33 = sphi 0, %s32
    %s49 = sphi 0, %s33
    %s53 = sphi 0, %s53
    %s55 = sphi 0, %s53
    %s56 = sphi 0, %s55
    %s70 = sphi 0, %s56
    %s74 = sphi 0, %s74
    %s76 = sphi 0, %s74
    %s77 = sphi 0, %s76
    %s91 = sphi 0, %s77
    %s95 = sphi 0, %s95
    %s97 = sphi 0, %s95
    %s98 = sphi 0, %s97
    %s112 = sphi 0, %s98
    %s116 = sphi 0, %s116
    %s118 = sphi 0, %s116
    %s119 = sphi 0, %s118
    %s133 = sphi 0, %s119
    %s137 = sphi 0, %s137
    %s139 = sphi 0, %s137
    %s140 = sphi 0, %s139
    %s154 = sphi 0, %s140
    %s158 = sphi 0, %s158
    %s160 = sphi 0, %s158
    %s161 = sphi 0, %s160
    %s175 = sphi 0, %s161
    %s179 = sphi 0, %s179
    %s181 = sphi 0, %s179
    %s182 = sphi 0, %s181
    %s196 = sphi 0, %s182
    %s200 = sphi 0, %s200
    %s202 = sphi 0, %s200
    %s203 = sphi 0, %s202
    %s217 = sphi 0, %s203
    %s221 = sphi 0, %s221
    %s223 = sphi 0, %s221
    %s224 = sphi 0, %s223
    %s238 = sphi 0, %s224
    %s242 = sphi 0, %s242
    %s244 = sphi 0, %s242
    %s245 = sphi 0, %s244
    %s259 = sphi 0, %s245
    %s265 = sphi 0, %s267
    %s268 = sphi 0, %s265
    %s269 = sphi 0, %s268
    %s285 = sphi 0, %s269
  $region4: #{discriminator_forward.1} parent=0 // loop_header_branch
    %22 = sbr.rel (%p20) target = $region8
  $region5: #{discriminator_forward.1} parent=0 // loop_body
    %s24 = ssub.s32 %s19, 1
    %s25 = ssub.s32 %s19, 2
    %s26 = sadd.s32 %s19, 1
    %s27 = ssub.s32 %s19, %s26
    %p28 = scmp.eq.s32.totalorder %s27, 0
    %s30 = sadd.s32 %s29, 1
    %s31 = scalar_select %p28, %s29, %s30
    %p34 = pneg %p28
    %p35 = scmp.eq.s32.totalorder %s19, 1
    %p36 = por %p34, %p35
    %p37 = scmp.ne.s32.totalorder %s29, %s32
    %p38 = scmp.eq.s32.totalorder %s19, 0
    %p39 = por %p37, %p38
    %p40 = scmp.ne.s32.totalorder %s29, %s32
    %p41 = scmp.eq.s32.totalorder %s24, 1
    %p42 = por %p40, %p41
    %p43 = scmp.ne.s32.totalorder %s32, %s33
    %p44 = scmp.eq.s32.totalorder %s24, 0
    %p45 = por %p43, %p44
    %p46 = scmp.ne.s32.totalorder %s32, %s33
    %p47 = scmp.eq.s32.totalorder %s25, 1
    %p48 = por %p46, %p47
    %p50 = scmp.ne.s32.totalorder %s33, %s49
    %p51 = scmp.eq.s32.totalorder %s25, 0
    %p52 = por %p50, %p51
    %s54 = sadd.s32 %s53, 1
    %p57 = scmp.eq.s32.totalorder %s19, 1
    %p58 = scmp.ne.s32.totalorder %s53, %s55
    %p59 = scmp.eq.s32.totalorder %s19, 0
    %p60 = por %p58, %p59
    %p61 = scmp.ne.s32.totalorder %s53, %s55
    %p62 = scmp.eq.s32.totalorder %s24, 1
    %p63 = por %p61, %p62
    %p64 = scmp.ne.s32.totalorder %s55, %s56
    %p65 = scmp.eq.s32.totalorder %s24, 0
    %p66 = por %p64, %p65
    %p67 = scmp.ne.s32.totalorder %s55, %s56
    %p68 = scmp.eq.s32.totalorder %s25, 1
    %p69 = por %p67, %p68
    %p71 = scmp.ne.s32.totalorder %s56, %s70
    %p72 = scmp.eq.s32.totalorder %s25, 0
    %p73 = por %p71, %p72
    %s75 = sadd.s32 %s74, 1
    %p78 = scmp.eq.s32.totalorder %s19, 1
    %p79 = scmp.ne.s32.totalorder %s74, %s76
    %p80 = scmp.eq.s32.totalorder %s19, 0
    %p81 = por %p79, %p80
    %p82 = scmp.ne.s32.totalorder %s74, %s76
    %p83 = scmp.eq.s32.totalorder %s24, 1
    %p84 = por %p82, %p83
    %p85 = scmp.ne.s32.totalorder %s76, %s77
    %p86 = scmp.eq.s32.totalorder %s24, 0
    %p87 = por %p85, %p86
    %p88 = scmp.ne.s32.totalorder %s76, %s77
    %p89 = scmp.eq.s32.totalorder %s25, 1
    %p90 = por %p88, %p89
    %p92 = scmp.ne.s32.totalorder %s77, %s91
    %p93 = scmp.eq.s32.totalorder %s25, 0
    %p94 = por %p92, %p93
    %s96 = sadd.s32 %s95, 1
    %p99 = scmp.eq.s32.totalorder %s19, 1
    %p100 = scmp.ne.s32.totalorder %s95, %s97
    %p101 = scmp.eq.s32.totalorder %s19, 0
    %p102 = por %p100, %p101
    %p103 = scmp.ne.s32.totalorder %s95, %s97
    %p104 = scmp.eq.s32.totalorder %s24, 1
    %p105 = por %p103, %p104
    %p106 = scmp.ne.s32.totalorder %s97, %s98
    %p107 = scmp.eq.s32.totalorder %s24, 0
    %p108 = por %p106, %p107
    %p109 = scmp.ne.s32.totalorder %s97, %s98
    %p110 = scmp.eq.s32.totalorder %s25, 1
    %p111 = por %p109, %p110
    %p113 = scmp.ne.s32.totalorder %s98, %s112
    %p114 = scmp.eq.s32.totalorder %s25, 0
    %p115 = por %p113, %p114
    %s117 = sadd.s32 %s116, 1
    %p120 = scmp.eq.s32.totalorder %s19, 1
    %p121 = scmp.ne.s32.totalorder %s116, %s118
    %p122 = scmp.eq.s32.totalorder %s19, 0
    %p123 = por %p121, %p122
    %p124 = scmp.ne.s32.totalorder %s116, %s118
    %p125 = scmp.eq.s32.totalorder %s24, 1
    %p126 = por %p124, %p125
    %p127 = scmp.ne.s32.totalorder %s118, %s119
    %p128 = scmp.eq.s32.totalorder %s24, 0
    %p129 = por %p127, %p128
    %p130 = scmp.ne.s32.totalorder %s118, %s119
    %p131 = scmp.eq.s32.totalorder %s25, 1
    %p132 = por %p130, %p131
    %p134 = scmp.ne.s32.totalorder %s119, %s133
    %p135 = scmp.eq.s32.totalorder %s25, 0
    %p136 = por %p134, %p135
    %s138 = sadd.s32 %s137, 1
    %p141 = scmp.eq.s32.totalorder %s19, 1
    %p142 = scmp.ne.s32.totalorder %s137, %s139
    %p143 = scmp.eq.s32.totalorder %s19, 0
    %p144 = por %p142, %p143
    %p145 = scmp.ne.s32.totalorder %s137, %s139
    %p146 = scmp.eq.s32.totalorder %s24, 1
    %p147 = por %p145, %p146
    %p148 = scmp.ne.s32.totalorder %s139, %s140
    %p149 = scmp.eq.s32.totalorder %s24, 0
    %p150 = por %p148, %p149
    %p151 = scmp.ne.s32.totalorder %s139, %s140
    %p152 = scmp.eq.s32.totalorder %s25, 1
    %p153 = por %p151, %p152
    %p155 = scmp.ne.s32.totalorder %s140, %s154
    %p156 = scmp.eq.s32.totalorder %s25, 0
    %p157 = por %p155, %p156
    %s159 = sadd.s32 %s158, 1
    %p162 = scmp.eq.s32.totalorder %s19, 1
    %p163 = scmp.ne.s32.totalorder %s158, %s160
    %p164 = scmp.eq.s32.totalorder %s19, 0
    %p165 = por %p163, %p164
    %p166 = scmp.ne.s32.totalorder %s158, %s160
    %p167 = scmp.eq.s32.totalorder %s24, 1
    %p168 = por %p166, %p167
    %p169 = scmp.ne.s32.totalorder %s160, %s161
    %p170 = scmp.eq.s32.totalorder %s24, 0
    %p171 = por %p169, %p170
    %p172 = scmp.ne.s32.totalorder %s160, %s161
    %p173 = scmp.eq.s32.totalorder %s25, 1
    %p174 = por %p172, %p173
    %p176 = scmp.ne.s32.totalorder %s161, %s175
    %p177 = scmp.eq.s32.totalorder %s25, 0
    %p178 = por %p176, %p177
    %s180 = sadd.s32 %s179, 1
    %p183 = scmp.eq.s32.totalorder %s19, 1
    %p184 = scmp.ne.s32.totalorder %s179, %s181
    %p185 = scmp.eq.s32.totalorder %s19, 0
    %p186 = por %p184, %p185
    %p187 = scmp.ne.s32.totalorder %s179, %s181
    %p188 = scmp.eq.s32.totalorder %s24, 1
    %p189 = por %p187, %p188
    %p190 = scmp.ne.s32.totalorder %s181, %s182
    %p191 = scmp.eq.s32.totalorder %s24, 0
    %p192 = por %p190, %p191
    %p193 = scmp.ne.s32.totalorder %s181, %s182
    %p194 = scmp.eq.s32.totalorder %s25, 1
    %p195 = por %p193, %p194
    %p197 = scmp.ne.s32.totalorder %s182, %s196
    %p198 = scmp.eq.s32.totalorder %s25, 0
    %p199 = por %p197, %p198
    %s201 = sadd.s32 %s200, 1
    %p204 = scmp.eq.s32.totalorder %s19, 1
    %p205 = scmp.ne.s32.totalorder %s200, %s202
    %p206 = scmp.eq.s32.totalorder %s19, 0
    %p207 = por %p205, %p206
    %p208 = scmp.ne.s32.totalorder %s200, %s202
    %p209 = scmp.eq.s32.totalorder %s24, 1
    %p210 = por %p208, %p209
    %p211 = scmp.ne.s32.totalorder %s202, %s203
    %p212 = scmp.eq.s32.totalorder %s24, 0
    %p213 = por %p211, %p212
    %p214 = scmp.ne.s32.totalorder %s202, %s203
    %p215 = scmp.eq.s32.totalorder %s25, 1
    %p216 = por %p214, %p215
    %p218 = scmp.ne.s32.totalorder %s203, %s217
    %p219 = scmp.eq.s32.totalorder %s25, 0
    %p220 = por %p218, %p219
    %s222 = sadd.s32 %s221, 1
    %p225 = scmp.eq.s32.totalorder %s19, 1
    %p226 = scmp.ne.s32.totalorder %s221, %s223
    %p227 = scmp.eq.s32.totalorder %s19, 0
    %p228 = por %p226, %p227
    %p229 = scmp.ne.s32.totalorder %s221, %s223
    %p230 = scmp.eq.s32.totalorder %s24, 1
    %p231 = por %p229, %p230
    %p232 = scmp.ne.s32.totalorder %s223, %s224
    %p233 = scmp.eq.s32.totalorder %s24, 0
    %p234 = por %p232, %p233
    %p235 = scmp.ne.s32.totalorder %s223, %s224
    %p236 = scmp.eq.s32.totalorder %s25, 1
    %p237 = por %p235, %p236
    %p239 = scmp.ne.s32.totalorder %s224, %s238
    %p240 = scmp.eq.s32.totalorder %s25, 0
    %p241 = por %p239, %p240
    %s243 = sadd.s32 %s242, 1
    %p246 = scmp.eq.s32.totalorder %s19, 1
    %p247 = scmp.ne.s32.totalorder %s242, %s244
    %p248 = scmp.eq.s32.totalorder %s19, 0
    %p249 = por %p247, %p248
    %p250 = scmp.ne.s32.totalorder %s242, %s244
    %p251 = scmp.eq.s32.totalorder %s24, 1
    %p252 = por %p250, %p251
    %p253 = scmp.ne.s32.totalorder %s244, %s245
    %p254 = scmp.eq.s32.totalorder %s24, 0
    %p255 = por %p253, %p254
    %p256 = scmp.ne.s32.totalorder %s244, %s245
    %p257 = scmp.eq.s32.totalorder %s25, 1
    %p258 = por %p256, %p257
    %p260 = scmp.ne.s32.totalorder %s245, %s259
    %p261 = scmp.eq.s32.totalorder %s25, 0
    %p262 = por %p260, %p261
    %s263 = ssub.s32 %s19, %s26
    %p264 = scmp.eq.s32.totalorder %s263, 0
    %s266 = sadd.s32 %s265, 1
    %s267 = scalar_select %p264, %s265, %s266
    %p270 = pneg %p264
    %p271 = scmp.eq.s32.totalorder %s19, 1
    %p272 = por %p270, %p271
    %p273 = scmp.ne.s32.totalorder %s265, %s268
    %p274 = scmp.eq.s32.totalorder %s19, 0
    %p275 = por %p273, %p274
    %p276 = scmp.ne.s32.totalorder %s265, %s268
    %p277 = scmp.eq.s32.totalorder %s24, 1
    %p278 = por %p276, %p277
    %p279 = scmp.ne.s32.totalorder %s268, %s269
    %p280 = scmp.eq.s32.totalorder %s24, 0
    %p281 = por %p279, %p280
    %p282 = scmp.ne.s32.totalorder %s268, %s269
    %p283 = scmp.eq.s32.totalorder %s25, 1
    %p284 = por %p282, %p283
    %p286 = scmp.ne.s32.totalorder %s269, %s285
    %p287 = scmp.eq.s32.totalorder %s25, 0
    %p288 = por %p286, %p287
    %p289 = scmp.le.s32.totalorder 1, %s19
    %p290 = scmp.lt.s32.totalorder %s19, 3
    %p291 = pnand %p289, %p290
    %p292 = pneg %p291
    // Predicated region
    $region9: #{discriminator_forward.1} parent=5 // pred_check
      _
    $region10: #{discriminator_forward.1} parent=5 // pred_check_branch
      %294 = sbr.rel (%p291) target = $region12
    $region11: #{discriminator_forward.1} parent=5 // pred_region
      %s295 = ssub.s32 %s19, 1
      // Predicated region
      $region13: #{discriminator_forward.1} parent=11 // pred_check
        %p296 = pneg %p66
      $region14: #{discriminator_forward.1} parent=11 // pred_check_branch
        %298 = sbr.rel (%p296) target = $region16
      $region15: #{discriminator_forward.1} parent=11 // pred_region
        _
      $region16: #{discriminator_forward.1} parent=11 // pred_fallthru
        _
      // Predicated region
      $region17: #{discriminator_forward.1} parent=11 // pred_check
        %p299 = pneg %p87
      $region18: #{discriminator_forward.1} parent=11 // pred_check_branch
        %301 = sbr.rel (%p299) target = $region20
      $region19: #{discriminator_forward.1} parent=11 // pred_region
        _
      $region20: #{discriminator_forward.1} parent=11 // pred_fallthru
        _
      // Predicated region
      $region21: #{discriminator_forward.1} parent=11 // pred_check
        %p302 = pneg %p108
      $region22: #{discriminator_forward.1} parent=11 // pred_check_branch
        %304 = sbr.rel (%p302) target = $region24
      $region23: #{discriminator_forward.1} parent=11 // pred_region
        _
      $region24: #{discriminator_forward.1} parent=11 // pred_fallthru
        _
      // Predicated region
      $region25: #{discriminator_forward.1} parent=11 // pred_check
        %p305 = pneg %p129
      $region26: #{discriminator_forward.1} parent=11 // pred_check_branch
        %307 = sbr.rel (%p305) target = $region28
      $region27: #{discriminator_forward.1} parent=11 // pred_region
        _
      $region28: #{discriminator_forward.1} parent=11 // pred_fallthru
        _
      // Predicated region
      $region29: #{discriminator_forward.1} parent=11 // pred_check
        %p308 = pneg %p150
      $region30: #{discriminator_forward.1} parent=11 // pred_check_branch
        %310 = sbr.rel (%p308) target = $region32
      $region31: #{discriminator_forward.1} parent=11 // pred_region
        _
      $region32: #{discriminator_forward.1} parent=11 // pred_fallthru
        _
      // Predicated region
      $region33: #{discriminator_forward.1} parent=11 // pred_check
        %p311 = pneg %p171
      $region34: #{discriminator_forward.1} parent=11 // pred_check_branch
        %313 = sbr.rel (%p311) target = $region36
      $region35: #{discriminator_forward.1} parent=11 // pred_region
        _
      $region36: #{discriminator_forward.1} parent=11 // pred_fallthru
        _
      // Predicated region
      $region37: #{discriminator_forward.1} parent=11 // pred_check
        %p314 = pneg %p192
      $region38: #{discriminator_forward.1} parent=11 // pred_check_branch
        %316 = sbr.rel (%p314) target = $region40
      $region39: #{discriminator_forward.1} parent=11 // pred_region
        _
      $region40: #{discriminator_forward.1} parent=11 // pred_fallthru
        _
      // Predicated region
      $region41: #{discriminator_forward.1} parent=11 // pred_check
        %p317 = pneg %p213
      $region42: #{discriminator_forward.1} parent=11 // pred_check_branch
        %319 = sbr.rel (%p317) target = $region44
      $region43: #{discriminator_forward.1} parent=11 // pred_region
        _
      $region44: #{discriminator_forward.1} parent=11 // pred_fallthru
        _
      // Predicated region
      $region45: #{discriminator_forward.1} parent=11 // pred_check
        %p320 = pneg %p234
      $region46: #{discriminator_forward.1} parent=11 // pred_check_branch
        %322 = sbr.rel (%p320) target = $region48
      $region47: #{discriminator_forward.1} parent=11 // pred_region
        _
      $region48: #{discriminator_forward.1} parent=11 // pred_fallthru
        _
      // Predicated region
      $region49: #{discriminator_forward.1} parent=11 // pred_check
        %p323 = pneg %p255
      $region50: #{discriminator_forward.1} parent=11 // pred_check_branch
        %325 = sbr.rel (%p323) target = $region52
      $region51: #{discriminator_forward.1} parent=11 // pred_region
        _
      $region52: #{discriminator_forward.1} parent=11 // pred_fallthru
        _
    $region12: #{discriminator_forward.1} parent=5 // pred_fallthru
      _
    %p326 = scmp.lt.s32.totalorder %s19, 2
    // Predicated region
    $region53: #{discriminator_forward.1} parent=5 // pred_check
      %p327 = pneg %p326
    $region54: #{discriminator_forward.1} parent=5 // pred_check_branch
      %329 = sbr.rel (%p327) target = $region56
    $region55: #{discriminator_forward.1} parent=5 // pred_region
      // Predicated region
      $region57: #{discriminator_forward.1} parent=55 // pred_check
        %p330 = pneg %p39
      $region58: #{discriminator_forward.1} parent=55 // pred_check_branch
        %332 = sbr.rel (%p330) target = $region60
      $region59: #{discriminator_forward.1} parent=55 // pred_region
        %p333 = scmp.lt.s32.totalorder %s19, 1
        %s334 = scalar_select %p333, %s19, 1
        %s335 = smul.addr %s334, 32
        %s336 = smul.addr %s335, 4
        %s337 = scalar_lea.vmem %s0, %s336
      $region60: #{discriminator_forward.1} parent=55 // pred_fallthru
        _
    $region56: #{discriminator_forward.1} parent=5 // pred_fallthru
      _
    %p338 = scmp.le.s32.totalorder 1, %s19
    %p339 = scmp.lt.s32.totalorder %s19, 3
    %p340 = pnand %p338, %p339
    %p341 = pneg %p340
    // Predicated region
    $region61: #{discriminator_forward.1} parent=5 // pred_check
      _
    $region62: #{discriminator_forward.1} parent=5 // pred_check_branch
      %343 = sbr.rel (%p340) target = $region64
    $region63: #{discriminator_forward.1} parent=5 // pred_region
      %s344 = ssub.s32 %s19, 1
      %p345 = scmp.lt.s32.totalorder %s24, 1
      %s346 = scalar_select %p345, %s24, 1
      %s347 = smul.addr %s346, 32
      %s348 = smul.addr %s347, 4
      %s349 = scalar_lea.vmem %s0, %s348
      %p350 = pneg %p45
      %p351 = pneg %p42
      %p352 = pneg %p66
      %p353 = pneg %p63
      %p354 = pneg %p87
      %p355 = pneg %p84
      %p356 = pneg %p108
      %p357 = pneg %p105
      %p358 = pneg %p129
      %p359 = pneg %p126
      %p360 = pneg %p150
      %p361 = pneg %p147
      %p362 = pneg %p171
      %p363 = pneg %p168
      %p364 = pneg %p192
      %p365 = pneg %p189
      %p366 = pneg %p213
      %p367 = pneg %p210
      %p368 = pneg %p234
      %p369 = pneg %p231
      %p370 = pneg %p255
      %p371 = pneg %p252
      %p372 = pneg %p281
      %p373 = pneg %p278
      %p374 = scmp.lt.s32.totalorder %s24, 1
      %s375 = scalar_select %p374, %s24, 1
      %s376 = smul.addr %s375, 4
      %s377 = scalar_lea.vmem %s11, %s376
      %p378 = scmp.lt.s32.totalorder %s24, 1
      %s379 = scalar_select %p378, %s24, 1
      %s380 = smul.addr %s379, 32
      %s381 = smul.addr %s380, 4
      %s382 = scalar_lea.vmem %s0, %s381
      %p383 = scmp.lt.s32.totalorder %s24, 1
      %s384 = scalar_select %p383, %s24, 1
      %s385 = smul.addr %s384, 4
      %s386 = scalar_lea.vmem %s11, %s385
      %388 = vst [vmem:[#allocation3] sm:$0xf] 0
      %vm389 = vcmask 1040384
      %vm390 = vsmask.f32 256
      %vm391 = vmand %vm389, %vm390
      %v392 = vld [vmem:[#allocation3 + $0x4] sm:$0x1]
      %v393 = vsel %vm391, 0, %v392
      %394 = vst [vmem:[#allocation3 + $0x4] sm:$0x1] %v393
      %395 = vst [vmem:[#allocation3 + $0x8] sm:$0xf] 0
      %v396 = vld [vmem:[#allocation3 + $0xc] sm:$0x1]
      %v397 = vsel %vm391, 0, %v396
      %398 = vst [vmem:[#allocation3 + $0xc] sm:$0x1] %v397
      %399 = vst [vmem:[#allocation3 + $0x10] sm:$0xf] 0
      %v400 = vld [vmem:[#allocation3 + $0x14] sm:$0x1]
      %v401 = vsel %vm391, 0, %v400
      %402 = vst [vmem:[#allocation3 + $0x14] sm:$0x1] %v401
      %403 = vst [vmem:[#allocation3 + $0x18] sm:$0xf] 0
      %v404 = vld [vmem:[#allocation3 + $0x1c] sm:$0x1]
      %v405 = vsel %vm391, 0, %v404
      %406 = vst [vmem:[#allocation3 + $0x1c] sm:$0x1] %v405
      %407 = vst [vmem:[#allocation3 + $0x20] sm:$0xf] 0
      %v408 = vld [vmem:[#allocation3 + $0x24] sm:$0x1]
      %v409 = vsel %vm391, 0, %v408
      %410 = vst [vmem:[#allocation3 + $0x24] sm:$0x1] %v409
      %411 = vst [vmem:[#allocation3 + $0x28] sm:$0xf] 0
      %v412 = vld [vmem:[#allocation3 + $0x2c] sm:$0x1]
      %v413 = vsel %vm391, 0, %v412
      %414 = vst [vmem:[#allocation3 + $0x2c] sm:$0x1] %v413
      %415 = vst [vmem:[#allocation3 + $0x30] sm:$0xf] 0
      %v416 = vld [vmem:[#allocation3 + $0x34] sm:$0x1]
      %v417 = vsel %vm391, 0, %v416
      %418 = vst [vmem:[#allocation3 + $0x34] sm:$0x1] %v417
      %419 = vst [vmem:[#allocation3 + $0x38] sm:$0xf] 0
      %v420 = vld [vmem:[#allocation3 + $0x3c] sm:$0x1]
      %v421 = vsel %vm391, 0, %v420
      %422 = vst [vmem:[#allocation3 + $0x3c] sm:$0x1] %v421
      %423 = vst [vmem:[#allocation3 + $0x40] sm:$0xf] 0
      %v424 = vld [vmem:[#allocation3 + $0x44] sm:$0x1]
      %v425 = vsel %vm391, 0, %v424
      %426 = vst [vmem:[#allocation3 + $0x44] sm:$0x1] %v425
      %vm427 = vcmask 1042432
      %vm428 = vsmask.f32 2304
      %vm429 = vmand %vm427, %vm428
      %vm430 = vcmask 1046532
      %vm431 = vsmask.f32 6400
      %vm432 = vmand %vm430, %vm431
      %vm433 = vmor %vm432, %vm429
      %v434 = vld [vmem:[#allocation5] sm:$0x77]
      %v435 = vsel %vm433, 0, %v434
      %436 = vst [vmem:[#allocation5] sm:$0x77] %v435
      %v437 = vld [vmem:[#allocation5 + $0x8] sm:$0x77]
      %v438 = vsel %vm433, 0, %v437
      %439 = vst [vmem:[#allocation5 + $0x8] sm:$0x77] %v438
      %v440 = vld [vmem:[#allocation5 + $0x10] sm:$0x77]
      %v441 = vsel %vm433, 0, %v440
      %442 = vst [vmem:[#allocation5 + $0x10] sm:$0x77] %v441
      %v443 = vld [vmem:[#allocation5 + $0x18] sm:$0x77]
      %v444 = vsel %vm433, 0, %v443
      %445 = vst [vmem:[#allocation5 + $0x18] sm:$0x77] %v444
      %v446 = vld [vmem:[#allocation5 + $0x20] sm:$0x77]
      %v447 = vsel %vm433, 0, %v446
      %448 = vst [vmem:[#allocation5 + $0x20] sm:$0x77] %v447
      %449 = vst [vmem:[#allocation6] sm:$0x7] 0
      %450 = vst [vmem:[#allocation6 + $0x4] sm:$0x7] 0
      %451 = vst [vmem:[#allocation6 + $0x8] sm:$0x7] 0
      %452 = vst [vmem:[#allocation6 + $0xc] sm:$0x7] 0
      %453 = vst [vmem:[#allocation6 + $0x10] sm:$0x7] 0
      %454 = vst [vmem:[#allocation6 + $0x14] sm:$0x7] 0
      %455 = vst [vmem:[#allocation7] sm:$0x1f] 0.0
      %456 = vst [vmem:[#allocation7 + $0x8] sm:$0x1f] 0.0
      %457 = vst [vmem:[#allocation7 + $0x10] sm:$0x1f] 0.0
      %458 = vst [vmem:[#allocation7 + $0x18] sm:$0x1f] 0.0
      %459 = vst [vmem:[#allocation7 + $0x20] sm:$0x1f] 0.0
      %460 = vst [vmem:[#allocation7 + $0x28] sm:$0x1f] 0.0
      %461 = vst [vmem:[#allocation7 + $0x30] sm:$0x1f] 0.0
      %462 = vst [vmem:[#allocation7 + $0x38] sm:$0x1f] 0.0
      %463 = vst [vmem:[#allocation7 + $0x40] sm:$0x1f] 0.0
      %464 = vst [vmem:[#allocation7 + $0x48] sm:$0x1f] 0.0
      %v465 = vld [vmem:[%s382] sm:$0xf]
      %v466 = vld [vmem:[%s382 + $0x4] sm:$0xf]
      %v467 = vld [vmem:[%s382 + $0x8] sm:$0xf]
      %v468 = vld [vmem:[%s382 + $0xc] sm:$0xf]
      %v469 = vld [vmem:[%s382 + $0x10] sm:$0xf]
      %v470 = vld [vmem:[%s382 + $0x14] sm:$0xf]
      %v471 = vld [vmem:[%s382 + $0x18] sm:$0xf]
      %v472 = vld [vmem:[%s382 + $0x1c] sm:$0xf]
      %v473 = vld [vmem:[%s382 + $0x20] sm:$0xf]
      %v474 = vld [vmem:[%s382 + $0x24] sm:$0xf]
      %v475 = vld [vmem:[%s382 + $0x28] sm:$0xf]
      %v476 = vld [vmem:[%s382 + $0x2c] sm:$0xf]
      %v477 = vld [vmem:[%s382 + $0x30] sm:$0xf]
      %v478 = vld [vmem:[%s382 + $0x34] sm:$0xf]
      %v479 = vld [vmem:[%s382 + $0x38] sm:$0xf]
      %v480 = vld [vmem:[%s382 + $0x3c] sm:$0xf]
      %v481 = vld [vmem:[%s382 + $0x40] sm:$0xf]
      %v482 = vld [vmem:[%s382 + $0x44] sm:$0xf]
      %v483 = vld [vmem:[%s382 + $0x48] sm:$0xf]
      %v484 = vld [vmem:[%s382 + $0x4c] sm:$0xf]
      %v485 = vld [vmem:[%s382 + $0x50] sm:$0xf]
      %v486 = vld [vmem:[%s382 + $0x54] sm:$0xf]
      %v487 = vld [vmem:[%s382 + $0x58] sm:$0xf]
      %v488 = vld [vmem:[%s382 + $0x5c] sm:$0xf]
      %v489 = vld [vmem:[%s382 + $0x60] sm:$0xf]
      %v490 = vld [vmem:[%s382 + $0x64] sm:$0xf]
      %v491 = vld [vmem:[%s382 + $0x68] sm:$0xf]
      %v492 = vld [vmem:[%s382 + $0x6c] sm:$0xf]
      %v493 = vld [vmem:[%s382 + $0x70] sm:$0xf]
      %v494 = vld [vmem:[%s382 + $0x74] sm:$0xf]
      %v495 = vld [vmem:[%s382 + $0x78] sm:$0xf]
      %v496 = vld [vmem:[%s382 + $0x7c] sm:$0xf]
      %v497 = vld [vmem:[%s1] sm:$0xf]
      %v498 = vld [vmem:[%s1 + $0x4] sm:$0xf]
      %v499 = vld [vmem:[%s1 + $0x8] sm:$0xf]
      %v500 = vld [vmem:[%s1 + $0xc] sm:$0xf]
      %v501 = vld [vmem:[%s6] sm:$0x1]
      %v503 = vlaneseq
      %v504 = vshrl.u32 %v503, 7
      %v505 = vsub.s32 0, %v504
      %v506 = vrot.slane %v501, %v505
      %v540 = vunpack.c.l.b16 %v465
      %v541 = vunpack.c.l.b16 %v466
      %v542 = vunpack.c.l.b16 %v467
      %v543 = vunpack.c.l.b16 %v468
      %v544 = vunpack.c.l.b16 %v469
      %v545 = vunpack.c.l.b16 %v470
      %v546 = vunpack.c.l.b16 %v471
      %v547 = vunpack.c.l.b16 %v472
      %v548 = vunpack.c.l.b16 %v473
      %v549 = vunpack.c.l.b16 %v474
      %v550 = vunpack.c.l.b16 %v475
      %v551 = vunpack.c.l.b16 %v476
      %v552 = vunpack.c.l.b16 %v477
      %v553 = vunpack.c.l.b16 %v478
      %v554 = vunpack.c.l.b16 %v479
      %v555 = vunpack.c.l.b16 %v480
      %v556 = vunpack.c.l.b16 %v481
      %v557 = vunpack.c.l.b16 %v482
      %v558 = vunpack.c.l.b16 %v483
      %v559 = vunpack.c.l.b16 %v484
      %v560 = vunpack.c.l.b16 %v485
      %v561 = vunpack.c.l.b16 %v486
      %v562 = vunpack.c.l.b16 %v487
      %v563 = vunpack.c.l.b16 %v488
      %v564 = vunpack.c.l.b16 %v489
      %v565 = vunpack.c.l.b16 %v490
      %v566 = vunpack.c.l.b16 %v491
      %v567 = vunpack.c.l.b16 %v492
      %v568 = vunpack.c.l.b16 %v493
      %v569 = vunpack.c.l.b16 %v494
      %v570 = vunpack.c.l.b16 %v495
      %v571 = vunpack.c.l.b16 %v496
      %v572 = vpack.c.b16 %v541, %v540
      %v573 = vpack.c.b16 %v543, %v542
      %v574 = vpack.c.b16 %v545, %v544
      %v575 = vpack.c.b16 %v547, %v546
      %v576 = vpack.c.b16 %v549, %v548
      %v577 = vpack.c.b16 %v551, %v550
      %v578 = vpack.c.b16 %v553, %v552
      %v579 = vpack.c.b16 %v555, %v554
      %v580 = vpack.c.b16 %v557, %v556
      %v581 = vpack.c.b16 %v559, %v558
      %v582 = vpack.c.b16 %v561, %v560
      %v583 = vpack.c.b16 %v563, %v562
      %v584 = vpack.c.b16 %v565, %v564
      %v585 = vpack.c.b16 %v567, %v566
      %v586 = vpack.c.b16 %v569, %v568
      %v587 = vpack.c.b16 %v571, %v570
      %v592 = vunpack.c.l.b16 %v497
      %v593 = vunpack.c.l.b16 %v498
      %v594 = vunpack.c.l.b16 %v499
      %v595 = vunpack.c.l.b16 %v500
      %v596 = vpack.c.b16 %v593, %v592
      %v597 = vpack.c.b16 %v595, %v594
      %vm600 = vcmask 261120
      %v602 = vsel %vm600, %v572, 0
      %v605 = vsel %vm600, %v573, 0
      %v608 = vsel %vm600, %v574, 0
      %v611 = vsel %vm600, %v575, 0
      %v614 = vsel %vm600, %v576, 0
      %v617 = vsel %vm600, %v577, 0
      %v620 = vsel %vm600, %v578, 0
      %v623 = vsel %vm600, %v579, 0
      %v626 = vsel %vm600, %v580, 0
      %v629 = vsel %vm600, %v581, 0
      %v632 = vsel %vm600, %v582, 0
      %v635 = vsel %vm600, %v583, 0
      %v638 = vsel %vm600, %v584, 0
      %v641 = vsel %vm600, %v585, 0
      %v644 = vsel %vm600, %v586, 0
      %v647 = vsel %vm600, %v587, 0
      %649 = vmatprep.subr.bf16.mxu0 0
      %650 = vmatpush1.bf16.msra.mxu0 %v596
      %651 = vmatprep.subr.bf16.mxu0 0
      %652 = vmatpush1.bf16.msra.mxu0 %v597
      %653 = vmatprep.subr.bf16.mxu0 0
      %654 = vmatpush1.bf16.msra.mxu0 0
      %655 = vmatprep.subr.bf16.mxu0 0
      %656 = vmatpush1.bf16.msra.mxu0 0
      %657 = vmatprep.subr.bf16.mxu0 0
      %658 = vmatpush1.bf16.msra.mxu0 0
      %659 = vmatprep.subr.bf16.mxu0 0
      %660 = vmatpush1.bf16.msra.mxu0 0
      %661 = vmatprep.subr.bf16.mxu0 0
      %662 = vmatpush1.bf16.msra.mxu0 0
      %663 = vmatprep.subr.bf16.mxu0 0
      %664 = vmatpush1.bf16.msra.mxu0 0
      %665 = vmatprep.subr.bf16.mxu0 0
      %666 = vmatpush1.bf16.msra.mxu0 0
      %667 = vmatprep.subr.bf16.mxu0 0
      %668 = vmatpush1.bf16.msra.mxu0 0
      %669 = vmatprep.subr.bf16.mxu0 0
      %670 = vmatpush1.bf16.msra.mxu0 0
      %671 = vmatprep.subr.bf16.mxu0 0
      %672 = vmatpush1.bf16.msra.mxu0 0
      %673 = vmatprep.subr.bf16.mxu0 0
      %674 = vmatpush1.bf16.msra.mxu0 0
      %675 = vmatprep.subr.bf16.mxu0 0
      %676 = vmatpush1.bf16.msra.mxu0 0
      %677 = vmatprep.subr.bf16.mxu0 0
      %678 = vmatpush1.bf16.msra.mxu0 0
      %679 = vmatprep.subr.bf16.mxu0 0
      %680 = vmatpush1.bf16.msra.mxu0 0
      %681 = vmatprep.mubr.bf16.mxu0 0
      %682 = vmatmul.mubr.bf16.gmra.mrb[0].mxu0 %v602
      %v683 = vpop.f32.mrb[0].mxu0
      %v684 = vadd.f32 %v506, %v683
      %v685 = vpop.f32.mrb[0].mxu0
      %v686 = vpop.f32.mrb[0].mxu0
      %v687 = vadd.f32 %v506, %v686
      %v688 = vpop.f32.mrb[0].mxu0
      %689 = vmatprep.mubr.bf16.mxu0 0
      %690 = vmatmul.mubr.bf16.gmra.mrb[0].mxu0 %v605
      %v691 = vpop.f32.mrb[0].mxu0
      %v692 = vadd.f32 %v506, %v691
      %v693 = vpop.f32.mrb[0].mxu0
      %v694 = vpop.f32.mrb[0].mxu0
      %v695 = vadd.f32 %v506, %v694
      %v696 = vpop.f32.mrb[0].mxu0
      %697 = vmatprep.mubr.bf16.mxu0 0
      %698 = vmatmul.mubr.bf16.gmra.mrb[0].mxu0 %v608
      %v699 = vpop.f32.mrb[0].mxu0
      %v700 = vadd.f32 %v506, %v699
      %v701 = vpop.f32.mrb[0].mxu0
      %v702 = vpop.f32.mrb[0].mxu0
      %v703 = vadd.f32 %v506, %v702
      %v704 = vpop.f32.mrb[0].mxu0
      %705 = vmatprep.mubr.bf16.mxu0 0
      %706 = vmatmul.mubr.bf16.gmra.mrb[0].mxu0 %v611
      %v707 = vpop.f32.mrb[0].mxu0
      %v708 = vadd.f32 %v506, %v707
      %v709 = vpop.f32.mrb[0].mxu0
      %v710 = vpop.f32.mrb[0].mxu0
      %v711 = vadd.f32 %v506, %v710
      %v712 = vpop.f32.mrb[0].mxu0
      %713 = vmatprep.mubr.bf16.mxu0 0
      %714 = vmatmul.mubr.bf16.gmra.mrb[0].mxu0 %v614
      %v715 = vpop.f32.mrb[0].mxu0
      %v716 = vadd.f32 %v506, %v715
      %v717 = vpop.f32.mrb[0].mxu0
      %v718 = vpop.f32.mrb[0].mxu0
      %v719 = vadd.f32 %v506, %v718
      %v720 = vpop.f32.mrb[0].mxu0
      %721 = vmatprep.mubr.bf16.mxu0 0
      %722 = vmatmul.mubr.bf16.gmra.mrb[0].mxu0 %v617
      %v723 = vpop.f32.mrb[0].mxu0
      %v724 = vadd.f32 %v506, %v723
      %v725 = vpop.f32.mrb[0].mxu0
      %v726 = vpop.f32.mrb[0].mxu0
      %v727 = vadd.f32 %v506, %v726
      %v728 = vpop.f32.mrb[0].mxu0
      %729 = vmatprep.mubr.bf16.mxu0 0
      %730 = vmatmul.mubr.bf16.gmra.mrb[0].mxu0 %v620
      %v731 = vpop.f32.mrb[0].mxu0
      %v732 = vadd.f32 %v506, %v731
      %v733 = vpop.f32.mrb[0].mxu0
      %v734 = vpop.f32.mrb[0].mxu0
      %v735 = vadd.f32 %v506, %v734
      %v736 = vpop.f32.mrb[0].mxu0
      %737 = vmatprep.mubr.bf16.mxu0 0
      %738 = vmatmul.mubr.bf16.gmra.mrb[0].mxu0 %v623
      %v739 = vpop.f32.mrb[0].mxu0
      %v740 = vadd.f32 %v506, %v739
      %v741 = vpop.f32.mrb[0].mxu0
      %v742 = vpop.f32.mrb[0].mxu0
      %v743 = vadd.f32 %v506, %v742
      %v744 = vpop.f32.mrb[0].mxu0
      %745 = vmatprep.mubr.bf16.mxu0 0
      %746 = vmatmul.mubr.bf16.gmra.mrb[0].mxu0 %v626
      %v747 = vpop.f32.mrb[0].mxu0
      %v748 = vadd.f32 %v506, %v747
      %v749 = vpop.f32.mrb[0].mxu0
      %v750 = vpop.f32.mrb[0].mxu0
      %v751 = vadd.f32 %v506, %v750
      %v752 = vpop.f32.mrb[0].mxu0
      %753 = vmatprep.mubr.bf16.mxu0 0
      %754 = vmatmul.mubr.bf16.gmra.mrb[0].mxu0 %v629
      %v755 = vpop.f32.mrb[0].mxu0
      %v756 = vadd.f32 %v506, %v755
      %v757 = vpop.f32.mrb[0].mxu0
      %v758 = vpop.f32.mrb[0].mxu0
      %v759 = vadd.f32 %v506, %v758
      %v760 = vpop.f32.mrb[0].mxu0
      %761 = vmatprep.mubr.bf16.mxu0 0
      %762 = vmatmul.mubr.bf16.gmra.mrb[0].mxu0 %v632
      %v763 = vpop.f32.mrb[0].mxu0
      %v764 = vadd.f32 %v506, %v763
      %v765 = vpop.f32.mrb[0].mxu0
      %v766 = vpop.f32.mrb[0].mxu0
      %v767 = vadd.f32 %v506, %v766
      %v768 = vpop.f32.mrb[0].mxu0
      %769 = vmatprep.mubr.bf16.mxu0 0
      %770 = vmatmul.mubr.bf16.gmra.mrb[0].mxu0 %v635
      %v771 = vpop.f32.mrb[0].mxu0
      %v772 = vadd.f32 %v506, %v771
      %v773 = vpop.f32.mrb[0].mxu0
      %v774 = vpop.f32.mrb[0].mxu0
      %v775 = vadd.f32 %v506, %v774
      %v776 = vpop.f32.mrb[0].mxu0
      %777 = vmatprep.mubr.bf16.mxu0 0
      %778 = vmatmul.mubr.bf16.gmra.mrb[0].mxu0 %v638
      %v779 = vpop.f32.mrb[0].mxu0
      %v780 = vadd.f32 %v506, %v779
      %v781 = vpop.f32.mrb[0].mxu0
      %v782 = vpop.f32.mrb[0].mxu0
      %v783 = vadd.f32 %v506, %v782
      %v784 = vpop.f32.mrb[0].mxu0
      %785 = vmatprep.mubr.bf16.mxu0 0
      %786 = vmatmul.mubr.bf16.gmra.mrb[0].mxu0 %v641
      %v787 = vpop.f32.mrb[0].mxu0
      %v788 = vadd.f32 %v506, %v787
      %v789 = vpop.f32.mrb[0].mxu0
      %v790 = vpop.f32.mrb[0].mxu0
      %v791 = vadd.f32 %v506, %v790
      %v792 = vpop.f32.mrb[0].mxu0
      %793 = vmatprep.mubr.bf16.mxu0 0
      %794 = vmatmul.mubr.bf16.gmra.mrb[0].mxu0 %v644
      %v795 = vpop.f32.mrb[0].mxu0
      %v796 = vadd.f32 %v506, %v795
      %v797 = vpop.f32.mrb[0].mxu0
      %v798 = vpop.f32.mrb[0].mxu0
      %v799 = vadd.f32 %v506, %v798
      %v800 = vpop.f32.mrb[0].mxu0
      %801 = vmatprep.mubr.bf16.mxu0 0
      %802 = vmatmul.mubr.bf16.gmra.mrb[0].mxu0 %v647
      %v803 = vpop.f32.mrb[0].mxu0
      %v804 = vadd.f32 %v506, %v803
      %v805 = vpop.f32.mrb[0].mxu0
      %v806 = vpop.f32.mrb[0].mxu0
      %v807 = vadd.f32 %v506, %v806
      %v808 = vpop.f32.mrb[0].mxu0
      %809 = vdwg.mxu0
      %vm810 = vcmp.gt.f32.partialorder %v684, 0.0
      %vm811 = vcmp.gt.f32.partialorder %v687, 0.0
      %vm812 = vcmp.gt.f32.partialorder %v692, 0.0
      %vm813 = vcmp.gt.f32.partialorder %v695, 0.0
      %vm814 = vcmp.gt.f32.partialorder %v700, 0.0
      %vm815 = vcmp.gt.f32.partialorder %v703, 0.0
      %vm816 = vcmp.gt.f32.partialorder %v708, 0.0
      %vm817 = vcmp.gt.f32.partialorder %v711, 0.0
      %vm818 = vcmp.gt.f32.partialorder %v716, 0.0
      %vm819 = vcmp.gt.f32.partialorder %v719, 0.0
      %vm820 = vcmp.gt.f32.partialorder %v724, 0.0
      %vm821 = vcmp.gt.f32.partialorder %v727, 0.0
      %vm822 = vcmp.gt.f32.partialorder %v732, 0.0
      %vm823 = vcmp.gt.f32.partialorder %v735, 0.0
      %vm824 = vcmp.gt.f32.partialorder %v740, 0.0
      %vm825 = vcmp.gt.f32.partialorder %v743, 0.0
      %vm826 = vcmp.gt.f32.partialorder %v748, 0.0
      %vm827 = vcmp.gt.f32.partialorder %v751, 0.0
      %vm828 = vcmp.gt.f32.partialorder %v756, 0.0
      %vm829 = vcmp.gt.f32.partialorder %v759, 0.0
      %vm830 = vcmp.gt.f32.partialorder %v764, 0.0
      %vm831 = vcmp.gt.f32.partialorder %v767, 0.0
      %vm832 = vcmp.gt.f32.partialorder %v772, 0.0
      %vm833 = vcmp.gt.f32.partialorder %v775, 0.0
      %vm834 = vcmp.gt.f32.partialorder %v780, 0.0
      %vm835 = vcmp.gt.f32.partialorder %v783, 0.0
      %vm836 = vcmp.gt.f32.partialorder %v788, 0.0
      %vm837 = vcmp.gt.f32.partialorder %v791, 0.0
      %vm838 = vcmp.gt.f32.partialorder %v796, 0.0
      %vm839 = vcmp.gt.f32.partialorder %v799, 0.0
      %vm840 = vcmp.gt.f32.partialorder %v804, 0.0
      %vm841 = vcmp.gt.f32.partialorder %v807, 0.0
      %v842 = vmul.f32 %v684, 0.2
      %v843 = vmul.f32 %v687, 0.2
      %v844 = vmul.f32 %v692, 0.2
      %v845 = vmul.f32 %v695, 0.2
      %v846 = vmul.f32 %v700, 0.2
      %v847 = vmul.f32 %v703, 0.2
      %v848 = vmul.f32 %v708, 0.2
      %v849 = vmul.f32 %v711, 0.2
      %v850 = vmul.f32 %v716, 0.2
      %v851 = vmul.f32 %v719, 0.2
      %v852 = vmul.f32 %v724, 0.2
      %v853 = vmul.f32 %v727, 0.2
      %v854 = vmul.f32 %v732, 0.2
      %v855 = vmul.f32 %v735, 0.2
      %v856 = vmul.f32 %v740, 0.2
      %v857 = vmul.f32 %v743, 0.2
      %v858 = vmul.f32 %v748, 0.2
      %v859 = vmul.f32 %v751, 0.2
      %v860 = vmul.f32 %v756, 0.2
      %v861 = vmul.f32 %v759, 0.2
      %v862 = vmul.f32 %v764, 0.2
      %v863 = vmul.f32 %v767, 0.2
      %v864 = vmul.f32 %v772, 0.2
      %v865 = vmul.f32 %v775, 0.2
      %v866 = vmul.f32 %v780, 0.2
      %v867 = vmul.f32 %v783, 0.2
      %v868 = vmul.f32 %v788, 0.2
      %v869 = vmul.f32 %v791, 0.2
      %v870 = vmul.f32 %v796, 0.2
      %v871 = vmul.f32 %v799, 0.2
      %v872 = vmul.f32 %v804, 0.2
      %v873 = vmul.f32 %v807, 0.2
      %v874 = vsel %vm810, %v684, %v842
      %v875 = vsel %vm811, %v687, %v843
      %v876 = vsel %vm812, %v692, %v844
      %v877 = vsel %vm813, %v695, %v845
      %v878 = vsel %vm814, %v700, %v846
      %v879 = vsel %vm815, %v703, %v847
      %v880 = vsel %vm816, %v708, %v848
      %v881 = vsel %vm817, %v711, %v849
      %v882 = vsel %vm818, %v716, %v850
      %v883 = vsel %vm819, %v719, %v851
      %v884 = vsel %vm820, %v724, %v852
      %v885 = vsel %vm821, %v727, %v853
      %v886 = vsel %vm822, %v732, %v854
      %v887 = vsel %vm823, %v735, %v855
      %v888 = vsel %vm824, %v740, %v856
      %v889 = vsel %vm825, %v743, %v857
      %v890 = vsel %vm826, %v748, %v858
      %v891 = vsel %vm827, %v751, %v859
      %v892 = vsel %vm828, %v756, %v860
      %v893 = vsel %vm829, %v759, %v861
      %v894 = vsel %vm830, %v764, %v862
      %v895 = vsel %vm831, %v767, %v863
      %v896 = vsel %vm832, %v772, %v864
      %v897 = vsel %vm833, %v775, %v865
      %v898 = vsel %vm834, %v780, %v866
      %v899 = vsel %vm835, %v783, %v867
      %v900 = vsel %vm836, %v788, %v868
      %v901 = vsel %vm837, %v791, %v869
      %v902 = vsel %vm838, %v796, %v870
      %v903 = vsel %vm839, %v799, %v871
      %v904 = vsel %vm840, %v804, %v872
      %v905 = vsel %vm841, %v807, %v873
      %906 = vst.msk [vmem:[#allocation2] sm:$0xff] %vm600, %v874
      %907 = vst.msk [vmem:[#allocation2 + $0x8] sm:$0xff] %vm600, %v875
      %908 = vst.msk [vmem:[#allocation2 + $0x10] sm:$0xff] %vm600, %v876
      %909 = vst.msk [vmem:[#allocation2 + $0x18] sm:$0xff] %vm600, %v877
      %910 = vst.msk [vmem:[#allocation2 + $0x20] sm:$0xff] %vm600, %v878
      %911 = vst.msk [vmem:[#allocation2 + $0x28] sm:$0xff] %vm600, %v879
      %912 = vst.msk [vmem:[#allocation2 + $0x30] sm:$0xff] %vm600, %v880
      %913 = vst.msk [vmem:[#allocation2 + $0x38] sm:$0xff] %vm600, %v881
      %914 = vst.msk [vmem:[#allocation2 + $0x40] sm:$0xff] %vm600, %v882
      %915 = vst.msk [vmem:[#allocation2 + $0x48] sm:$0xff] %vm600, %v883
      %916 = vst.msk [vmem:[#allocation2 + $0x50] sm:$0xff] %vm600, %v884
      %917 = vst.msk [vmem:[#allocation2 + $0x58] sm:$0xff] %vm600, %v885
      %918 = vst.msk [vmem:[#allocation2 + $0x60] sm:$0xff] %vm600, %v886
      %919 = vst.msk [vmem:[#allocation2 + $0x68] sm:$0xff] %vm600, %v887
      %920 = vst.msk [vmem:[#allocation2 + $0x70] sm:$0xff] %vm600, %v888
      %921 = vst.msk [vmem:[#allocation2 + $0x78] sm:$0xff] %vm600, %v889
      %922 = vst.msk [vmem:[#allocation2 + $0x80] sm:$0xff] %vm600, %v890
      %923 = vst.msk [vmem:[#allocation2 + $0x88] sm:$0xff] %vm600, %v891
      %924 = vst.msk [vmem:[#allocation2 + $0x90] sm:$0xff] %vm600, %v892
      %925 = vst.msk [vmem:[#allocation2 + $0x98] sm:$0xff] %vm600, %v893
      %926 = vst.msk [vmem:[#allocation2 + $0xa0] sm:$0xff] %vm600, %v894
      %927 = vst.msk [vmem:[#allocation2 + $0xa8] sm:$0xff] %vm600, %v895
      %928 = vst.msk [vmem:[#allocation2 + $0xb0] sm:$0xff] %vm600, %v896
      %929 = vst.msk [vmem:[#allocation2 + $0xb8] sm:$0xff] %vm600, %v897
      %930 = vst.msk [vmem:[#allocation2 + $0xc0] sm:$0xff] %vm600, %v898
      %931 = vst.msk [vmem:[#allocation2 + $0xc8] sm:$0xff] %vm600, %v899
      %932 = vst.msk [vmem:[#allocation2 + $0xd0] sm:$0xff] %vm600, %v900
      %933 = vst.msk [vmem:[#allocation2 + $0xd8] sm:$0xff] %vm600, %v901
      %934 = vst.msk [vmem:[#allocation2 + $0xe0] sm:$0xff] %vm600, %v902
      %935 = vst.msk [vmem:[#allocation2 + $0xe8] sm:$0xff] %vm600, %v903
      %936 = vst.msk [vmem:[#allocation2 + $0xf0] sm:$0xff] %vm600, %v904
      %937 = vst.msk [vmem:[#allocation2 + $0xf8] sm:$0xff] %vm600, %v905
      %s938 = scalar_lea.vmem [#allocation2], 17
      %v939 = vld [vmem:[%s938] ss:$2 sm:$0xff]
      %v940 = vpack.c.bf16 %v939, %v939
      %v942 = vunpack.c.l.b16 %v940
      %v943 = vpack.c.b16 %v942, %v942
      %v945 = vshrl.u32 %v943, 16
      %v947 = vrot.slane %v945, 7
      %v948 = vshll.u32 %v943, 16
      %v950 = vor.u32 %v947, %v948
      %v951 = vrot.slane %v947, 4
      %s954 = scalar_lea.vmem [#allocation3], 8
      %vm955 = vcmask 257024
      %vm956 = vsmask.f32 7938
      %vm957 = vmand %vm955, %vm956
      %v958 = vld [vmem:[%s954] sm:$0xf]
      %v959 = vsel %vm957, %v950, %v958
      %960 = vst [vmem:[%s954] sm:$0xf] %v959
      %vm961 = vcmask 253952
      %vm962 = vmand %vm961, %vm390
      %v963 = vld [vmem:[%s954 + $0x4] sm:$0x1]
      %v964 = vsel %vm962, %v951, %v963
      %965 = vst [vmem:[%s954 + $0x4] sm:$0x1] %v964
      %s966 = scalar_lea.vmem [#allocation2], 49
      %v967 = vld [vmem:[%s966] ss:$2 sm:$0xff]
      %v968 = vpack.c.bf16 %v967, %v967
      %v970 = vunpack.c.l.b16 %v968
      %v971 = vpack.c.b16 %v970, %v970
      %v973 = vshrl.u32 %v971, 16
      %v975 = vrot.slane %v973, 7
      %v976 = vshll.u32 %v971, 16
      %v978 = vor.u32 %v975, %v976
      %v979 = vrot.slane %v975, 4
      %s982 = scalar_lea.vmem [#allocation3], 16
      %v983 = vld [vmem:[%s982] sm:$0xf]
      %v984 = vsel %vm957, %v978, %v983
      %985 = vst [vmem:[%s982] sm:$0xf] %v984
      %v986 = vld [vmem:[%s982 + $0x4] sm:$0x1]
      %v987 = vsel %vm962, %v979, %v986
      %988 = vst [vmem:[%s982 + $0x4] sm:$0x1] %v987
      %s989 = scalar_lea.vmem [#allocation2], 81
      %v990 = vld [vmem:[%s989] ss:$2 sm:$0xff]
      %v991 = vpack.c.bf16 %v990, %v990
      %v993 = vunpack.c.l.b16 %v991
      %v994 = vpack.c.b16 %v993, %v993
      %v996 = vshrl.u32 %v994, 16
      %v998 = vrot.slane %v996, 7
      %v999 = vshll.u32 %v994, 16
      %v1001 = vor.u32 %v998, %v999
      %v1002 = vrot.slane %v998, 4
      %s1005 = scalar_lea.vmem [#allocation3], 24
      %v1006 = vld [vmem:[%s1005] sm:$0xf]
      %v1007 = vsel %vm957, %v1001, %v1006
      %1008 = vst [vmem:[%s1005] sm:$0xf] %v1007
      %v1009 = vld [vmem:[%s1005 + $0x4] sm:$0x1]
      %v1010 = vsel %vm962, %v1002, %v1009
      %1011 = vst [vmem:[%s1005 + $0x4] sm:$0x1] %v1010
      %s1012 = scalar_lea.vmem [#allocation2], 113
      %v1013 = vld [vmem:[%s1012] ss:$2 sm:$0xff]
      %v1014 = vpack.c.bf16 %v1013, %v1013
      %v1016 = vunpack.c.l.b16 %v1014
      %v1017 = vpack.c.b16 %v1016, %v1016
      %v1019 = vshrl.u32 %v1017, 16
      %v1021 = vrot.slane %v1019, 7
      %v1022 = vshll.u32 %v1017, 16
      %v1024 = vor.u32 %v1021, %v1022
      %v1025 = vrot.slane %v1021, 4
      %s1028 = scalar_lea.vmem [#allocation3], 32
      %v1029 = vld [vmem:[%s1028] sm:$0xf]
      %v1030 = vsel %vm957, %v1024, %v1029
      %1031 = vst [vmem:[%s1028] sm:$0xf] %v1030
      %v1032 = vld [vmem:[%s1028 + $0x4] sm:$0x1]
      %v1033 = vsel %vm962, %v1025, %v1032
      %1034 = vst [vmem:[%s1028 + $0x4] sm:$0x1] %v1033
      %s1035 = scalar_lea.vmem [#allocation2], 145
      %v1036 = vld [vmem:[%s1035] ss:$2 sm:$0xff]
      %v1037 = vpack.c.bf16 %v1036, %v1036
      %v1039 = vunpack.c.l.b16 %v1037
      %v1040 = vpack.c.b16 %v1039, %v1039
      %v1042 = vshrl.u32 %v1040, 16
      %v1044 = vrot.slane %v1042, 7
      %v1045 = vshll.u32 %v1040, 16
      %v1047 = vor.u32 %v1044, %v1045
      %v1048 = vrot.slane %v1044, 4
      %s1051 = scalar_lea.vmem [#allocation3], 40
      %v1052 = vld [vmem:[%s1051] sm:$0xf]
      %v1053 = vsel %vm957, %v1047, %v1052
      %1054 = vst [vmem:[%s1051] sm:$0xf] %v1053
      %v1055 = vld [vmem:[%s1051 + $0x4] sm:$0x1]
      %v1056 = vsel %vm962, %v1048, %v1055
      %1057 = vst [vmem:[%s1051 + $0x4] sm:$0x1] %v1056
      %s1058 = scalar_lea.vmem [#allocation2], 177
      %v1059 = vld [vmem:[%s1058] ss:$2 sm:$0xff]
      %v1060 = vpack.c.bf16 %v1059, %v1059
      %v1062 = vunpack.c.l.b16 %v1060
      %v1063 = vpack.c.b16 %v1062, %v1062
      %v1065 = vshrl.u32 %v1063, 16
      %v1067 = vrot.slane %v1065, 7
      %v1068 = vshll.u32 %v1063, 16
      %v1070 = vor.u32 %v1067, %v1068
      %v1071 = vrot.slane %v1067, 4
      %s1074 = scalar_lea.vmem [#allocation3], 48
      %v1075 = vld [vmem:[%s1074] sm:$0xf]
      %v1076 = vsel %vm957, %v1070, %v1075
      %1077 = vst [vmem:[%s1074] sm:$0xf] %v1076
      %v1078 = vld [vmem:[%s1074 + $0x4] sm:$0x1]
      %v1079 = vsel %vm962, %v1071, %v1078
      %1080 = vst [vmem:[%s1074 + $0x4] sm:$0x1] %v1079
      %s1081 = scalar_lea.vmem [#allocation2], 209
      %v1082 = vld [vmem:[%s1081] ss:$2 sm:$0xff]
      %v1083 = vpack.c.bf16 %v1082, %v1082
      %v1085 = vunpack.c.l.b16 %v1083
      %v1086 = vpack.c.b16 %v1085, %v1085
      %v1088 = vshrl.u32 %v1086, 16
      %v1090 = vrot.slane %v1088, 7
      %v1091 = vshll.u32 %v1086, 16
      %v1093 = vor.u32 %v1090, %v1091
      %v1094 = vrot.slane %v1090, 4
      %s1097 = scalar_lea.vmem [#allocation3], 56
      %v1098 = vld [vmem:[%s1097] sm:$0xf]
      %v1099 = vsel %vm957, %v1093, %v1098
      %1100 = vst [vmem:[%s1097] sm:$0xf] %v1099
      %v1101 = vld [vmem:[%s1097 + $0x4] sm:$0x1]
      %v1102 = vsel %vm962, %v1094, %v1101
      %1103 = vst [vmem:[%s1097 + $0x4] sm:$0x1] %v1102
      %s1104 = scalar_lea.vmem [#allocation2], 241
      %v1105 = vld [vmem:[%s1104] ss:$2 sm:$0xff]
      %v1106 = vpack.c.bf16 %v1105, %v1105
      %v1108 = vunpack.c.l.b16 %v1106
      %v1109 = vpack.c.b16 %v1108, %v1108
      %v1111 = vshrl.u32 %v1109, 16
      %v1113 = vrot.slane %v1111, 7
      %v1114 = vshll.u32 %v1109, 16
      %v1116 = vor.u32 %v1113, %v1114
      %v1117 = vrot.slane %v1113, 4
      %s1120 = scalar_lea.vmem [#allocation3], 64
      %v1121 = vld [vmem:[%s1120] sm:$0xf]
      %v1122 = vsel %vm957, %v1116, %v1121
      %1123 = vst [vmem:[%s1120] sm:$0xf] %v1122
      %v1124 = vld [vmem:[%s1120 + $0x4] sm:$0x1]
      %v1125 = vsel %vm962, %v1117, %v1124
      %1126 = vst [vmem:[%s1120 + $0x4] sm:$0x1] %v1125
      %s1127 = scalar_lea.vmem [#allocation2], 16
      %v1128 = vld [vmem:[%s1127] ss:$2 sm:$0xff]
      %v1129 = vpack.c.bf16 %v1128, %v1128
      %v1131 = vunpack.c.l.b16 %v1129
      %v1132 = vpack.c.b16 %v1131, %v1131
      %1133 = vrot.lane.b32.xlu0 %v1132, 32
      %v1134 = vpop.permute.xlu0 %1133
      %vm1136 = vcmask 519424
      %1137 = vst.msk [vmem:[%s954] sm:$0xf] %vm1136, %v1134
      %s1138 = scalar_lea.vmem [#allocation2], 48
      %v1139 = vld [vmem:[%s1138] ss:$2 sm:$0xff]
      %v1140 = vpack.c.bf16 %v1139, %v1139
      %v1142 = vunpack.c.l.b16 %v1140
      %v1143 = vpack.c.b16 %v1142, %v1142
      %1144 = vrot.lane.b32.xlu0 %v1143, 32
      %v1145 = vpop.permute.xlu0 %1144
      %1147 = vst.msk [vmem:[%s982] sm:$0xf] %vm1136, %v1145
      %s1148 = scalar_lea.vmem [#allocation2], 80
      %v1149 = vld [vmem:[%s1148] ss:$2 sm:$0xff]
      %v1150 = vpack.c.bf16 %v1149, %v1149
      %v1152 = vunpack.c.l.b16 %v1150
      %v1153 = vpack.c.b16 %v1152, %v1152
      %1154 = vrot.lane.b32.xlu0 %v1153, 32
      %v1155 = vpop.permute.xlu0 %1154
      %1157 = vst.msk [vmem:[%s1005] sm:$0xf] %vm1136, %v1155
      %s1158 = scalar_lea.vmem [#allocation2], 112
      %v1159 = vld [vmem:[%s1158] ss:$2 sm:$0xff]
      %v1160 = vpack.c.bf16 %v1159, %v1159
      %v1162 = vunpack.c.l.b16 %v1160
      %v1163 = vpack.c.b16 %v1162, %v1162
      %1164 = vrot.lane.b32.xlu0 %v1163, 32
      %v1165 = vpop.permute.xlu0 %1164
      %1167 = vst.msk [vmem:[%s1028] sm:$0xf] %vm1136, %v1165
      %s1168 = scalar_lea.vmem [#allocation2], 144
      %v1169 = vld [vmem:[%s1168] ss:$2 sm:$0xff]
      %v1170 = vpack.c.bf16 %v1169, %v1169
      %v1172 = vunpack.c.l.b16 %v1170
      %v1173 = vpack.c.b16 %v1172, %v1172
      %1174 = vrot.lane.b32.xlu0 %v1173, 32
      %v1175 = vpop.permute.xlu0 %1174
      %1177 = vst.msk [vmem:[%s1051] sm:$0xf] %vm1136, %v1175
      %s1178 = scalar_lea.vmem [#allocation2], 176
      %v1179 = vld [vmem:[%s1178] ss:$2 sm:$0xff]
      %v1180 = vpack.c.bf16 %v1179, %v1179
      %v1182 = vunpack.c.l.b16 %v1180
      %v1183 = vpack.c.b16 %v1182, %v1182
      %1184 = vrot.lane.b32.xlu0 %v1183, 32
      %v1185 = vpop.permute.xlu0 %1184
      %1187 = vst.msk [vmem:[%s1074] sm:$0xf] %vm1136, %v1185
      %s1188 = scalar_lea.vmem [#allocation2], 208
      %v1189 = vld [vmem:[%s1188] ss:$2 sm:$0xff]
      %v1190 = vpack.c.bf16 %v1189, %v1189
      %v1192 = vunpack.c.l.b16 %v1190
      %v1193 = vpack.c.b16 %v1192, %v1192
      %1194 = vrot.lane.b32.xlu0 %v1193, 32
      %v1195 = vpop.permute.xlu0 %1194
      %1197 = vst.msk [vmem:[%s1097] sm:$0xf] %vm1136, %v1195
      %s1198 = scalar_lea.vmem [#allocation2], 240
      %v1199 = vld [vmem:[%s1198] ss:$2 sm:$0xff]
      %v1200 = vpack.c.bf16 %v1199, %v1199
      %v1202 = vunpack.c.l.b16 %v1200
      %v1203 = vpack.c.b16 %v1202, %v1202
      %1204 = vrot.lane.b32.xlu0 %v1203, 32
      %v1205 = vpop.permute.xlu0 %1204
      %1207 = vst.msk [vmem:[%s1120] sm:$0xf] %vm1136, %v1205
      %s1208 = scalar_lea.vmem [#allocation2], 1
      %v1209 = vld [vmem:[%s1208] ss:$2 sm:$0xff]
      %v1210 = vpack.c.bf16 %v1209, %v1209
      %v1212 = vunpack.c.l.b16 %v1210
      %v1213 = vpack.c.b16 %v1212, %v1212
      %v1215 = vshrl.u32 %v1213, 16
      %v1217 = vrot.slane %v1215, 7
      %v1218 = vshll.u32 %v1213, 16
      %v1220 = vor.u32 %v1217, %v1218
      %v1221 = vrot.slane %v1217, 4
      %1222 = vrot.lane.b32.xlu0 %v1220, 64
      %v1223 = vpop.permute.xlu0 %1222
      %1224 = vrot.lane.b32.xlu0 %v1221, 64
      %v1225 = vpop.permute.xlu0 %1224
      %vm1228 = vcmask 781824
      %vm1229 = vmand %vm1228, %vm956
      %v1230 = vld [vmem:[#allocation3] sm:$0xf]
      %v1231 = vsel %vm1229, %v1223, %v1230
      %1232 = vst [vmem:[#allocation3] sm:$0xf] %v1231
      %vm1233 = vcmask 778752
      %vm1234 = vmand %vm1233, %vm390
      %v1235 = vld [vmem:[#allocation3 + $0x4] sm:$0x1]
      %v1236 = vsel %vm1234, %v1225, %v1235
      %1237 = vst [vmem:[#allocation3 + $0x4] sm:$0x1] %v1236
      %s1238 = scalar_lea.vmem [#allocation2], 33
      %v1239 = vld [vmem:[%s1238] ss:$2 sm:$0xff]
      %v1240 = vpack.c.bf16 %v1239, %v1239
      %v1242 = vunpack.c.l.b16 %v1240
      %v1243 = vpack.c.b16 %v1242, %v1242
      %v1245 = vshrl.u32 %v1243, 16
      %v1247 = vrot.slane %v1245, 7
      %v1248 = vshll.u32 %v1243, 16
      %v1250 = vor.u32 %v1247, %v1248
      %v1251 = vrot.slane %v1247, 4
      %1252 = vrot.lane.b32.xlu0 %v1250, 64
      %v1253 = vpop.permute.xlu0 %1252
      %1254 = vrot.lane.b32.xlu0 %v1251, 64
      %v1255 = vpop.permute.xlu0 %1254
      %v1258 = vld [vmem:[%s954] sm:$0xf]
      %v1259 = vsel %vm1229, %v1253, %v1258
      %1260 = vst [vmem:[%s954] sm:$0xf] %v1259
      %v1261 = vld [vmem:[%s954 + $0x4] sm:$0x1]
      %v1262 = vsel %vm1234, %v1255, %v1261
      %1263 = vst [vmem:[%s954 + $0x4] sm:$0x1] %v1262
      %s1264 = scalar_lea.vmem [#allocation2], 65
      %v1265 = vld [vmem:[%s1264] ss:$2 sm:$0xff]
      %v1266 = vpack.c.bf16 %v1265, %v1265
      %v1268 = vunpack.c.l.b16 %v1266
      %v1269 = vpack.c.b16 %v1268, %v1268
      %v1271 = vshrl.u32 %v1269, 16
      %v1273 = vrot.slane %v1271, 7
      %v1274 = vshll.u32 %v1269, 16
      %v1276 = vor.u32 %v1273, %v1274
      %v1277 = vrot.slane %v1273, 4
      %1278 = vrot.lane.b32.xlu0 %v1276, 64
      %v1279 = vpop.permute.xlu0 %1278
      %1280 = vrot.lane.b32.xlu0 %v1277, 64
      %v1281 = vpop.permute.xlu0 %1280
      %v1284 = vld [vmem:[%s982] sm:$0xf]
      %v1285 = vsel %vm1229, %v1279, %v1284
      %1286 = vst [vmem:[%s982] sm:$0xf] %v1285
      %v1287 = vld [vmem:[%s982 + $0x4] sm:$0x1]
      %v1288 = vsel %vm1234, %v1281, %v1287
      %1289 = vst [vmem:[%s982 + $0x4] sm:$0x1] %v1288
      %s1290 = scalar_lea.vmem [#allocation2], 97
      %v1291 = vld [vmem:[%s1290] ss:$2 sm:$0xff]
      %v1292 = vpack.c.bf16 %v1291, %v1291
      %v1294 = vunpack.c.l.b16 %v1292
      %v1295 = vpack.c.b16 %v1294, %v1294
      %v1297 = vshrl.u32 %v1295, 16
      %v1299 = vrot.slane %v1297, 7
      %v1300 = vshll.u32 %v1295, 16
      %v1302 = vor.u32 %v1299, %v1300
      %v1303 = vrot.slane %v1299, 4
      %1304 = vrot.lane.b32.xlu0 %v1302, 64
      %v1305 = vpop.permute.xlu0 %1304
      %1306 = vrot.lane.b32.xlu0 %v1303, 64
      %v1307 = vpop.permute.xlu0 %1306
      %v1310 = vld [vmem:[%s1005] sm:$0xf]
      %v1311 = vsel %vm1229, %v1305, %v1310
      %1312 = vst [vmem:[%s1005] sm:$0xf] %v1311
      %v1313 = vld [vmem:[%s1005 + $0x4] sm:$0x1]
      %v1314 = vsel %vm1234, %v1307, %v1313
      %1315 = vst [vmem:[%s1005 + $0x4] sm:$0x1] %v1314
      %s1316 = scalar_lea.vmem [#allocation2], 129
      %v1317 = vld [vmem:[%s1316] ss:$2 sm:$0xff]
      %v1318 = vpack.c.bf16 %v1317, %v1317
      %v1320 = vunpack.c.l.b16 %v1318
      %v1321 = vpack.c.b16 %v1320, %v1320
      %v1323 = vshrl.u32 %v1321, 16
      %v1325 = vrot.slane %v1323, 7
      %v1326 = vshll.u32 %v1321, 16
      %v1328 = vor.u32 %v1325, %v1326
      %v1329 = vrot.slane %v1325, 4
      %1330 = vrot.lane.b32.xlu0 %v1328, 64
      %v1331 = vpop.permute.xlu0 %1330
      %1332 = vrot.lane.b32.xlu0 %v1329, 64
      %v1333 = vpop.permute.xlu0 %1332
      %v1336 = vld [vmem:[%s1028] sm:$0xf]
      %v1337 = vsel %vm1229, %v1331, %v1336
      %1338 = vst [vmem:[%s1028] sm:$0xf] %v1337
      %v1339 = vld [vmem:[%s1028 + $0x4] sm:$0x1]
      %v1340 = vsel %vm1234, %v1333, %v1339
      %1341 = vst [vmem:[%s1028 + $0x4] sm:$0x1] %v1340
      %s1342 = scalar_lea.vmem [#allocation2], 161
      %v1343 = vld [vmem:[%s1342] ss:$2 sm:$0xff]
      %v1344 = vpack.c.bf16 %v1343, %v1343
      %v1346 = vunpack.c.l.b16 %v1344
      %v1347 = vpack.c.b16 %v1346, %v1346
      %v1349 = vshrl.u32 %v1347, 16
      %v1351 = vrot.slane %v1349, 7
      %v1352 = vshll.u32 %v1347, 16
      %v1354 = vor.u32 %v1351, %v1352
      %v1355 = vrot.slane %v1351, 4
      %1356 = vrot.lane.b32.xlu0 %v1354, 64
      %v1357 = vpop.permute.xlu0 %1356
      %1358 = vrot.lane.b32.xlu0 %v1355, 64
      %v1359 = vpop.permute.xlu0 %1358
      %v1362 = vld [vmem:[%s1051] sm:$0xf]
      %v1363 = vsel %vm1229, %v1357, %v1362
      %1364 = vst [vmem:[%s1051] sm:$0xf] %v1363
      %v1365 = vld [vmem:[%s1051 + $0x4] sm:$0x1]
      %v1366 = vsel %vm1234, %v1359, %v1365
      %1367 = vst [vmem:[%s1051 + $0x4] sm:$0x1] %v1366
      %s1368 = scalar_lea.vmem [#allocation2], 193
      %v1369 = vld [vmem:[%s1368] ss:$2 sm:$0xff]
      %v1370 = vpack.c.bf16 %v1369, %v1369
      %v1372 = vunpack.c.l.b16 %v1370
      %v1373 = vpack.c.b16 %v1372, %v1372
      %v1375 = vshrl.u32 %v1373, 16
      %v1377 = vrot.slane %v1375, 7
      %v1378 = vshll.u32 %v1373, 16
      %v1380 = vor.u32 %v1377, %v1378
      %v1381 = vrot.slane %v1377, 4
      %1382 = vrot.lane.b32.xlu0 %v1380, 64
      %v1383 = vpop.permute.xlu0 %1382
      %1384 = vrot.lane.b32.xlu0 %v1381, 64
      %v1385 = vpop.permute.xlu0 %1384
      %v1388 = vld [vmem:[%s1074] sm:$0xf]
      %v1389 = vsel %vm1229, %v1383, %v1388
      %1390 = vst [vmem:[%s1074] sm:$0xf] %v1389
      %v1391 = vld [vmem:[%s1074 + $0x4] sm:$0x1]
      %v1392 = vsel %vm1234, %v1385, %v1391
      %1393 = vst [vmem:[%s1074 + $0x4] sm:$0x1] %v1392
      %s1394 = scalar_lea.vmem [#allocation2], 225
      %v1395 = vld [vmem:[%s1394] ss:$2 sm:$0xff]
      %v1396 = vpack.c.bf16 %v1395, %v1395
      %v1398 = vunpack.c.l.b16 %v1396
      %v1399 = vpack.c.b16 %v1398, %v1398
      %v1401 = vshrl.u32 %v1399, 16
      %v1403 = vrot.slane %v1401, 7
      %v1404 = vshll.u32 %v1399, 16
      %v1406 = vor.u32 %v1403, %v1404
      %v1407 = vrot.slane %v1403, 4
      %1408 = vrot.lane.b32.xlu0 %v1406, 64
      %v1409 = vpop.permute.xlu0 %1408
      %1410 = vrot.lane.b32.xlu0 %v1407, 64
      %v1411 = vpop.permute.xlu0 %1410
      %v1414 = vld [vmem:[%s1097] sm:$0xf]
      %v1415 = vsel %vm1229, %v1409, %v1414
      %1416 = vst [vmem:[%s1097] sm:$0xf] %v1415
      %v1417 = vld [vmem:[%s1097 + $0x4] sm:$0x1]
      %v1418 = vsel %vm1234, %v1411, %v1417
      %1419 = vst [vmem:[%s1097 + $0x4] sm:$0x1] %v1418
      %v1420 = vld [vmem:[#allocation2] ss:$2 sm:$0xff]
      %v1421 = vpack.c.bf16 %v1420, %v1420
      %v1423 = vunpack.c.l.b16 %v1421
      %v1424 = vpack.c.b16 %v1423, %v1423
      %1425 = vrot.lane.b32.xlu0 %v1424, 96
      %v1426 = vpop.permute.xlu0 %1425
      %vm1428 = vcmask 1044224
      %1429 = vst.msk [vmem:[#allocation3] sm:$0xf] %vm1428, %v1426
      %s1430 = scalar_lea.vmem [#allocation2], 32
      %v1431 = vld [vmem:[%s1430] ss:$2 sm:$0xff]
      %v1432 = vpack.c.bf16 %v1431, %v1431
      %v1434 = vunpack.c.l.b16 %v1432
      %v1435 = vpack.c.b16 %v1434, %v1434
      %1436 = vrot.lane.b32.xlu0 %v1435, 96
      %v1437 = vpop.permute.xlu0 %1436
      %1439 = vst.msk [vmem:[%s954] sm:$0xf] %vm1428, %v1437
      %s1440 = scalar_lea.vmem [#allocation2], 64
      %v1441 = vld [vmem:[%s1440] ss:$2 sm:$0xff]
      %v1442 = vpack.c.bf16 %v1441, %v1441
      %v1444 = vunpack.c.l.b16 %v1442
      %v1445 = vpack.c.b16 %v1444, %v1444
      %1446 = vrot.lane.b32.xlu0 %v1445, 96
      %v1447 = vpop.permute.xlu0 %1446
      %1449 = vst.msk [vmem:[%s982] sm:$0xf] %vm1428, %v1447
      %s1450 = scalar_lea.vmem [#allocation2], 96
      %v1451 = vld [vmem:[%s1450] ss:$2 sm:$0xff]
      %v1452 = vpack.c.bf16 %v1451, %v1451
      %v1454 = vunpack.c.l.b16 %v1452
      %v1455 = vpack.c.b16 %v1454, %v1454
      %1456 = vrot.lane.b32.xlu0 %v1455, 96
      %v1457 = vpop.permute.xlu0 %1456
      %1459 = vst.msk [vmem:[%s1005] sm:$0xf] %vm1428, %v1457
      %s1460 = scalar_lea.vmem [#allocation2], 128
      %v1461 = vld [vmem:[%s1460] ss:$2 sm:$0xff]
      %v1462 = vpack.c.bf16 %v1461, %v1461
      %v1464 = vunpack.c.l.b16 %v1462
      %v1465 = vpack.c.b16 %v1464, %v1464
      %1466 = vrot.lane.b32.xlu0 %v1465, 96
      %v1467 = vpop.permute.xlu0 %1466
      %1469 = vst.msk [vmem:[%s1028] sm:$0xf] %vm1428, %v1467
      %s1470 = scalar_lea.vmem [#allocation2], 160
      %v1471 = vld [vmem:[%s1470] ss:$2 sm:$0xff]
      %v1472 = vpack.c.bf16 %v1471, %v1471
      %v1474 = vunpack.c.l.b16 %v1472
      %v1475 = vpack.c.b16 %v1474, %v1474
      %1476 = vrot.lane.b32.xlu0 %v1475, 96
      %v1477 = vpop.permute.xlu0 %1476
      %1479 = vst.msk [vmem:[%s1051] sm:$0xf] %vm1428, %v1477
      %s1480 = scalar_lea.vmem [#allocation2], 192
      %v1481 = vld [vmem:[%s1480] ss:$2 sm:$0xff]
      %v1482 = vpack.c.bf16 %v1481, %v1481
      %v1484 = vunpack.c.l.b16 %v1482
      %v1485 = vpack.c.b16 %v1484, %v1484
      %1486 = vrot.lane.b32.xlu0 %v1485, 96
      %v1487 = vpop.permute.xlu0 %1486
      %1489 = vst.msk [vmem:[%s1074] sm:$0xf] %vm1428, %v1487
      %s1490 = scalar_lea.vmem [#allocation2], 224
      %v1491 = vld [vmem:[%s1490] ss:$2 sm:$0xff]
      %v1492 = vpack.c.bf16 %v1491, %v1491
      %v1494 = vunpack.c.l.b16 %v1492
      %v1495 = vpack.c.b16 %v1494, %v1494
      %1496 = vrot.lane.b32.xlu0 %v1495, 96
      %v1497 = vpop.permute.xlu0 %1496
      %1499 = vst.msk [vmem:[%s1097] sm:$0xf] %vm1428, %v1497
      %v1500 = vld [vmem:[#allocation3] sm:$0xf]
      %v1501 = vld [vmem:[#allocation3 + $0x8] sm:$0xf]
      %v1502 = vld [vmem:[#allocation3 + $0x10] sm:$0xf]
      %v1503 = vld [vmem:[#allocation3 + $0x18] sm:$0xf]
      %v1504 = vld [vmem:[#allocation3 + $0x20] sm:$0xf]
      %v1505 = vld [vmem:[#allocation3 + $0x28] sm:$0xf]
      %v1506 = vld [vmem:[#allocation3 + $0x30] sm:$0xf]
      %v1507 = vld [vmem:[#allocation3 + $0x38] sm:$0xf]
      %v1509 = vunpack.c.l.b16 %v1501
      %v1510 = vpack.c.b16 %v1509, %v1509
      %v1512 = vunpack.c.l.b16 %v1503
      %v1513 = vpack.c.b16 %v1512, %v1512
      %v1515 = vunpack.c.l.b16 %v1505
      %v1516 = vpack.c.b16 %v1515, %v1515
      %v1518 = vunpack.c.l.b16 %v1507
      %v1519 = vpack.c.b16 %v1518, %v1518
      %vm1520 = vcmask 1043456
      %v1523 = vsel %vm1520, %v1500, %v1510
      %v1527 = vsel %vm1520, %v1502, %v1513
      %v1531 = vsel %vm1520, %v1504, %v1516
      %v1535 = vsel %vm1520, %v1506, %v1519
      %v1537 = vld [vmem:[%s2] sm:$0xf]
      %v1538 = vld [vmem:[%s2 + $0x4] sm:$0xf]
      %v1539 = vld [vmem:[%s2 + $0x8] sm:$0xf]
      %v1540 = vld [vmem:[%s2 + $0xc] sm:$0xf]
      %v1541 = vld [vmem:[%s2 + $0x10] sm:$0xf]
      %v1542 = vld [vmem:[%s2 + $0x14] sm:$0xf]
      %v1543 = vld [vmem:[%s2 + $0x18] sm:$0xf]
      %v1544 = vld [vmem:[%s2 + $0x1c] sm:$0xf]
      %v1545 = vld [vmem:[%s2 + $0x20] sm:$0xf]
      %v1546 = vld [vmem:[%s2 + $0x24] sm:$0xf]
      %v1547 = vld [vmem:[%s2 + $0x28] sm:$0xf]
      %v1548 = vld [vmem:[%s2 + $0x2c] sm:$0xf]
      %v1549 = vld [vmem:[%s2 + $0x30] sm:$0xf]
      %v1550 = vld [vmem:[%s2 + $0x34] sm:$0xf]
      %v1551 = vld [vmem:[%s2 + $0x38] sm:$0xf]
      %v1552 = vld [vmem:[%s2 + $0x3c] sm:$0xf]
      %v1553 = vld [vmem:[#allocation3 + $0x4] sm:$0x1]
      %v1554 = vld [vmem:[#allocation3 + $0xc] sm:$0x1]
      %v1555 = vld [vmem:[#allocation3 + $0x14] sm:$0x1]
      %v1556 = vld [vmem:[#allocation3 + $0x1c] sm:$0x1]
      %v1557 = vld [vmem:[#allocation3 + $0x24] sm:$0x1]
      %v1558 = vld [vmem:[#allocation3 + $0x2c] sm:$0x1]
      %v1559 = vld [vmem:[#allocation3 + $0x34] sm:$0x1]
      %v1560 = vld [vmem:[#allocation3 + $0x3c] sm:$0x1]
      %v1563 = vunpack.c.l.b16 %v1500
      %v1564 = vunpack.c.l.b16 %v1553
      %v1565 = vpack.c.b16 %v1564, %v1563
      %v1567 = vshrl.u32 %v1565, 16
      %v1569 = vshll.u32 %v1565, 16
      %v1571 = vrot.slane %v1569, 1
      %v1572 = vor.u32 %v1567, %v1571
      %v1574 = vunpack.c.l.b16 %v1554
      %v1575 = vpack.c.b16 %v1574, %v1509
      %v1577 = vshrl.u32 %v1575, 16
      %v1579 = vrot.slane %v1577, 4
      %v1580 = vshll.u32 %v1575, 16
      %v1582 = vrot.slane %v1580, 5
      %v1583 = vor.u32 %v1579, %v1582
      %v1586 = vunpack.c.l.b16 %v1502
      %v1587 = vunpack.c.l.b16 %v1555
      %v1588 = vpack.c.b16 %v1587, %v1586
      %v1590 = vshrl.u32 %v1588, 16
      %v1592 = vshll.u32 %v1588, 16
      %v1594 = vrot.slane %v1592, 1
      %v1595 = vor.u32 %v1590, %v1594
      %v1597 = vunpack.c.l.b16 %v1556
      %v1598 = vpack.c.b16 %v1597, %v1512
      %v1600 = vshrl.u32 %v1598, 16
      %v1602 = vrot.slane %v1600, 4
      %v1603 = vshll.u32 %v1598, 16
      %v1605 = vrot.slane %v1603, 5
      %v1606 = vor.u32 %v1602, %v1605
      %v1609 = vunpack.c.l.b16 %v1504
      %v1610 = vunpack.c.l.b16 %v1557
      %v1611 = vpack.c.b16 %v1610, %v1609
      %v1613 = vshrl.u32 %v1611, 16
      %v1615 = vshll.u32 %v1611, 16
      %v1617 = vrot.slane %v1615, 1
      %v1618 = vor.u32 %v1613, %v1617
      %v1620 = vunpack.c.l.b16 %v1558
      %v1621 = vpack.c.b16 %v1620, %v1515
      %v1623 = vshrl.u32 %v1621, 16
      %v1625 = vrot.slane %v1623, 4
      %v1626 = vshll.u32 %v1621, 16
      %v1628 = vrot.slane %v1626, 5
      %v1629 = vor.u32 %v1625, %v1628
      %v1632 = vunpack.c.l.b16 %v1506
      %v1633 = vunpack.c.l.b16 %v1559
      %v1634 = vpack.c.b16 %v1633, %v1632
      %v1636 = vshrl.u32 %v1634, 16
      %v1638 = vshll.u32 %v1634, 16
      %v1640 = vrot.slane %v1638, 1
      %v1641 = vor.u32 %v1636, %v1640
      %v1643 = vunpack.c.l.b16 %v1560
      %v1644 = vpack.c.b16 %v1643, %v1518
      %v1646 = vshrl.u32 %v1644, 16
      %v1648 = vrot.slane %v1646, 4
      %v1649 = vshll.u32 %v1644, 16
      %v1651 = vrot.slane %v1649, 5
      %v1652 = vor.u32 %v1648, %v1651
      %v1655 = vsel %vm1520, %v1572, %v1583
      %v1659 = vsel %vm1520, %v1595, %v1606
      %v1663 = vsel %vm1520, %v1618, %v1629
      %v1667 = vsel %vm1520, %v1641, %v1652
      %s1669 = scalar_lea.vmem %s2, 64
      %v1670 = vld [vmem:[%s1669] sm:$0xf]
      %v1671 = vld [vmem:[%s1669 + $0x4] sm:$0xf]
      %v1672 = vld [vmem:[%s1669 + $0x8] sm:$0xf]
      %v1673 = vld [vmem:[%s1669 + $0xc] sm:$0xf]
      %v1674 = vld [vmem:[%s1669 + $0x10] sm:$0xf]
      %v1675 = vld [vmem:[%s1669 + $0x14] sm:$0xf]
      %v1676 = vld [vmem:[%s1669 + $0x18] sm:$0xf]
      %v1677 = vld [vmem:[%s1669 + $0x1c] sm:$0xf]
      %v1678 = vld [vmem:[%s1669 + $0x20] sm:$0xf]
      %v1679 = vld [vmem:[%s1669 + $0x24] sm:$0xf]
      %v1680 = vld [vmem:[%s1669 + $0x28] sm:$0xf]
      %v1681 = vld [vmem:[%s1669 + $0x2c] sm:$0xf]
      %v1682 = vld [vmem:[%s1669 + $0x30] sm:$0xf]
      %v1683 = vld [vmem:[%s1669 + $0x34] sm:$0xf]
      %v1684 = vld [vmem:[%s1669 + $0x38] sm:$0xf]
      %v1685 = vld [vmem:[%s1669 + $0x3c] sm:$0xf]
      %v1702 = vunpack.c.l.b16 %v1670
      %v1703 = vunpack.c.l.b16 %v1671
      %v1704 = vunpack.c.l.b16 %v1672
      %v1705 = vunpack.c.l.b16 %v1673
      %v1706 = vunpack.c.l.b16 %v1674
      %v1707 = vunpack.c.l.b16 %v1675
      %v1708 = vunpack.c.l.b16 %v1676
      %v1709 = vunpack.c.l.b16 %v1677
      %v1710 = vunpack.c.l.b16 %v1678
      %v1711 = vunpack.c.l.b16 %v1679
      %v1712 = vunpack.c.l.b16 %v1680
      %v1713 = vunpack.c.l.b16 %v1681
      %v1714 = vunpack.c.l.b16 %v1682
      %v1715 = vunpack.c.l.b16 %v1683
      %v1716 = vunpack.c.l.b16 %v1684
      %v1717 = vunpack.c.l.b16 %v1685
      %v1718 = vpack.c.b16 %v1703, %v1702
      %v1719 = vpack.c.b16 %v1705, %v1704
      %v1720 = vpack.c.b16 %v1707, %v1706
      %v1721 = vpack.c.b16 %v1709, %v1708
      %v1722 = vpack.c.b16 %v1711, %v1710
      %v1723 = vpack.c.b16 %v1713, %v1712
      %v1724 = vpack.c.b16 %v1715, %v1714
      %v1725 = vpack.c.b16 %v1717, %v1716
      %1734 = vmatprep.subr.bf16.mxu0 0
      %1735 = vmatpush1.bf16.msra.mxu0 %v1718
      %1736 = vmatprep.subr.bf16.mxu0 0
      %1737 = vmatpush1.bf16.msra.mxu0 %v1719
      %1738 = vmatprep.subr.bf16.mxu0 0
      %1739 = vmatpush1.bf16.msra.mxu0 %v1720
      %1740 = vmatprep.subr.bf16.mxu0 0
      %1741 = vmatpush1.bf16.msra.mxu0 %v1721
      %1742 = vmatprep.subr.bf16.mxu0 0
      %1743 = vmatpush1.bf16.msra.mxu0 %v1722
      %1744 = vmatprep.subr.bf16.mxu0 0
      %1745 = vmatpush1.bf16.msra.mxu0 %v1723
      %1746 = vmatprep.subr.bf16.mxu0 0
      %1747 = vmatpush1.bf16.msra.mxu0 %v1724
      %1748 = vmatprep.subr.bf16.mxu0 0
      %1749 = vmatpush1.bf16.msra.mxu0 %v1725
      %1750 = vmatprep.subr.bf16.mxu0 0
      %1751 = vmatpush1.bf16.msra.mxu0 0
      %1752 = vmatprep.subr.bf16.mxu0 0
      %1753 = vmatpush1.bf16.msra.mxu0 0
      %1754 = vmatprep.subr.bf16.mxu0 0
      %1755 = vmatpush1.bf16.msra.mxu0 0
      %1756 = vmatprep.subr.bf16.mxu0 0
      %1757 = vmatpush1.bf16.msra.mxu0 0
      %1758 = vmatprep.subr.bf16.mxu0 0
      %1759 = vmatpush1.bf16.msra.mxu0 0
      %1760 = vmatprep.subr.bf16.mxu0 0
      %1761 = vmatpush1.bf16.msra.mxu0 0
      %1762 = vmatprep.subr.bf16.mxu0 0
      %1763 = vmatpush1.bf16.msra.mxu0 0
      %1764 = vmatprep.subr.bf16.mxu0 0
      %1765 = vmatpush1.bf16.msra.mxu0 0
      %1766 = vmatprep.mubr.bf16.mxu0 0
      %1767 = vmatmul.mubr.bf16.gmra.mrb[0].mxu0 %v1655
      %v1768 = vpop.f32.mrb[0].mxu0
      %v1769 = vadd.f32 0.0, %v1768
      %v1770 = vpop.f32.mrb[0].mxu0
      %v1771 = vpop.f32.mrb[0].mxu0
      %v1772 = vadd.f32 0.0, %v1771
      %v1773 = vpop.f32.mrb[0].mxu0
      %1774 = vmatprep.mubr.bf16.mxu0 0
      %1775 = vmatmul.mubr.bf16.gmra.mrb[0].mxu0 %v1659
      %v1776 = vpop.f32.mrb[0].mxu0
      %v1777 = vadd.f32 0.0, %v1776
      %v1778 = vpop.f32.mrb[0].mxu0
      %v1779 = vpop.f32.mrb[0].mxu0
      %v1780 = vadd.f32 0.0, %v1779
      %v1781 = vpop.f32.mrb[0].mxu0
      %1782 = vmatprep.mubr.bf16.mxu0 0
      %1783 = vmatmul.mubr.bf16.gmra.mrb[0].mxu0 %v1663
      %v1784 = vpop.f32.mrb[0].mxu0
      %v1785 = vadd.f32 0.0, %v1784
      %v1786 = vpop.f32.mrb[0].mxu0
      %v1787 = vpop.f32.mrb[0].mxu0
      %v1788 = vadd.f32 0.0, %v1787
      %v1789 = vpop.f32.mrb[0].mxu0
      %1790 = vmatprep.mubr.bf16.mxu0 0
      %1791 = vmatmul.mubr.bf16.gmra.mrb[0].mxu0 %v1667
      %v1792 = vpop.f32.mrb[0].mxu0
      %v1793 = vadd.f32 0.0, %v1792
      %v1794 = vpop.f32.mrb[0].mxu0
      %v1795 = vpop.f32.mrb[0].mxu0
      %v1796 = vadd.f32 0.0, %v1795
      %v1797 = vpop.f32.mrb[0].mxu0
      %1798 = vdwg.mxu0
      %v1815 = vunpack.c.l.b16 %v1537
      %v1816 = vunpack.c.l.b16 %v1538
      %v1817 = vunpack.c.l.b16 %v1539
      %v1818 = vunpack.c.l.b16 %v1540
      %v1819 = vunpack.c.l.b16 %v1541
      %v1820 = vunpack.c.l.b16 %v1542
      %v1821 = vunpack.c.l.b16 %v1543
      %v1822 = vunpack.c.l.b16 %v1544
      %v1823 = vunpack.c.l.b16 %v1545
      %v1824 = vunpack.c.l.b16 %v1546
      %v1825 = vunpack.c.l.b16 %v1547
      %v1826 = vunpack.c.l.b16 %v1548
      %v1827 = vunpack.c.l.b16 %v1549
      %v1828 = vunpack.c.l.b16 %v1550
      %v1829 = vunpack.c.l.b16 %v1551
      %v1830 = vunpack.c.l.b16 %v1552
      %v1831 = vpack.c.b16 %v1816, %v1815
      %v1832 = vpack.c.b16 %v1818, %v1817
      %v1833 = vpack.c.b16 %v1820, %v1819
      %v1834 = vpack.c.b16 %v1822, %v1821
      %v1835 = vpack.c.b16 %v1824, %v1823
      %v1836 = vpack.c.b16 %v1826, %v1825
      %v1837 = vpack.c.b16 %v1828, %v1827
      %v1838 = vpack.c.b16 %v1830, %v1829
      %1847 = vmatprep.subr.bf16.mxu0 0
      %1848 = vmatpush1.bf16.msra.mxu0 %v1831
      %1849 = vmatprep.subr.bf16.mxu0 0
      %1850 = vmatpush1.bf16.msra.mxu0 %v1832
      %1851 = vmatprep.subr.bf16.mxu0 0
      %1852 = vmatpush1.bf16.msra.mxu0 %v1833
      %1853 = vmatprep.subr.bf16.mxu0 0
      %1854 = vmatpush1.bf16.msra.mxu0 %v1834
      %1855 = vmatprep.subr.bf16.mxu0 0
      %1856 = vmatpush1.bf16.msra.mxu0 %v1835
      %1857 = vmatprep.subr.bf16.mxu0 0
      %1858 = vmatpush1.bf16.msra.mxu0 %v1836
      %1859 = vmatprep.subr.bf16.mxu0 0
      %1860 = vmatpush1.bf16.msra.mxu0 %v1837
      %1861 = vmatprep.subr.bf16.mxu0 0
      %1862 = vmatpush1.bf16.msra.mxu0 %v1838
      %1863 = vmatprep.subr.bf16.mxu0 0
      %1864 = vmatpush1.bf16.msra.mxu0 0
      %1865 = vmatprep.subr.bf16.mxu0 0
      %1866 = vmatpush1.bf16.msra.mxu0 0
      %1867 = vmatprep.subr.bf16.mxu0 0
      %1868 = vmatpush1.bf16.msra.mxu0 0
      %1869 = vmatprep.subr.bf16.mxu0 0
      %1870 = vmatpush1.bf16.msra.mxu0 0
      %1871 = vmatprep.subr.bf16.mxu0 0
      %1872 = vmatpush1.bf16.msra.mxu0 0
      %1873 = vmatprep.subr.bf16.mxu0 0
      %1874 = vmatpush1.bf16.msra.mxu0 0
      %1875 = vmatprep.subr.bf16.mxu0 0
      %1876 = vmatpush1.bf16.msra.mxu0 0
      %1877 = vmatprep.subr.bf16.mxu0 0
      %1878 = vmatpush1.bf16.msra.mxu0 0
      %1879 = vmatprep.mubr.bf16.mxu0 0
      %1880 = vmatmul.mubr.bf16.gmra.mrb[0].mxu0 %v1523
      %v1881 = vpop.f32.mrb[0].mxu0
      %v1882 = vadd.f32 %v1769, %v1881
      %v1883 = vpop.f32.mrb[0].mxu0
      %v1884 = vpop.f32.mrb[0].mxu0
      %v1885 = vadd.f32 %v1772, %v1884
      %v1886 = vpop.f32.mrb[0].mxu0
      %1887 = vmatprep.mubr.bf16.mxu0 0
      %1888 = vmatmul.mubr.bf16.gmra.mrb[0].mxu0 %v1527
      %v1889 = vpop.f32.mrb[0].mxu0
      %v1890 = vadd.f32 %v1777, %v1889
      %v1891 = vpop.f32.mrb[0].mxu0
      %v1892 = vpop.f32.mrb[0].mxu0
      %v1893 = vadd.f32 %v1780, %v1892
      %v1894 = vpop.f32.mrb[0].mxu0
      %1895 = vmatprep.mubr.bf16.mxu0 0
      %1896 = vmatmul.mubr.bf16.gmra.mrb[0].mxu0 %v1531
      %v1897 = vpop.f32.mrb[0].mxu0
      %v1898 = vadd.f32 %v1785, %v1897
      %v1899 = vpop.f32.mrb[0].mxu0
      %v1900 = vpop.f32.mrb[0].mxu0
      %v1901 = vadd.f32 %v1788, %v1900
      %v1902 = vpop.f32.mrb[0].mxu0
      %1903 = vmatprep.mubr.bf16.mxu0 0
      %1904 = vmatmul.mubr.bf16.gmra.mrb[0].mxu0 %v1535
      %v1905 = vpop.f32.mrb[0].mxu0
      %v1906 = vadd.f32 %v1793, %v1905
      %v1907 = vpop.f32.mrb[0].mxu0
      %v1908 = vpop.f32.mrb[0].mxu0
      %v1909 = vadd.f32 %v1796, %v1908
      %v1910 = vpop.f32.mrb[0].mxu0
      %1911 = vdwg.mxu0
      %v1912 = vld [vmem:[%s954] sm:$0xf]
      %v1913 = vld [vmem:[%s954 + $0x8] sm:$0xf]
      %v1914 = vld [vmem:[%s954 + $0x10] sm:$0xf]
      %v1915 = vld [vmem:[%s954 + $0x18] sm:$0xf]
      %v1916 = vld [vmem:[%s954 + $0x20] sm:$0xf]
      %v1917 = vld [vmem:[%s954 + $0x28] sm:$0xf]
      %v1918 = vld [vmem:[%s954 + $0x30] sm:$0xf]
      %v1919 = vld [vmem:[%s954 + $0x38] sm:$0xf]
      %v1921 = vunpack.c.l.b16 %v1913
      %v1922 = vpack.c.b16 %v1921, %v1921
      %v1924 = vunpack.c.l.b16 %v1915
      %v1925 = vpack.c.b16 %v1924, %v1924
      %v1927 = vunpack.c.l.b16 %v1917
      %v1928 = vpack.c.b16 %v1927, %v1927
      %v1930 = vunpack.c.l.b16 %v1919
      %v1931 = vpack.c.b16 %v1930, %v1930
      %v1934 = vsel %vm1520, %v1912, %v1922
      %v1938 = vsel %vm1520, %v1914, %v1925
      %v1942 = vsel %vm1520, %v1916, %v1928
      %v1946 = vsel %vm1520, %v1918, %v1931
      %s1948 = scalar_lea.vmem %s2, 128
      %v1949 = vld [vmem:[%s1948] sm:$0xf]
      %v1950 = vld [vmem:[%s1948 + $0x4] sm:$0xf]
      %v1951 = vld [vmem:[%s1948 + $0x8] sm:$0xf]
      %v1952 = vld [vmem:[%s1948 + $0xc] sm:$0xf]
      %v1953 = vld [vmem:[%s1948 + $0x10] sm:$0xf]
      %v1954 = vld [vmem:[%s1948 + $0x14] sm:$0xf]
      %v1955 = vld [vmem:[%s1948 + $0x18] sm:$0xf]
      %v1956 = vld [vmem:[%s1948 + $0x1c] sm:$0xf]
      %v1957 = vld [vmem:[%s1948 + $0x20] sm:$0xf]
      %v1958 = vld [vmem:[%s1948 + $0x24] sm:$0xf]
      %v1959 = vld [vmem:[%s1948 + $0x28] sm:$0xf]
      %v1960 = vld [vmem:[%s1948 + $0x2c] sm:$0xf]
      %v1961 = vld [vmem:[%s1948 + $0x30] sm:$0xf]
      %v1962 = vld [vmem:[%s1948 + $0x34] sm:$0xf]
      %v1963 = vld [vmem:[%s1948 + $0x38] sm:$0xf]
      %v1964 = vld [vmem:[%s1948 + $0x3c] sm:$0xf]
      %v1981 = vunpack.c.l.b16 %v1949
      %v1982 = vunpack.c.l.b16 %v1950
      %v1983 = vunpack.c.l.b16 %v1951
      %v1984 = vunpack.c.l.b16 %v1952
      %v1985 = vunpack.c.l.b16 %v1953
      %v1986 = vunpack.c.l.b16 %v1954
      %v1987 = vunpack.c.l.b16 %v1955
      %v1988 = vunpack.c.l.b16 %v1956
      %v1989 = vunpack.c.l.b16 %v1957
      %v1990 = vunpack.c.l.b16 %v1958
      %v1991 = vunpack.c.l.b16 %v1959
      %v1992 = vunpack.c.l.b16 %v1960
      %v1993 = vunpack.c.l.b16 %v1961
      %v1994 = vunpack.c.l.b16 %v1962
      %v1995 = vunpack.c.l.b16 %v1963
      %v1996 = vunpack.c.l.b16 %v1964
      %v1997 = vpack.c.b16 %v1982, %v1981
      %v1998 = vpack.c.b16 %v1984, %v1983
      %v1999 = vpack.c.b16 %v1986, %v1985
      %v2000 = vpack.c.b16 %v1988, %v1987
      %v2001 = vpack.c.b16 %v1990, %v1989
      %v2002 = vpack.c.b16 %v1992, %v1991
      %v2003 = vpack.c.b16 %v1994, %v1993
      %v2004 = vpack.c.b16 %v1996, %v1995
      %2013 = vmatprep.subr.bf16.mxu0 0
      %2014 = vmatpush1.bf16.msra.mxu0 %v1997
      %2015 = vmatprep.subr.bf16.mxu0 0
      %2016 = vmatpush1.bf16.msra.mxu0 %v1998
      %2017 = vmatprep.subr.bf16.mxu0 0
      %2018 = vmatpush1.bf16.msra.mxu0 %v1999
      %2019 = vmatprep.subr.bf16.mxu0 0
      %2020 = vmatpush1.bf16.msra.mxu0 %v2000
      %2021 = vmatprep.subr.bf16.mxu0 0
      %2022 = vmatpush1.bf16.msra.mxu0 %v2001
      %2023 = vmatprep.subr.bf16.mxu0 0
      %2024 = vmatpush1.bf16.msra.mxu0 %v2002
      %2025 = vmatprep.subr.bf16.mxu0 0
      %2026 = vmatpush1.bf16.msra.mxu0 %v2003
      %2027 = vmatprep.subr.bf16.mxu0 0
      %2028 = vmatpush1.bf16.msra.mxu0 %v2004
      %2029 = vmatprep.subr.bf16.mxu0 0
      %2030 = vmatpush1.bf16.msra.mxu0 0
      %2031 = vmatprep.subr.bf16.mxu0 0
      %2032 = vmatpush1.bf16.msra.mxu0 0
      %2033 = vmatprep.subr.bf16.mxu0 0
      %2034 = vmatpush1.bf16.msra.mxu0 0
      %2035 = vmatprep.subr.bf16.mxu0 0
      %2036 = vmatpush1.bf16.msra.mxu0 0
      %2037 = vmatprep.subr.bf16.mxu0 0
      %2038 = vmatpush1.bf16.msra.mxu0 0
      %2039 = vmatprep.subr.bf16.mxu0 0
      %2040 = vmatpush1.bf16.msra.mxu0 0
      %2041 = vmatprep.subr.bf16.mxu0 0
      %2042 = vmatpush1.bf16.msra.mxu0 0
      %2043 = vmatprep.subr.bf16.mxu0 0
      %2044 = vmatpush1.bf16.msra.mxu0 0
      %2045 = vmatprep.mubr.bf16.mxu0 0
      %2046 = vmatmul.mubr.bf16.gmra.mrb[0].mxu0 %v1934
      %v2047 = vpop.f32.mrb[0].mxu0
      %v2048 = vadd.f32 0.0, %v2047
      %v2049 = vpop.f32.mrb[0].mxu0
      %v2050 = vpop.f32.mrb[0].mxu0
      %v2051 = vadd.f32 0.0, %v2050
      %v2052 = vpop.f32.mrb[0].mxu0
      %2053 = vmatprep.mubr.bf16.mxu0 0
      %2054 = vmatmul.mubr.bf16.gmra.mrb[0].mxu0 %v1938
      %v2055 = vpop.f32.mrb[0].mxu0
      %v2056 = vadd.f32 0.0, %v2055
      %v2057 = vpop.f32.mrb[0].mxu0
      %v2058 = vpop.f32.mrb[0].mxu0
      %v2059 = vadd.f32 0.0, %v2058
      %v2060 = vpop.f32.mrb[0].mxu0
      %2061 = vmatprep.mubr.bf16.mxu0 0
      %2062 = vmatmul.mubr.bf16.gmra.mrb[0].mxu0 %v1942
      %v2063 = vpop.f32.mrb[0].mxu0
      %v2064 = vadd.f32 0.0, %v2063
      %v2065 = vpop.f32.mrb[0].mxu0
      %v2066 = vpop.f32.mrb[0].mxu0
      %v2067 = vadd.f32 0.0, %v2066
      %v2068 = vpop.f32.mrb[0].mxu0
      %2069 = vmatprep.mubr.bf16.mxu0 0
      %2070 = vmatmul.mubr.bf16.gmra.mrb[0].mxu0 %v1946
      %v2071 = vpop.f32.mrb[0].mxu0
      %v2072 = vadd.f32 0.0, %v2071
      %v2073 = vpop.f32.mrb[0].mxu0
      %v2074 = vpop.f32.mrb[0].mxu0
      %v2075 = vadd.f32 0.0, %v2074
      %v2076 = vpop.f32.mrb[0].mxu0
      %2077 = vdwg.mxu0
      %v2078 = vadd.f32 %v1882, %v2048
      %v2079 = vadd.f32 %v1885, %v2051
      %v2080 = vadd.f32 %v1890, %v2056
      %v2081 = vadd.f32 %v1893, %v2059
      %v2082 = vadd.f32 %v1898, %v2064
      %v2083 = vadd.f32 %v1901, %v2067
      %v2084 = vadd.f32 %v1906, %v2072
      %v2085 = vadd.f32 %v1909, %v2075
      %v2086 = vld [vmem:[%s954] sm:$0xf]
      %v2087 = vld [vmem:[%s954 + $0x4] sm:$0x1]
      %v2088 = vld [vmem:[%s954 + $0x8] sm:$0xf]
      %v2089 = vld [vmem:[%s954 + $0xc] sm:$0x1]
      %v2090 = vld [vmem:[%s954 + $0x10] sm:$0xf]
      %v2091 = vld [vmem:[%s954 + $0x14] sm:$0x1]
      %v2092 = vld [vmem:[%s954 + $0x18] sm:$0xf]
      %v2093 = vld [vmem:[%s954 + $0x1c] sm:$0x1]
      %v2094 = vld [vmem:[%s954 + $0x20] sm:$0xf]
      %v2095 = vld [vmem:[%s954 + $0x24] sm:$0x1]
      %v2096 = vld [vmem:[%s954 + $0x28] sm:$0xf]
      %v2097 = vld [vmem:[%s954 + $0x2c] sm:$0x1]
      %v2098 = vld [vmem:[%s954 + $0x30] sm:$0xf]
      %v2099 = vld [vmem:[%s954 + $0x34] sm:$0x1]
      %v2100 = vld [vmem:[%s954 + $0x38] sm:$0xf]
      %v2101 = vld [vmem:[%s954 + $0x3c] sm:$0x1]
      %v2104 = vunpack.c.l.b16 %v2086
      %v2105 = vunpack.c.l.b16 %v2087
      %v2106 = vpack.c.b16 %v2105, %v2104
      %v2108 = vshrl.u32 %v2106, 16
      %v2110 = vshll.u32 %v2106, 16
      %v2112 = vrot.slane %v2110, 1
      %v2113 = vor.u32 %v2108, %v2112
      %v2116 = vunpack.c.l.b16 %v2088
      %v2117 = vunpack.c.l.b16 %v2089
      %v2118 = vpack.c.b16 %v2117, %v2116
      %v2120 = vshrl.u32 %v2118, 16
      %v2122 = vrot.slane %v2120, 4
      %v2123 = vshll.u32 %v2118, 16
      %v2125 = vrot.slane %v2123, 5
      %v2126 = vor.u32 %v2122, %v2125
      %v2129 = vunpack.c.l.b16 %v2090
      %v2130 = vunpack.c.l.b16 %v2091
      %v2131 = vpack.c.b16 %v2130, %v2129
      %v2133 = vshrl.u32 %v2131, 16
      %v2135 = vshll.u32 %v2131, 16
      %v2137 = vrot.slane %v2135, 1
      %v2138 = vor.u32 %v2133, %v2137
      %v2141 = vunpack.c.l.b16 %v2092
      %v2142 = vunpack.c.l.b16 %v2093
      %v2143 = vpack.c.b16 %v2142, %v2141
      %v2145 = vshrl.u32 %v2143, 16
      %v2147 = vrot.slane %v2145, 4
      %v2148 = vshll.u32 %v2143, 16
      %v2150 = vrot.slane %v2148, 5
      %v2151 = vor.u32 %v2147, %v2150
      %v2154 = vunpack.c.l.b16 %v2094
      %v2155 = vunpack.c.l.b16 %v2095
      %v2156 = vpack.c.b16 %v2155, %v2154
      %v2158 = vshrl.u32 %v2156, 16
      %v2160 = vshll.u32 %v2156, 16
      %v2162 = vrot.slane %v2160, 1
      %v2163 = vor.u32 %v2158, %v2162
      %v2166 = vunpack.c.l.b16 %v2096
      %v2167 = vunpack.c.l.b16 %v2097
      %v2168 = vpack.c.b16 %v2167, %v2166
      %v2170 = vshrl.u32 %v2168, 16
      %v2172 = vrot.slane %v2170, 4
      %v2173 = vshll.u32 %v2168, 16
      %v2175 = vrot.slane %v2173, 5
      %v2176 = vor.u32 %v2172, %v2175
      %v2179 = vunpack.c.l.b16 %v2098
      %v2180 = vunpack.c.l.b16 %v2099
      %v2181 = vpack.c.b16 %v2180, %v2179
      %v2183 = vshrl.u32 %v2181, 16
      %v2185 = vshll.u32 %v2181, 16
      %v2187 = vrot.slane %v2185, 1
      %v2188 = vor.u32 %v2183, %v2187
      %v2191 = vunpack.c.l.b16 %v2100
      %v2192 = vunpack.c.l.b16 %v2101
      %v2193 = vpack.c.b16 %v2192, %v2191
      %v2195 = vshrl.u32 %v2193, 16
      %v2197 = vrot.slane %v2195, 4
      %v2198 = vshll.u32 %v2193, 16
      %v2200 = vrot.slane %v2198, 5
      %v2201 = vor.u32 %v2197, %v2200
      %v2204 = vsel %vm1520, %v2113, %v2126
      %v2208 = vsel %vm1520, %v2138, %v2151
      %v2212 = vsel %vm1520, %v2163, %v2176
      %v2216 = vsel %vm1520, %v2188, %v2201
      %s2218 = scalar_lea.vmem %s2, 192
      %v2219 = vld [vmem:[%s2218] sm:$0xf]
      %v2220 = vld [vmem:[%s2218 + $0x4] sm:$0xf]
      %v2221 = vld [vmem:[%s2218 + $0x8] sm:$0xf]
      %v2222 = vld [vmem:[%s2218 + $0xc] sm:$0xf]
      %v2223 = vld [vmem:[%s2218 + $0x10] sm:$0xf]
      %v2224 = vld [vmem:[%s2218 + $0x14] sm:$0xf]
      %v2225 = vld [vmem:[%s2218 + $0x18] sm:$0xf]
      %v2226 = vld [vmem:[%s2218 + $0x1c] sm:$0xf]
      %v2227 = vld [vmem:[%s2218 + $0x20] sm:$0xf]
      %v2228 = vld [vmem:[%s2218 + $0x24] sm:$0xf]
      %v2229 = vld [vmem:[%s2218 + $0x28] sm:$0xf]
      %v2230 = vld [vmem:[%s2218 + $0x2c] sm:$0xf]
      %v2231 = vld [vmem:[%s2218 + $0x30] sm:$0xf]
      %v2232 = vld [vmem:[%s2218 + $0x34] sm:$0xf]
      %v2233 = vld [vmem:[%s2218 + $0x38] sm:$0xf]
      %v2234 = vld [vmem:[%s2218 + $0x3c] sm:$0xf]
      %v2251 = vunpack.c.l.b16 %v2219
      %v2252 = vunpack.c.l.b16 %v2220
      %v2253 = vunpack.c.l.b16 %v2221
      %v2254 = vunpack.c.l.b16 %v2222
      %v2255 = vunpack.c.l.b16 %v2223
      %v2256 = vunpack.c.l.b16 %v2224
      %v2257 = vunpack.c.l.b16 %v2225
      %v2258 = vunpack.c.l.b16 %v2226
      %v2259 = vunpack.c.l.b16 %v2227
      %v2260 = vunpack.c.l.b16 %v2228
      %v2261 = vunpack.c.l.b16 %v2229
      %v2262 = vunpack.c.l.b16 %v2230
      %v2263 = vunpack.c.l.b16 %v2231
      %v2264 = vunpack.c.l.b16 %v2232
      %v2265 = vunpack.c.l.b16 %v2233
      %v2266 = vunpack.c.l.b16 %v2234
      %v2267 = vpack.c.b16 %v2252, %v2251
      %v2268 = vpack.c.b16 %v2254, %v2253
      %v2269 = vpack.c.b16 %v2256, %v2255
      %v2270 = vpack.c.b16 %v2258, %v2257
      %v2271 = vpack.c.b16 %v2260, %v2259
      %v2272 = vpack.c.b16 %v2262, %v2261
      %v2273 = vpack.c.b16 %v2264, %v2263
      %v2274 = vpack.c.b16 %v2266, %v2265
      %2283 = vmatprep.subr.bf16.mxu0 0
      %2284 = vmatpush1.bf16.msra.mxu0 %v2267
      %2285 = vmatprep.subr.bf16.mxu0 0
      %2286 = vmatpush1.bf16.msra.mxu0 %v2268
      %2287 = vmatprep.subr.bf16.mxu0 0
      %2288 = vmatpush1.bf16.msra.mxu0 %v2269
      %2289 = vmatprep.subr.bf16.mxu0 0
      %2290 = vmatpush1.bf16.msra.mxu0 %v2270
      %2291 = vmatprep.subr.bf16.mxu0 0
      %2292 = vmatpush1.bf16.msra.mxu0 %v2271
      %2293 = vmatprep.subr.bf16.mxu0 0
      %2294 = vmatpush1.bf16.msra.mxu0 %v2272
      %2295 = vmatprep.subr.bf16.mxu0 0
      %2296 = vmatpush1.bf16.msra.mxu0 %v2273
      %2297 = vmatprep.subr.bf16.mxu0 0
      %2298 = vmatpush1.bf16.msra.mxu0 %v2274
      %2299 = vmatprep.subr.bf16.mxu0 0
      %2300 = vmatpush1.bf16.msra.mxu0 0
      %2301 = vmatprep.subr.bf16.mxu0 0
      %2302 = vmatpush1.bf16.msra.mxu0 0
      %2303 = vmatprep.subr.bf16.mxu0 0
      %2304 = vmatpush1.bf16.msra.mxu0 0
      %2305 = vmatprep.subr.bf16.mxu0 0
      %2306 = vmatpush1.bf16.msra.mxu0 0
      %2307 = vmatprep.subr.bf16.mxu0 0
      %2308 = vmatpush1.bf16.msra.mxu0 0
      %2309 = vmatprep.subr.bf16.mxu0 0
      %2310 = vmatpush1.bf16.msra.mxu0 0
      %2311 = vmatprep.subr.bf16.mxu0 0
      %2312 = vmatpush1.bf16.msra.mxu0 0
      %2313 = vmatprep.subr.bf16.mxu0 0
      %2314 = vmatpush1.bf16.msra.mxu0 0
      %2315 = vmatprep.mubr.bf16.mxu0 0
      %2316 = vmatmul.mubr.bf16.gmra.mrb[0].mxu0 %v2204
      %v2317 = vpop.f32.mrb[0].mxu0
      %v2318 = vadd.f32 0.0, %v2317
      %v2319 = vpop.f32.mrb[0].mxu0
      %v2320 = vpop.f32.mrb[0].mxu0
      %v2321 = vadd.f32 0.0, %v2320
      %v2322 = vpop.f32.mrb[0].mxu0
      %2323 = vmatprep.mubr.bf16.mxu0 0
      %2324 = vmatmul.mubr.bf16.gmra.mrb[0].mxu0 %v2208
      %v2325 = vpop.f32.mrb[0].mxu0
      %v2326 = vadd.f32 0.0, %v2325
      %v2327 = vpop.f32.mrb[0].mxu0
      %v2328 = vpop.f32.mrb[0].mxu0
      %v2329 = vadd.f32 0.0, %v2328
      %v2330 = vpop.f32.mrb[0].mxu0
      %2331 = vmatprep.mubr.bf16.mxu0 0
      %2332 = vmatmul.mubr.bf16.gmra.mrb[0].mxu0 %v2212
      %v2333 = vpop.f32.mrb[0].mxu0
      %v2334 = vadd.f32 0.0, %v2333
      %v2335 = vpop.f32.mrb[0].mxu0
      %v2336 = vpop.f32.mrb[0].mxu0
      %v2337 = vadd.f32 0.0, %v2336
      %v2338 = vpop.f32.mrb[0].mxu0
      %2339 = vmatprep.mubr.bf16.mxu0 0
      %2340 = vmatmul.mubr.bf16.gmra.mrb[0].mxu0 %v2216
      %v2341 = vpop.f32.mrb[0].mxu0
      %v2342 = vadd.f32 0.0, %v2341
      %v2343 = vpop.f32.mrb[0].mxu0
      %v2344 = vpop.f32.mrb[0].mxu0
      %v2345 = vadd.f32 0.0, %v2344
      %v2346 = vpop.f32.mrb[0].mxu0
      %2347 = vdwg.mxu0
      %v2348 = vadd.f32 %v2078, %v2318
      %v2349 = vadd.f32 %v2079, %v2321
      %v2350 = vadd.f32 %v2080, %v2326
      %v2351 = vadd.f32 %v2081, %v2329
      %v2352 = vadd.f32 %v2082, %v2334
      %v2353 = vadd.f32 %v2083, %v2337
      %v2354 = vadd.f32 %v2084, %v2342
      %v2355 = vadd.f32 %v2085, %v2345
      %v2356 = vld [vmem:[%s7] sm:$0x1]
      %v2358 = vlaneseq
      %v2359 = vshrl.u32 %v2358, 7
      %v2360 = vsub.s32 0, %v2359
      %v2361 = vrot.slane %v2356, %v2360
      %v2363 = vadd.f32 %v2348, %v2361
      %v2364 = vadd.f32 %v2349, %v2361
      %v2365 = vadd.f32 %v2350, %v2361
      %v2366 = vadd.f32 %v2351, %v2361
      %v2367 = vadd.f32 %v2352, %v2361
      %v2368 = vadd.f32 %v2353, %v2361
      %v2369 = vadd.f32 %v2354, %v2361
      %v2370 = vadd.f32 %v2355, %v2361
      %vm2371 = vcmask 523264
      %v2372 = vsel %vm2371, %v2363, 0.0
      %v2373 = vsel %vm2371, %v2364, 0.0
      %v2374 = vadd.f32 %v2372, %v2373
      %v2375 = vsel %vm2371, %v2365, 0.0
      %v2376 = vadd.f32 %v2374, %v2375
      %v2377 = vsel %vm2371, %v2366, 0.0
      %v2378 = vadd.f32 %v2376, %v2377
      %v2379 = vsel %vm2371, %v2367, 0.0
      %v2380 = vadd.f32 %v2378, %v2379
      %v2381 = vsel %vm2371, %v2368, 0.0
      %v2382 = vadd.f32 %v2380, %v2381
      %v2383 = vsel %vm2371, %v2369, 0.0
      %v2384 = vadd.f32 %v2382, %v2383
      %v2385 = vsel %vm2371, %v2370, 0.0
      %v2386 = vadd.f32 %v2384, %v2385
      %v2387 = vrot.slane %v2386, 4
      %v2388 = vadd.f32 %v2386, %v2387
      %v2389 = vrot.slane %v2388, 2
      %v2390 = vadd.f32 %v2388, %v2389
      %v2391 = vrot.slane %v2390, 1
      %v2392 = vadd.f32 %v2390, %v2391
      %v2393 = vrcp.pop 64.0
      %v2394 = vmul.f32 %v2392, %v2393
      %v2395 = vsub.f32 %v2363, %v2394
      %v2396 = vsub.f32 %v2364, %v2394
      %v2397 = vsub.f32 %v2365, %v2394
      %v2398 = vsub.f32 %v2366, %v2394
      %v2399 = vsub.f32 %v2367, %v2394
      %v2400 = vsub.f32 %v2368, %v2394
      %v2401 = vsub.f32 %v2369, %v2394
      %v2402 = vsub.f32 %v2370, %v2394
      %v2403 = vmul.f32 %v2395, %v2395
      %v2404 = vmul.f32 %v2396, %v2396
      %v2405 = vmul.f32 %v2397, %v2397
      %v2406 = vmul.f32 %v2398, %v2398
      %v2407 = vmul.f32 %v2399, %v2399
      %v2408 = vmul.f32 %v2400, %v2400
      %v2409 = vmul.f32 %v2401, %v2401
      %v2410 = vmul.f32 %v2402, %v2402
      %v2411 = vsel %vm2371, %v2403, 0.0
      %v2412 = vsel %vm2371, %v2404, 0.0
      %v2413 = vadd.f32 %v2411, %v2412
      %v2414 = vsel %vm2371, %v2405, 0.0
      %v2415 = vadd.f32 %v2413, %v2414
      %v2416 = vsel %vm2371, %v2406, 0.0
      %v2417 = vadd.f32 %v2415, %v2416
      %v2418 = vsel %vm2371, %v2407, 0.0
      %v2419 = vadd.f32 %v2417, %v2418
      %v2420 = vsel %vm2371, %v2408, 0.0
      %v2421 = vadd.f32 %v2419, %v2420
      %v2422 = vsel %vm2371, %v2409, 0.0
      %v2423 = vadd.f32 %v2421, %v2422
      %v2424 = vsel %vm2371, %v2410, 0.0
      %v2425 = vadd.f32 %v2423, %v2424
      %v2426 = vrot.slane %v2425, 4
      %v2427 = vadd.f32 %v2425, %v2426
      %v2428 = vrot.slane %v2427, 2
      %v2429 = vadd.f32 %v2427, %v2428
      %v2430 = vrot.slane %v2429, 1
      %v2431 = vadd.f32 %v2429, %v2430
      %v2432 = vmul.f32 %v2431, %v2393
      %v2433 = vadd.f32 %v2432, 1e-05
      %v2434 = vrsqrt.pop %v2433
      %v2435 = vmul.f32 %v2395, %v2434
      %v2436 = vmul.f32 %v2396, %v2434
      %v2437 = vmul.f32 %v2397, %v2434
      %v2438 = vmul.f32 %v2398, %v2434
      %v2439 = vmul.f32 %v2399, %v2434
      %v2440 = vmul.f32 %v2400, %v2434
      %v2441 = vmul.f32 %v2401, %v2434
      %v2442 = vmul.f32 %v2402, %v2434
      %vm2443 = vcmp.gt.f32.partialorder %v2435, 0.0
      %vm2444 = vcmp.gt.f32.partialorder %v2436, 0.0
      %vm2445 = vcmp.gt.f32.partialorder %v2437, 0.0
      %vm2446 = vcmp.gt.f32.partialorder %v2438, 0.0
      %vm2447 = vcmp.gt.f32.partialorder %v2439, 0.0
      %vm2448 = vcmp.gt.f32.partialorder %v2440, 0.0
      %vm2449 = vcmp.gt.f32.partialorder %v2441, 0.0
      %vm2450 = vcmp.gt.f32.partialorder %v2442, 0.0
      %v2451 = vmul.f32 %v2435, 0.2
      %v2452 = vmul.f32 %v2436, 0.2
      %v2453 = vmul.f32 %v2437, 0.2
      %v2454 = vmul.f32 %v2438, 0.2
      %v2455 = vmul.f32 %v2439, 0.2
      %v2456 = vmul.f32 %v2440, 0.2
      %v2457 = vmul.f32 %v2441, 0.2
      %v2458 = vmul.f32 %v2442, 0.2
      %v2459 = vsel %vm2443, %v2435, %v2451
      %v2460 = vsel %vm2444, %v2436, %v2452
      %v2461 = vsel %vm2445, %v2437, %v2453
      %v2462 = vsel %vm2446, %v2438, %v2454
      %v2463 = vsel %vm2447, %v2439, %v2455
      %v2464 = vsel %vm2448, %v2440, %v2456
      %v2465 = vsel %vm2449, %v2441, %v2457
      %v2466 = vsel %vm2450, %v2442, %v2458
      %2467 = vst.msk [vmem:[#allocation4] sm:$0xff] %vm2371, %v2459
      %2468 = vst.msk [vmem:[#allocation4 + $0x8] sm:$0xff] %vm2371, %v2460
      %2469 = vst.msk [vmem:[#allocation4 + $0x10] sm:$0xff] %vm2371, %v2461
      %2470 = vst.msk [vmem:[#allocation4 + $0x18] sm:$0xff] %vm2371, %v2462
      %2471 = vst.msk [vmem:[#allocation4 + $0x20] sm:$0xff] %vm2371, %v2463
      %2472 = vst.msk [vmem:[#allocation4 + $0x28] sm:$0xff] %vm2371, %v2464
      %2473 = vst.msk [vmem:[#allocation4 + $0x30] sm:$0xff] %vm2371, %v2465
      %2474 = vst.msk [vmem:[#allocation4 + $0x38] sm:$0xff] %vm2371, %v2466
      %s2475 = scalar_lea.vmem [#allocation4], 9
      %v2476 = vld [vmem:[%s2475] ss:$2 sm:$0xf]
      %v2477 = vpack.c.bf16 %v2476, %v2476
      %v2479 = vunpack.c.l.b16 %v2477
      %v2480 = vpack.c.b16 %v2479, %v2479
      %v2482 = vshrl.u32 %v2480, 16
      %v2484 = vrot.slane %v2482, 7
      %v2485 = vshll.u32 %v2480, 16
      %v2487 = vor.u32 %v2484, %v2485
      %s2489 = scalar_lea.vmem [#allocation5], 8
      %vm2490 = vcmask 518144
      %vm2491 = vsmask.f32 2306
      %vm2492 = vmand %vm2490, %vm2491
      %v2493 = vld [vmem:[%s2489] sm:$0x7]
      %v2494 = vsel %vm2492, %v2487, %v2493
      %2495 = vst [vmem:[%s2489] sm:$0x7] %v2494
      %s2496 = scalar_lea.vmem [#allocation4], 25
      %v2497 = vld [vmem:[%s2496] ss:$2 sm:$0xf]
      %v2498 = vpack.c.bf16 %v2497, %v2497
      %v2500 = vunpack.c.l.b16 %v2498
      %v2501 = vpack.c.b16 %v2500, %v2500
      %v2503 = vshrl.u32 %v2501, 16
      %v2505 = vrot.slane %v2503, 7
      %v2506 = vshll.u32 %v2501, 16
      %v2508 = vor.u32 %v2505, %v2506
      %s2510 = scalar_lea.vmem [#allocation5], 16
      %v2511 = vld [vmem:[%s2510] sm:$0x7]
      %v2512 = vsel %vm2492, %v2508, %v2511
      %2513 = vst [vmem:[%s2510] sm:$0x7] %v2512
      %s2514 = scalar_lea.vmem [#allocation4], 41
      %v2515 = vld [vmem:[%s2514] ss:$2 sm:$0xf]
      %v2516 = vpack.c.bf16 %v2515, %v2515
      %v2518 = vunpack.c.l.b16 %v2516
      %v2519 = vpack.c.b16 %v2518, %v2518
      %v2521 = vshrl.u32 %v2519, 16
      %v2523 = vrot.slane %v2521, 7
      %v2524 = vshll.u32 %v2519, 16
      %v2526 = vor.u32 %v2523, %v2524
      %s2528 = scalar_lea.vmem [#allocation5], 24
      %v2529 = vld [vmem:[%s2528] sm:$0x7]
      %v2530 = vsel %vm2492, %v2526, %v2529
      %2531 = vst [vmem:[%s2528] sm:$0x7] %v2530
      %s2532 = scalar_lea.vmem [#allocation4], 57
      %v2533 = vld [vmem:[%s2532] ss:$2 sm:$0xf]
      %v2534 = vpack.c.bf16 %v2533, %v2533
      %v2536 = vunpack.c.l.b16 %v2534
      %v2537 = vpack.c.b16 %v2536, %v2536
      %v2539 = vshrl.u32 %v2537, 16
      %v2541 = vrot.slane %v2539, 7
      %v2542 = vshll.u32 %v2537, 16
      %v2544 = vor.u32 %v2541, %v2542
      %s2546 = scalar_lea.vmem [#allocation5], 32
      %v2547 = vld [vmem:[%s2546] sm:$0x7]
      %v2548 = vsel %vm2492, %v2544, %v2547
      %2549 = vst [vmem:[%s2546] sm:$0x7] %v2548
      %s2550 = scalar_lea.vmem [#allocation4], 8
      %v2551 = vld [vmem:[%s2550] ss:$2 sm:$0xf]
      %v2552 = vpack.c.bf16 %v2551, %v2551
      %v2554 = vunpack.c.l.b16 %v2552
      %v2555 = vpack.c.b16 %v2554, %v2554
      %2556 = vrot.lane.b32.xlu0 %v2555, 64
      %v2557 = vpop.permute.xlu0 %2556
      %vm2559 = vcmask 1041920
      %2560 = vst.msk [vmem:[%s2489] sm:$0x3] %vm2559, %v2557
      %s2561 = scalar_lea.vmem [#allocation4], 24
      %v2562 = vld [vmem:[%s2561] ss:$2 sm:$0xf]
      %v2563 = vpack.c.bf16 %v2562, %v2562
      %v2565 = vunpack.c.l.b16 %v2563
      %v2566 = vpack.c.b16 %v2565, %v2565
      %2567 = vrot.lane.b32.xlu0 %v2566, 64
      %v2568 = vpop.permute.xlu0 %2567
      %2570 = vst.msk [vmem:[%s2510] sm:$0x3] %vm2559, %v2568
      %s2571 = scalar_lea.vmem [#allocation4], 40
      %v2572 = vld [vmem:[%s2571] ss:$2 sm:$0xf]
      %v2573 = vpack.c.bf16 %v2572, %v2572
      %v2575 = vunpack.c.l.b16 %v2573
      %v2576 = vpack.c.b16 %v2575, %v2575
      %2577 = vrot.lane.b32.xlu0 %v2576, 64
      %v2578 = vpop.permute.xlu0 %2577
      %2580 = vst.msk [vmem:[%s2528] sm:$0x3] %vm2559, %v2578
      %s2581 = scalar_lea.vmem [#allocation4], 56
      %v2582 = vld [vmem:[%s2581] ss:$2 sm:$0xf]
      %v2583 = vpack.c.bf16 %v2582, %v2582
      %v2585 = vunpack.c.l.b16 %v2583
      %v2586 = vpack.c.b16 %v2585, %v2585
      %2587 = vrot.lane.b32.xlu0 %v2586, 64
      %v2588 = vpop.permute.xlu0 %2587
      %2590 = vst.msk [vmem:[%s2546] sm:$0x3] %vm2559, %v2588
      %s2591 = scalar_lea.vmem [#allocation4], 1
      %v2592 = vld [vmem:[%s2591] ss:$2 sm:$0xf]
      %v2593 = vpack.c.bf16 %v2592, %v2592
      %v2595 = vunpack.c.l.b16 %v2593
      %v2596 = vpack.c.b16 %v2595, %v2595
      %v2598 = vshrl.u32 %v2596, 16
      %v2600 = vrot.slane %v2598, 7
      %v2601 = vshll.u32 %v2596, 16
      %v2603 = vor.u32 %v2600, %v2601
      %v2605 = vld [vmem:[#allocation5 + $0x4] sm:$0x7]
      %v2606 = vsel %vm2492, %v2603, %v2605
      %2607 = vst [vmem:[#allocation5 + $0x4] sm:$0x7] %v2606
      %s2608 = scalar_lea.vmem [#allocation4], 17
      %v2609 = vld [vmem:[%s2608] ss:$2 sm:$0xf]
      %v2610 = vpack.c.bf16 %v2609, %v2609
      %v2612 = vunpack.c.l.b16 %v2610
      %v2613 = vpack.c.b16 %v2612, %v2612
      %v2615 = vshrl.u32 %v2613, 16
      %v2617 = vrot.slane %v2615, 7
      %v2618 = vshll.u32 %v2613, 16
      %v2620 = vor.u32 %v2617, %v2618
      %v2622 = vld [vmem:[%s2489 + $0x4] sm:$0x7]
      %v2623 = vsel %vm2492, %v2620, %v2622
      %2624 = vst [vmem:[%s2489 + $0x4] sm:$0x7] %v2623
      %s2625 = scalar_lea.vmem [#allocation4], 33
      %v2626 = vld [vmem:[%s2625] ss:$2 sm:$0xf]
      %v2627 = vpack.c.bf16 %v2626, %v2626
      %v2629 = vunpack.c.l.b16 %v2627
      %v2630 = vpack.c.b16 %v2629, %v2629
      %v2632 = vshrl.u32 %v2630, 16
      %v2634 = vrot.slane %v2632, 7
      %v2635 = vshll.u32 %v2630, 16
      %v2637 = vor.u32 %v2634, %v2635
      %v2639 = vld [vmem:[%s2510 + $0x4] sm:$0x7]
      %v2640 = vsel %vm2492, %v2637, %v2639
      %2641 = vst [vmem:[%s2510 + $0x4] sm:$0x7] %v2640
      %s2642 = scalar_lea.vmem [#allocation4], 49
      %v2643 = vld [vmem:[%s2642] ss:$2 sm:$0xf]
      %v2644 = vpack.c.bf16 %v2643, %v2643
      %v2646 = vunpack.c.l.b16 %v2644
      %v2647 = vpack.c.b16 %v2646, %v2646
      %v2649 = vshrl.u32 %v2647, 16
      %v2651 = vrot.slane %v2649, 7
      %v2652 = vshll.u32 %v2647, 16
      %v2654 = vor.u32 %v2651, %v2652
      %v2656 = vld [vmem:[%s2528 + $0x4] sm:$0x7]
      %v2657 = vsel %vm2492, %v2654, %v2656
      %2658 = vst [vmem:[%s2528 + $0x4] sm:$0x7] %v2657
      %v2659 = vld [vmem:[#allocation4] ss:$2 sm:$0xf]
      %v2660 = vpack.c.bf16 %v2659, %v2659
      %v2662 = vunpack.c.l.b16 %v2660
      %v2663 = vpack.c.b16 %v2662, %v2662
      %2664 = vrot.lane.b32.xlu0 %v2663, 64
      %v2665 = vpop.permute.xlu0 %2664
      %2667 = vst.msk [vmem:[#allocation5 + $0x4] sm:$0x3] %vm2559, %v2665
      %s2668 = scalar_lea.vmem [#allocation4], 16
      %v2669 = vld [vmem:[%s2668] ss:$2 sm:$0xf]
      %v2670 = vpack.c.bf16 %v2669, %v2669
      %v2672 = vunpack.c.l.b16 %v2670
      %v2673 = vpack.c.b16 %v2672, %v2672
      %2674 = vrot.lane.b32.xlu0 %v2673, 64
      %v2675 = vpop.permute.xlu0 %2674
      %2677 = vst.msk [vmem:[%s2489 + $0x4] sm:$0x3] %vm2559, %v2675
      %s2678 = scalar_lea.vmem [#allocation4], 32
      %v2679 = vld [vmem:[%s2678] ss:$2 sm:$0xf]
      %v2680 = vpack.c.bf16 %v2679, %v2679
      %v2682 = vunpack.c.l.b16 %v2680
      %v2683 = vpack.c.b16 %v2682, %v2682
      %2684 = vrot.lane.b32.xlu0 %v2683, 64
      %v2685 = vpop.permute.xlu0 %2684
      %2687 = vst.msk [vmem:[%s2510 + $0x4] sm:$0x3] %vm2559, %v2685
      %s2688 = scalar_lea.vmem [#allocation4], 48
      %v2689 = vld [vmem:[%s2688] ss:$2 sm:$0xf]
      %v2690 = vpack.c.bf16 %v2689, %v2689
      %v2692 = vunpack.c.l.b16 %v2690
      %v2693 = vpack.c.b16 %v2692, %v2692
      %2694 = vrot.lane.b32.xlu0 %v2693, 64
      %v2695 = vpop.permute.xlu0 %2694
      %2697 = vst.msk [vmem:[%s2528 + $0x4] sm:$0x3] %vm2559, %v2695
      %v2698 = vld [vmem:[#allocation5] sm:$0x33]
      %v2699 = vld [vmem:[#allocation5 + $0x8] sm:$0x33]
      %v2700 = vld [vmem:[#allocation5 + $0x10] sm:$0x33]
      %v2701 = vld [vmem:[#allocation5 + $0x18] sm:$0x33]
      %v2703 = vunpack.c.l.b16 %v2698
      %v2704 = vunpack.c.h.b16 %v2698
      %v2705 = vpack.c.b16 %v2703, %v2703
      %v2706 = vpack.c.b16 %v2704, %v2704
      %v2708 = vunpack.c.l.b16 %v2699
      %v2709 = vunpack.c.h.b16 %v2699
      %v2710 = vpack.c.b16 %v2708, %v2708
      %v2711 = vpack.c.b16 %v2709, %v2709
      %v2712 = vrot.slane %v2710, 6
      %v2713 = vrot.slane %v2711, 6
      %v2715 = vunpack.c.l.b16 %v2700
      %v2716 = vunpack.c.h.b16 %v2700
      %v2717 = vpack.c.b16 %v2715, %v2715
      %v2718 = vpack.c.b16 %v2716, %v2716
      %v2720 = vunpack.c.l.b16 %v2701
      %v2721 = vunpack.c.h.b16 %v2701
      %v2722 = vpack.c.b16 %v2720, %v2720
      %v2723 = vpack.c.b16 %v2721, %v2721
      %v2724 = vrot.slane %v2722, 2
      %v2725 = vrot.slane %v2723, 2
      %vm2726 = vcmask 1041408
      %v2729 = vsel %vm2726, %v2705, %v2712
      %v2732 = vsel %vm2726, %v2706, %v2713
      %v2734 = vsel %vm1520, %v2729, %v2717
      %v2736 = vsel %vm1520, %v2732, %v2718
      %vm2737 = vcmask 1045504
      %v2739 = vsel %vm2737, %v2734, %v2724
      %v2742 = vsel %vm2737, %v2736, %v2725
      %v2744 = vld [vmem:[%s3] sm:$0xf]
      %v2745 = vld [vmem:[%s3 + $0x4] sm:$0xf]
      %v2746 = vld [vmem:[%s3 + $0x8] sm:$0xf]
      %v2747 = vld [vmem:[%s3 + $0xc] sm:$0xf]
      %v2748 = vld [vmem:[%s3 + $0x10] sm:$0xf]
      %v2749 = vld [vmem:[%s3 + $0x14] sm:$0xf]
      %v2750 = vld [vmem:[%s3 + $0x18] sm:$0xf]
      %v2751 = vld [vmem:[%s3 + $0x1c] sm:$0xf]
      %v2752 = vld [vmem:[%s3 + $0x20] sm:$0xf]
      %v2753 = vld [vmem:[%s3 + $0x24] sm:$0xf]
      %v2754 = vld [vmem:[%s3 + $0x28] sm:$0xf]
      %v2755 = vld [vmem:[%s3 + $0x2c] sm:$0xf]
      %v2756 = vld [vmem:[%s3 + $0x30] sm:$0xf]
      %v2757 = vld [vmem:[%s3 + $0x34] sm:$0xf]
      %v2758 = vld [vmem:[%s3 + $0x38] sm:$0xf]
      %v2759 = vld [vmem:[%s3 + $0x3c] sm:$0xf]
      %v2760 = vld [vmem:[%s3 + $0x40] sm:$0xf]
      %v2761 = vld [vmem:[%s3 + $0x44] sm:$0xf]
      %v2762 = vld [vmem:[%s3 + $0x48] sm:$0xf]
      %v2763 = vld [vmem:[%s3 + $0x4c] sm:$0xf]
      %v2764 = vld [vmem:[%s3 + $0x50] sm:$0xf]
      %v2765 = vld [vmem:[%s3 + $0x54] sm:$0xf]
      %v2766 = vld [vmem:[%s3 + $0x58] sm:$0xf]
      %v2767 = vld [vmem:[%s3 + $0x5c] sm:$0xf]
      %v2768 = vld [vmem:[%s3 + $0x60] sm:$0xf]
      %v2769 = vld [vmem:[%s3 + $0x64] sm:$0xf]
      %v2770 = vld [vmem:[%s3 + $0x68] sm:$0xf]
      %v2771 = vld [vmem:[%s3 + $0x6c] sm:$0xf]
      %v2772 = vld [vmem:[%s3 + $0x70] sm:$0xf]
      %v2773 = vld [vmem:[%s3 + $0x74] sm:$0xf]
      %v2774 = vld [vmem:[%s3 + $0x78] sm:$0xf]
      %v2775 = vld [vmem:[%s3 + $0x7c] sm:$0xf]
      %v2776 = vld [vmem:[#allocation5] sm:$0x77]
      %v2777 = vld [vmem:[#allocation5 + $0x8] sm:$0x77]
      %v2778 = vld [vmem:[#allocation5 + $0x10] sm:$0x77]
      %v2779 = vld [vmem:[#allocation5 + $0x18] sm:$0x77]
      %v2781 = vunpack.c.l.b16 %v2776
      %v2782 = vunpack.c.h.b16 %v2776
      %v2783 = vpack.c.b16 %v2781, %v2781
      %v2784 = vpack.c.b16 %v2782, %v2782
      %v2786 = vshrl.u32 %v2783, 16
      %v2788 = vshll.u32 %v2783, 16
      %v2790 = vrot.slane %v2788, 1
      %v2791 = vor.u32 %v2786, %v2790
      %v2793 = vshrl.u32 %v2784, 16
      %v2795 = vshll.u32 %v2784, 16
      %v2797 = vrot.slane %v2795, 1
      %v2798 = vor.u32 %v2793, %v2797
      %v2800 = vunpack.c.l.b16 %v2777
      %v2801 = vunpack.c.h.b16 %v2777
      %v2802 = vpack.c.b16 %v2800, %v2800
      %v2803 = vpack.c.b16 %v2801, %v2801
      %v2805 = vshrl.u32 %v2802, 16
      %v2807 = vrot.slane %v2805, 6
      %v2808 = vshll.u32 %v2802, 16
      %v2810 = vrot.slane %v2808, 7
      %v2811 = vor.u32 %v2807, %v2810
      %v2813 = vshrl.u32 %v2803, 16
      %v2815 = vrot.slane %v2813, 6
      %v2816 = vshll.u32 %v2803, 16
      %v2818 = vrot.slane %v2816, 7
      %v2819 = vor.u32 %v2815, %v2818
      %v2821 = vunpack.c.l.b16 %v2778
      %v2822 = vunpack.c.h.b16 %v2778
      %v2823 = vpack.c.b16 %v2821, %v2821
      %v2824 = vpack.c.b16 %v2822, %v2822
      %v2826 = vshrl.u32 %v2823, 16
      %v2828 = vrot.slane %v2826, 4
      %v2829 = vshll.u32 %v2823, 16
      %v2831 = vrot.slane %v2829, 5
      %v2832 = vor.u32 %v2828, %v2831
      %v2834 = vshrl.u32 %v2824, 16
      %v2836 = vrot.slane %v2834, 4
      %v2837 = vshll.u32 %v2824, 16
      %v2839 = vrot.slane %v2837, 5
      %v2840 = vor.u32 %v2836, %v2839
      %v2842 = vunpack.c.l.b16 %v2779
      %v2843 = vunpack.c.h.b16 %v2779
      %v2844 = vpack.c.b16 %v2842, %v2842
      %v2845 = vpack.c.b16 %v2843, %v2843
      %v2847 = vshrl.u32 %v2844, 16
      %v2849 = vrot.slane %v2847, 2
      %v2850 = vshll.u32 %v2844, 16
      %v2852 = vrot.slane %v2850, 3
      %v2853 = vor.u32 %v2849, %v2852
      %v2855 = vshrl.u32 %v2845, 16
      %v2857 = vrot.slane %v2855, 2
      %v2858 = vshll.u32 %v2845, 16
      %v2860 = vrot.slane %v2858, 3
      %v2861 = vor.u32 %v2857, %v2860
      %v2864 = vsel %vm2726, %v2791, %v2811
      %v2867 = vsel %vm2726, %v2798, %v2819
      %v2869 = vsel %vm1520, %v2864, %v2832
      %v2871 = vsel %vm1520, %v2867, %v2840
      %v2873 = vsel %vm2737, %v2869, %v2853
      %v2876 = vsel %vm2737, %v2871, %v2861
      %s2878 = scalar_lea.vmem %s3, 128
      %v2879 = vld [vmem:[%s2878] sm:$0xf]
      %v2880 = vld [vmem:[%s2878 + $0x4] sm:$0xf]
      %v2881 = vld [vmem:[%s2878 + $0x8] sm:$0xf]
      %v2882 = vld [vmem:[%s2878 + $0xc] sm:$0xf]
      %v2883 = vld [vmem:[%s2878 + $0x10] sm:$0xf]
      %v2884 = vld [vmem:[%s2878 + $0x14] sm:$0xf]
      %v2885 = vld [vmem:[%s2878 + $0x18] sm:$0xf]
      %v2886 = vld [vmem:[%s2878 + $0x1c] sm:$0xf]
      %v2887 = vld [vmem:[%s2878 + $0x20] sm:$0xf]
      %v2888 = vld [vmem:[%s2878 + $0x24] sm:$0xf]
      %v2889 = vld [vmem:[%s2878 + $0x28] sm:$0xf]
      %v2890 = vld [vmem:[%s2878 + $0x2c] sm:$0xf]
      %v2891 = vld [vmem:[%s2878 + $0x30] sm:$0xf]
      %v2892 = vld [vmem:[%s2878 + $0x34] sm:$0xf]
      %v2893 = vld [vmem:[%s2878 + $0x38] sm:$0xf]
      %v2894 = vld [vmem:[%s2878 + $0x3c] sm:$0xf]
      %v2895 = vld [vmem:[%s2878 + $0x40] sm:$0xf]
      %v2896 = vld [vmem:[%s2878 + $0x44] sm:$0xf]
      %v2897 = vld [vmem:[%s2878 + $0x48] sm:$0xf]
      %v2898 = vld [vmem:[%s2878 + $0x4c] sm:$0xf]
      %v2899 = vld [vmem:[%s2878 + $0x50] sm:$0xf]
      %v2900 = vld [vmem:[%s2878 + $0x54] sm:$0xf]
      %v2901 = vld [vmem:[%s2878 + $0x58] sm:$0xf]
      %v2902 = vld [vmem:[%s2878 + $0x5c] sm:$0xf]
      %v2903 = vld [vmem:[%s2878 + $0x60] sm:$0xf]
      %v2904 = vld [vmem:[%s2878 + $0x64] sm:$0xf]
      %v2905 = vld [vmem:[%s2878 + $0x68] sm:$0xf]
      %v2906 = vld [vmem:[%s2878 + $0x6c] sm:$0xf]
      %v2907 = vld [vmem:[%s2878 + $0x70] sm:$0xf]
      %v2908 = vld [vmem:[%s2878 + $0x74] sm:$0xf]
      %v2909 = vld [vmem:[%s2878 + $0x78] sm:$0xf]
      %v2910 = vld [vmem:[%s2878 + $0x7c] sm:$0xf]
      %v2943 = vunpack.c.l.b16 %v2879
      %v2944 = vunpack.c.l.b16 %v2880
      %v2945 = vunpack.c.l.b16 %v2881
      %v2946 = vunpack.c.l.b16 %v2882
      %v2947 = vunpack.c.l.b16 %v2883
      %v2948 = vunpack.c.l.b16 %v2884
      %v2949 = vunpack.c.l.b16 %v2885
      %v2950 = vunpack.c.l.b16 %v2886
      %v2951 = vunpack.c.l.b16 %v2887
      %v2952 = vunpack.c.l.b16 %v2888
      %v2953 = vunpack.c.l.b16 %v2889
      %v2954 = vunpack.c.l.b16 %v2890
      %v2955 = vunpack.c.l.b16 %v2891
      %v2956 = vunpack.c.l.b16 %v2892
      %v2957 = vunpack.c.l.b16 %v2893
      %v2958 = vunpack.c.l.b16 %v2894
      %v2959 = vunpack.c.l.b16 %v2895
      %v2960 = vunpack.c.l.b16 %v2896
      %v2961 = vunpack.c.l.b16 %v2897
      %v2962 = vunpack.c.l.b16 %v2898
      %v2963 = vunpack.c.l.b16 %v2899
      %v2964 = vunpack.c.l.b16 %v2900
      %v2965 = vunpack.c.l.b16 %v2901
      %v2966 = vunpack.c.l.b16 %v2902
      %v2967 = vunpack.c.l.b16 %v2903
      %v2968 = vunpack.c.l.b16 %v2904
      %v2969 = vunpack.c.l.b16 %v2905
      %v2970 = vunpack.c.l.b16 %v2906
      %v2971 = vunpack.c.l.b16 %v2907
      %v2972 = vunpack.c.l.b16 %v2908
      %v2973 = vunpack.c.l.b16 %v2909
      %v2974 = vunpack.c.l.b16 %v2910
      %v2975 = vpack.c.b16 %v2944, %v2943
      %v2976 = vpack.c.b16 %v2946, %v2945
      %v2977 = vpack.c.b16 %v2948, %v2947
      %v2978 = vpack.c.b16 %v2950, %v2949
      %v2979 = vpack.c.b16 %v2952, %v2951
      %v2980 = vpack.c.b16 %v2954, %v2953
      %v2981 = vpack.c.b16 %v2956, %v2955
      %v2982 = vpack.c.b16 %v2958, %v2957
      %v2983 = vpack.c.b16 %v2960, %v2959
      %v2984 = vpack.c.b16 %v2962, %v2961
      %v2985 = vpack.c.b16 %v2964, %v2963
      %v2986 = vpack.c.b16 %v2966, %v2965
      %v2987 = vpack.c.b16 %v2968, %v2967
      %v2988 = vpack.c.b16 %v2970, %v2969
      %v2989 = vpack.c.b16 %v2972, %v2971
      %v2990 = vpack.c.b16 %v2974, %v2973
      %3007 = vmatprep.subr.bf16.mxu0 0
      %3008 = vmatpush1.bf16.msra.mxu0 %v2975
      %3009 = vmatprep.subr.bf16.mxu0 0
      %3010 = vmatpush1.bf16.msra.mxu0 %v2976
      %3011 = vmatprep.subr.bf16.mxu0 0
      %3012 = vmatpush1.bf16.msra.mxu0 %v2977
      %3013 = vmatprep.subr.bf16.mxu0 0
      %3014 = vmatpush1.bf16.msra.mxu0 %v2978
      %3015 = vmatprep.subr.bf16.mxu0 0
      %3016 = vmatpush1.bf16.msra.mxu0 %v2979
      %3017 = vmatprep.subr.bf16.mxu0 0
      %3018 = vmatpush1.bf16.msra.mxu0 %v2980
      %3019 = vmatprep.subr.bf16.mxu0 0
      %3020 = vmatpush1.bf16.msra.mxu0 %v2981
      %3021 = vmatprep.subr.bf16.mxu0 0
      %3022 = vmatpush1.bf16.msra.mxu0 %v2982
      %3023 = vmatprep.subr.bf16.mxu0 0
      %3024 = vmatpush1.bf16.msra.mxu0 %v2983
      %3025 = vmatprep.subr.bf16.mxu0 0
      %3026 = vmatpush1.bf16.msra.mxu0 %v2984
      %3027 = vmatprep.subr.bf16.mxu0 0
      %3028 = vmatpush1.bf16.msra.mxu0 %v2985
      %3029 = vmatprep.subr.bf16.mxu0 0
      %3030 = vmatpush1.bf16.msra.mxu0 %v2986
      %3031 = vmatprep.subr.bf16.mxu0 0
      %3032 = vmatpush1.bf16.msra.mxu0 %v2987
      %3033 = vmatprep.subr.bf16.mxu0 0
      %3034 = vmatpush1.bf16.msra.mxu0 %v2988
      %3035 = vmatprep.subr.bf16.mxu0 0
      %3036 = vmatpush1.bf16.msra.mxu0 %v2989
      %3037 = vmatprep.subr.bf16.mxu0 0
      %3038 = vmatpush1.bf16.msra.mxu0 %v2990
      %3039 = vmatprep.mubr.bf16.mxu0 %v2876
      %3040 = vmatmul.mubr.bf16.gmra.mrb[0].mxu0 %v2873
      %v3041 = vpop.f32.mrb[0].mxu0
      %v3042 = vadd.f32 0.0, %v3041
      %v3043 = vpop.f32.mrb[0].mxu0
      %v3044 = vpop.f32.mrb[0].mxu0
      %v3045 = vadd.f32 0.0, %v3044
      %v3046 = vpop.f32.mrb[0].mxu0
      %3047 = vdwg.mxu0
      %v3080 = vunpack.c.l.b16 %v2744
      %v3081 = vunpack.c.l.b16 %v2745
      %v3082 = vunpack.c.l.b16 %v2746
      %v3083 = vunpack.c.l.b16 %v2747
      %v3084 = vunpack.c.l.b16 %v2748
      %v3085 = vunpack.c.l.b16 %v2749
      %v3086 = vunpack.c.l.b16 %v2750
      %v3087 = vunpack.c.l.b16 %v2751
      %v3088 = vunpack.c.l.b16 %v2752
      %v3089 = vunpack.c.l.b16 %v2753
      %v3090 = vunpack.c.l.b16 %v2754
      %v3091 = vunpack.c.l.b16 %v2755
      %v3092 = vunpack.c.l.b16 %v2756
      %v3093 = vunpack.c.l.b16 %v2757
      %v3094 = vunpack.c.l.b16 %v2758
      %v3095 = vunpack.c.l.b16 %v2759
      %v3096 = vunpack.c.l.b16 %v2760
      %v3097 = vunpack.c.l.b16 %v2761
      %v3098 = vunpack.c.l.b16 %v2762
      %v3099 = vunpack.c.l.b16 %v2763
      %v3100 = vunpack.c.l.b16 %v2764
      %v3101 = vunpack.c.l.b16 %v2765
      %v3102 = vunpack.c.l.b16 %v2766
      %v3103 = vunpack.c.l.b16 %v2767
      %v3104 = vunpack.c.l.b16 %v2768
      %v3105 = vunpack.c.l.b16 %v2769
      %v3106 = vunpack.c.l.b16 %v2770
      %v3107 = vunpack.c.l.b16 %v2771
      %v3108 = vunpack.c.l.b16 %v2772
      %v3109 = vunpack.c.l.b16 %v2773
      %v3110 = vunpack.c.l.b16 %v2774
      %v3111 = vunpack.c.l.b16 %v2775
      %v3112 = vpack.c.b16 %v3081, %v3080
      %v3113 = vpack.c.b16 %v3083, %v3082
      %v3114 = vpack.c.b16 %v3085, %v3084
      %v3115 = vpack.c.b16 %v3087, %v3086
      %v3116 = vpack.c.b16 %v3089, %v3088
      %v3117 = vpack.c.b16 %v3091, %v3090
      %v3118 = vpack.c.b16 %v3093, %v3092
      %v3119 = vpack.c.b16 %v3095, %v3094
      %v3120 = vpack.c.b16 %v3097, %v3096
      %v3121 = vpack.c.b16 %v3099, %v3098
      %v3122 = vpack.c.b16 %v3101, %v3100
      %v3123 = vpack.c.b16 %v3103, %v3102
      %v3124 = vpack.c.b16 %v3105, %v3104
      %v3125 = vpack.c.b16 %v3107, %v3106
      %v3126 = vpack.c.b16 %v3109, %v3108
      %v3127 = vpack.c.b16 %v3111, %v3110
      %3144 = vmatprep.subr.bf16.mxu0 0
      %3145 = vmatpush1.bf16.msra.mxu0 %v3112
      %3146 = vmatprep.subr.bf16.mxu0 0
      %3147 = vmatpush1.bf16.msra.mxu0 %v3113
      %3148 = vmatprep.subr.bf16.mxu0 0
      %3149 = vmatpush1.bf16.msra.mxu0 %v3114
      %3150 = vmatprep.subr.bf16.mxu0 0
      %3151 = vmatpush1.bf16.msra.mxu0 %v3115
      %3152 = vmatprep.subr.bf16.mxu0 0
      %3153 = vmatpush1.bf16.msra.mxu0 %v3116
      %3154 = vmatprep.subr.bf16.mxu0 0
      %3155 = vmatpush1.bf16.msra.mxu0 %v3117
      %3156 = vmatprep.subr.bf16.mxu0 0
      %3157 = vmatpush1.bf16.msra.mxu0 %v3118
      %3158 = vmatprep.subr.bf16.mxu0 0
      %3159 = vmatpush1.bf16.msra.mxu0 %v3119
      %3160 = vmatprep.subr.bf16.mxu0 0
      %3161 = vmatpush1.bf16.msra.mxu0 %v3120
      %3162 = vmatprep.subr.bf16.mxu0 0
      %3163 = vmatpush1.bf16.msra.mxu0 %v3121
      %3164 = vmatprep.subr.bf16.mxu0 0
      %3165 = vmatpush1.bf16.msra.mxu0 %v3122
      %3166 = vmatprep.subr.bf16.mxu0 0
      %3167 = vmatpush1.bf16.msra.mxu0 %v3123
      %3168 = vmatprep.subr.bf16.mxu0 0
      %3169 = vmatpush1.bf16.msra.mxu0 %v3124
      %3170 = vmatprep.subr.bf16.mxu0 0
      %3171 = vmatpush1.bf16.msra.mxu0 %v3125
      %3172 = vmatprep.subr.bf16.mxu0 0
      %3173 = vmatpush1.bf16.msra.mxu0 %v3126
      %3174 = vmatprep.subr.bf16.mxu0 0
      %3175 = vmatpush1.bf16.msra.mxu0 %v3127
      %3176 = vmatprep.mubr.bf16.mxu0 %v2742
      %3177 = vmatmul.mubr.bf16.gmra.mrb[0].mxu0 %v2739
      %v3178 = vpop.f32.mrb[0].mxu0
      %v3179 = vadd.f32 %v3042, %v3178
      %v3180 = vpop.f32.mrb[0].mxu0
      %v3181 = vpop.f32.mrb[0].mxu0
      %v3182 = vadd.f32 %v3045, %v3181
      %v3183 = vpop.f32.mrb[0].mxu0
      %3184 = vdwg.mxu0
      %v3185 = vld [vmem:[%s2489] sm:$0x33]
      %v3186 = vld [vmem:[%s2489 + $0x8] sm:$0x33]
      %v3187 = vld [vmem:[%s2489 + $0x10] sm:$0x33]
      %v3188 = vld [vmem:[%s2489 + $0x18] sm:$0x33]
      %v3190 = vunpack.c.l.b16 %v3185
      %v3191 = vunpack.c.h.b16 %v3185
      %v3192 = vpack.c.b16 %v3190, %v3190
      %v3193 = vpack.c.b16 %v3191, %v3191
      %v3195 = vunpack.c.l.b16 %v3186
      %v3196 = vunpack.c.h.b16 %v3186
      %v3197 = vpack.c.b16 %v3195, %v3195
      %v3198 = vpack.c.b16 %v3196, %v3196
      %v3199 = vrot.slane %v3197, 6
      %v3200 = vrot.slane %v3198, 6
      %v3202 = vunpack.c.l.b16 %v3187
      %v3203 = vunpack.c.h.b16 %v3187
      %v3204 = vpack.c.b16 %v3202, %v3202
      %v3205 = vpack.c.b16 %v3203, %v3203
      %v3207 = vunpack.c.l.b16 %v3188
      %v3208 = vunpack.c.h.b16 %v3188
      %v3209 = vpack.c.b16 %v3207, %v3207
      %v3210 = vpack.c.b16 %v3208, %v3208
      %v3211 = vrot.slane %v3209, 2
      %v3212 = vrot.slane %v3210, 2
      %v3215 = vsel %vm2726, %v3192, %v3199
      %v3218 = vsel %vm2726, %v3193, %v3200
      %v3220 = vsel %vm1520, %v3215, %v3204
      %v3222 = vsel %vm1520, %v3218, %v3205
      %v3224 = vsel %vm2737, %v3220, %v3211
      %v3227 = vsel %vm2737, %v3222, %v3212
      %s3229 = scalar_lea.vmem %s3, 256
      %v3230 = vld [vmem:[%s3229] sm:$0xf]
      %v3231 = vld [vmem:[%s3229 + $0x4] sm:$0xf]
      %v3232 = vld [vmem:[%s3229 + $0x8] sm:$0xf]
      %v3233 = vld [vmem:[%s3229 + $0xc] sm:$0xf]
      %v3234 = vld [vmem:[%s3229 + $0x10] sm:$0xf]
      %v3235 = vld [vmem:[%s3229 + $0x14] sm:$0xf]
      %v3236 = vld [vmem:[%s3229 + $0x18] sm:$0xf]
      %v3237 = vld [vmem:[%s3229 + $0x1c] sm:$0xf]
      %v3238 = vld [vmem:[%s3229 + $0x20] sm:$0xf]
      %v3239 = vld [vmem:[%s3229 + $0x24] sm:$0xf]
      %v3240 = vld [vmem:[%s3229 + $0x28] sm:$0xf]
      %v3241 = vld [vmem:[%s3229 + $0x2c] sm:$0xf]
      %v3242 = vld [vmem:[%s3229 + $0x30] sm:$0xf]
      %v3243 = vld [vmem:[%s3229 + $0x34] sm:$0xf]
      %v3244 = vld [vmem:[%s3229 + $0x38] sm:$0xf]
      %v3245 = vld [vmem:[%s3229 + $0x3c] sm:$0xf]
      %v3246 = vld [vmem:[%s3229 + $0x40] sm:$0xf]
      %v3247 = vld [vmem:[%s3229 + $0x44] sm:$0xf]
      %v3248 = vld [vmem:[%s3229 + $0x48] sm:$0xf]
      %v3249 = vld [vmem:[%s3229 + $0x4c] sm:$0xf]
      %v3250 = vld [vmem:[%s3229 + $0x50] sm:$0xf]
      %v3251 = vld [vmem:[%s3229 + $0x54] sm:$0xf]
      %v3252 = vld [vmem:[%s3229 + $0x58] sm:$0xf]
      %v3253 = vld [vmem:[%s3229 + $0x5c] sm:$0xf]
      %v3254 = vld [vmem:[%s3229 + $0x60] sm:$0xf]
      %v3255 = vld [vmem:[%s3229 + $0x64] sm:$0xf]
      %v3256 = vld [vmem:[%s3229 + $0x68] sm:$0xf]
      %v3257 = vld [vmem:[%s3229 + $0x6c] sm:$0xf]
      %v3258 = vld [vmem:[%s3229 + $0x70] sm:$0xf]
      %v3259 = vld [vmem:[%s3229 + $0x74] sm:$0xf]
      %v3260 = vld [vmem:[%s3229 + $0x78] sm:$0xf]
      %v3261 = vld [vmem:[%s3229 + $0x7c] sm:$0xf]
      %v3294 = vunpack.c.l.b16 %v3230
      %v3295 = vunpack.c.l.b16 %v3231
      %v3296 = vunpack.c.l.b16 %v3232
      %v3297 = vunpack.c.l.b16 %v3233
      %v3298 = vunpack.c.l.b16 %v3234
      %v3299 = vunpack.c.l.b16 %v3235
      %v3300 = vunpack.c.l.b16 %v3236
      %v3301 = vunpack.c.l.b16 %v3237
      %v3302 = vunpack.c.l.b16 %v3238
      %v3303 = vunpack.c.l.b16 %v3239
      %v3304 = vunpack.c.l.b16 %v3240
      %v3305 = vunpack.c.l.b16 %v3241
      %v3306 = vunpack.c.l.b16 %v3242
      %v3307 = vunpack.c.l.b16 %v3243
      %v3308 = vunpack.c.l.b16 %v3244
      %v3309 = vunpack.c.l.b16 %v3245
      %v3310 = vunpack.c.l.b16 %v3246
      %v3311 = vunpack.c.l.b16 %v3247
      %v3312 = vunpack.c.l.b16 %v3248
      %v3313 = vunpack.c.l.b16 %v3249
      %v3314 = vunpack.c.l.b16 %v3250
      %v3315 = vunpack.c.l.b16 %v3251
      %v3316 = vunpack.c.l.b16 %v3252
      %v3317 = vunpack.c.l.b16 %v3253
      %v3318 = vunpack.c.l.b16 %v3254
      %v3319 = vunpack.c.l.b16 %v3255
      %v3320 = vunpack.c.l.b16 %v3256
      %v3321 = vunpack.c.l.b16 %v3257
      %v3322 = vunpack.c.l.b16 %v3258
      %v3323 = vunpack.c.l.b16 %v3259
      %v3324 = vunpack.c.l.b16 %v3260
      %v3325 = vunpack.c.l.b16 %v3261
      %v3326 = vpack.c.b16 %v3295, %v3294
      %v3327 = vpack.c.b16 %v3297, %v3296
      %v3328 = vpack.c.b16 %v3299, %v3298
      %v3329 = vpack.c.b16 %v3301, %v3300
      %v3330 = vpack.c.b16 %v3303, %v3302
      %v3331 = vpack.c.b16 %v3305, %v3304
      %v3332 = vpack.c.b16 %v3307, %v3306
      %v3333 = vpack.c.b16 %v3309, %v3308
      %v3334 = vpack.c.b16 %v3311, %v3310
      %v3335 = vpack.c.b16 %v3313, %v3312
      %v3336 = vpack.c.b16 %v3315, %v3314
      %v3337 = vpack.c.b16 %v3317, %v3316
      %v3338 = vpack.c.b16 %v3319, %v3318
      %v3339 = vpack.c.b16 %v3321, %v3320
      %v3340 = vpack.c.b16 %v3323, %v3322
      %v3341 = vpack.c.b16 %v3325, %v3324
      %3358 = vmatprep.subr.bf16.mxu0 0
      %3359 = vmatpush1.bf16.msra.mxu0 %v3326
      %3360 = vmatprep.subr.bf16.mxu0 0
      %3361 = vmatpush1.bf16.msra.mxu0 %v3327
      %3362 = vmatprep.subr.bf16.mxu0 0
      %3363 = vmatpush1.bf16.msra.mxu0 %v3328
      %3364 = vmatprep.subr.bf16.mxu0 0
      %3365 = vmatpush1.bf16.msra.mxu0 %v3329
      %3366 = vmatprep.subr.bf16.mxu0 0
      %3367 = vmatpush1.bf16.msra.mxu0 %v3330
      %3368 = vmatprep.subr.bf16.mxu0 0
      %3369 = vmatpush1.bf16.msra.mxu0 %v3331
      %3370 = vmatprep.subr.bf16.mxu0 0
      %3371 = vmatpush1.bf16.msra.mxu0 %v3332
      %3372 = vmatprep.subr.bf16.mxu0 0
      %3373 = vmatpush1.bf16.msra.mxu0 %v3333
      %3374 = vmatprep.subr.bf16.mxu0 0
      %3375 = vmatpush1.bf16.msra.mxu0 %v3334
      %3376 = vmatprep.subr.bf16.mxu0 0
      %3377 = vmatpush1.bf16.msra.mxu0 %v3335
      %3378 = vmatprep.subr.bf16.mxu0 0
      %3379 = vmatpush1.bf16.msra.mxu0 %v3336
      %3380 = vmatprep.subr.bf16.mxu0 0
      %3381 = vmatpush1.bf16.msra.mxu0 %v3337
      %3382 = vmatprep.subr.bf16.mxu0 0
      %3383 = vmatpush1.bf16.msra.mxu0 %v3338
      %3384 = vmatprep.subr.bf16.mxu0 0
      %3385 = vmatpush1.bf16.msra.mxu0 %v3339
      %3386 = vmatprep.subr.bf16.mxu0 0
      %3387 = vmatpush1.bf16.msra.mxu0 %v3340
      %3388 = vmatprep.subr.bf16.mxu0 0
      %3389 = vmatpush1.bf16.msra.mxu0 %v3341
      %3390 = vmatprep.mubr.bf16.mxu0 %v3227
      %3391 = vmatmul.mubr.bf16.gmra.mrb[0].mxu0 %v3224
      %v3392 = vpop.f32.mrb[0].mxu0
      %v3393 = vadd.f32 0.0, %v3392
      %v3394 = vpop.f32.mrb[0].mxu0
      %v3395 = vpop.f32.mrb[0].mxu0
      %v3396 = vadd.f32 0.0, %v3395
      %v3397 = vpop.f32.mrb[0].mxu0
      %3398 = vdwg.mxu0
      %v3399 = vadd.f32 %v3179, %v3393
      %v3400 = vadd.f32 %v3182, %v3396
      %v3401 = vld [vmem:[%s2489] sm:$0x77]
      %v3402 = vld [vmem:[%s2489 + $0x8] sm:$0x77]
      %v3403 = vld [vmem:[%s2489 + $0x10] sm:$0x77]
      %v3404 = vld [vmem:[%s2489 + $0x18] sm:$0x77]
      %v3406 = vunpack.c.l.b16 %v3401
      %v3407 = vunpack.c.h.b16 %v3401
      %v3408 = vpack.c.b16 %v3406, %v3406
      %v3409 = vpack.c.b16 %v3407, %v3407
      %v3411 = vshrl.u32 %v3408, 16
      %v3413 = vshll.u32 %v3408, 16
      %v3415 = vrot.slane %v3413, 1
      %v3416 = vor.u32 %v3411, %v3415
      %v3418 = vshrl.u32 %v3409, 16
      %v3420 = vshll.u32 %v3409, 16
      %v3422 = vrot.slane %v3420, 1
      %v3423 = vor.u32 %v3418, %v3422
      %v3425 = vunpack.c.l.b16 %v3402
      %v3426 = vunpack.c.h.b16 %v3402
      %v3427 = vpack.c.b16 %v3425, %v3425
      %v3428 = vpack.c.b16 %v3426, %v3426
      %v3430 = vshrl.u32 %v3427, 16
      %v3432 = vrot.slane %v3430, 6
      %v3433 = vshll.u32 %v3427, 16
      %v3435 = vrot.slane %v3433, 7
      %v3436 = vor.u32 %v3432, %v3435
      %v3438 = vshrl.u32 %v3428, 16
      %v3440 = vrot.slane %v3438, 6
      %v3441 = vshll.u32 %v3428, 16
      %v3443 = vrot.slane %v3441, 7
      %v3444 = vor.u32 %v3440, %v3443
      %v3446 = vunpack.c.l.b16 %v3403
      %v3447 = vunpack.c.h.b16 %v3403
      %v3448 = vpack.c.b16 %v3446, %v3446
      %v3449 = vpack.c.b16 %v3447, %v3447
      %v3451 = vshrl.u32 %v3448, 16
      %v3453 = vrot.slane %v3451, 4
      %v3454 = vshll.u32 %v3448, 16
      %v3456 = vrot.slane %v3454, 5
      %v3457 = vor.u32 %v3453, %v3456
      %v3459 = vshrl.u32 %v3449, 16
      %v3461 = vrot.slane %v3459, 4
      %v3462 = vshll.u32 %v3449, 16
      %v3464 = vrot.slane %v3462, 5
      %v3465 = vor.u32 %v3461, %v3464
      %v3467 = vunpack.c.l.b16 %v3404
      %v3468 = vunpack.c.h.b16 %v3404
      %v3469 = vpack.c.b16 %v3467, %v3467
      %v3470 = vpack.c.b16 %v3468, %v3468
      %v3472 = vshrl.u32 %v3469, 16
      %v3474 = vrot.slane %v3472, 2
      %v3475 = vshll.u32 %v3469, 16
      %v3477 = vrot.slane %v3475, 3
      %v3478 = vor.u32 %v3474, %v3477
      %v3480 = vshrl.u32 %v3470, 16
      %v3482 = vrot.slane %v3480, 2
      %v3483 = vshll.u32 %v3470, 16
      %v3485 = vrot.slane %v3483, 3
      %v3486 = vor.u32 %v3482, %v3485
      %v3489 = vsel %vm2726, %v3416, %v3436
      %v3492 = vsel %vm2726, %v3423, %v3444
      %v3494 = vsel %vm1520, %v3489, %v3457
      %v3496 = vsel %vm1520, %v3492, %v3465
      %v3498 = vsel %vm2737, %v3494, %v3478
      %v3501 = vsel %vm2737, %v3496, %v3486
      %s3503 = scalar_lea.vmem %s3, 384
      %v3504 = vld [vmem:[%s3503] sm:$0xf]
      %v3505 = vld [vmem:[%s3503 + $0x4] sm:$0xf]
      %v3506 = vld [vmem:[%s3503 + $0x8] sm:$0xf]
      %v3507 = vld [vmem:[%s3503 + $0xc] sm:$0xf]
      %v3508 = vld [vmem:[%s3503 + $0x10] sm:$0xf]
      %v3509 = vld [vmem:[%s3503 + $0x14] sm:$0xf]
      %v3510 = vld [vmem:[%s3503 + $0x18] sm:$0xf]
      %v3511 = vld [vmem:[%s3503 + $0x1c] sm:$0xf]
      %v3512 = vld [vmem:[%s3503 + $0x20] sm:$0xf]
      %v3513 = vld [vmem:[%s3503 + $0x24] sm:$0xf]
      %v3514 = vld [vmem:[%s3503 + $0x28] sm:$0xf]
      %v3515 = vld [vmem:[%s3503 + $0x2c] sm:$0xf]
      %v3516 = vld [vmem:[%s3503 + $0x30] sm:$0xf]
      %v3517 = vld [vmem:[%s3503 + $0x34] sm:$0xf]
      %v3518 = vld [vmem:[%s3503 + $0x38] sm:$0xf]
      %v3519 = vld [vmem:[%s3503 + $0x3c] sm:$0xf]
      %v3520 = vld [vmem:[%s3503 + $0x40] sm:$0xf]
      %v3521 = vld [vmem:[%s3503 + $0x44] sm:$0xf]
      %v3522 = vld [vmem:[%s3503 + $0x48] sm:$0xf]
      %v3523 = vld [vmem:[%s3503 + $0x4c] sm:$0xf]
      %v3524 = vld [vmem:[%s3503 + $0x50] sm:$0xf]
      %v3525 = vld [vmem:[%s3503 + $0x54] sm:$0xf]
      %v3526 = vld [vmem:[%s3503 + $0x58] sm:$0xf]
      %v3527 = vld [vmem:[%s3503 + $0x5c] sm:$0xf]
      %v3528 = vld [vmem:[%s3503 + $0x60] sm:$0xf]
      %v3529 = vld [vmem:[%s3503 + $0x64] sm:$0xf]
      %v3530 = vld [vmem:[%s3503 + $0x68] sm:$0xf]
      %v3531 = vld [vmem:[%s3503 + $0x6c] sm:$0xf]
      %v3532 = vld [vmem:[%s3503 + $0x70] sm:$0xf]
      %v3533 = vld [vmem:[%s3503 + $0x74] sm:$0xf]
      %v3534 = vld [vmem:[%s3503 + $0x78] sm:$0xf]
      %v3535 = vld [vmem:[%s3503 + $0x7c] sm:$0xf]
      %v3568 = vunpack.c.l.b16 %v3504
      %v3569 = vunpack.c.l.b16 %v3505
      %v3570 = vunpack.c.l.b16 %v3506
      %v3571 = vunpack.c.l.b16 %v3507
      %v3572 = vunpack.c.l.b16 %v3508
      %v3573 = vunpack.c.l.b16 %v3509
      %v3574 = vunpack.c.l.b16 %v3510
      %v3575 = vunpack.c.l.b16 %v3511
      %v3576 = vunpack.c.l.b16 %v3512
      %v3577 = vunpack.c.l.b16 %v3513
      %v3578 = vunpack.c.l.b16 %v3514
      %v3579 = vunpack.c.l.b16 %v3515
      %v3580 = vunpack.c.l.b16 %v3516
      %v3581 = vunpack.c.l.b16 %v3517
      %v3582 = vunpack.c.l.b16 %v3518
      %v3583 = vunpack.c.l.b16 %v3519
      %v3584 = vunpack.c.l.b16 %v3520
      %v3585 = vunpack.c.l.b16 %v3521
      %v3586 = vunpack.c.l.b16 %v3522
      %v3587 = vunpack.c.l.b16 %v3523
      %v3588 = vunpack.c.l.b16 %v3524
      %v3589 = vunpack.c.l.b16 %v3525
      %v3590 = vunpack.c.l.b16 %v3526
      %v3591 = vunpack.c.l.b16 %v3527
      %v3592 = vunpack.c.l.b16 %v3528
      %v3593 = vunpack.c.l.b16 %v3529
      %v3594 = vunpack.c.l.b16 %v3530
      %v3595 = vunpack.c.l.b16 %v3531
      %v3596 = vunpack.c.l.b16 %v3532
      %v3597 = vunpack.c.l.b16 %v3533
      %v3598 = vunpack.c.l.b16 %v3534
      %v3599 = vunpack.c.l.b16 %v3535
      %v3600 = vpack.c.b16 %v3569, %v3568
      %v3601 = vpack.c.b16 %v3571, %v3570
      %v3602 = vpack.c.b16 %v3573, %v3572
      %v3603 = vpack.c.b16 %v3575, %v3574
      %v3604 = vpack.c.b16 %v3577, %v3576
      %v3605 = vpack.c.b16 %v3579, %v3578
      %v3606 = vpack.c.b16 %v3581, %v3580
      %v3607 = vpack.c.b16 %v3583, %v3582
      %v3608 = vpack.c.b16 %v3585, %v3584
      %v3609 = vpack.c.b16 %v3587, %v3586
      %v3610 = vpack.c.b16 %v3589, %v3588
      %v3611 = vpack.c.b16 %v3591, %v3590
      %v3612 = vpack.c.b16 %v3593, %v3592
      %v3613 = vpack.c.b16 %v3595, %v3594
      %v3614 = vpack.c.b16 %v3597, %v3596
      %v3615 = vpack.c.b16 %v3599, %v3598
      %3632 = vmatprep.subr.bf16.mxu0 0
      %3633 = vmatpush1.bf16.msra.mxu0 %v3600
      %3634 = vmatprep.subr.bf16.mxu0 0
      %3635 = vmatpush1.bf16.msra.mxu0 %v3601
      %3636 = vmatprep.subr.bf16.mxu0 0
      %3637 = vmatpush1.bf16.msra.mxu0 %v3602
      %3638 = vmatprep.subr.bf16.mxu0 0
      %3639 = vmatpush1.bf16.msra.mxu0 %v3603
      %3640 = vmatprep.subr.bf16.mxu0 0
      %3641 = vmatpush1.bf16.msra.mxu0 %v3604
      %3642 = vmatprep.subr.bf16.mxu0 0
      %3643 = vmatpush1.bf16.msra.mxu0 %v3605
      %3644 = vmatprep.subr.bf16.mxu0 0
      %3645 = vmatpush1.bf16.msra.mxu0 %v3606
      %3646 = vmatprep.subr.bf16.mxu0 0
      %3647 = vmatpush1.bf16.msra.mxu0 %v3607
      %3648 = vmatprep.subr.bf16.mxu0 0
      %3649 = vmatpush1.bf16.msra.mxu0 %v3608
      %3650 = vmatprep.subr.bf16.mxu0 0
      %3651 = vmatpush1.bf16.msra.mxu0 %v3609
      %3652 = vmatprep.subr.bf16.mxu0 0
      %3653 = vmatpush1.bf16.msra.mxu0 %v3610
      %3654 = vmatprep.subr.bf16.mxu0 0
      %3655 = vmatpush1.bf16.msra.mxu0 %v3611
      %3656 = vmatprep.subr.bf16.mxu0 0
      %3657 = vmatpush1.bf16.msra.mxu0 %v3612
      %3658 = vmatprep.subr.bf16.mxu0 0
      %3659 = vmatpush1.bf16.msra.mxu0 %v3613
      %3660 = vmatprep.subr.bf16.mxu0 0
      %3661 = vmatpush1.bf16.msra.mxu0 %v3614
      %3662 = vmatprep.subr.bf16.mxu0 0
      %3663 = vmatpush1.bf16.msra.mxu0 %v3615
      %3664 = vmatprep.mubr.bf16.mxu0 %v3501
      %3665 = vmatmul.mubr.bf16.gmra.mrb[0].mxu0 %v3498
      %v3666 = vpop.f32.mrb[0].mxu0
      %v3667 = vadd.f32 0.0, %v3666
      %v3668 = vpop.f32.mrb[0].mxu0
      %v3669 = vpop.f32.mrb[0].mxu0
      %v3670 = vadd.f32 0.0, %v3669
      %v3671 = vpop.f32.mrb[0].mxu0
      %3672 = vdwg.mxu0
      %v3673 = vadd.f32 %v3399, %v3667
      %v3674 = vadd.f32 %v3400, %v3670
      %v3675 = vld [vmem:[%s8] sm:$0x1]
      %v3677 = vlaneseq
      %v3678 = vshrl.u32 %v3677, 7
      %v3679 = vsub.s32 0, %v3678
      %v3680 = vrot.slane %v3675, %v3679
      %v3682 = vadd.f32 %v3673, %v3680
      %v3683 = vadd.f32 %v3674, %v3680
      %v3684 = vadd.f32 %v3682, %v3683
      %v3685 = vrot.slane %v3684, 4
      %v3686 = vadd.f32 %v3684, %v3685
      %v3687 = vrot.slane %v3686, 2
      %v3688 = vadd.f32 %v3686, %v3687
      %v3689 = vrot.slane %v3688, 1
      %v3690 = vadd.f32 %v3688, %v3689
      %v3691 = vrcp.pop 16.0
      %v3692 = vmul.f32 %v3690, %v3691
      %v3693 = vsub.f32 %v3682, %v3692
      %v3694 = vsub.f32 %v3683, %v3692
      %v3695 = vmul.f32 %v3693, %v3693
      %v3696 = vmul.f32 %v3694, %v3694
      %v3697 = vadd.f32 %v3695, %v3696
      %v3698 = vrot.slane %v3697, 4
      %v3699 = vadd.f32 %v3697, %v3698
      %v3700 = vrot.slane %v3699, 2
      %v3701 = vadd.f32 %v3699, %v3700
      %v3702 = vrot.slane %v3701, 1
      %v3703 = vadd.f32 %v3701, %v3702
      %v3704 = vmul.f32 %v3703, %v3691
      %v3705 = vadd.f32 %v3704, 1e-05
      %v3706 = vrsqrt.pop %v3705
      %v3707 = vmul.f32 %v3693, %v3706
      %v3708 = vmul.f32 %v3694, %v3706
      %vm3709 = vcmp.gt.f32.partialorder %v3707, 0.0
      %vm3710 = vcmp.gt.f32.partialorder %v3708, 0.0
      %v3711 = vmul.f32 %v3707, 0.2
      %v3712 = vmul.f32 %v3708, 0.2
      %v3713 = vsel %vm3709, %v3707, %v3711
      %v3714 = vsel %vm3710, %v3708, %v3712
      %v3715 = vpack.c.bf16 %v3713, %v3713
      %v3717 = vunpack.c.l.b16 %v3715
      %v3718 = vpack.c.b16 %v3717, %v3717
      %v3720 = vshrl.u32 %v3718, 16
      %v3722 = vrot.slane %v3720, 7
      %v3723 = vshll.u32 %v3718, 16
      %v3725 = vor.u32 %v3722, %v3723
      %s3727 = scalar_lea.vmem [#allocation6], 4
      %vm3728 = vmand %vm427, %vm2491
      %v3729 = vld [vmem:[%s3727] sm:$0x7]
      %v3730 = vsel %vm3728, %v3725, %v3729
      %3731 = vst [vmem:[%s3727] sm:$0x7] %v3730
      %v3732 = vrot.slane %v3720, 5
      %v3733 = vrot.slane %v3723, 6
      %v3734 = vor.u32 %v3732, %v3733
      %v3735 = vrot.slane %v3734, 4
      %s3737 = scalar_lea.vmem [#allocation6], 8
      %v3738 = vld [vmem:[%s3737] sm:$0x7]
      %v3739 = vsel %vm3728, %v3735, %v3738
      %3740 = vst [vmem:[%s3737] sm:$0x7] %v3739
      %v3741 = vpack.c.bf16 %v3714, %v3714
      %v3743 = vunpack.c.l.b16 %v3741
      %v3744 = vpack.c.b16 %v3743, %v3743
      %v3746 = vshrl.u32 %v3744, 16
      %v3748 = vrot.slane %v3746, 7
      %v3749 = vshll.u32 %v3744, 16
      %v3751 = vor.u32 %v3748, %v3749
      %s3753 = scalar_lea.vmem [#allocation6], 12
      %v3754 = vld [vmem:[%s3753] sm:$0x7]
      %v3755 = vsel %vm3728, %v3751, %v3754
      %3756 = vst [vmem:[%s3753] sm:$0x7] %v3755
      %v3757 = vrot.slane %v3746, 5
      %v3758 = vrot.slane %v3749, 6
      %v3759 = vor.u32 %v3757, %v3758
      %v3760 = vrot.slane %v3759, 4
      %s3762 = scalar_lea.vmem [#allocation6], 16
      %v3763 = vld [vmem:[%s3762] sm:$0x7]
      %v3764 = vsel %vm3728, %v3760, %v3763
      %3765 = vst [vmem:[%s3762] sm:$0x7] %v3764
      %v3766 = vld [vmem:[#allocation6] sm:$0x3]
      %v3767 = vld [vmem:[#allocation6 + $0x4] sm:$0x3]
      %v3768 = vld [vmem:[#allocation6 + $0x8] sm:$0x3]
      %v3770 = vunpack.c.l.b16 %v3767
      %v3771 = vpack.c.b16 %v3770, %v3770
      %v3773 = vshrl.u32 %v3771, 16
      %v3775 = vrot.slane %v3773, 6
      %v3776 = vshll.u32 %v3771, 16
      %v3778 = vrot.slane %v3776, 7
      %v3779 = vor.u32 %v3775, %v3778
      %v3782 = vunpack.c.l.b16 %v3768
      %v3783 = vpack.c.b16 %v3782, %v3782
      %v3784 = vrot.slane %v3783, 5
      %vm3785 = vcmask 1041408
      %vm3786 = vsmask.f32 1280
      %vm3787 = vmand %vm3785, %vm3786
      %v3788 = vsel %vm3787, %v3766, %v3779
      %vm3789 = vcmask 1042432
      %v3792 = vsel %vm3789, %v3788, %v3784
      %v3795 = vunpack.c.l.b16 %v3766
      %v3796 = vpack.c.b16 %v3795, %v3795
      %v3798 = vshrl.u32 %v3796, 16
      %v3800 = vshll.u32 %v3796, 16
      %v3802 = vrot.slane %v3800, 1
      %v3803 = vor.u32 %v3798, %v3802
      %v3805 = vrot.slane %v3771, 7
      %v3808 = vshrl.u32 %v3783, 16
      %v3810 = vrot.slane %v3808, 5
      %v3811 = vshll.u32 %v3783, 16
      %v3813 = vrot.slane %v3811, 6
      %v3814 = vor.u32 %v3810, %v3813
      %v3815 = vsel %vm3787, %v3803, %v3805
      %v3818 = vsel %vm3789, %v3815, %v3814
      %v3820 = vld [vmem:[%s4] sm:$0xff]
      %v3821 = vld [vmem:[%s4 + $0x8] sm:$0xff]
      %v3822 = vld [vmem:[%s4 + $0x10] sm:$0xff]
      %v3823 = vld [vmem:[%s4 + $0x18] sm:$0xff]
      %v3824 = vld [vmem:[%s4 + $0x20] sm:$0xff]
      %v3825 = vld [vmem:[%s4 + $0x28] sm:$0xff]
      %v3826 = vld [vmem:[%s4 + $0x30] sm:$0xff]
      %v3827 = vld [vmem:[%s4 + $0x38] sm:$0xff]
      %v3828 = vld [vmem:[%s4 + $0x40] sm:$0xff]
      %v3829 = vld [vmem:[%s4 + $0x48] sm:$0xff]
      %v3830 = vld [vmem:[%s4 + $0x50] sm:$0xff]
      %v3831 = vld [vmem:[%s4 + $0x58] sm:$0xff]
      %v3832 = vld [vmem:[%s4 + $0x60] sm:$0xff]
      %v3833 = vld [vmem:[%s4 + $0x68] sm:$0xff]
      %v3834 = vld [vmem:[%s4 + $0x70] sm:$0xff]
      %v3835 = vld [vmem:[%s4 + $0x78] sm:$0xff]
      %v3836 = vld [vmem:[%s4 + $0x80] sm:$0xff]
      %v3837 = vld [vmem:[%s4 + $0x88] sm:$0xff]
      %v3838 = vld [vmem:[%s4 + $0x90] sm:$0xff]
      %v3839 = vld [vmem:[%s4 + $0x98] sm:$0xff]
      %v3840 = vld [vmem:[%s4 + $0xa0] sm:$0xff]
      %v3841 = vld [vmem:[%s4 + $0xa8] sm:$0xff]
      %v3842 = vld [vmem:[%s4 + $0xb0] sm:$0xff]
      %v3843 = vld [vmem:[%s4 + $0xb8] sm:$0xff]
      %v3844 = vld [vmem:[%s4 + $0xc0] sm:$0xff]
      %v3845 = vld [vmem:[%s4 + $0xc8] sm:$0xff]
      %v3846 = vld [vmem:[%s4 + $0xd0] sm:$0xff]
      %v3847 = vld [vmem:[%s4 + $0xd8] sm:$0xff]
      %v3848 = vld [vmem:[%s4 + $0xe0] sm:$0xff]
      %v3849 = vld [vmem:[%s4 + $0xe8] sm:$0xff]
      %v3850 = vld [vmem:[%s4 + $0xf0] sm:$0xff]
      %v3851 = vld [vmem:[%s4 + $0xf8] sm:$0xff]
      %v3868 = vunpack.c.l.b16 %v3820
      %v3869 = vunpack.c.h.b16 %v3820
      %v3870 = vunpack.c.l.b16 %v3821
      %v3871 = vunpack.c.h.b16 %v3821
      %v3872 = vunpack.c.l.b16 %v3822
      %v3873 = vunpack.c.h.b16 %v3822
      %v3874 = vunpack.c.l.b16 %v3823
      %v3875 = vunpack.c.h.b16 %v3823
      %v3876 = vunpack.c.l.b16 %v3824
      %v3877 = vunpack.c.h.b16 %v3824
      %v3878 = vunpack.c.l.b16 %v3825
      %v3879 = vunpack.c.h.b16 %v3825
      %v3880 = vunpack.c.l.b16 %v3826
      %v3881 = vunpack.c.h.b16 %v3826
      %v3882 = vunpack.c.l.b16 %v3827
      %v3883 = vunpack.c.h.b16 %v3827
      %v3884 = vunpack.c.l.b16 %v3828
      %v3885 = vunpack.c.h.b16 %v3828
      %v3886 = vunpack.c.l.b16 %v3829
      %v3887 = vunpack.c.h.b16 %v3829
      %v3888 = vunpack.c.l.b16 %v3830
      %v3889 = vunpack.c.h.b16 %v3830
      %v3890 = vunpack.c.l.b16 %v3831
      %v3891 = vunpack.c.h.b16 %v3831
      %v3892 = vunpack.c.l.b16 %v3832
      %v3893 = vunpack.c.h.b16 %v3832
      %v3894 = vunpack.c.l.b16 %v3833
      %v3895 = vunpack.c.h.b16 %v3833
      %v3896 = vunpack.c.l.b16 %v3834
      %v3897 = vunpack.c.h.b16 %v3834
      %v3898 = vunpack.c.l.b16 %v3835
      %v3899 = vunpack.c.h.b16 %v3835
      %v3900 = vpack.c.b16 %v3870, %v3868
      %v3901 = vpack.c.b16 %v3871, %v3869
      %v3902 = vpack.c.b16 %v3874, %v3872
      %v3903 = vpack.c.b16 %v3875, %v3873
      %v3904 = vpack.c.b16 %v3878, %v3876
      %v3905 = vpack.c.b16 %v3879, %v3877
      %v3906 = vpack.c.b16 %v3882, %v3880
      %v3907 = vpack.c.b16 %v3883, %v3881
      %v3908 = vpack.c.b16 %v3886, %v3884
      %v3909 = vpack.c.b16 %v3887, %v3885
      %v3910 = vpack.c.b16 %v3890, %v3888
      %v3911 = vpack.c.b16 %v3891, %v3889
      %v3912 = vpack.c.b16 %v3894, %v3892
      %v3913 = vpack.c.b16 %v3895, %v3893
      %v3914 = vpack.c.b16 %v3898, %v3896
      %v3915 = vpack.c.b16 %v3899, %v3897
      %v3948 = vunpack.c.l.b16 %v3836
      %v3949 = vunpack.c.h.b16 %v3836
      %v3950 = vunpack.c.l.b16 %v3837
      %v3951 = vunpack.c.h.b16 %v3837
      %v3952 = vunpack.c.l.b16 %v3838
      %v3953 = vunpack.c.h.b16 %v3838
      %v3954 = vunpack.c.l.b16 %v3839
      %v3955 = vunpack.c.h.b16 %v3839
      %v3956 = vunpack.c.l.b16 %v3840
      %v3957 = vunpack.c.h.b16 %v3840
      %v3958 = vunpack.c.l.b16 %v3841
      %v3959 = vunpack.c.h.b16 %v3841
      %v3960 = vunpack.c.l.b16 %v3842
      %v3961 = vunpack.c.h.b16 %v3842
      %v3962 = vunpack.c.l.b16 %v3843
      %v3963 = vunpack.c.h.b16 %v3843
      %v3964 = vunpack.c.l.b16 %v3844
      %v3965 = vunpack.c.h.b16 %v3844
      %v3966 = vunpack.c.l.b16 %v3845
      %v3967 = vunpack.c.h.b16 %v3845
      %v3968 = vunpack.c.l.b16 %v3846
      %v3969 = vunpack.c.h.b16 %v3846
      %v3970 = vunpack.c.l.b16 %v3847
      %v3971 = vunpack.c.h.b16 %v3847
      %v3972 = vunpack.c.l.b16 %v3848
      %v3973 = vunpack.c.h.b16 %v3848
      %v3974 = vunpack.c.l.b16 %v3849
      %v3975 = vunpack.c.h.b16 %v3849
      %v3976 = vunpack.c.l.b16 %v3850
      %v3977 = vunpack.c.h.b16 %v3850
      %v3978 = vunpack.c.l.b16 %v3851
      %v3979 = vunpack.c.h.b16 %v3851
      %v3980 = vpack.c.b16 %v3950, %v3948
      %v3981 = vpack.c.b16 %v3951, %v3949
      %v3982 = vpack.c.b16 %v3954, %v3952
      %v3983 = vpack.c.b16 %v3955, %v3953
      %v3984 = vpack.c.b16 %v3958, %v3956
      %v3985 = vpack.c.b16 %v3959, %v3957
      %v3986 = vpack.c.b16 %v3962, %v3960
      %v3987 = vpack.c.b16 %v3963, %v3961
      %v3988 = vpack.c.b16 %v3966, %v3964
      %v3989 = vpack.c.b16 %v3967, %v3965
      %v3990 = vpack.c.b16 %v3970, %v3968
      %v3991 = vpack.c.b16 %v3971, %v3969
      %v3992 = vpack.c.b16 %v3974, %v3972
      %v3993 = vpack.c.b16 %v3975, %v3973
      %v3994 = vpack.c.b16 %v3978, %v3976
      %v3995 = vpack.c.b16 %v3979, %v3977
      %v4012 = vld [vmem:[#allocation6] sm:$0x6]
      %v4013 = vld [vmem:[#allocation6 + $0x4] sm:$0x6]
      %v4014 = vld [vmem:[#allocation6 + $0x8] sm:$0x6]
      %v4016 = vunpack.c.l.b16 %v4012
      %v4017 = vpack.c.b16 %v4016, %v4016
      %v4018 = vrot.slane %v4017, 1
      %v4021 = vunpack.c.l.b16 %v4013
      %v4022 = vpack.c.b16 %v4021, %v4021
      %v4024 = vshrl.u32 %v4022, 16
      %v4026 = vrot.slane %v4024, 7
      %v4027 = vshll.u32 %v4022, 16
      %v4029 = vor.u32 %v4026, %v4027
      %v4032 = vunpack.c.l.b16 %v4014
      %v4033 = vpack.c.b16 %v4032, %v4032
      %v4034 = vrot.slane %v4033, 6
      %v4035 = vsel %vm3787, %v4018, %v4029
      %v4038 = vsel %vm3789, %v4035, %v4034
      %v4041 = vshrl.u32 %v4017, 16
      %v4043 = vrot.slane %v4041, 1
      %v4044 = vshll.u32 %v4017, 16
      %v4046 = vrot.slane %v4044, 2
      %v4047 = vor.u32 %v4043, %v4046
      %v4050 = vshrl.u32 %v4033, 16
      %v4052 = vrot.slane %v4050, 6
      %v4053 = vshll.u32 %v4033, 16
      %v4055 = vrot.slane %v4053, 7
      %v4056 = vor.u32 %v4052, %v4055
      %v4057 = vsel %vm3787, %v4047, %v4013
      %v4060 = vsel %vm3789, %v4057, %v4056
      %s4062 = scalar_lea.vmem %s4, 256
      %v4063 = vld [vmem:[%s4062] sm:$0xff]
      %v4064 = vld [vmem:[%s4062 + $0x8] sm:$0xff]
      %v4065 = vld [vmem:[%s4062 + $0x10] sm:$0xff]
      %v4066 = vld [vmem:[%s4062 + $0x18] sm:$0xff]
      %v4067 = vld [vmem:[%s4062 + $0x20] sm:$0xff]
      %v4068 = vld [vmem:[%s4062 + $0x28] sm:$0xff]
      %v4069 = vld [vmem:[%s4062 + $0x30] sm:$0xff]
      %v4070 = vld [vmem:[%s4062 + $0x38] sm:$0xff]
      %v4071 = vld [vmem:[%s4062 + $0x40] sm:$0xff]
      %v4072 = vld [vmem:[%s4062 + $0x48] sm:$0xff]
      %v4073 = vld [vmem:[%s4062 + $0x50] sm:$0xff]
      %v4074 = vld [vmem:[%s4062 + $0x58] sm:$0xff]
      %v4075 = vld [vmem:[%s4062 + $0x60] sm:$0xff]
      %v4076 = vld [vmem:[%s4062 + $0x68] sm:$0xff]
      %v4077 = vld [vmem:[%s4062 + $0x70] sm:$0xff]
      %v4078 = vld [vmem:[%s4062 + $0x78] sm:$0xff]
      %v4079 = vld [vmem:[%s4062 + $0x80] sm:$0xff]
      %v4080 = vld [vmem:[%s4062 + $0x88] sm:$0xff]
      %v4081 = vld [vmem:[%s4062 + $0x90] sm:$0xff]
      %v4082 = vld [vmem:[%s4062 + $0x98] sm:$0xff]
      %v4083 = vld [vmem:[%s4062 + $0xa0] sm:$0xff]
      %v4084 = vld [vmem:[%s4062 + $0xa8] sm:$0xff]
      %v4085 = vld [vmem:[%s4062 + $0xb0] sm:$0xff]
      %v4086 = vld [vmem:[%s4062 + $0xb8] sm:$0xff]
      %v4087 = vld [vmem:[%s4062 + $0xc0] sm:$0xff]
      %v4088 = vld [vmem:[%s4062 + $0xc8] sm:$0xff]
      %v4089 = vld [vmem:[%s4062 + $0xd0] sm:$0xff]
      %v4090 = vld [vmem:[%s4062 + $0xd8] sm:$0xff]
      %v4091 = vld [vmem:[%s4062 + $0xe0] sm:$0xff]
      %v4092 = vld [vmem:[%s4062 + $0xe8] sm:$0xff]
      %v4093 = vld [vmem:[%s4062 + $0xf0] sm:$0xff]
      %v4094 = vld [vmem:[%s4062 + $0xf8] sm:$0xff]
      %v4111 = vunpack.c.l.b16 %v4063
      %v4112 = vunpack.c.h.b16 %v4063
      %v4113 = vunpack.c.l.b16 %v4064
      %v4114 = vunpack.c.h.b16 %v4064
      %v4115 = vunpack.c.l.b16 %v4065
      %v4116 = vunpack.c.h.b16 %v4065
      %v4117 = vunpack.c.l.b16 %v4066
      %v4118 = vunpack.c.h.b16 %v4066
      %v4119 = vunpack.c.l.b16 %v4067
      %v4120 = vunpack.c.h.b16 %v4067
      %v4121 = vunpack.c.l.b16 %v4068
      %v4122 = vunpack.c.h.b16 %v4068
      %v4123 = vunpack.c.l.b16 %v4069
      %v4124 = vunpack.c.h.b16 %v4069
      %v4125 = vunpack.c.l.b16 %v4070
      %v4126 = vunpack.c.h.b16 %v4070
      %v4127 = vunpack.c.l.b16 %v4071
      %v4128 = vunpack.c.h.b16 %v4071
      %v4129 = vunpack.c.l.b16 %v4072
      %v4130 = vunpack.c.h.b16 %v4072
      %v4131 = vunpack.c.l.b16 %v4073
      %v4132 = vunpack.c.h.b16 %v4073
      %v4133 = vunpack.c.l.b16 %v4074
      %v4134 = vunpack.c.h.b16 %v4074
      %v4135 = vunpack.c.l.b16 %v4075
      %v4136 = vunpack.c.h.b16 %v4075
      %v4137 = vunpack.c.l.b16 %v4076
      %v4138 = vunpack.c.h.b16 %v4076
      %v4139 = vunpack.c.l.b16 %v4077
      %v4140 = vunpack.c.h.b16 %v4077
      %v4141 = vunpack.c.l.b16 %v4078
      %v4142 = vunpack.c.h.b16 %v4078
      %v4143 = vpack.c.b16 %v4113, %v4111
      %v4144 = vpack.c.b16 %v4114, %v4112
      %v4145 = vpack.c.b16 %v4117, %v4115
      %v4146 = vpack.c.b16 %v4118, %v4116
      %v4147 = vpack.c.b16 %v4121, %v4119
      %v4148 = vpack.c.b16 %v4122, %v4120
      %v4149 = vpack.c.b16 %v4125, %v4123
      %v4150 = vpack.c.b16 %v4126, %v4124
      %v4151 = vpack.c.b16 %v4129, %v4127
      %v4152 = vpack.c.b16 %v4130, %v4128
      %v4153 = vpack.c.b16 %v4133, %v4131
      %v4154 = vpack.c.b16 %v4134, %v4132
      %v4155 = vpack.c.b16 %v4137, %v4135
      %v4156 = vpack.c.b16 %v4138, %v4136
      %v4157 = vpack.c.b16 %v4141, %v4139
      %v4158 = vpack.c.b16 %v4142, %v4140
      %v4191 = vunpack.c.l.b16 %v4079
      %v4192 = vunpack.c.h.b16 %v4079
      %v4193 = vunpack.c.l.b16 %v4080
      %v4194 = vunpack.c.h.b16 %v4080
      %v4195 = vunpack.c.l.b16 %v4081
      %v4196 = vunpack.c.h.b16 %v4081
      %v4197 = vunpack.c.l.b16 %v4082
      %v4198 = vunpack.c.h.b16 %v4082
      %v4199 = vunpack.c.l.b16 %v4083
      %v4200 = vunpack.c.h.b16 %v4083
      %v4201 = vunpack.c.l.b16 %v4084
      %v4202 = vunpack.c.h.b16 %v4084
      %v4203 = vunpack.c.l.b16 %v4085
      %v4204 = vunpack.c.h.b16 %v4085
      %v4205 = vunpack.c.l.b16 %v4086
      %v4206 = vunpack.c.h.b16 %v4086
      %v4207 = vunpack.c.l.b16 %v4087
      %v4208 = vunpack.c.h.b16 %v4087
      %v4209 = vunpack.c.l.b16 %v4088
      %v4210 = vunpack.c.h.b16 %v4088
      %v4211 = vunpack.c.l.b16 %v4089
      %v4212 = vunpack.c.h.b16 %v4089
      %v4213 = vunpack.c.l.b16 %v4090
      %v4214 = vunpack.c.h.b16 %v4090
      %v4215 = vunpack.c.l.b16 %v4091
      %v4216 = vunpack.c.h.b16 %v4091
      %v4217 = vunpack.c.l.b16 %v4092
      %v4218 = vunpack.c.h.b16 %v4092
      %v4219 = vunpack.c.l.b16 %v4093
      %v4220 = vunpack.c.h.b16 %v4093
      %v4221 = vunpack.c.l.b16 %v4094
      %v4222 = vunpack.c.h.b16 %v4094
      %v4223 = vpack.c.b16 %v4193, %v4191
      %v4224 = vpack.c.b16 %v4194, %v4192
      %v4225 = vpack.c.b16 %v4197, %v4195
      %v4226 = vpack.c.b16 %v4198, %v4196
      %v4227 = vpack.c.b16 %v4201, %v4199
      %v4228 = vpack.c.b16 %v4202, %v4200
      %v4229 = vpack.c.b16 %v4205, %v4203
      %v4230 = vpack.c.b16 %v4206, %v4204
      %v4231 = vpack.c.b16 %v4209, %v4207
      %v4232 = vpack.c.b16 %v4210, %v4208
      %v4233 = vpack.c.b16 %v4213, %v4211
      %v4234 = vpack.c.b16 %v4214, %v4212
      %v4235 = vpack.c.b16 %v4217, %v4215
      %v4236 = vpack.c.b16 %v4218, %v4216
      %v4237 = vpack.c.b16 %v4221, %v4219
      %v4238 = vpack.c.b16 %v4222, %v4220
      %4255 = vmatprep.subr.bf16.mxu0 %v4144
      %4256 = vmatpush1.bf16.msra.mxu0 %v4143
      %4257 = vmatprep.subr.bf16.mxu0 %v4146
      %4258 = vmatpush1.bf16.msra.mxu0 %v4145
      %4259 = vmatprep.subr.bf16.mxu0 %v4148
      %4260 = vmatpush1.bf16.msra.mxu0 %v4147
      %4261 = vmatprep.subr.bf16.mxu0 %v4150
      %4262 = vmatpush1.bf16.msra.mxu0 %v4149
      %4263 = vmatprep.subr.bf16.mxu0 %v4152
      %4264 = vmatpush1.bf16.msra.mxu0 %v4151
      %4265 = vmatprep.subr.bf16.mxu0 %v4154
      %4266 = vmatpush1.bf16.msra.mxu0 %v4153
      %4267 = vmatprep.subr.bf16.mxu0 %v4156
      %4268 = vmatpush1.bf16.msra.mxu0 %v4155
      %4269 = vmatprep.subr.bf16.mxu0 %v4158
      %4270 = vmatpush1.bf16.msra.mxu0 %v4157
      %4271 = vmatprep.subr.bf16.mxu0 %v4224
      %4272 = vmatpush1.bf16.msra.mxu0 %v4223
      %4273 = vmatprep.subr.bf16.mxu0 %v4226
      %4274 = vmatpush1.bf16.msra.mxu0 %v4225
      %4275 = vmatprep.subr.bf16.mxu0 %v4228
      %4276 = vmatpush1.bf16.msra.mxu0 %v4227
      %4277 = vmatprep.subr.bf16.mxu0 %v4230
      %4278 = vmatpush1.bf16.msra.mxu0 %v4229
      %4279 = vmatprep.subr.bf16.mxu0 %v4232
      %4280 = vmatpush1.bf16.msra.mxu0 %v4231
      %4281 = vmatprep.subr.bf16.mxu0 %v4234
      %4282 = vmatpush1.bf16.msra.mxu0 %v4233
      %4283 = vmatprep.subr.bf16.mxu0 %v4236
      %4284 = vmatpush1.bf16.msra.mxu0 %v4235
      %4285 = vmatprep.subr.bf16.mxu0 %v4238
      %4286 = vmatpush1.bf16.msra.mxu0 %v4237
      %4287 = vmatprep.mubr.bf16.mxu0 %v4060
      %4288 = vmatmul.mubr.bf16.gmra.mrb[0].mxu0 %v4038
      %v4289 = vpop.f32.mrb[0].mxu0
      %v4290 = vadd.f32 0.0, %v4289
      %v4291 = vpop.f32.mrb[0].mxu0
      %v4292 = vadd.f32 0.0, %v4291
      %v4293 = vpop.f32.mrb[0].mxu0
      %v4294 = vadd.f32 0.0, %v4293
      %v4295 = vpop.f32.mrb[0].mxu0
      %v4296 = vadd.f32 0.0, %v4295
      %4297 = vdwg.mxu0
      %4298 = vmatprep.subr.bf16.mxu0 %v3901
      %4299 = vmatpush1.bf16.msra.mxu0 %v3900
      %4300 = vmatprep.subr.bf16.mxu0 %v3903
      %4301 = vmatpush1.bf16.msra.mxu0 %v3902
      %4302 = vmatprep.subr.bf16.mxu0 %v3905
      %4303 = vmatpush1.bf16.msra.mxu0 %v3904
      %4304 = vmatprep.subr.bf16.mxu0 %v3907
      %4305 = vmatpush1.bf16.msra.mxu0 %v3906
      %4306 = vmatprep.subr.bf16.mxu0 %v3909
      %4307 = vmatpush1.bf16.msra.mxu0 %v3908
      %4308 = vmatprep.subr.bf16.mxu0 %v3911
      %4309 = vmatpush1.bf16.msra.mxu0 %v3910
      %4310 = vmatprep.subr.bf16.mxu0 %v3913
      %4311 = vmatpush1.bf16.msra.mxu0 %v3912
      %4312 = vmatprep.subr.bf16.mxu0 %v3915
      %4313 = vmatpush1.bf16.msra.mxu0 %v3914
      %4314 = vmatprep.subr.bf16.mxu0 %v3981
      %4315 = vmatpush1.bf16.msra.mxu0 %v3980
      %4316 = vmatprep.subr.bf16.mxu0 %v3983
      %4317 = vmatpush1.bf16.msra.mxu0 %v3982
      %4318 = vmatprep.subr.bf16.mxu0 %v3985
      %4319 = vmatpush1.bf16.msra.mxu0 %v3984
      %4320 = vmatprep.subr.bf16.mxu0 %v3987
      %4321 = vmatpush1.bf16.msra.mxu0 %v3986
      %4322 = vmatprep.subr.bf16.mxu0 %v3989
      %4323 = vmatpush1.bf16.msra.mxu0 %v3988
      %4324 = vmatprep.subr.bf16.mxu0 %v3991
      %4325 = vmatpush1.bf16.msra.mxu0 %v3990
      %4326 = vmatprep.subr.bf16.mxu0 %v3993
      %4327 = vmatpush1.bf16.msra.mxu0 %v3992
      %4328 = vmatprep.subr.bf16.mxu0 %v3995
      %4329 = vmatpush1.bf16.msra.mxu0 %v3994
      %4330 = vmatprep.mubr.bf16.mxu0 %v3818
      %4331 = vmatmul.mubr.bf16.gmra.mrb[0].mxu0 %v3792
      %v4332 = vpop.f32.mrb[0].mxu0
      %v4333 = vadd.f32 %v4290, %v4332
      %v4334 = vpop.f32.mrb[0].mxu0
      %v4335 = vadd.f32 %v4292, %v4334
      %v4336 = vpop.f32.mrb[0].mxu0
      %v4337 = vadd.f32 %v4294, %v4336
      %v4338 = vpop.f32.mrb[0].mxu0
      %v4339 = vadd.f32 %v4296, %v4338
      %4340 = vdwg.mxu0
      %v4341 = vld [vmem:[%s3727] sm:$0x3]
      %v4342 = vld [vmem:[%s3727 + $0x4] sm:$0x3]
      %v4343 = vld [vmem:[%s3727 + $0x8] sm:$0x3]
      %v4345 = vunpack.c.l.b16 %v4342
      %v4346 = vpack.c.b16 %v4345, %v4345
      %v4348 = vshrl.u32 %v4346, 16
      %v4350 = vrot.slane %v4348, 6
      %v4351 = vshll.u32 %v4346, 16
      %v4353 = vrot.slane %v4351, 7
      %v4354 = vor.u32 %v4350, %v4353
      %v4357 = vunpack.c.l.b16 %v4343
      %v4358 = vpack.c.b16 %v4357, %v4357
      %v4359 = vrot.slane %v4358, 5
      %v4360 = vsel %vm3787, %v4341, %v4354
      %v4363 = vsel %vm3789, %v4360, %v4359
      %v4366 = vunpack.c.l.b16 %v4341
      %v4367 = vpack.c.b16 %v4366, %v4366
      %v4369 = vshrl.u32 %v4367, 16
      %v4371 = vshll.u32 %v4367, 16
      %v4373 = vrot.slane %v4371, 1
      %v4374 = vor.u32 %v4369, %v4373
      %v4376 = vrot.slane %v4346, 7
      %v4379 = vshrl.u32 %v4358, 16
      %v4381 = vrot.slane %v4379, 5
      %v4382 = vshll.u32 %v4358, 16
      %v4384 = vrot.slane %v4382, 6
      %v4385 = vor.u32 %v4381, %v4384
      %v4386 = vsel %vm3787, %v4374, %v4376
      %v4389 = vsel %vm3789, %v4386, %v4385
      %s4391 = scalar_lea.vmem %s4, 512
      %v4392 = vld [vmem:[%s4391] sm:$0xff]
      %v4393 = vld [vmem:[%s4391 + $0x8] sm:$0xff]
      %v4394 = vld [vmem:[%s4391 + $0x10] sm:$0xff]
      %v4395 = vld [vmem:[%s4391 + $0x18] sm:$0xff]
      %v4396 = vld [vmem:[%s4391 + $0x20] sm:$0xff]
      %v4397 = vld [vmem:[%s4391 + $0x28] sm:$0xff]
      %v4398 = vld [vmem:[%s4391 + $0x30] sm:$0xff]
      %v4399 = vld [vmem:[%s4391 + $0x38] sm:$0xff]
      %v4400 = vld [vmem:[%s4391 + $0x40] sm:$0xff]
      %v4401 = vld [vmem:[%s4391 + $0x48] sm:$0xff]
      %v4402 = vld [vmem:[%s4391 + $0x50] sm:$0xff]
      %v4403 = vld [vmem:[%s4391 + $0x58] sm:$0xff]
      %v4404 = vld [vmem:[%s4391 + $0x60] sm:$0xff]
      %v4405 = vld [vmem:[%s4391 + $0x68] sm:$0xff]
      %v4406 = vld [vmem:[%s4391 + $0x70] sm:$0xff]
      %v4407 = vld [vmem:[%s4391 + $0x78] sm:$0xff]
      %v4408 = vld [vmem:[%s4391 + $0x80] sm:$0xff]
      %v4409 = vld [vmem:[%s4391 + $0x88] sm:$0xff]
      %v4410 = vld [vmem:[%s4391 + $0x90] sm:$0xff]
      %v4411 = vld [vmem:[%s4391 + $0x98] sm:$0xff]
      %v4412 = vld [vmem:[%s4391 + $0xa0] sm:$0xff]
      %v4413 = vld [vmem:[%s4391 + $0xa8] sm:$0xff]
      %v4414 = vld [vmem:[%s4391 + $0xb0] sm:$0xff]
      %v4415 = vld [vmem:[%s4391 + $0xb8] sm:$0xff]
      %v4416 = vld [vmem:[%s4391 + $0xc0] sm:$0xff]
      %v4417 = vld [vmem:[%s4391 + $0xc8] sm:$0xff]
      %v4418 = vld [vmem:[%s4391 + $0xd0] sm:$0xff]
      %v4419 = vld [vmem:[%s4391 + $0xd8] sm:$0xff]
      %v4420 = vld [vmem:[%s4391 + $0xe0] sm:$0xff]
      %v4421 = vld [vmem:[%s4391 + $0xe8] sm:$0xff]
      %v4422 = vld [vmem:[%s4391 + $0xf0] sm:$0xff]
      %v4423 = vld [vmem:[%s4391 + $0xf8] sm:$0xff]
      %v4440 = vunpack.c.l.b16 %v4392
      %v4441 = vunpack.c.h.b16 %v4392
      %v4442 = vunpack.c.l.b16 %v4393
      %v4443 = vunpack.c.h.b16 %v4393
      %v4444 = vunpack.c.l.b16 %v4394
      %v4445 = vunpack.c.h.b16 %v4394
      %v4446 = vunpack.c.l.b16 %v4395
      %v4447 = vunpack.c.h.b16 %v4395
      %v4448 = vunpack.c.l.b16 %v4396
      %v4449 = vunpack.c.h.b16 %v4396
      %v4450 = vunpack.c.l.b16 %v4397
      %v4451 = vunpack.c.h.b16 %v4397
      %v4452 = vunpack.c.l.b16 %v4398
      %v4453 = vunpack.c.h.b16 %v4398
      %v4454 = vunpack.c.l.b16 %v4399
      %v4455 = vunpack.c.h.b16 %v4399
      %v4456 = vunpack.c.l.b16 %v4400
      %v4457 = vunpack.c.h.b16 %v4400
      %v4458 = vunpack.c.l.b16 %v4401
      %v4459 = vunpack.c.h.b16 %v4401
      %v4460 = vunpack.c.l.b16 %v4402
      %v4461 = vunpack.c.h.b16 %v4402
      %v4462 = vunpack.c.l.b16 %v4403
      %v4463 = vunpack.c.h.b16 %v4403
      %v4464 = vunpack.c.l.b16 %v4404
      %v4465 = vunpack.c.h.b16 %v4404
      %v4466 = vunpack.c.l.b16 %v4405
      %v4467 = vunpack.c.h.b16 %v4405
      %v4468 = vunpack.c.l.b16 %v4406
      %v4469 = vunpack.c.h.b16 %v4406
      %v4470 = vunpack.c.l.b16 %v4407
      %v4471 = vunpack.c.h.b16 %v4407
      %v4472 = vpack.c.b16 %v4442, %v4440
      %v4473 = vpack.c.b16 %v4443, %v4441
      %v4474 = vpack.c.b16 %v4446, %v4444
      %v4475 = vpack.c.b16 %v4447, %v4445
      %v4476 = vpack.c.b16 %v4450, %v4448
      %v4477 = vpack.c.b16 %v4451, %v4449
      %v4478 = vpack.c.b16 %v4454, %v4452
      %v4479 = vpack.c.b16 %v4455, %v4453
      %v4480 = vpack.c.b16 %v4458, %v4456
      %v4481 = vpack.c.b16 %v4459, %v4457
      %v4482 = vpack.c.b16 %v4462, %v4460
      %v4483 = vpack.c.b16 %v4463, %v4461
      %v4484 = vpack.c.b16 %v4466, %v4464
      %v4485 = vpack.c.b16 %v4467, %v4465
      %v4486 = vpack.c.b16 %v4470, %v4468
      %v4487 = vpack.c.b16 %v4471, %v4469
      %v4520 = vunpack.c.l.b16 %v4408
      %v4521 = vunpack.c.h.b16 %v4408
      %v4522 = vunpack.c.l.b16 %v4409
      %v4523 = vunpack.c.h.b16 %v4409
      %v4524 = vunpack.c.l.b16 %v4410
      %v4525 = vunpack.c.h.b16 %v4410
      %v4526 = vunpack.c.l.b16 %v4411
      %v4527 = vunpack.c.h.b16 %v4411
      %v4528 = vunpack.c.l.b16 %v4412
      %v4529 = vunpack.c.h.b16 %v4412
      %v4530 = vunpack.c.l.b16 %v4413
      %v4531 = vunpack.c.h.b16 %v4413
      %v4532 = vunpack.c.l.b16 %v4414
      %v4533 = vunpack.c.h.b16 %v4414
      %v4534 = vunpack.c.l.b16 %v4415
      %v4535 = vunpack.c.h.b16 %v4415
      %v4536 = vunpack.c.l.b16 %v4416
      %v4537 = vunpack.c.h.b16 %v4416
      %v4538 = vunpack.c.l.b16 %v4417
      %v4539 = vunpack.c.h.b16 %v4417
      %v4540 = vunpack.c.l.b16 %v4418
      %v4541 = vunpack.c.h.b16 %v4418
      %v4542 = vunpack.c.l.b16 %v4419
      %v4543 = vunpack.c.h.b16 %v4419
      %v4544 = vunpack.c.l.b16 %v4420
      %v4545 = vunpack.c.h.b16 %v4420
      %v4546 = vunpack.c.l.b16 %v4421
      %v4547 = vunpack.c.h.b16 %v4421
      %v4548 = vunpack.c.l.b16 %v4422
      %v4549 = vunpack.c.h.b16 %v4422
      %v4550 = vunpack.c.l.b16 %v4423
      %v4551 = vunpack.c.h.b16 %v4423
      %v4552 = vpack.c.b16 %v4522, %v4520
      %v4553 = vpack.c.b16 %v4523, %v4521
      %v4554 = vpack.c.b16 %v4526, %v4524
      %v4555 = vpack.c.b16 %v4527, %v4525
      %v4556 = vpack.c.b16 %v4530, %v4528
      %v4557 = vpack.c.b16 %v4531, %v4529
      %v4558 = vpack.c.b16 %v4534, %v4532
      %v4559 = vpack.c.b16 %v4535, %v4533
      %v4560 = vpack.c.b16 %v4538, %v4536
      %v4561 = vpack.c.b16 %v4539, %v4537
      %v4562 = vpack.c.b16 %v4542, %v4540
      %v4563 = vpack.c.b16 %v4543, %v4541
      %v4564 = vpack.c.b16 %v4546, %v4544
      %v4565 = vpack.c.b16 %v4547, %v4545
      %v4566 = vpack.c.b16 %v4550, %v4548
      %v4567 = vpack.c.b16 %v4551, %v4549
      %4584 = vmatprep.subr.bf16.mxu0 %v4473
      %4585 = vmatpush1.bf16.msra.mxu0 %v4472
      %4586 = vmatprep.subr.bf16.mxu0 %v4475
      %4587 = vmatpush1.bf16.msra.mxu0 %v4474
      %4588 = vmatprep.subr.bf16.mxu0 %v4477
      %4589 = vmatpush1.bf16.msra.mxu0 %v4476
      %4590 = vmatprep.subr.bf16.mxu0 %v4479
      %4591 = vmatpush1.bf16.msra.mxu0 %v4478
      %4592 = vmatprep.subr.bf16.mxu0 %v4481
      %4593 = vmatpush1.bf16.msra.mxu0 %v4480
      %4594 = vmatprep.subr.bf16.mxu0 %v4483
      %4595 = vmatpush1.bf16.msra.mxu0 %v4482
      %4596 = vmatprep.subr.bf16.mxu0 %v4485
      %4597 = vmatpush1.bf16.msra.mxu0 %v4484
      %4598 = vmatprep.subr.bf16.mxu0 %v4487
      %4599 = vmatpush1.bf16.msra.mxu0 %v4486
      %4600 = vmatprep.subr.bf16.mxu0 %v4553
      %4601 = vmatpush1.bf16.msra.mxu0 %v4552
      %4602 = vmatprep.subr.bf16.mxu0 %v4555
      %4603 = vmatpush1.bf16.msra.mxu0 %v4554
      %4604 = vmatprep.subr.bf16.mxu0 %v4557
      %4605 = vmatpush1.bf16.msra.mxu0 %v4556
      %4606 = vmatprep.subr.bf16.mxu0 %v4559
      %4607 = vmatpush1.bf16.msra.mxu0 %v4558
      %4608 = vmatprep.subr.bf16.mxu0 %v4561
      %4609 = vmatpush1.bf16.msra.mxu0 %v4560
      %4610 = vmatprep.subr.bf16.mxu0 %v4563
      %4611 = vmatpush1.bf16.msra.mxu0 %v4562
      %4612 = vmatprep.subr.bf16.mxu0 %v4565
      %4613 = vmatpush1.bf16.msra.mxu0 %v4564
      %4614 = vmatprep.subr.bf16.mxu0 %v4567
      %4615 = vmatpush1.bf16.msra.mxu0 %v4566
      %4616 = vmatprep.mubr.bf16.mxu0 %v4389
      %4617 = vmatmul.mubr.bf16.gmra.mrb[0].mxu0 %v4363
      %v4618 = vpop.f32.mrb[0].mxu0
      %v4619 = vadd.f32 0.0, %v4618
      %v4620 = vpop.f32.mrb[0].mxu0
      %v4621 = vadd.f32 0.0, %v4620
      %v4622 = vpop.f32.mrb[0].mxu0
      %v4623 = vadd.f32 0.0, %v4622
      %v4624 = vpop.f32.mrb[0].mxu0
      %v4625 = vadd.f32 0.0, %v4624
      %4626 = vdwg.mxu0
      %v4627 = vadd.f32 %v4333, %v4619
      %v4628 = vadd.f32 %v4335, %v4621
      %v4629 = vadd.f32 %v4337, %v4623
      %v4630 = vadd.f32 %v4339, %v4625
      %v4631 = vld [vmem:[%s3727] sm:$0x6]
      %v4632 = vld [vmem:[%s3727 + $0x4] sm:$0x6]
      %v4633 = vld [vmem:[%s3727 + $0x8] sm:$0x6]
      %v4635 = vunpack.c.l.b16 %v4631
      %v4636 = vpack.c.b16 %v4635, %v4635
      %v4637 = vrot.slane %v4636, 1
      %v4640 = vunpack.c.l.b16 %v4632
      %v4641 = vpack.c.b16 %v4640, %v4640
      %v4643 = vshrl.u32 %v4641, 16
      %v4645 = vrot.slane %v4643, 7
      %v4646 = vshll.u32 %v4641, 16
      %v4648 = vor.u32 %v4645, %v4646
      %v4651 = vunpack.c.l.b16 %v4633
      %v4652 = vpack.c.b16 %v4651, %v4651
      %v4653 = vrot.slane %v4652, 6
      %v4654 = vsel %vm3787, %v4637, %v4648
      %v4657 = vsel %vm3789, %v4654, %v4653
      %v4660 = vshrl.u32 %v4636, 16
      %v4662 = vrot.slane %v4660, 1
      %v4663 = vshll.u32 %v4636, 16
      %v4665 = vrot.slane %v4663, 2
      %v4666 = vor.u32 %v4662, %v4665
      %v4669 = vshrl.u32 %v4652, 16
      %v4671 = vrot.slane %v4669, 6
      %v4672 = vshll.u32 %v4652, 16
      %v4674 = vrot.slane %v4672, 7
      %v4675 = vor.u32 %v4671, %v4674
      %v4676 = vsel %vm3787, %v4666, %v4632
      %v4679 = vsel %vm3789, %v4676, %v4675
      %s4681 = scalar_lea.vmem %s4, 768
      %v4682 = vld [vmem:[%s4681] sm:$0xff]
      %v4683 = vld [vmem:[%s4681 + $0x8] sm:$0xff]
      %v4684 = vld [vmem:[%s4681 + $0x10] sm:$0xff]
      %v4685 = vld [vmem:[%s4681 + $0x18] sm:$0xff]
      %v4686 = vld [vmem:[%s4681 + $0x20] sm:$0xff]
      %v4687 = vld [vmem:[%s4681 + $0x28] sm:$0xff]
      %v4688 = vld [vmem:[%s4681 + $0x30] sm:$0xff]
      %v4689 = vld [vmem:[%s4681 + $0x38] sm:$0xff]
      %v4690 = vld [vmem:[%s4681 + $0x40] sm:$0xff]
      %v4691 = vld [vmem:[%s4681 + $0x48] sm:$0xff]
      %v4692 = vld [vmem:[%s4681 + $0x50] sm:$0xff]
      %v4693 = vld [vmem:[%s4681 + $0x58] sm:$0xff]
      %v4694 = vld [vmem:[%s4681 + $0x60] sm:$0xff]
      %v4695 = vld [vmem:[%s4681 + $0x68] sm:$0xff]
      %v4696 = vld [vmem:[%s4681 + $0x70] sm:$0xff]
      %v4697 = vld [vmem:[%s4681 + $0x78] sm:$0xff]
      %v4698 = vld [vmem:[%s4681 + $0x80] sm:$0xff]
      %v4699 = vld [vmem:[%s4681 + $0x88] sm:$0xff]
      %v4700 = vld [vmem:[%s4681 + $0x90] sm:$0xff]
      %v4701 = vld [vmem:[%s4681 + $0x98] sm:$0xff]
      %v4702 = vld [vmem:[%s4681 + $0xa0] sm:$0xff]
      %v4703 = vld [vmem:[%s4681 + $0xa8] sm:$0xff]
      %v4704 = vld [vmem:[%s4681 + $0xb0] sm:$0xff]
      %v4705 = vld [vmem:[%s4681 + $0xb8] sm:$0xff]
      %v4706 = vld [vmem:[%s4681 + $0xc0] sm:$0xff]
      %v4707 = vld [vmem:[%s4681 + $0xc8] sm:$0xff]
      %v4708 = vld [vmem:[%s4681 + $0xd0] sm:$0xff]
      %v4709 = vld [vmem:[%s4681 + $0xd8] sm:$0xff]
      %v4710 = vld [vmem:[%s4681 + $0xe0] sm:$0xff]
      %v4711 = vld [vmem:[%s4681 + $0xe8] sm:$0xff]
      %v4712 = vld [vmem:[%s4681 + $0xf0] sm:$0xff]
      %v4713 = vld [vmem:[%s4681 + $0xf8] sm:$0xff]
      %v4730 = vunpack.c.l.b16 %v4682
      %v4731 = vunpack.c.h.b16 %v4682
      %v4732 = vunpack.c.l.b16 %v4683
      %v4733 = vunpack.c.h.b16 %v4683
      %v4734 = vunpack.c.l.b16 %v4684
      %v4735 = vunpack.c.h.b16 %v4684
      %v4736 = vunpack.c.l.b16 %v4685
      %v4737 = vunpack.c.h.b16 %v4685
      %v4738 = vunpack.c.l.b16 %v4686
      %v4739 = vunpack.c.h.b16 %v4686
      %v4740 = vunpack.c.l.b16 %v4687
      %v4741 = vunpack.c.h.b16 %v4687
      %v4742 = vunpack.c.l.b16 %v4688
      %v4743 = vunpack.c.h.b16 %v4688
      %v4744 = vunpack.c.l.b16 %v4689
      %v4745 = vunpack.c.h.b16 %v4689
      %v4746 = vunpack.c.l.b16 %v4690
      %v4747 = vunpack.c.h.b16 %v4690
      %v4748 = vunpack.c.l.b16 %v4691
      %v4749 = vunpack.c.h.b16 %v4691
      %v4750 = vunpack.c.l.b16 %v4692
      %v4751 = vunpack.c.h.b16 %v4692
      %v4752 = vunpack.c.l.b16 %v4693
      %v4753 = vunpack.c.h.b16 %v4693
      %v4754 = vunpack.c.l.b16 %v4694
      %v4755 = vunpack.c.h.b16 %v4694
      %v4756 = vunpack.c.l.b16 %v4695
      %v4757 = vunpack.c.h.b16 %v4695
      %v4758 = vunpack.c.l.b16 %v4696
      %v4759 = vunpack.c.h.b16 %v4696
      %v4760 = vunpack.c.l.b16 %v4697
      %v4761 = vunpack.c.h.b16 %v4697
      %v4762 = vpack.c.b16 %v4732, %v4730
      %v4763 = vpack.c.b16 %v4733, %v4731
      %v4764 = vpack.c.b16 %v4736, %v4734
      %v4765 = vpack.c.b16 %v4737, %v4735
      %v4766 = vpack.c.b16 %v4740, %v4738
      %v4767 = vpack.c.b16 %v4741, %v4739
      %v4768 = vpack.c.b16 %v4744, %v4742
      %v4769 = vpack.c.b16 %v4745, %v4743
      %v4770 = vpack.c.b16 %v4748, %v4746
      %v4771 = vpack.c.b16 %v4749, %v4747
      %v4772 = vpack.c.b16 %v4752, %v4750
      %v4773 = vpack.c.b16 %v4753, %v4751
      %v4774 = vpack.c.b16 %v4756, %v4754
      %v4775 = vpack.c.b16 %v4757, %v4755
      %v4776 = vpack.c.b16 %v4760, %v4758
      %v4777 = vpack.c.b16 %v4761, %v4759
      %v4810 = vunpack.c.l.b16 %v4698
      %v4811 = vunpack.c.h.b16 %v4698
      %v4812 = vunpack.c.l.b16 %v4699
      %v4813 = vunpack.c.h.b16 %v4699
      %v4814 = vunpack.c.l.b16 %v4700
      %v4815 = vunpack.c.h.b16 %v4700
      %v4816 = vunpack.c.l.b16 %v4701
      %v4817 = vunpack.c.h.b16 %v4701
      %v4818 = vunpack.c.l.b16 %v4702
      %v4819 = vunpack.c.h.b16 %v4702
      %v4820 = vunpack.c.l.b16 %v4703
      %v4821 = vunpack.c.h.b16 %v4703
      %v4822 = vunpack.c.l.b16 %v4704
      %v4823 = vunpack.c.h.b16 %v4704
      %v4824 = vunpack.c.l.b16 %v4705
      %v4825 = vunpack.c.h.b16 %v4705
      %v4826 = vunpack.c.l.b16 %v4706
      %v4827 = vunpack.c.h.b16 %v4706
      %v4828 = vunpack.c.l.b16 %v4707
      %v4829 = vunpack.c.h.b16 %v4707
      %v4830 = vunpack.c.l.b16 %v4708
      %v4831 = vunpack.c.h.b16 %v4708
      %v4832 = vunpack.c.l.b16 %v4709
      %v4833 = vunpack.c.h.b16 %v4709
      %v4834 = vunpack.c.l.b16 %v4710
      %v4835 = vunpack.c.h.b16 %v4710
      %v4836 = vunpack.c.l.b16 %v4711
      %v4837 = vunpack.c.h.b16 %v4711
      %v4838 = vunpack.c.l.b16 %v4712
      %v4839 = vunpack.c.h.b16 %v4712
      %v4840 = vunpack.c.l.b16 %v4713
      %v4841 = vunpack.c.h.b16 %v4713
      %v4842 = vpack.c.b16 %v4812, %v4810
      %v4843 = vpack.c.b16 %v4813, %v4811
      %v4844 = vpack.c.b16 %v4816, %v4814
      %v4845 = vpack.c.b16 %v4817, %v4815
      %v4846 = vpack.c.b16 %v4820, %v4818
      %v4847 = vpack.c.b16 %v4821, %v4819
      %v4848 = vpack.c.b16 %v4824, %v4822
      %v4849 = vpack.c.b16 %v4825, %v4823
      %v4850 = vpack.c.b16 %v4828, %v4826
      %v4851 = vpack.c.b16 %v4829, %v4827
      %v4852 = vpack.c.b16 %v4832, %v4830
      %v4853 = vpack.c.b16 %v4833, %v4831
      %v4854 = vpack.c.b16 %v4836, %v4834
      %v4855 = vpack.c.b16 %v4837, %v4835
      %v4856 = vpack.c.b16 %v4840, %v4838
      %v4857 = vpack.c.b16 %v4841, %v4839
      %4874 = vmatprep.subr.bf16.mxu0 %v4763
      %4875 = vmatpush1.bf16.msra.mxu0 %v4762
      %4876 = vmatprep.subr.bf16.mxu0 %v4765
      %4877 = vmatpush1.bf16.msra.mxu0 %v4764
      %4878 = vmatprep.subr.bf16.mxu0 %v4767
      %4879 = vmatpush1.bf16.msra.mxu0 %v4766
      %4880 = vmatprep.subr.bf16.mxu0 %v4769
      %4881 = vmatpush1.bf16.msra.mxu0 %v4768
      %4882 = vmatprep.subr.bf16.mxu0 %v4771
      %4883 = vmatpush1.bf16.msra.mxu0 %v4770
      %4884 = vmatprep.subr.bf16.mxu0 %v4773
      %4885 = vmatpush1.bf16.msra.mxu0 %v4772
      %4886 = vmatprep.subr.bf16.mxu0 %v4775
      %4887 = vmatpush1.bf16.msra.mxu0 %v4774
      %4888 = vmatprep.subr.bf16.mxu0 %v4777
      %4889 = vmatpush1.bf16.msra.mxu0 %v4776
      %4890 = vmatprep.subr.bf16.mxu0 %v4843
      %4891 = vmatpush1.bf16.msra.mxu0 %v4842
      %4892 = vmatprep.subr.bf16.mxu0 %v4845
      %4893 = vmatpush1.bf16.msra.mxu0 %v4844
      %4894 = vmatprep.subr.bf16.mxu0 %v4847
      %4895 = vmatpush1.bf16.msra.mxu0 %v4846
      %4896 = vmatprep.subr.bf16.mxu0 %v4849
      %4897 = vmatpush1.bf16.msra.mxu0 %v4848
      %4898 = vmatprep.subr.bf16.mxu0 %v4851
      %4899 = vmatpush1.bf16.msra.mxu0 %v4850
      %4900 = vmatprep.subr.bf16.mxu0 %v4853
      %4901 = vmatpush1.bf16.msra.mxu0 %v4852
      %4902 = vmatprep.subr.bf16.mxu0 %v4855
      %4903 = vmatpush1.bf16.msra.mxu0 %v4854
      %4904 = vmatprep.subr.bf16.mxu0 %v4857
      %4905 = vmatpush1.bf16.msra.mxu0 %v4856
      %4906 = vmatprep.mubr.bf16.mxu0 %v4679
      %4907 = vmatmul.mubr.bf16.gmra.mrb[0].mxu0 %v4657
      %v4908 = vpop.f32.mrb[0].mxu0
      %v4909 = vadd.f32 0.0, %v4908
      %v4910 = vpop.f32.mrb[0].mxu0
      %v4911 = vadd.f32 0.0, %v4910
      %v4912 = vpop.f32.mrb[0].mxu0
      %v4913 = vadd.f32 0.0, %v4912
      %v4914 = vpop.f32.mrb[0].mxu0
      %v4915 = vadd.f32 0.0, %v4914
      %4916 = vdwg.mxu0
      %v4917 = vadd.f32 %v4627, %v4909
      %v4918 = vadd.f32 %v4628, %v4911
      %v4919 = vadd.f32 %v4629, %v4913
      %v4920 = vadd.f32 %v4630, %v4915
      %v4921 = vld [vmem:[%s3737] sm:$0x3]
      %v4922 = vld [vmem:[%s3737 + $0x4] sm:$0x3]
      %v4923 = vld [vmem:[%s3737 + $0x8] sm:$0x3]
      %v4925 = vunpack.c.l.b16 %v4922
      %v4926 = vpack.c.b16 %v4925, %v4925
      %v4928 = vshrl.u32 %v4926, 16
      %v4930 = vrot.slane %v4928, 6
      %v4931 = vshll.u32 %v4926, 16
      %v4933 = vrot.slane %v4931, 7
      %v4934 = vor.u32 %v4930, %v4933
      %v4937 = vunpack.c.l.b16 %v4923
      %v4938 = vpack.c.b16 %v4937, %v4937
      %v4939 = vrot.slane %v4938, 5
      %v4940 = vsel %vm3787, %v4921, %v4934
      %v4943 = vsel %vm3789, %v4940, %v4939
      %v4946 = vunpack.c.l.b16 %v4921
      %v4947 = vpack.c.b16 %v4946, %v4946
      %v4949 = vshrl.u32 %v4947, 16
      %v4951 = vshll.u32 %v4947, 16
      %v4953 = vrot.slane %v4951, 1
      %v4954 = vor.u32 %v4949, %v4953
      %v4956 = vrot.slane %v4926, 7
      %v4959 = vshrl.u32 %v4938, 16
      %v4961 = vrot.slane %v4959, 5
      %v4962 = vshll.u32 %v4938, 16
      %v4964 = vrot.slane %v4962, 6
      %v4965 = vor.u32 %v4961, %v4964
      %v4966 = vsel %vm3787, %v4954, %v4956
      %v4969 = vsel %vm3789, %v4966, %v4965
      %s4971 = scalar_lea.vmem %s4, 1024
      %v4972 = vld [vmem:[%s4971] sm:$0xff]
      %v4973 = vld [vmem:[%s4971 + $0x8] sm:$0xff]
      %v4974 = vld [vmem:[%s4971 + $0x10] sm:$0xff]
      %v4975 = vld [vmem:[%s4971 + $0x18] sm:$0xff]
      %v4976 = vld [vmem:[%s4971 + $0x20] sm:$0xff]
      %v4977 = vld [vmem:[%s4971 + $0x28] sm:$0xff]
      %v4978 = vld [vmem:[%s4971 + $0x30] sm:$0xff]
      %v4979 = vld [vmem:[%s4971 + $0x38] sm:$0xff]
      %v4980 = vld [vmem:[%s4971 + $0x40] sm:$0xff]
      %v4981 = vld [vmem:[%s4971 + $0x48] sm:$0xff]
      %v4982 = vld [vmem:[%s4971 + $0x50] sm:$0xff]
      %v4983 = vld [vmem:[%s4971 + $0x58] sm:$0xff]
      %v4984 = vld [vmem:[%s4971 + $0x60] sm:$0xff]
      %v4985 = vld [vmem:[%s4971 + $0x68] sm:$0xff]
      %v4986 = vld [vmem:[%s4971 + $0x70] sm:$0xff]
      %v4987 = vld [vmem:[%s4971 + $0x78] sm:$0xff]
      %v4988 = vld [vmem:[%s4971 + $0x80] sm:$0xff]
      %v4989 = vld [vmem:[%s4971 + $0x88] sm:$0xff]
      %v4990 = vld [vmem:[%s4971 + $0x90] sm:$0xff]
      %v4991 = vld [vmem:[%s4971 + $0x98] sm:$0xff]
      %v4992 = vld [vmem:[%s4971 + $0xa0] sm:$0xff]
      %v4993 = vld [vmem:[%s4971 + $0xa8] sm:$0xff]
      %v4994 = vld [vmem:[%s4971 + $0xb0] sm:$0xff]
      %v4995 = vld [vmem:[%s4971 + $0xb8] sm:$0xff]
      %v4996 = vld [vmem:[%s4971 + $0xc0] sm:$0xff]
      %v4997 = vld [vmem:[%s4971 + $0xc8] sm:$0xff]
      %v4998 = vld [vmem:[%s4971 + $0xd0] sm:$0xff]
      %v4999 = vld [vmem:[%s4971 + $0xd8] sm:$0xff]
      %v5000 = vld [vmem:[%s4971 + $0xe0] sm:$0xff]
      %v5001 = vld [vmem:[%s4971 + $0xe8] sm:$0xff]
      %v5002 = vld [vmem:[%s4971 + $0xf0] sm:$0xff]
      %v5003 = vld [vmem:[%s4971 + $0xf8] sm:$0xff]
      %v5020 = vunpack.c.l.b16 %v4972
      %v5021 = vunpack.c.h.b16 %v4972
      %v5022 = vunpack.c.l.b16 %v4973
      %v5023 = vunpack.c.h.b16 %v4973
      %v5024 = vunpack.c.l.b16 %v4974
      %v5025 = vunpack.c.h.b16 %v4974
      %v5026 = vunpack.c.l.b16 %v4975
      %v5027 = vunpack.c.h.b16 %v4975
      %v5028 = vunpack.c.l.b16 %v4976
      %v5029 = vunpack.c.h.b16 %v4976
      %v5030 = vunpack.c.l.b16 %v4977
      %v5031 = vunpack.c.h.b16 %v4977
      %v5032 = vunpack.c.l.b16 %v4978
      %v5033 = vunpack.c.h.b16 %v4978
      %v5034 = vunpack.c.l.b16 %v4979
      %v5035 = vunpack.c.h.b16 %v4979
      %v5036 = vunpack.c.l.b16 %v4980
      %v5037 = vunpack.c.h.b16 %v4980
      %v5038 = vunpack.c.l.b16 %v4981
      %v5039 = vunpack.c.h.b16 %v4981
      %v5040 = vunpack.c.l.b16 %v4982
      %v5041 = vunpack.c.h.b16 %v4982
      %v5042 = vunpack.c.l.b16 %v4983
      %v5043 = vunpack.c.h.b16 %v4983
      %v5044 = vunpack.c.l.b16 %v4984
      %v5045 = vunpack.c.h.b16 %v4984
      %v5046 = vunpack.c.l.b16 %v4985
      %v5047 = vunpack.c.h.b16 %v4985
      %v5048 = vunpack.c.l.b16 %v4986
      %v5049 = vunpack.c.h.b16 %v4986
      %v5050 = vunpack.c.l.b16 %v4987
      %v5051 = vunpack.c.h.b16 %v4987
      %v5052 = vpack.c.b16 %v5022, %v5020
      %v5053 = vpack.c.b16 %v5023, %v5021
      %v5054 = vpack.c.b16 %v5026, %v5024
      %v5055 = vpack.c.b16 %v5027, %v5025
      %v5056 = vpack.c.b16 %v5030, %v5028
      %v5057 = vpack.c.b16 %v5031, %v5029
      %v5058 = vpack.c.b16 %v5034, %v5032
      %v5059 = vpack.c.b16 %v5035, %v5033
      %v5060 = vpack.c.b16 %v5038, %v5036
      %v5061 = vpack.c.b16 %v5039, %v5037
      %v5062 = vpack.c.b16 %v5042, %v5040
      %v5063 = vpack.c.b16 %v5043, %v5041
      %v5064 = vpack.c.b16 %v5046, %v5044
      %v5065 = vpack.c.b16 %v5047, %v5045
      %v5066 = vpack.c.b16 %v5050, %v5048
      %v5067 = vpack.c.b16 %v5051, %v5049
      %v5100 = vunpack.c.l.b16 %v4988
      %v5101 = vunpack.c.h.b16 %v4988
      %v5102 = vunpack.c.l.b16 %v4989
      %v5103 = vunpack.c.h.b16 %v4989
      %v5104 = vunpack.c.l.b16 %v4990
      %v5105 = vunpack.c.h.b16 %v4990
      %v5106 = vunpack.c.l.b16 %v4991
      %v5107 = vunpack.c.h.b16 %v4991
      %v5108 = vunpack.c.l.b16 %v4992
      %v5109 = vunpack.c.h.b16 %v4992
      %v5110 = vunpack.c.l.b16 %v4993
      %v5111 = vunpack.c.h.b16 %v4993
      %v5112 = vunpack.c.l.b16 %v4994
      %v5113 = vunpack.c.h.b16 %v4994
      %v5114 = vunpack.c.l.b16 %v4995
      %v5115 = vunpack.c.h.b16 %v4995
      %v5116 = vunpack.c.l.b16 %v4996
      %v5117 = vunpack.c.h.b16 %v4996
      %v5118 = vunpack.c.l.b16 %v4997
      %v5119 = vunpack.c.h.b16 %v4997
      %v5120 = vunpack.c.l.b16 %v4998
      %v5121 = vunpack.c.h.b16 %v4998
      %v5122 = vunpack.c.l.b16 %v4999
      %v5123 = vunpack.c.h.b16 %v4999
      %v5124 = vunpack.c.l.b16 %v5000
      %v5125 = vunpack.c.h.b16 %v5000
      %v5126 = vunpack.c.l.b16 %v5001
      %v5127 = vunpack.c.h.b16 %v5001
      %v5128 = vunpack.c.l.b16 %v5002
      %v5129 = vunpack.c.h.b16 %v5002
      %v5130 = vunpack.c.l.b16 %v5003
      %v5131 = vunpack.c.h.b16 %v5003
      %v5132 = vpack.c.b16 %v5102, %v5100
      %v5133 = vpack.c.b16 %v5103, %v5101
      %v5134 = vpack.c.b16 %v5106, %v5104
      %v5135 = vpack.c.b16 %v5107, %v5105
      %v5136 = vpack.c.b16 %v5110, %v5108
      %v5137 = vpack.c.b16 %v5111, %v5109
      %v5138 = vpack.c.b16 %v5114, %v5112
      %v5139 = vpack.c.b16 %v5115, %v5113
      %v5140 = vpack.c.b16 %v5118, %v5116
      %v5141 = vpack.c.b16 %v5119, %v5117
      %v5142 = vpack.c.b16 %v5122, %v5120
      %v5143 = vpack.c.b16 %v5123, %v5121
      %v5144 = vpack.c.b16 %v5126, %v5124
      %v5145 = vpack.c.b16 %v5127, %v5125
      %v5146 = vpack.c.b16 %v5130, %v5128
      %v5147 = vpack.c.b16 %v5131, %v5129
      %5164 = vmatprep.subr.bf16.mxu0 %v5053
      %5165 = vmatpush1.bf16.msra.mxu0 %v5052
      %5166 = vmatprep.subr.bf16.mxu0 %v5055
      %5167 = vmatpush1.bf16.msra.mxu0 %v5054
      %5168 = vmatprep.subr.bf16.mxu0 %v5057
      %5169 = vmatpush1.bf16.msra.mxu0 %v5056
      %5170 = vmatprep.subr.bf16.mxu0 %v5059
      %5171 = vmatpush1.bf16.msra.mxu0 %v5058
      %5172 = vmatprep.subr.bf16.mxu0 %v5061
      %5173 = vmatpush1.bf16.msra.mxu0 %v5060
      %5174 = vmatprep.subr.bf16.mxu0 %v5063
      %5175 = vmatpush1.bf16.msra.mxu0 %v5062
      %5176 = vmatprep.subr.bf16.mxu0 %v5065
      %5177 = vmatpush1.bf16.msra.mxu0 %v5064
      %5178 = vmatprep.subr.bf16.mxu0 %v5067
      %5179 = vmatpush1.bf16.msra.mxu0 %v5066
      %5180 = vmatprep.subr.bf16.mxu0 %v5133
      %5181 = vmatpush1.bf16.msra.mxu0 %v5132
      %5182 = vmatprep.subr.bf16.mxu0 %v5135
      %5183 = vmatpush1.bf16.msra.mxu0 %v5134
      %5184 = vmatprep.subr.bf16.mxu0 %v5137
      %5185 = vmatpush1.bf16.msra.mxu0 %v5136
      %5186 = vmatprep.subr.bf16.mxu0 %v5139
      %5187 = vmatpush1.bf16.msra.mxu0 %v5138
      %5188 = vmatprep.subr.bf16.mxu0 %v5141
      %5189 = vmatpush1.bf16.msra.mxu0 %v5140
      %5190 = vmatprep.subr.bf16.mxu0 %v5143
      %5191 = vmatpush1.bf16.msra.mxu0 %v5142
      %5192 = vmatprep.subr.bf16.mxu0 %v5145
      %5193 = vmatpush1.bf16.msra.mxu0 %v5144
      %5194 = vmatprep.subr.bf16.mxu0 %v5147
      %5195 = vmatpush1.bf16.msra.mxu0 %v5146
      %5196 = vmatprep.mubr.bf16.mxu0 %v4969
      %5197 = vmatmul.mubr.bf16.gmra.mrb[0].mxu0 %v4943
      %v5198 = vpop.f32.mrb[0].mxu0
      %v5199 = vadd.f32 0.0, %v5198
      %v5200 = vpop.f32.mrb[0].mxu0
      %v5201 = vadd.f32 0.0, %v5200
      %v5202 = vpop.f32.mrb[0].mxu0
      %v5203 = vadd.f32 0.0, %v5202
      %v5204 = vpop.f32.mrb[0].mxu0
      %v5205 = vadd.f32 0.0, %v5204
      %5206 = vdwg.mxu0
      %v5207 = vadd.f32 %v4917, %v5199
      %v5208 = vadd.f32 %v4918, %v5201
      %v5209 = vadd.f32 %v4919, %v5203
      %v5210 = vadd.f32 %v4920, %v5205
      %v5211 = vld [vmem:[%s3737] sm:$0x6]
      %v5212 = vld [vmem:[%s3737 + $0x4] sm:$0x6]
      %v5213 = vld [vmem:[%s3737 + $0x8] sm:$0x6]
      %v5215 = vunpack.c.l.b16 %v5211
      %v5216 = vpack.c.b16 %v5215, %v5215
      %v5217 = vrot.slane %v5216, 1
      %v5220 = vunpack.c.l.b16 %v5212
      %v5221 = vpack.c.b16 %v5220, %v5220
      %v5223 = vshrl.u32 %v5221, 16
      %v5225 = vrot.slane %v5223, 7
      %v5226 = vshll.u32 %v5221, 16
      %v5228 = vor.u32 %v5225, %v5226
      %v5231 = vunpack.c.l.b16 %v5213
      %v5232 = vpack.c.b16 %v5231, %v5231
      %v5233 = vrot.slane %v5232, 6
      %v5234 = vsel %vm3787, %v5217, %v5228
      %v5237 = vsel %vm3789, %v5234, %v5233
      %v5240 = vshrl.u32 %v5216, 16
      %v5242 = vrot.slane %v5240, 1
      %v5243 = vshll.u32 %v5216, 16
      %v5245 = vrot.slane %v5243, 2
      %v5246 = vor.u32 %v5242, %v5245
      %v5249 = vshrl.u32 %v5232, 16
      %v5251 = vrot.slane %v5249, 6
      %v5252 = vshll.u32 %v5232, 16
      %v5254 = vrot.slane %v5252, 7
      %v5255 = vor.u32 %v5251, %v5254
      %v5256 = vsel %vm3787, %v5246, %v5212
      %v5259 = vsel %vm3789, %v5256, %v5255
      %s5261 = scalar_lea.vmem %s4, 1280
      %v5262 = vld [vmem:[%s5261] sm:$0xff]
      %v5263 = vld [vmem:[%s5261 + $0x8] sm:$0xff]
      %v5264 = vld [vmem:[%s5261 + $0x10] sm:$0xff]
      %v5265 = vld [vmem:[%s5261 + $0x18] sm:$0xff]
      %v5266 = vld [vmem:[%s5261 + $0x20] sm:$0xff]
      %v5267 = vld [vmem:[%s5261 + $0x28] sm:$0xff]
      %v5268 = vld [vmem:[%s5261 + $0x30] sm:$0xff]
      %v5269 = vld [vmem:[%s5261 + $0x38] sm:$0xff]
      %v5270 = vld [vmem:[%s5261 + $0x40] sm:$0xff]
      %v5271 = vld [vmem:[%s5261 + $0x48] sm:$0xff]
      %v5272 = vld [vmem:[%s5261 + $0x50] sm:$0xff]
      %v5273 = vld [vmem:[%s5261 + $0x58] sm:$0xff]
      %v5274 = vld [vmem:[%s5261 + $0x60] sm:$0xff]
      %v5275 = vld [vmem:[%s5261 + $0x68] sm:$0xff]
      %v5276 = vld [vmem:[%s5261 + $0x70] sm:$0xff]
      %v5277 = vld [vmem:[%s5261 + $0x78] sm:$0xff]
      %v5278 = vld [vmem:[%s5261 + $0x80] sm:$0xff]
      %v5279 = vld [vmem:[%s5261 + $0x88] sm:$0xff]
      %v5280 = vld [vmem:[%s5261 + $0x90] sm:$0xff]
      %v5281 = vld [vmem:[%s5261 + $0x98] sm:$0xff]
      %v5282 = vld [vmem:[%s5261 + $0xa0] sm:$0xff]
      %v5283 = vld [vmem:[%s5261 + $0xa8] sm:$0xff]
      %v5284 = vld [vmem:[%s5261 + $0xb0] sm:$0xff]
      %v5285 = vld [vmem:[%s5261 + $0xb8] sm:$0xff]
      %v5286 = vld [vmem:[%s5261 + $0xc0] sm:$0xff]
      %v5287 = vld [vmem:[%s5261 + $0xc8] sm:$0xff]
      %v5288 = vld [vmem:[%s5261 + $0xd0] sm:$0xff]
      %v5289 = vld [vmem:[%s5261 + $0xd8] sm:$0xff]
      %v5290 = vld [vmem:[%s5261 + $0xe0] sm:$0xff]
      %v5291 = vld [vmem:[%s5261 + $0xe8] sm:$0xff]
      %v5292 = vld [vmem:[%s5261 + $0xf0] sm:$0xff]
      %v5293 = vld [vmem:[%s5261 + $0xf8] sm:$0xff]
      %v5310 = vunpack.c.l.b16 %v5262
      %v5311 = vunpack.c.h.b16 %v5262
      %v5312 = vunpack.c.l.b16 %v5263
      %v5313 = vunpack.c.h.b16 %v5263
      %v5314 = vunpack.c.l.b16 %v5264
      %v5315 = vunpack.c.h.b16 %v5264
      %v5316 = vunpack.c.l.b16 %v5265
      %v5317 = vunpack.c.h.b16 %v5265
      %v5318 = vunpack.c.l.b16 %v5266
      %v5319 = vunpack.c.h.b16 %v5266
      %v5320 = vunpack.c.l.b16 %v5267
      %v5321 = vunpack.c.h.b16 %v5267
      %v5322 = vunpack.c.l.b16 %v5268
      %v5323 = vunpack.c.h.b16 %v5268
      %v5324 = vunpack.c.l.b16 %v5269
      %v5325 = vunpack.c.h.b16 %v5269
      %v5326 = vunpack.c.l.b16 %v5270
      %v5327 = vunpack.c.h.b16 %v5270
      %v5328 = vunpack.c.l.b16 %v5271
      %v5329 = vunpack.c.h.b16 %v5271
      %v5330 = vunpack.c.l.b16 %v5272
      %v5331 = vunpack.c.h.b16 %v5272
      %v5332 = vunpack.c.l.b16 %v5273
      %v5333 = vunpack.c.h.b16 %v5273
      %v5334 = vunpack.c.l.b16 %v5274
      %v5335 = vunpack.c.h.b16 %v5274
      %v5336 = vunpack.c.l.b16 %v5275
      %v5337 = vunpack.c.h.b16 %v5275
      %v5338 = vunpack.c.l.b16 %v5276
      %v5339 = vunpack.c.h.b16 %v5276
      %v5340 = vunpack.c.l.b16 %v5277
      %v5341 = vunpack.c.h.b16 %v5277
      %v5342 = vpack.c.b16 %v5312, %v5310
      %v5343 = vpack.c.b16 %v5313, %v5311
      %v5344 = vpack.c.b16 %v5316, %v5314
      %v5345 = vpack.c.b16 %v5317, %v5315
      %v5346 = vpack.c.b16 %v5320, %v5318
      %v5347 = vpack.c.b16 %v5321, %v5319
      %v5348 = vpack.c.b16 %v5324, %v5322
      %v5349 = vpack.c.b16 %v5325, %v5323
      %v5350 = vpack.c.b16 %v5328, %v5326
      %v5351 = vpack.c.b16 %v5329, %v5327
      %v5352 = vpack.c.b16 %v5332, %v5330
      %v5353 = vpack.c.b16 %v5333, %v5331
      %v5354 = vpack.c.b16 %v5336, %v5334
      %v5355 = vpack.c.b16 %v5337, %v5335
      %v5356 = vpack.c.b16 %v5340, %v5338
      %v5357 = vpack.c.b16 %v5341, %v5339
      %v5390 = vunpack.c.l.b16 %v5278
      %v5391 = vunpack.c.h.b16 %v5278
      %v5392 = vunpack.c.l.b16 %v5279
      %v5393 = vunpack.c.h.b16 %v5279
      %v5394 = vunpack.c.l.b16 %v5280
      %v5395 = vunpack.c.h.b16 %v5280
      %v5396 = vunpack.c.l.b16 %v5281
      %v5397 = vunpack.c.h.b16 %v5281
      %v5398 = vunpack.c.l.b16 %v5282
      %v5399 = vunpack.c.h.b16 %v5282
      %v5400 = vunpack.c.l.b16 %v5283
      %v5401 = vunpack.c.h.b16 %v5283
      %v5402 = vunpack.c.l.b16 %v5284
      %v5403 = vunpack.c.h.b16 %v5284
      %v5404 = vunpack.c.l.b16 %v5285
      %v5405 = vunpack.c.h.b16 %v5285
      %v5406 = vunpack.c.l.b16 %v5286
      %v5407 = vunpack.c.h.b16 %v5286
      %v5408 = vunpack.c.l.b16 %v5287
      %v5409 = vunpack.c.h.b16 %v5287
      %v5410 = vunpack.c.l.b16 %v5288
      %v5411 = vunpack.c.h.b16 %v5288
      %v5412 = vunpack.c.l.b16 %v5289
      %v5413 = vunpack.c.h.b16 %v5289
      %v5414 = vunpack.c.l.b16 %v5290
      %v5415 = vunpack.c.h.b16 %v5290
      %v5416 = vunpack.c.l.b16 %v5291
      %v5417 = vunpack.c.h.b16 %v5291
      %v5418 = vunpack.c.l.b16 %v5292
      %v5419 = vunpack.c.h.b16 %v5292
      %v5420 = vunpack.c.l.b16 %v5293
      %v5421 = vunpack.c.h.b16 %v5293
      %v5422 = vpack.c.b16 %v5392, %v5390
      %v5423 = vpack.c.b16 %v5393, %v5391
      %v5424 = vpack.c.b16 %v5396, %v5394
      %v5425 = vpack.c.b16 %v5397, %v5395
      %v5426 = vpack.c.b16 %v5400, %v5398
      %v5427 = vpack.c.b16 %v5401, %v5399
      %v5428 = vpack.c.b16 %v5404, %v5402
      %v5429 = vpack.c.b16 %v5405, %v5403
      %v5430 = vpack.c.b16 %v5408, %v5406
      %v5431 = vpack.c.b16 %v5409, %v5407
      %v5432 = vpack.c.b16 %v5412, %v5410
      %v5433 = vpack.c.b16 %v5413, %v5411
      %v5434 = vpack.c.b16 %v5416, %v5414
      %v5435 = vpack.c.b16 %v5417, %v5415
      %v5436 = vpack.c.b16 %v5420, %v5418
      %v5437 = vpack.c.b16 %v5421, %v5419
      %5454 = vmatprep.subr.bf16.mxu0 %v5343
      %5455 = vmatpush1.bf16.msra.mxu0 %v5342
      %5456 = vmatprep.subr.bf16.mxu0 %v5345
      %5457 = vmatpush1.bf16.msra.mxu0 %v5344
      %5458 = vmatprep.subr.bf16.mxu0 %v5347
      %5459 = vmatpush1.bf16.msra.mxu0 %v5346
      %5460 = vmatprep.subr.bf16.mxu0 %v5349
      %5461 = vmatpush1.bf16.msra.mxu0 %v5348
      %5462 = vmatprep.subr.bf16.mxu0 %v5351
      %5463 = vmatpush1.bf16.msra.mxu0 %v5350
      %5464 = vmatprep.subr.bf16.mxu0 %v5353
      %5465 = vmatpush1.bf16.msra.mxu0 %v5352
      %5466 = vmatprep.subr.bf16.mxu0 %v5355
      %5467 = vmatpush1.bf16.msra.mxu0 %v5354
      %5468 = vmatprep.subr.bf16.mxu0 %v5357
      %5469 = vmatpush1.bf16.msra.mxu0 %v5356
      %5470 = vmatprep.subr.bf16.mxu0 %v5423
      %5471 = vmatpush1.bf16.msra.mxu0 %v5422
      %5472 = vmatprep.subr.bf16.mxu0 %v5425
      %5473 = vmatpush1.bf16.msra.mxu0 %v5424
      %5474 = vmatprep.subr.bf16.mxu0 %v5427
      %5475 = vmatpush1.bf16.msra.mxu0 %v5426
      %5476 = vmatprep.subr.bf16.mxu0 %v5429
      %5477 = vmatpush1.bf16.msra.mxu0 %v5428
      %5478 = vmatprep.subr.bf16.mxu0 %v5431
      %5479 = vmatpush1.bf16.msra.mxu0 %v5430
      %5480 = vmatprep.subr.bf16.mxu0 %v5433
      %5481 = vmatpush1.bf16.msra.mxu0 %v5432
      %5482 = vmatprep.subr.bf16.mxu0 %v5435
      %5483 = vmatpush1.bf16.msra.mxu0 %v5434
      %5484 = vmatprep.subr.bf16.mxu0 %v5437
      %5485 = vmatpush1.bf16.msra.mxu0 %v5436
      %5486 = vmatprep.mubr.bf16.mxu0 %v5259
      %5487 = vmatmul.mubr.bf16.gmra.mrb[0].mxu0 %v5237
      %v5488 = vpop.f32.mrb[0].mxu0
      %v5489 = vadd.f32 0.0, %v5488
      %v5490 = vpop.f32.mrb[0].mxu0
      %v5491 = vadd.f32 0.0, %v5490
      %v5492 = vpop.f32.mrb[0].mxu0
      %v5493 = vadd.f32 0.0, %v5492
      %v5494 = vpop.f32.mrb[0].mxu0
      %v5495 = vadd.f32 0.0, %v5494
      %5496 = vdwg.mxu0
      %v5497 = vadd.f32 %v5207, %v5489
      %v5498 = vadd.f32 %v5208, %v5491
      %v5499 = vadd.f32 %v5209, %v5493
      %v5500 = vadd.f32 %v5210, %v5495
      %v5501 = vld [vmem:[%s3753] sm:$0x3]
      %v5502 = vld [vmem:[%s3753 + $0x4] sm:$0x3]
      %v5503 = vld [vmem:[%s3753 + $0x8] sm:$0x3]
      %v5505 = vunpack.c.l.b16 %v5502
      %v5506 = vpack.c.b16 %v5505, %v5505
      %v5508 = vshrl.u32 %v5506, 16
      %v5510 = vrot.slane %v5508, 6
      %v5511 = vshll.u32 %v5506, 16
      %v5513 = vrot.slane %v5511, 7
      %v5514 = vor.u32 %v5510, %v5513
      %v5517 = vunpack.c.l.b16 %v5503
      %v5518 = vpack.c.b16 %v5517, %v5517
      %v5519 = vrot.slane %v5518, 5
      %v5520 = vsel %vm3787, %v5501, %v5514
      %v5523 = vsel %vm3789, %v5520, %v5519
      %v5526 = vunpack.c.l.b16 %v5501
      %v5527 = vpack.c.b16 %v5526, %v5526
      %v5529 = vshrl.u32 %v5527, 16
      %v5531 = vshll.u32 %v5527, 16
      %v5533 = vrot.slane %v5531, 1
      %v5534 = vor.u32 %v5529, %v5533
      %v5536 = vrot.slane %v5506, 7
      %v5539 = vshrl.u32 %v5518, 16
      %v5541 = vrot.slane %v5539, 5
      %v5542 = vshll.u32 %v5518, 16
      %v5544 = vrot.slane %v5542, 6
      %v5545 = vor.u32 %v5541, %v5544
      %v5546 = vsel %vm3787, %v5534, %v5536
      %v5549 = vsel %vm3789, %v5546, %v5545
      %s5551 = scalar_lea.vmem %s4, 1536
      %v5552 = vld [vmem:[%s5551] sm:$0xff]
      %v5553 = vld [vmem:[%s5551 + $0x8] sm:$0xff]
      %v5554 = vld [vmem:[%s5551 + $0x10] sm:$0xff]
      %v5555 = vld [vmem:[%s5551 + $0x18] sm:$0xff]
      %v5556 = vld [vmem:[%s5551 + $0x20] sm:$0xff]
      %v5557 = vld [vmem:[%s5551 + $0x28] sm:$0xff]
      %v5558 = vld [vmem:[%s5551 + $0x30] sm:$0xff]
      %v5559 = vld [vmem:[%s5551 + $0x38] sm:$0xff]
      %v5560 = vld [vmem:[%s5551 + $0x40] sm:$0xff]
      %v5561 = vld [vmem:[%s5551 + $0x48] sm:$0xff]
      %v5562 = vld [vmem:[%s5551 + $0x50] sm:$0xff]
      %v5563 = vld [vmem:[%s5551 + $0x58] sm:$0xff]
      %v5564 = vld [vmem:[%s5551 + $0x60] sm:$0xff]
      %v5565 = vld [vmem:[%s5551 + $0x68] sm:$0xff]
      %v5566 = vld [vmem:[%s5551 + $0x70] sm:$0xff]
      %v5567 = vld [vmem:[%s5551 + $0x78] sm:$0xff]
      %v5568 = vld [vmem:[%s5551 + $0x80] sm:$0xff]
      %v5569 = vld [vmem:[%s5551 + $0x88] sm:$0xff]
      %v5570 = vld [vmem:[%s5551 + $0x90] sm:$0xff]
      %v5571 = vld [vmem:[%s5551 + $0x98] sm:$0xff]
      %v5572 = vld [vmem:[%s5551 + $0xa0] sm:$0xff]
      %v5573 = vld [vmem:[%s5551 + $0xa8] sm:$0xff]
      %v5574 = vld [vmem:[%s5551 + $0xb0] sm:$0xff]
      %v5575 = vld [vmem:[%s5551 + $0xb8] sm:$0xff]
      %v5576 = vld [vmem:[%s5551 + $0xc0] sm:$0xff]
      %v5577 = vld [vmem:[%s5551 + $0xc8] sm:$0xff]
      %v5578 = vld [vmem:[%s5551 + $0xd0] sm:$0xff]
      %v5579 = vld [vmem:[%s5551 + $0xd8] sm:$0xff]
      %v5580 = vld [vmem:[%s5551 + $0xe0] sm:$0xff]
      %v5581 = vld [vmem:[%s5551 + $0xe8] sm:$0xff]
      %v5582 = vld [vmem:[%s5551 + $0xf0] sm:$0xff]
      %v5583 = vld [vmem:[%s5551 + $0xf8] sm:$0xff]
      %v5600 = vunpack.c.l.b16 %v5552
      %v5601 = vunpack.c.h.b16 %v5552
      %v5602 = vunpack.c.l.b16 %v5553
      %v5603 = vunpack.c.h.b16 %v5553
      %v5604 = vunpack.c.l.b16 %v5554
      %v5605 = vunpack.c.h.b16 %v5554
      %v5606 = vunpack.c.l.b16 %v5555
      %v5607 = vunpack.c.h.b16 %v5555
      %v5608 = vunpack.c.l.b16 %v5556
      %v5609 = vunpack.c.h.b16 %v5556
      %v5610 = vunpack.c.l.b16 %v5557
      %v5611 = vunpack.c.h.b16 %v5557
      %v5612 = vunpack.c.l.b16 %v5558
      %v5613 = vunpack.c.h.b16 %v5558
      %v5614 = vunpack.c.l.b16 %v5559
      %v5615 = vunpack.c.h.b16 %v5559
      %v5616 = vunpack.c.l.b16 %v5560
      %v5617 = vunpack.c.h.b16 %v5560
      %v5618 = vunpack.c.l.b16 %v5561
      %v5619 = vunpack.c.h.b16 %v5561
      %v5620 = vunpack.c.l.b16 %v5562
      %v5621 = vunpack.c.h.b16 %v5562
      %v5622 = vunpack.c.l.b16 %v5563
      %v5623 = vunpack.c.h.b16 %v5563
      %v5624 = vunpack.c.l.b16 %v5564
      %v5625 = vunpack.c.h.b16 %v5564
      %v5626 = vunpack.c.l.b16 %v5565
      %v5627 = vunpack.c.h.b16 %v5565
      %v5628 = vunpack.c.l.b16 %v5566
      %v5629 = vunpack.c.h.b16 %v5566
      %v5630 = vunpack.c.l.b16 %v5567
      %v5631 = vunpack.c.h.b16 %v5567
      %v5632 = vpack.c.b16 %v5602, %v5600
      %v5633 = vpack.c.b16 %v5603, %v5601
      %v5634 = vpack.c.b16 %v5606, %v5604
      %v5635 = vpack.c.b16 %v5607, %v5605
      %v5636 = vpack.c.b16 %v5610, %v5608
      %v5637 = vpack.c.b16 %v5611, %v5609
      %v5638 = vpack.c.b16 %v5614, %v5612
      %v5639 = vpack.c.b16 %v5615, %v5613
      %v5640 = vpack.c.b16 %v5618, %v5616
      %v5641 = vpack.c.b16 %v5619, %v5617
      %v5642 = vpack.c.b16 %v5622, %v5620
      %v5643 = vpack.c.b16 %v5623, %v5621
      %v5644 = vpack.c.b16 %v5626, %v5624
      %v5645 = vpack.c.b16 %v5627, %v5625
      %v5646 = vpack.c.b16 %v5630, %v5628
      %v5647 = vpack.c.b16 %v5631, %v5629
      %v5680 = vunpack.c.l.b16 %v5568
      %v5681 = vunpack.c.h.b16 %v5568
      %v5682 = vunpack.c.l.b16 %v5569
      %v5683 = vunpack.c.h.b16 %v5569
      %v5684 = vunpack.c.l.b16 %v5570
      %v5685 = vunpack.c.h.b16 %v5570
      %v5686 = vunpack.c.l.b16 %v5571
      %v5687 = vunpack.c.h.b16 %v5571
      %v5688 = vunpack.c.l.b16 %v5572
      %v5689 = vunpack.c.h.b16 %v5572
      %v5690 = vunpack.c.l.b16 %v5573
      %v5691 = vunpack.c.h.b16 %v5573
      %v5692 = vunpack.c.l.b16 %v5574
      %v5693 = vunpack.c.h.b16 %v5574
      %v5694 = vunpack.c.l.b16 %v5575
      %v5695 = vunpack.c.h.b16 %v5575
      %v5696 = vunpack.c.l.b16 %v5576
      %v5697 = vunpack.c.h.b16 %v5576
      %v5698 = vunpack.c.l.b16 %v5577
      %v5699 = vunpack.c.h.b16 %v5577
      %v5700 = vunpack.c.l.b16 %v5578
      %v5701 = vunpack.c.h.b16 %v5578
      %v5702 = vunpack.c.l.b16 %v5579
      %v5703 = vunpack.c.h.b16 %v5579
      %v5704 = vunpack.c.l.b16 %v5580
      %v5705 = vunpack.c.h.b16 %v5580
      %v5706 = vunpack.c.l.b16 %v5581
      %v5707 = vunpack.c.h.b16 %v5581
      %v5708 = vunpack.c.l.b16 %v5582
      %v5709 = vunpack.c.h.b16 %v5582
      %v5710 = vunpack.c.l.b16 %v5583
      %v5711 = vunpack.c.h.b16 %v5583
      %v5712 = vpack.c.b16 %v5682, %v5680
      %v5713 = vpack.c.b16 %v5683, %v5681
      %v5714 = vpack.c.b16 %v5686, %v5684
      %v5715 = vpack.c.b16 %v5687, %v5685
      %v5716 = vpack.c.b16 %v5690, %v5688
      %v5717 = vpack.c.b16 %v5691, %v5689
      %v5718 = vpack.c.b16 %v5694, %v5692
      %v5719 = vpack.c.b16 %v5695, %v5693
      %v5720 = vpack.c.b16 %v5698, %v5696
      %v5721 = vpack.c.b16 %v5699, %v5697
      %v5722 = vpack.c.b16 %v5702, %v5700
      %v5723 = vpack.c.b16 %v5703, %v5701
      %v5724 = vpack.c.b16 %v5706, %v5704
      %v5725 = vpack.c.b16 %v5707, %v5705
      %v5726 = vpack.c.b16 %v5710, %v5708
      %v5727 = vpack.c.b16 %v5711, %v5709
      %5744 = vmatprep.subr.bf16.mxu0 %v5633
      %5745 = vmatpush1.bf16.msra.mxu0 %v5632
      %5746 = vmatprep.subr.bf16.mxu0 %v5635
      %5747 = vmatpush1.bf16.msra.mxu0 %v5634
      %5748 = vmatprep.subr.bf16.mxu0 %v5637
      %5749 = vmatpush1.bf16.msra.mxu0 %v5636
      %5750 = vmatprep.subr.bf16.mxu0 %v5639
      %5751 = vmatpush1.bf16.msra.mxu0 %v5638
      %5752 = vmatprep.subr.bf16.mxu0 %v5641
      %5753 = vmatpush1.bf16.msra.mxu0 %v5640
      %5754 = vmatprep.subr.bf16.mxu0 %v5643
      %5755 = vmatpush1.bf16.msra.mxu0 %v5642
      %5756 = vmatprep.subr.bf16.mxu0 %v5645
      %5757 = vmatpush1.bf16.msra.mxu0 %v5644
      %5758 = vmatprep.subr.bf16.mxu0 %v5647
      %5759 = vmatpush1.bf16.msra.mxu0 %v5646
      %5760 = vmatprep.subr.bf16.mxu0 %v5713
      %5761 = vmatpush1.bf16.msra.mxu0 %v5712
      %5762 = vmatprep.subr.bf16.mxu0 %v5715
      %5763 = vmatpush1.bf16.msra.mxu0 %v5714
      %5764 = vmatprep.subr.bf16.mxu0 %v5717
      %5765 = vmatpush1.bf16.msra.mxu0 %v5716
      %5766 = vmatprep.subr.bf16.mxu0 %v5719
      %5767 = vmatpush1.bf16.msra.mxu0 %v5718
      %5768 = vmatprep.subr.bf16.mxu0 %v5721
      %5769 = vmatpush1.bf16.msra.mxu0 %v5720
      %5770 = vmatprep.subr.bf16.mxu0 %v5723
      %5771 = vmatpush1.bf16.msra.mxu0 %v5722
      %5772 = vmatprep.subr.bf16.mxu0 %v5725
      %5773 = vmatpush1.bf16.msra.mxu0 %v5724
      %5774 = vmatprep.subr.bf16.mxu0 %v5727
      %5775 = vmatpush1.bf16.msra.mxu0 %v5726
      %5776 = vmatprep.mubr.bf16.mxu0 %v5549
      %5777 = vmatmul.mubr.bf16.gmra.mrb[0].mxu0 %v5523
      %v5778 = vpop.f32.mrb[0].mxu0
      %v5779 = vadd.f32 0.0, %v5778
      %v5780 = vpop.f32.mrb[0].mxu0
      %v5781 = vadd.f32 0.0, %v5780
      %v5782 = vpop.f32.mrb[0].mxu0
      %v5783 = vadd.f32 0.0, %v5782
      %v5784 = vpop.f32.mrb[0].mxu0
      %v5785 = vadd.f32 0.0, %v5784
      %5786 = vdwg.mxu0
      %v5787 = vadd.f32 %v5497, %v5779
      %v5788 = vadd.f32 %v5498, %v5781
      %v5789 = vadd.f32 %v5499, %v5783
      %v5790 = vadd.f32 %v5500, %v5785
      %v5791 = vld [vmem:[%s3753] sm:$0x6]
      %v5792 = vld [vmem:[%s3753 + $0x4] sm:$0x6]
      %v5793 = vld [vmem:[%s3753 + $0x8] sm:$0x6]
      %v5795 = vunpack.c.l.b16 %v5791
      %v5796 = vpack.c.b16 %v5795, %v5795
      %v5797 = vrot.slane %v5796, 1
      %v5800 = vunpack.c.l.b16 %v5792
      %v5801 = vpack.c.b16 %v5800, %v5800
      %v5803 = vshrl.u32 %v5801, 16
      %v5805 = vrot.slane %v5803, 7
      %v5806 = vshll.u32 %v5801, 16
      %v5808 = vor.u32 %v5805, %v5806
      %v5811 = vunpack.c.l.b16 %v5793
      %v5812 = vpack.c.b16 %v5811, %v5811
      %v5813 = vrot.slane %v5812, 6
      %v5814 = vsel %vm3787, %v5797, %v5808
      %v5817 = vsel %vm3789, %v5814, %v5813
      %v5820 = vshrl.u32 %v5796, 16
      %v5822 = vrot.slane %v5820, 1
      %v5823 = vshll.u32 %v5796, 16
      %v5825 = vrot.slane %v5823, 2
      %v5826 = vor.u32 %v5822, %v5825
      %v5829 = vshrl.u32 %v5812, 16
      %v5831 = vrot.slane %v5829, 6
      %v5832 = vshll.u32 %v5812, 16
      %v5834 = vrot.slane %v5832, 7
      %v5835 = vor.u32 %v5831, %v5834
      %v5836 = vsel %vm3787, %v5826, %v5792
      %v5839 = vsel %vm3789, %v5836, %v5835
      %s5841 = scalar_lea.vmem %s4, 1792
      %v5842 = vld [vmem:[%s5841] sm:$0xff]
      %v5843 = vld [vmem:[%s5841 + $0x8] sm:$0xff]
      %v5844 = vld [vmem:[%s5841 + $0x10] sm:$0xff]
      %v5845 = vld [vmem:[%s5841 + $0x18] sm:$0xff]
      %v5846 = vld [vmem:[%s5841 + $0x20] sm:$0xff]
      %v5847 = vld [vmem:[%s5841 + $0x28] sm:$0xff]
      %v5848 = vld [vmem:[%s5841 + $0x30] sm:$0xff]
      %v5849 = vld [vmem:[%s5841 + $0x38] sm:$0xff]
      %v5850 = vld [vmem:[%s5841 + $0x40] sm:$0xff]
      %v5851 = vld [vmem:[%s5841 + $0x48] sm:$0xff]
      %v5852 = vld [vmem:[%s5841 + $0x50] sm:$0xff]
      %v5853 = vld [vmem:[%s5841 + $0x58] sm:$0xff]
      %v5854 = vld [vmem:[%s5841 + $0x60] sm:$0xff]
      %v5855 = vld [vmem:[%s5841 + $0x68] sm:$0xff]
      %v5856 = vld [vmem:[%s5841 + $0x70] sm:$0xff]
      %v5857 = vld [vmem:[%s5841 + $0x78] sm:$0xff]
      %v5858 = vld [vmem:[%s5841 + $0x80] sm:$0xff]
      %v5859 = vld [vmem:[%s5841 + $0x88] sm:$0xff]
      %v5860 = vld [vmem:[%s5841 + $0x90] sm:$0xff]
      %v5861 = vld [vmem:[%s5841 + $0x98] sm:$0xff]
      %v5862 = vld [vmem:[%s5841 + $0xa0] sm:$0xff]
      %v5863 = vld [vmem:[%s5841 + $0xa8] sm:$0xff]
      %v5864 = vld [vmem:[%s5841 + $0xb0] sm:$0xff]
      %v5865 = vld [vmem:[%s5841 + $0xb8] sm:$0xff]
      %v5866 = vld [vmem:[%s5841 + $0xc0] sm:$0xff]
      %v5867 = vld [vmem:[%s5841 + $0xc8] sm:$0xff]
      %v5868 = vld [vmem:[%s5841 + $0xd0] sm:$0xff]
      %v5869 = vld [vmem:[%s5841 + $0xd8] sm:$0xff]
      %v5870 = vld [vmem:[%s5841 + $0xe0] sm:$0xff]
      %v5871 = vld [vmem:[%s5841 + $0xe8] sm:$0xff]
      %v5872 = vld [vmem:[%s5841 + $0xf0] sm:$0xff]
      %v5873 = vld [vmem:[%s5841 + $0xf8] sm:$0xff]
      %v5890 = vunpack.c.l.b16 %v5842
      %v5891 = vunpack.c.h.b16 %v5842
      %v5892 = vunpack.c.l.b16 %v5843
      %v5893 = vunpack.c.h.b16 %v5843
      %v5894 = vunpack.c.l.b16 %v5844
      %v5895 = vunpack.c.h.b16 %v5844
      %v5896 = vunpack.c.l.b16 %v5845
      %v5897 = vunpack.c.h.b16 %v5845
      %v5898 = vunpack.c.l.b16 %v5846
      %v5899 = vunpack.c.h.b16 %v5846
      %v5900 = vunpack.c.l.b16 %v5847
      %v5901 = vunpack.c.h.b16 %v5847
      %v5902 = vunpack.c.l.b16 %v5848
      %v5903 = vunpack.c.h.b16 %v5848
      %v5904 = vunpack.c.l.b16 %v5849
      %v5905 = vunpack.c.h.b16 %v5849
      %v5906 = vunpack.c.l.b16 %v5850
      %v5907 = vunpack.c.h.b16 %v5850
      %v5908 = vunpack.c.l.b16 %v5851
      %v5909 = vunpack.c.h.b16 %v5851
      %v5910 = vunpack.c.l.b16 %v5852
      %v5911 = vunpack.c.h.b16 %v5852
      %v5912 = vunpack.c.l.b16 %v5853
      %v5913 = vunpack.c.h.b16 %v5853
      %v5914 = vunpack.c.l.b16 %v5854
      %v5915 = vunpack.c.h.b16 %v5854
      %v5916 = vunpack.c.l.b16 %v5855
      %v5917 = vunpack.c.h.b16 %v5855
      %v5918 = vunpack.c.l.b16 %v5856
      %v5919 = vunpack.c.h.b16 %v5856
      %v5920 = vunpack.c.l.b16 %v5857
      %v5921 = vunpack.c.h.b16 %v5857
      %v5922 = vpack.c.b16 %v5892, %v5890
      %v5923 = vpack.c.b16 %v5893, %v5891
      %v5924 = vpack.c.b16 %v5896, %v5894
      %v5925 = vpack.c.b16 %v5897, %v5895
      %v5926 = vpack.c.b16 %v5900, %v5898
      %v5927 = vpack.c.b16 %v5901, %v5899
      %v5928 = vpack.c.b16 %v5904, %v5902
      %v5929 = vpack.c.b16 %v5905, %v5903
      %v5930 = vpack.c.b16 %v5908, %v5906
      %v5931 = vpack.c.b16 %v5909, %v5907
      %v5932 = vpack.c.b16 %v5912, %v5910
      %v5933 = vpack.c.b16 %v5913, %v5911
      %v5934 = vpack.c.b16 %v5916, %v5914
      %v5935 = vpack.c.b16 %v5917, %v5915
      %v5936 = vpack.c.b16 %v5920, %v5918
      %v5937 = vpack.c.b16 %v5921, %v5919
      %v5970 = vunpack.c.l.b16 %v5858
      %v5971 = vunpack.c.h.b16 %v5858
      %v5972 = vunpack.c.l.b16 %v5859
      %v5973 = vunpack.c.h.b16 %v5859
      %v5974 = vunpack.c.l.b16 %v5860
      %v5975 = vunpack.c.h.b16 %v5860
      %v5976 = vunpack.c.l.b16 %v5861
      %v5977 = vunpack.c.h.b16 %v5861
      %v5978 = vunpack.c.l.b16 %v5862
      %v5979 = vunpack.c.h.b16 %v5862
      %v5980 = vunpack.c.l.b16 %v5863
      %v5981 = vunpack.c.h.b16 %v5863
      %v5982 = vunpack.c.l.b16 %v5864
      %v5983 = vunpack.c.h.b16 %v5864
      %v5984 = vunpack.c.l.b16 %v5865
      %v5985 = vunpack.c.h.b16 %v5865
      %v5986 = vunpack.c.l.b16 %v5866
      %v5987 = vunpack.c.h.b16 %v5866
      %v5988 = vunpack.c.l.b16 %v5867
      %v5989 = vunpack.c.h.b16 %v5867
      %v5990 = vunpack.c.l.b16 %v5868
      %v5991 = vunpack.c.h.b16 %v5868
      %v5992 = vunpack.c.l.b16 %v5869
      %v5993 = vunpack.c.h.b16 %v5869
      %v5994 = vunpack.c.l.b16 %v5870
      %v5995 = vunpack.c.h.b16 %v5870
      %v5996 = vunpack.c.l.b16 %v5871
      %v5997 = vunpack.c.h.b16 %v5871
      %v5998 = vunpack.c.l.b16 %v5872
      %v5999 = vunpack.c.h.b16 %v5872
      %v6000 = vunpack.c.l.b16 %v5873
      %v6001 = vunpack.c.h.b16 %v5873
      %v6002 = vpack.c.b16 %v5972, %v5970
      %v6003 = vpack.c.b16 %v5973, %v5971
      %v6004 = vpack.c.b16 %v5976, %v5974
      %v6005 = vpack.c.b16 %v5977, %v5975
      %v6006 = vpack.c.b16 %v5980, %v5978
      %v6007 = vpack.c.b16 %v5981, %v5979
      %v6008 = vpack.c.b16 %v5984, %v5982
      %v6009 = vpack.c.b16 %v5985, %v5983
      %v6010 = vpack.c.b16 %v5988, %v5986
      %v6011 = vpack.c.b16 %v5989, %v5987
      %v6012 = vpack.c.b16 %v5992, %v5990
      %v6013 = vpack.c.b16 %v5993, %v5991
      %v6014 = vpack.c.b16 %v5996, %v5994
      %v6015 = vpack.c.b16 %v5997, %v5995
      %v6016 = vpack.c.b16 %v6000, %v5998
      %v6017 = vpack.c.b16 %v6001, %v5999
      %6034 = vmatprep.subr.bf16.mxu0 %v5923
      %6035 = vmatpush1.bf16.msra.mxu0 %v5922
      %6036 = vmatprep.subr.bf16.mxu0 %v5925
      %6037 = vmatpush1.bf16.msra.mxu0 %v5924
      %6038 = vmatprep.subr.bf16.mxu0 %v5927
      %6039 = vmatpush1.bf16.msra.mxu0 %v5926
      %6040 = vmatprep.subr.bf16.mxu0 %v5929
      %6041 = vmatpush1.bf16.msra.mxu0 %v5928
      %6042 = vmatprep.subr.bf16.mxu0 %v5931
      %6043 = vmatpush1.bf16.msra.mxu0 %v5930
      %6044 = vmatprep.subr.bf16.mxu0 %v5933
      %6045 = vmatpush1.bf16.msra.mxu0 %v5932
      %6046 = vmatprep.subr.bf16.mxu0 %v5935
      %6047 = vmatpush1.bf16.msra.mxu0 %v5934
      %6048 = vmatprep.subr.bf16.mxu0 %v5937
      %6049 = vmatpush1.bf16.msra.mxu0 %v5936
      %6050 = vmatprep.subr.bf16.mxu0 %v6003
      %6051 = vmatpush1.bf16.msra.mxu0 %v6002
      %6052 = vmatprep.subr.bf16.mxu0 %v6005
      %6053 = vmatpush1.bf16.msra.mxu0 %v6004
      %6054 = vmatprep.subr.bf16.mxu0 %v6007
      %6055 = vmatpush1.bf16.msra.mxu0 %v6006
      %6056 = vmatprep.subr.bf16.mxu0 %v6009
      %6057 = vmatpush1.bf16.msra.mxu0 %v6008
      %6058 = vmatprep.subr.bf16.mxu0 %v6011
      %6059 = vmatpush1.bf16.msra.mxu0 %v6010
      %6060 = vmatprep.subr.bf16.mxu0 %v6013
      %6061 = vmatpush1.bf16.msra.mxu0 %v6012
      %6062 = vmatprep.subr.bf16.mxu0 %v6015
      %6063 = vmatpush1.bf16.msra.mxu0 %v6014
      %6064 = vmatprep.subr.bf16.mxu0 %v6017
      %6065 = vmatpush1.bf16.msra.mxu0 %v6016
      %6066 = vmatprep.mubr.bf16.mxu0 %v5839
      %6067 = vmatmul.mubr.bf16.gmra.mrb[0].mxu0 %v5817
      %v6068 = vpop.f32.mrb[0].mxu0
      %v6069 = vadd.f32 0.0, %v6068
      %v6070 = vpop.f32.mrb[0].mxu0
      %v6071 = vadd.f32 0.0, %v6070
      %v6072 = vpop.f32.mrb[0].mxu0
      %v6073 = vadd.f32 0.0, %v6072
      %v6074 = vpop.f32.mrb[0].mxu0
      %v6075 = vadd.f32 0.0, %v6074
      %6076 = vdwg.mxu0
      %v6077 = vadd.f32 %v5787, %v6069
      %v6078 = vadd.f32 %v5788, %v6071
      %v6079 = vadd.f32 %v5789, %v6073
      %v6080 = vadd.f32 %v5790, %v6075
      %v6081 = vld [vmem:[%s9] sm:$0x3]
      %v6083 = vlaneseq
      %v6084 = vshrl.u32 %v6083, 7
      %v6085 = vsub.s32 0, %v6084
      %v6086 = vrot.slane %v6081, %v6085
      %v6087 = vlaneseq
      %v6088 = vshrl.u32 %v6087, 7
      %v6089 = vsub.s32 1, %v6088
      %v6090 = vrot.slane %v6081, %v6089
      %v6093 = vadd.f32 %v6077, %v6086
      %v6094 = vadd.f32 %v6078, %v6090
      %v6095 = vadd.f32 %v6079, %v6086
      %v6096 = vadd.f32 %v6080, %v6090
      %vm6097 = vcmask 1040384
      %v6098 = vsel %vm6097, %v6095, 0.0
      %v6099 = vadd.f32 %v6093, %v6098
      %v6100 = vrot.slane %v6099, 4
      %v6101 = vadd.f32 %v6099, %v6100
      %v6102 = vrot.slane %v6101, 2
      %v6103 = vadd.f32 %v6101, %v6102
      %v6104 = vrot.slane %v6103, 1
      %v6105 = vadd.f32 %v6103, %v6104
      %v6106 = vsel %vm6097, %v6096, 0.0
      %v6107 = vadd.f32 %v6094, %v6106
      %v6108 = vrot.slane %v6107, 4
      %v6109 = vadd.f32 %v6107, %v6108
      %v6110 = vrot.slane %v6109, 2
      %v6111 = vadd.f32 %v6109, %v6110
      %v6112 = vrot.slane %v6111, 1
      %v6113 = vadd.f32 %v6111, %v6112
      %v6114 = vrcp.pop 9.0
      %v6115 = vmul.f32 %v6105, %v6114
      %v6116 = vmul.f32 %v6113, %v6114
      %v6117 = vsub.f32 %v6093, %v6115
      %v6118 = vsub.f32 %v6094, %v6116
      %v6119 = vsub.f32 %v6095, %v6115
      %v6120 = vsub.f32 %v6096, %v6116
      %v6121 = vmul.f32 %v6117, %v6117
      %v6122 = vmul.f32 %v6118, %v6118
      %v6123 = vmul.f32 %v6119, %v6119
      %v6124 = vmul.f32 %v6120, %v6120
      %v6125 = vsel %vm6097, %v6123, 0.0
      %v6126 = vadd.f32 %v6121, %v6125
      %v6127 = vrot.slane %v6126, 4
      %v6128 = vadd.f32 %v6126, %v6127
      %v6129 = vrot.slane %v6128, 2
      %v6130 = vadd.f32 %v6128, %v6129
      %v6131 = vrot.slane %v6130, 1
      %v6132 = vadd.f32 %v6130, %v6131
      %v6133 = vsel %vm6097, %v6124, 0.0
      %v6134 = vadd.f32 %v6122, %v6133
      %v6135 = vrot.slane %v6134, 4
      %v6136 = vadd.f32 %v6134, %v6135
      %v6137 = vrot.slane %v6136, 2
      %v6138 = vadd.f32 %v6136, %v6137
      %v6139 = vrot.slane %v6138, 1
      %v6140 = vadd.f32 %v6138, %v6139
      %v6141 = vmul.f32 %v6132, %v6114
      %v6142 = vmul.f32 %v6140, %v6114
      %v6143 = vadd.f32 %v6141, 1e-05
      %v6144 = vadd.f32 %v6142, 1e-05
      %v6145 = vrsqrt.pop %v6143
      %v6146 = vrsqrt.pop %v6144
      %v6147 = vmul.f32 %v6117, %v6145
      %v6148 = vmul.f32 %v6118, %v6146
      %v6149 = vmul.f32 %v6119, %v6145
      %v6150 = vmul.f32 %v6120, %v6146
      %vm6151 = vcmp.gt.f32.partialorder %v6147, 0.0
      %vm6152 = vcmp.gt.f32.partialorder %v6148, 0.0
      %vm6153 = vcmp.gt.f32.partialorder %v6149, 0.0
      %vm6154 = vcmp.gt.f32.partialorder %v6150, 0.0
      %v6155 = vmul.f32 %v6147, 0.2
      %v6156 = vmul.f32 %v6148, 0.2
      %v6157 = vmul.f32 %v6149, 0.2
      %v6158 = vmul.f32 %v6150, 0.2
      %v6159 = vsel %vm6151, %v6147, %v6155
      %v6160 = vsel %vm6152, %v6148, %v6156
      %v6161 = vsel %vm6153, %v6149, %v6157
      %v6162 = vsel %vm6154, %v6150, %v6158
      %v6165 = vrot.slane %v6159, 7
      %v6166 = vrot.slane %v6160, 7
      %s6169 = scalar_lea.vmem [#allocation7], 16
      %6170 = vst [vmem:[%s6169] sm:$0xe] %v6165
      %6171 = vst [vmem:[%s6169 + $0x8] sm:$0xe] %v6166
      %v6172 = vrot.slane %v6159, 2
      %v6173 = vrot.slane %v6160, 2
      %s6176 = scalar_lea.vmem [#allocation7], 32
      %6177 = vst [vmem:[%s6176] sm:$0xe] %v6172
      %6178 = vst [vmem:[%s6176 + $0x8] sm:$0xe] %v6173
      %v6181 = vrot.slane %v6159, 5
      %v6182 = vrot.slane %v6161, 5
      %v6183 = vsel %vm3789, %v6181, %v6182
      %v6184 = vrot.slane %v6160, 5
      %v6185 = vrot.slane %v6162, 5
      %v6186 = vsel %vm3789, %v6184, %v6185
      %s6189 = scalar_lea.vmem [#allocation7], 48
      %6190 = vst [vmem:[%s6189] sm:$0xe] %v6183
      %6191 = vst [vmem:[%s6189 + $0x8] sm:$0xe] %v6186
      %v6192 = vld [vmem:[#allocation7] sm:$0x3]
      %v6193 = vld [vmem:[#allocation7 + $0x8] sm:$0x3]
      %v6194 = vld [vmem:[#allocation7 + $0x10] sm:$0x3]
      %v6195 = vld [vmem:[#allocation7 + $0x18] sm:$0x3]
      %v6198 = vrot.slane %v6194, 6
      %v6199 = vrot.slane %v6195, 6
      %v6202 = vsel %vm2726, %v6192, %v6198
      %v6203 = vsel %vm2726, %v6193, %v6199
      %v6204 = vld [vmem:[%s5] sm:$0x3]
      %v6206 = vlaneseq
      %v6207 = vshrl.u32 %v6206, 7
      %v6208 = vsub.s32 0, %v6207
      %v6209 = vrot.slane %v6204, %v6208
      %v6210 = vlaneseq
      %v6211 = vshrl.u32 %v6210, 7
      %v6212 = vsub.s32 1, %v6211
      %v6213 = vrot.slane %v6204, %v6212
      %v6216 = vmul.f32 %v6202, %v6209
      %v6217 = vmul.f32 %v6203, %v6213
      %v6218 = vsel %vm1520, %v6216, 0.0
      %v6219 = vsel %vm1520, %v6217, 0.0
      %v6220 = vadd.f32 %v6218, %v6219
      %6221 = vadd.xlane.f32.xlu0 %v6220
      %v6222 = vpop.xlane.xlu0 %6221
      %v6223 = vadd.f32 %v6222, 0.0
      %v6224 = vld [vmem:[#allocation7] sm:$0x6]
      %v6225 = vld [vmem:[#allocation7 + $0x8] sm:$0x6]
      %v6226 = vld [vmem:[#allocation7 + $0x10] sm:$0x6]
      %v6227 = vld [vmem:[#allocation7 + $0x18] sm:$0x6]
      %v6230 = vrot.slane %v6224, 1
      %v6231 = vrot.slane %v6225, 1
      %v6236 = vrot.slane %v6226, 7
      %v6237 = vrot.slane %v6227, 7
      %v6240 = vsel %vm2726, %v6230, %v6236
      %v6241 = vsel %vm2726, %v6231, %v6237
      %s6242 = scalar_lea.vmem %s5, 2
      %v6243 = vld [vmem:[%s6242] sm:$0x3]
      %v6245 = vlaneseq
      %v6246 = vshrl.u32 %v6245, 7
      %v6247 = vsub.s32 0, %v6246
      %v6248 = vrot.slane %v6243, %v6247
      %v6249 = vlaneseq
      %v6250 = vshrl.u32 %v6249, 7
      %v6251 = vsub.s32 1, %v6250
      %v6252 = vrot.slane %v6243, %v6251
      %v6255 = vmul.f32 %v6240, %v6248
      %v6256 = vmul.f32 %v6241, %v6252
      %v6257 = vsel %vm1520, %v6255, 0.0
      %v6258 = vsel %vm1520, %v6256, 0.0
      %v6259 = vadd.f32 %v6257, %v6258
      %6260 = vadd.xlane.f32.xlu0 %v6259
      %v6261 = vpop.xlane.xlu0 %6260
      %v6262 = vadd.f32 %v6223, %v6261
      %v6263 = vld [vmem:[#allocation7] sm:$0xc]
      %v6264 = vld [vmem:[#allocation7 + $0x8] sm:$0xc]
      %v6265 = vld [vmem:[#allocation7 + $0x10] sm:$0xc]
      %v6266 = vld [vmem:[#allocation7 + $0x18] sm:$0xc]
      %v6269 = vrot.slane %v6263, 2
      %v6270 = vrot.slane %v6264, 2
      %v6273 = vsel %vm2726, %v6269, %v6265
      %v6274 = vsel %vm2726, %v6270, %v6266
      %s6275 = scalar_lea.vmem %s5, 4
      %v6276 = vld [vmem:[%s6275] sm:$0x3]
      %v6278 = vlaneseq
      %v6279 = vshrl.u32 %v6278, 7
      %v6280 = vsub.s32 0, %v6279
      %v6281 = vrot.slane %v6276, %v6280
      %v6282 = vlaneseq
      %v6283 = vshrl.u32 %v6282, 7
      %v6284 = vsub.s32 1, %v6283
      %v6285 = vrot.slane %v6276, %v6284
      %v6288 = vmul.f32 %v6273, %v6281
      %v6289 = vmul.f32 %v6274, %v6285
      %v6290 = vsel %vm1520, %v6288, 0.0
      %v6291 = vsel %vm1520, %v6289, 0.0
      %v6292 = vadd.f32 %v6290, %v6291
      %6293 = vadd.xlane.f32.xlu0 %v6292
      %v6294 = vpop.xlane.xlu0 %6293
      %v6295 = vadd.f32 %v6262, %v6294
      %v6296 = vld [vmem:[#allocation7] sm:$0x18]
      %v6297 = vld [vmem:[#allocation7 + $0x8] sm:$0x18]
      %v6298 = vld [vmem:[#allocation7 + $0x10] sm:$0x18]
      %v6299 = vld [vmem:[#allocation7 + $0x18] sm:$0x18]
      %v6302 = vrot.slane %v6296, 3
      %v6303 = vrot.slane %v6297, 3
      %v6308 = vrot.slane %v6298, 1
      %v6309 = vrot.slane %v6299, 1
      %v6312 = vsel %vm2726, %v6302, %v6308
      %v6313 = vsel %vm2726, %v6303, %v6309
      %s6314 = scalar_lea.vmem %s5, 6
      %v6315 = vld [vmem:[%s6314] sm:$0x3]
      %v6317 = vlaneseq
      %v6318 = vshrl.u32 %v6317, 7
      %v6319 = vsub.s32 0, %v6318
      %v6320 = vrot.slane %v6315, %v6319
      %v6321 = vlaneseq
      %v6322 = vshrl.u32 %v6321, 7
      %v6323 = vsub.s32 1, %v6322
      %v6324 = vrot.slane %v6315, %v6323
      %v6327 = vmul.f32 %v6312, %v6320
      %v6328 = vmul.f32 %v6313, %v6324
      %v6329 = vsel %vm1520, %v6327, 0.0
      %v6330 = vsel %vm1520, %v6328, 0.0
      %v6331 = vadd.f32 %v6329, %v6330
      %6332 = vadd.xlane.f32.xlu0 %v6331
      %v6333 = vpop.xlane.xlu0 %6332
      %v6334 = vadd.f32 %v6295, %v6333
      %v6335 = vld [vmem:[%s6169] sm:$0x3]
      %v6336 = vld [vmem:[%s6169 + $0x8] sm:$0x3]
      %v6337 = vld [vmem:[%s6169 + $0x10] sm:$0x3]
      %v6338 = vld [vmem:[%s6169 + $0x18] sm:$0x3]
      %v6341 = vrot.slane %v6337, 6
      %v6342 = vrot.slane %v6338, 6
      %v6345 = vsel %vm2726, %v6335, %v6341
      %v6346 = vsel %vm2726, %v6336, %v6342
      %s6347 = scalar_lea.vmem %s5, 8
      %v6348 = vld [vmem:[%s6347] sm:$0x3]
      %v6350 = vlaneseq
      %v6351 = vshrl.u32 %v6350, 7
      %v6352 = vsub.s32 0, %v6351
      %v6353 = vrot.slane %v6348, %v6352
      %v6354 = vlaneseq
      %v6355 = vshrl.u32 %v6354, 7
      %v6356 = vsub.s32 1, %v6355
      %v6357 = vrot.slane %v6348, %v6356
      %v6360 = vmul.f32 %v6345, %v6353
      %v6361 = vmul.f32 %v6346, %v6357
      %v6362 = vsel %vm1520, %v6360, 0.0
      %v6363 = vsel %vm1520, %v6361, 0.0
      %v6364 = vadd.f32 %v6362, %v6363
      %6365 = vadd.xlane.f32.xlu0 %v6364
      %v6366 = vpop.xlane.xlu0 %6365
      %v6367 = vadd.f32 %v6334, %v6366
      %v6368 = vld [vmem:[%s6169] sm:$0x6]
      %v6369 = vld [vmem:[%s6169 + $0x8] sm:$0x6]
      %v6370 = vld [vmem:[%s6169 + $0x10] sm:$0x6]
      %v6371 = vld [vmem:[%s6169 + $0x18] sm:$0x6]
      %v6374 = vrot.slane %v6368, 1
      %v6375 = vrot.slane %v6369, 1
      %v6380 = vrot.slane %v6370, 7
      %v6381 = vrot.slane %v6371, 7
      %v6384 = vsel %vm2726, %v6374, %v6380
      %v6385 = vsel %vm2726, %v6375, %v6381
      %s6386 = scalar_lea.vmem %s5, 10
      %v6387 = vld [vmem:[%s6386] sm:$0x3]
      %v6389 = vlaneseq
      %v6390 = vshrl.u32 %v6389, 7
      %v6391 = vsub.s32 0, %v6390
      %v6392 = vrot.slane %v6387, %v6391
      %v6393 = vlaneseq
      %v6394 = vshrl.u32 %v6393, 7
      %v6395 = vsub.s32 1, %v6394
      %v6396 = vrot.slane %v6387, %v6395
      %v6399 = vmul.f32 %v6384, %v6392
      %v6400 = vmul.f32 %v6385, %v6396
      %v6401 = vsel %vm1520, %v6399, 0.0
      %v6402 = vsel %vm1520, %v6400, 0.0
      %v6403 = vadd.f32 %v6401, %v6402
      %6404 = vadd.xlane.f32.xlu0 %v6403
      %v6405 = vpop.xlane.xlu0 %6404
      %v6406 = vadd.f32 %v6367, %v6405
      %v6407 = vld [vmem:[%s6169] sm:$0xc]
      %v6408 = vld [vmem:[%s6169 + $0x8] sm:$0xc]
      %v6409 = vld [vmem:[%s6169 + $0x10] sm:$0xc]
      %v6410 = vld [vmem:[%s6169 + $0x18] sm:$0xc]
      %v6413 = vrot.slane %v6407, 2
      %v6414 = vrot.slane %v6408, 2
      %v6417 = vsel %vm2726, %v6413, %v6409
      %v6418 = vsel %vm2726, %v6414, %v6410
      %s6419 = scalar_lea.vmem %s5, 12
      %v6420 = vld [vmem:[%s6419] sm:$0x3]
      %v6422 = vlaneseq
      %v6423 = vshrl.u32 %v6422, 7
      %v6424 = vsub.s32 0, %v6423
      %v6425 = vrot.slane %v6420, %v6424
      %v6426 = vlaneseq
      %v6427 = vshrl.u32 %v6426, 7
      %v6428 = vsub.s32 1, %v6427
      %v6429 = vrot.slane %v6420, %v6428
      %v6432 = vmul.f32 %v6417, %v6425
      %v6433 = vmul.f32 %v6418, %v6429
      %v6434 = vsel %vm1520, %v6432, 0.0
      %v6435 = vsel %vm1520, %v6433, 0.0
      %v6436 = vadd.f32 %v6434, %v6435
      %6437 = vadd.xlane.f32.xlu0 %v6436
      %v6438 = vpop.xlane.xlu0 %6437
      %v6439 = vadd.f32 %v6406, %v6438
      %v6440 = vld [vmem:[%s6169] sm:$0x18]
      %v6441 = vld [vmem:[%s6169 + $0x8] sm:$0x18]
      %v6442 = vld [vmem:[%s6169 + $0x10] sm:$0x18]
      %v6443 = vld [vmem:[%s6169 + $0x18] sm:$0x18]
      %v6446 = vrot.slane %v6440, 3
      %v6447 = vrot.slane %v6441, 3
      %v6452 = vrot.slane %v6442, 1
      %v6453 = vrot.slane %v6443, 1
      %v6456 = vsel %vm2726, %v6446, %v6452
      %v6457 = vsel %vm2726, %v6447, %v6453
      %s6458 = scalar_lea.vmem %s5, 14
      %v6459 = vld [vmem:[%s6458] sm:$0x3]
      %v6461 = vlaneseq
      %v6462 = vshrl.u32 %v6461, 7
      %v6463 = vsub.s32 0, %v6462
      %v6464 = vrot.slane %v6459, %v6463
      %v6465 = vlaneseq
      %v6466 = vshrl.u32 %v6465, 7
      %v6467 = vsub.s32 1, %v6466
      %v6468 = vrot.slane %v6459, %v6467
      %v6471 = vmul.f32 %v6456, %v6464
      %v6472 = vmul.f32 %v6457, %v6468
      %v6473 = vsel %vm1520, %v6471, 0.0
      %v6474 = vsel %vm1520, %v6472, 0.0
      %v6475 = vadd.f32 %v6473, %v6474
      %6476 = vadd.xlane.f32.xlu0 %v6475
      %v6477 = vpop.xlane.xlu0 %6476
      %v6478 = vadd.f32 %v6439, %v6477
      %v6479 = vld [vmem:[%s6176] sm:$0x3]
      %v6480 = vld [vmem:[%s6176 + $0x8] sm:$0x3]
      %v6481 = vld [vmem:[%s6176 + $0x10] sm:$0x3]
      %v6482 = vld [vmem:[%s6176 + $0x18] sm:$0x3]
      %v6485 = vrot.slane %v6481, 6
      %v6486 = vrot.slane %v6482, 6
      %v6489 = vsel %vm2726, %v6479, %v6485
      %v6490 = vsel %vm2726, %v6480, %v6486
      %s6491 = scalar_lea.vmem %s5, 16
      %v6492 = vld [vmem:[%s6491] sm:$0x3]
      %v6494 = vlaneseq
      %v6495 = vshrl.u32 %v6494, 7
      %v6496 = vsub.s32 0, %v6495
      %v6497 = vrot.slane %v6492, %v6496
      %v6498 = vlaneseq
      %v6499 = vshrl.u32 %v6498, 7
      %v6500 = vsub.s32 1, %v6499
      %v6501 = vrot.slane %v6492, %v6500
      %v6504 = vmul.f32 %v6489, %v6497
      %v6505 = vmul.f32 %v6490, %v6501
      %v6506 = vsel %vm1520, %v6504, 0.0
      %v6507 = vsel %vm1520, %v6505, 0.0
      %v6508 = vadd.f32 %v6506, %v6507
      %6509 = vadd.xlane.f32.xlu0 %v6508
      %v6510 = vpop.xlane.xlu0 %6509
      %v6511 = vadd.f32 %v6478, %v6510
      %v6512 = vld [vmem:[%s6176] sm:$0x6]
      %v6513 = vld [vmem:[%s6176 + $0x8] sm:$0x6]
      %v6514 = vld [vmem:[%s6176 + $0x10] sm:$0x6]
      %v6515 = vld [vmem:[%s6176 + $0x18] sm:$0x6]
      %v6518 = vrot.slane %v6512, 1
      %v6519 = vrot.slane %v6513, 1
      %v6524 = vrot.slane %v6514, 7
      %v6525 = vrot.slane %v6515, 7
      %v6528 = vsel %vm2726, %v6518, %v6524
      %v6529 = vsel %vm2726, %v6519, %v6525
      %s6530 = scalar_lea.vmem %s5, 18
      %v6531 = vld [vmem:[%s6530] sm:$0x3]
      %v6533 = vlaneseq
      %v6534 = vshrl.u32 %v6533, 7
      %v6535 = vsub.s32 0, %v6534
      %v6536 = vrot.slane %v6531, %v6535
      %v6537 = vlaneseq
      %v6538 = vshrl.u32 %v6537, 7
      %v6539 = vsub.s32 1, %v6538
      %v6540 = vrot.slane %v6531, %v6539
      %v6543 = vmul.f32 %v6528, %v6536
      %v6544 = vmul.f32 %v6529, %v6540
      %v6545 = vsel %vm1520, %v6543, 0.0
      %v6546 = vsel %vm1520, %v6544, 0.0
      %v6547 = vadd.f32 %v6545, %v6546
      %6548 = vadd.xlane.f32.xlu0 %v6547
      %v6549 = vpop.xlane.xlu0 %6548
      %v6550 = vadd.f32 %v6511, %v6549
      %v6551 = vld [vmem:[%s6176] sm:$0xc]
      %v6552 = vld [vmem:[%s6176 + $0x8] sm:$0xc]
      %v6553 = vld [vmem:[%s6176 + $0x10] sm:$0xc]
      %v6554 = vld [vmem:[%s6176 + $0x18] sm:$0xc]
      %v6557 = vrot.slane %v6551, 2
      %v6558 = vrot.slane %v6552, 2
      %v6561 = vsel %vm2726, %v6557, %v6553
      %v6562 = vsel %vm2726, %v6558, %v6554
      %s6563 = scalar_lea.vmem %s5, 20
      %v6564 = vld [vmem:[%s6563] sm:$0x3]
      %v6566 = vlaneseq
      %v6567 = vshrl.u32 %v6566, 7
      %v6568 = vsub.s32 0, %v6567
      %v6569 = vrot.slane %v6564, %v6568
      %v6570 = vlaneseq
      %v6571 = vshrl.u32 %v6570, 7
      %v6572 = vsub.s32 1, %v6571
      %v6573 = vrot.slane %v6564, %v6572
      %v6576 = vmul.f32 %v6561, %v6569
      %v6577 = vmul.f32 %v6562, %v6573
      %v6578 = vsel %vm1520, %v6576, 0.0
      %v6579 = vsel %vm1520, %v6577, 0.0
      %v6580 = vadd.f32 %v6578, %v6579
      %6581 = vadd.xlane.f32.xlu0 %v6580
      %v6582 = vpop.xlane.xlu0 %6581
      %v6583 = vadd.f32 %v6550, %v6582
      %v6584 = vld [vmem:[%s6176] sm:$0x18]
      %v6585 = vld [vmem:[%s6176 + $0x8] sm:$0x18]
      %v6586 = vld [vmem:[%s6176 + $0x10] sm:$0x18]
      %v6587 = vld [vmem:[%s6176 + $0x18] sm:$0x18]
      %v6590 = vrot.slane %v6584, 3
      %v6591 = vrot.slane %v6585, 3
      %v6596 = vrot.slane %v6586, 1
      %v6597 = vrot.slane %v6587, 1
      %v6600 = vsel %vm2726, %v6590, %v6596
      %v6601 = vsel %vm2726, %v6591, %v6597
      %s6602 = scalar_lea.vmem %s5, 22
      %v6603 = vld [vmem:[%s6602] sm:$0x3]
      %v6605 = vlaneseq
      %v6606 = vshrl.u32 %v6605, 7
      %v6607 = vsub.s32 0, %v6606
      %v6608 = vrot.slane %v6603, %v6607
      %v6609 = vlaneseq
      %v6610 = vshrl.u32 %v6609, 7
      %v6611 = vsub.s32 1, %v6610
      %v6612 = vrot.slane %v6603, %v6611
      %v6615 = vmul.f32 %v6600, %v6608
      %v6616 = vmul.f32 %v6601, %v6612
      %v6617 = vsel %vm1520, %v6615, 0.0
      %v6618 = vsel %vm1520, %v6616, 0.0
      %v6619 = vadd.f32 %v6617, %v6618
      %6620 = vadd.xlane.f32.xlu0 %v6619
      %v6621 = vpop.xlane.xlu0 %6620
      %v6622 = vadd.f32 %v6583, %v6621
      %v6623 = vld [vmem:[%s6189] sm:$0x3]
      %v6624 = vld [vmem:[%s6189 + $0x8] sm:$0x3]
      %v6625 = vld [vmem:[%s6189 + $0x10] sm:$0x3]
      %v6626 = vld [vmem:[%s6189 + $0x18] sm:$0x3]
      %v6629 = vrot.slane %v6625, 6
      %v6630 = vrot.slane %v6626, 6
      %v6633 = vsel %vm2726, %v6623, %v6629
      %v6634 = vsel %vm2726, %v6624, %v6630
      %s6635 = scalar_lea.vmem %s5, 24
      %v6636 = vld [vmem:[%s6635] sm:$0x3]
      %v6638 = vlaneseq
      %v6639 = vshrl.u32 %v6638, 7
      %v6640 = vsub.s32 0, %v6639
      %v6641 = vrot.slane %v6636, %v6640
      %v6642 = vlaneseq
      %v6643 = vshrl.u32 %v6642, 7
      %v6644 = vsub.s32 1, %v6643
      %v6645 = vrot.slane %v6636, %v6644
      %v6648 = vmul.f32 %v6633, %v6641
      %v6649 = vmul.f32 %v6634, %v6645
      %v6650 = vsel %vm1520, %v6648, 0.0
      %v6651 = vsel %vm1520, %v6649, 0.0
      %v6652 = vadd.f32 %v6650, %v6651
      %6653 = vadd.xlane.f32.xlu0 %v6652
      %v6654 = vpop.xlane.xlu0 %6653
      %v6655 = vadd.f32 %v6622, %v6654
      %v6656 = vld [vmem:[%s6189] sm:$0x6]
      %v6657 = vld [vmem:[%s6189 + $0x8] sm:$0x6]
      %v6658 = vld [vmem:[%s6189 + $0x10] sm:$0x6]
      %v6659 = vld [vmem:[%s6189 + $0x18] sm:$0x6]
      %v6662 = vrot.slane %v6656, 1
      %v6663 = vrot.slane %v6657, 1
      %v6668 = vrot.slane %v6658, 7
      %v6669 = vrot.slane %v6659, 7
      %v6672 = vsel %vm2726, %v6662, %v6668
      %v6673 = vsel %vm2726, %v6663, %v6669
      %s6674 = scalar_lea.vmem %s5, 26
      %v6675 = vld [vmem:[%s6674] sm:$0x3]
      %v6677 = vlaneseq
      %v6678 = vshrl.u32 %v6677, 7
      %v6679 = vsub.s32 0, %v6678
      %v6680 = vrot.slane %v6675, %v6679
      %v6681 = vlaneseq
      %v6682 = vshrl.u32 %v6681, 7
      %v6683 = vsub.s32 1, %v6682
      %v6684 = vrot.slane %v6675, %v6683
      %v6687 = vmul.f32 %v6672, %v6680
      %v6688 = vmul.f32 %v6673, %v6684
      %v6689 = vsel %vm1520, %v6687, 0.0
      %v6690 = vsel %vm1520, %v6688, 0.0
      %v6691 = vadd.f32 %v6689, %v6690
      %6692 = vadd.xlane.f32.xlu0 %v6691
      %v6693 = vpop.xlane.xlu0 %6692
      %v6694 = vadd.f32 %v6655, %v6693
      %v6695 = vld [vmem:[%s6189] sm:$0xc]
      %v6696 = vld [vmem:[%s6189 + $0x8] sm:$0xc]
      %v6697 = vld [vmem:[%s6189 + $0x10] sm:$0xc]
      %v6698 = vld [vmem:[%s6189 + $0x18] sm:$0xc]
      %v6701 = vrot.slane %v6695, 2
      %v6702 = vrot.slane %v6696, 2
      %v6705 = vsel %vm2726, %v6701, %v6697
      %v6706 = vsel %vm2726, %v6702, %v6698
      %s6707 = scalar_lea.vmem %s5, 28
      %v6708 = vld [vmem:[%s6707] sm:$0x3]
      %v6710 = vlaneseq
      %v6711 = vshrl.u32 %v6710, 7
      %v6712 = vsub.s32 0, %v6711
      %v6713 = vrot.slane %v6708, %v6712
      %v6714 = vlaneseq
      %v6715 = vshrl.u32 %v6714, 7
      %v6716 = vsub.s32 1, %v6715
      %v6717 = vrot.slane %v6708, %v6716
      %v6720 = vmul.f32 %v6705, %v6713
      %v6721 = vmul.f32 %v6706, %v6717
      %v6722 = vsel %vm1520, %v6720, 0.0
      %v6723 = vsel %vm1520, %v6721, 0.0
      %v6724 = vadd.f32 %v6722, %v6723
      %6725 = vadd.xlane.f32.xlu0 %v6724
      %v6726 = vpop.xlane.xlu0 %6725
      %v6727 = vadd.f32 %v6694, %v6726
      %v6728 = vld [vmem:[%s6189] sm:$0x18]
      %v6729 = vld [vmem:[%s6189 + $0x8] sm:$0x18]
      %v6730 = vld [vmem:[%s6189 + $0x10] sm:$0x18]
      %v6731 = vld [vmem:[%s6189 + $0x18] sm:$0x18]
      %v6734 = vrot.slane %v6728, 3
      %v6735 = vrot.slane %v6729, 3
      %v6740 = vrot.slane %v6730, 1
      %v6741 = vrot.slane %v6731, 1
      %v6744 = vsel %vm2726, %v6734, %v6740
      %v6745 = vsel %vm2726, %v6735, %v6741
      %s6746 = scalar_lea.vmem %s5, 30
      %v6747 = vld [vmem:[%s6746] sm:$0x3]
      %v6749 = vlaneseq
      %v6750 = vshrl.u32 %v6749, 7
      %v6751 = vsub.s32 0, %v6750
      %v6752 = vrot.slane %v6747, %v6751
      %v6753 = vlaneseq
      %v6754 = vshrl.u32 %v6753, 7
      %v6755 = vsub.s32 1, %v6754
      %v6756 = vrot.slane %v6747, %v6755
      %v6759 = vmul.f32 %v6744, %v6752
      %v6760 = vmul.f32 %v6745, %v6756
      %v6761 = vsel %vm1520, %v6759, 0.0
      %v6762 = vsel %vm1520, %v6760, 0.0
      %v6763 = vadd.f32 %v6761, %v6762
      %6764 = vadd.xlane.f32.xlu0 %v6763
      %v6765 = vpop.xlane.xlu0 %6764
      %v6766 = vadd.f32 %v6727, %v6765
      %v6767 = vld [vmem:[#allocation8] sm:$0x1]
      %v6769 = vlaneseq
      %v6770 = vshrl.u32 %v6769, 7
      %v6771 = vsub.s32 0, %v6770
      %v6772 = vrot.slane %v6767, %v6771
      %v6774 = vadd.f32 %v6766, %v6772
      %v6775 = vxor.u32 %v6774, 2147483648
      %v6776 = vmul.f32 %v6775, 1.442695
      %v6777 = vpow.pop %v6776
      %v6778 = vadd.f32 %v6777, 1.0
      %v6779 = vrcp.pop %v6778
      %v6780 = vmul.f32 1.0, %v6779
      %vm6781 = vcmask 3072
      %6782 = vst.msk [vmem:[%s386] sm:$0xf] %vm6781, %v6780
      %p6783 = scmp.lt.s32.totalorder %s24, 1
      %s6784 = scalar_select %p6783, %s24, 1
      %s6785 = smul.addr %s6784, 4
      %s6786 = scalar_lea.vmem %s11, %s6785
      // Predicated region
      $region65: #{discriminator_forward.1} parent=63 // pred_check
        %p6787 = pneg %p278
      $region66: #{discriminator_forward.1} parent=63 // pred_check_branch
        %6789 = sbr.rel (%p6787) target = $region68
      $region67: #{discriminator_forward.1} parent=63 // pred_region
        _
      $region68: #{discriminator_forward.1} parent=63 // pred_fallthru
        _
    $region64: #{discriminator_forward.1} parent=5 // pred_fallthru
      _
    %p6790 = scmp.le.s32.totalorder 2, %s19
    // Predicated region
    $region69: #{discriminator_forward.1} parent=5 // pred_check
      %p6791 = pneg %p6790
    $region70: #{discriminator_forward.1} parent=5 // pred_check_branch
      %6793 = sbr.rel (%p6791) target = $region72
    $region71: #{discriminator_forward.1} parent=5 // pred_region
      %s6794 = ssub.s32 %s19, 2
      // Predicated region
      $region73: #{discriminator_forward.1} parent=71 // pred_check
        %p6795 = pneg %p284
      $region74: #{discriminator_forward.1} parent=71 // pred_check_branch
        %6797 = sbr.rel (%p6795) target = $region76
      $region75: #{discriminator_forward.1} parent=71 // pred_region
        %p6798 = scmp.lt.s32.totalorder %s25, 1
        %s6799 = scalar_select %p6798, %s25, 1
        %s6800 = smul.addr %s6799, 4
        %s6801 = scalar_lea.vmem %s11, %s6800
      $region76: #{discriminator_forward.1} parent=71 // pred_fallthru
        _
    $region72: #{discriminator_forward.1} parent=5 // pred_fallthru
      _
  $region6: #{discriminator_forward.1} parent=0 // loop_footer
    %s23 = sadd.s32 1, %s19
  $region7: #{discriminator_forward.1} parent=0 // loop_footer_branch
    %18 = sbr.rel target = $region3
  $region8: #{discriminator_forward.1} parent=0 // loop_exit
    _

</llo_original>
